<compile_context>
chip_gen: v5e
topology: v5e:2x2
jax: 0.10.0
libtpu: 0.0.40
codegen_flags: <defaults>
</compile_context>

<pallas_src>
import jax
import jax.numpy as jnp
from jax.experimental import pallas as pl
from jax.experimental.pallas import tpu as pltpu

H = W = 8
C0, C1, C2, C3 = 3, 16, 32, 64
FC1_IN = C3 * H * W          # 4096
FC1_OUT = 512
TK = W * C3                  # 512 = one spatial row of the NHWC flatten
KT = FC1_IN // TK            # 8 grid steps (== H)


# ---------------------------------------------------------------------------
# Fused kernel: convs (step 0, VMEM-resident) + K-tiled fc1 + fused fc2 head
# ---------------------------------------------------------------------------
def _critic_kernel(x_ref, w1_ref, b1_ref, w2_ref, b2_ref, w3_ref, b3_ref,
                   wf1_ref, bf1_ref, wf2_ref, bf2_ref, out_ref,
                   pad0, pad1, pad2, a3, acc):
    k = pl.program_id(0)
    B = x_ref.shape[0]

    def conv3x3_relu(pin, w_ref, b_ref, cin, cout):
        # pin : (B, H+2, W+2, cin) zero-padded input (VMEM scratch ref)
        # w_ref : (9, cin, cout) tap-major im2col weights ; b_ref : (1, cout)
        accv = jnp.zeros((B * H * W, cout), jnp.float32)
        for dh in range(3):
            for dw in range(3):
                slab = pin[:, dh:dh + H, dw:dw + W, :]            # (B,H,W,cin)
                accv = accv + jnp.dot(slab.reshape(B * H * W, cin),
                                      w_ref[dh * 3 + dw],
                                      preferred_element_type=jnp.float32)
        y = jnp.maximum(accv + b_ref[...], 0.0)                   # (B*H*W,cout)
        return y.reshape(B, H, W, cout)

    # -- step 0: run all three convs entirely inside VMEM --------------------
    @pl.when(k == 0)
    def _convs():
        pad0[...] = jnp.zeros(pad0.shape, pad0.dtype)
        pad0[:, 1:1 + H, 1:1 + W, :] = x_ref[...]
        y1 = conv3x3_relu(pad0, w1_ref, b1_ref, C0, C1)           # (B,H,W,16)

        pad1[...] = jnp.zeros(pad1.shape, pad1.dtype)
        pad1[:, 1:1 + H, 1:1 + W, :] = y1
        y2 = conv3x3_relu(pad1, w2_ref, b2_ref, C1, C2)           # (B,H,W,32)

        pad2[...] = jnp.zeros(pad2.shape, pad2.dtype)
        pad2[:, 1:1 + H, 1:1 + W, :] = y2
        y3 = conv3x3_relu(pad2, w3_ref, b3_ref, C2, C3)           # (B,H,W,64)

        for h in range(H):                                        # h-major stash
            a3[h] = y3[:, h, :, :]                                # (B, W, C3)

        acc[...] = jnp.zeros(acc.shape, acc.dtype)

    # -- every step: fc1 partial for feature rows [k*TK, (k+1)*TK) -----------
    blk = a3[k]                                                   # (B, W, C3)
    part = jnp.zeros((B, FC1_OUT), jnp.float32)
    for w in range(W):
        part = part + jnp.dot(blk[:, w, :],
                              wf1_ref[w * C3:(w + 1) * C3, :],
                              preferred_element_type=jnp.float32)
    acc[...] = acc[...] + part

    # -- last step: fc1 bias+ReLU, fc2 as VPU multiply + lane reduction ------
    @pl.when(k == pl.num_programs(0) - 1)
    def _head():
        h1 = jnp.maximum(acc[...] + bf1_ref[...], 0.0)            # (B, 512)
        v = jnp.sum(h1 * wf2_ref[...], axis=-1, keepdims=True)    # (B, 1)
        out_ref[...] = v + bf2_ref[...]


def critic_forward_pallas(kparams, x_nchw):
    (w1, b1, w2, b2, w3, b3, wf1, bf1, wf2, bf2) = kparams
    B = x_nchw.shape[0]
    assert x_nchw.shape[1:] == (C0, H, W)
    x = jnp.transpose(x_nchw, (0, 2, 3, 1))                       # tiny NCHW->NHWC

    return pl.pallas_call(
        _critic_kernel,
        out_shape=jax.ShapeDtypeStruct((B, 1), jnp.float32),
        grid=(KT,),
        in_specs=[
            pl.BlockSpec((B, H, W, C0), lambda k: (0, 0, 0, 0)),   # x (NHWC)
            pl.BlockSpec((9, C0, C1), lambda k: (0, 0, 0)),        # conv1 w
            pl.BlockSpec((1, C1), lambda k: (0, 0)),               # conv1 b
            pl.BlockSpec((9, C1, C2), lambda k: (0, 0, 0)),        # conv2 w
            pl.BlockSpec((1, C2), lambda k: (0, 0)),               # conv2 b
            pl.BlockSpec((9, C2, C3), lambda k: (0, 0, 0)),        # conv3 w
            pl.BlockSpec((1, C3), lambda k: (0, 0)),               # conv3 b
            pl.BlockSpec((TK, FC1_OUT), lambda k: (k, 0)),         # fc1 w K-tile
            pl.BlockSpec((1, FC1_OUT), lambda k: (0, 0)),          # fc1 b
            pl.BlockSpec((1, FC1_OUT), lambda k: (0, 0)),          # fc2 w
            pl.BlockSpec((1, 1), lambda k: (0, 0)),                # fc2 b
        ],
        out_specs=pl.BlockSpec((B, 1), lambda k: (0, 0)),
        scratch_shapes=[
            pltpu.VMEM((B, H + 2, W + 2, C0), jnp.float32),        # padded input
            pltpu.VMEM((B, H + 2, W + 2, C1), jnp.float32),        # padded act 1
            pltpu.VMEM((B, H + 2, W + 2, C2), jnp.float32),        # padded act 2
            pltpu.VMEM((H, B, W, C3), jnp.float32),                # conv3 act (h-major)
            pltpu.VMEM((B, FC1_OUT), jnp.float32),                 # fc1 accumulator
        ],
        compiler_params=pltpu.CompilerParams(
            dimension_semantics=("arbitrary",)),
    )(x, w1, b1, w2, b2, w3, b3, wf1, bf1, wf2, bf2)


critic_forward = jax.jit(critic_forward_pallas)


# ---------------------------------------------------------------------------
# Params: PyTorch-layout init + one-time repack into kernel layout
# ---------------------------------------------------------------------------
def _uniform(key, shape, bound):
    return jax.random.uniform(key, shape, jnp.float32, -bound, bound)


def init_params(key):
    ks = jax.random.split(key, 10)

    def conv_init(kw, kb, cout, cin):
        bound = 1.0 / float(cin * 9) ** 0.5
        return _uniform(kw, (cout, cin, 3, 3), bound), _uniform(kb, (cout,), bound)

    def lin_init(kw, kb, out_f, in_f):
        bound = 1.0 / float(in_f) ** 0.5
        return _uniform(kw, (out_f, in_f), bound), _uniform(kb, (out_f,), bound)

    return {
        "conv1": conv_init(ks[0], ks[1], C1, C0),
        "conv2": conv_init(ks[2], ks[3], C2, C1),
        "conv3": conv_init(ks[4], ks[5], C3, C2),
        "fc1": lin_init(ks[6], ks[7], FC1_OUT, FC1_IN),
        "fc2": lin_init(ks[8], ks[9], 1, FC1_OUT),
    }


def prepare_kernel_params(params):
    """One-time repack (outside jit): im2col tap-major conv weights and an
    NHWC-permuted, pre-transposed (4096, 512) fc1 weight, so the forward pass
    contains no runtime weight transposes."""
    def conv_prep(w, b):
        cout, cin = w.shape[0], w.shape[1]
        wk = jnp.transpose(w, (2, 3, 1, 0)).reshape(9, cin, cout)  # (tap,Cin,Cout)
        return wk, b.reshape(1, cout)

    w1, b1 = conv_prep(*params["conv1"])
    w2, b2 = conv_prep(*params["conv2"])
    w3, b3 = conv_prep(*params["conv3"])

    wf1, bf1 = params["fc1"]                                      # (512,4096),(512,)
    # PyTorch flatten column j = c*H*W + h*W + w  ->  kernel row h*(W*C3)+w*C3+c
    wf1k = jnp.transpose(wf1.reshape(FC1_OUT, C3, H, W),
                         (2, 3, 1, 0)).reshape(FC1_IN, FC1_OUT)
    bf1k = bf1.reshape(1, FC1_OUT)

    wf2, bf2 = params["fc2"]                                      # (1,512),(1,)
    return (w1, b1, w2, b2, w3, b3, wf1k, bf1k,
            wf2.reshape(1, FC1_OUT), bf2.reshape(1, 1))


# ---------------------------------------------------------------------------
# Pure-JAX reference (mirrors the PyTorch module exactly) for a sanity check
# ---------------------------------------------------------------------------
def reference_forward(params, x_nchw):
    def conv(x, wb):
        w, b = wb
        y = jax.lax.conv_general_dilated(
            x, w, window_strides=(1, 1), padding=((1, 1), (1, 1)),
            dimension_numbers=("NCHW", "OIHW", "NCHW"),
            precision=jax.lax.Precision.HIGHEST)
        return jnp.maximum(y + b[None, :, None, None], 0.0)

    x = conv(x_nchw, params["conv1"])
    x = conv(x, params["conv2"])
    x = conv(x, params["conv3"])
    x = x.reshape(x.shape[0], -1)                                 # NCHW flatten
    wf1, bf1 = params["fc1"]
    x = jnp.maximum(jnp.dot(x, wf1.T, precision=jax.lax.Precision.HIGHEST) + bf1, 0.0)
    wf2, bf2 = params["fc2"]
    return jnp.dot(x, wf2.T, precision=jax.lax.Precision.HIGHEST) + bf2


if __name__ == "__main__":
    key = jax.random.PRNGKey(0)
    kp, kx = jax.random.split(key)
    params = init_params(kp)
    kparams = prepare_kernel_params(params)

    # Conv2d(3,...) and Linear(64*8*8,...) imply 3-channel 8x8 NCHW images.
    x = jax.random.normal(kx, (2, C0, H, W), jnp.float32)

    out = critic_forward(kparams, x)
    jax.block_until_ready(out)
    assert out.shape == (2, 1), out.shape

    ref = reference_forward(params, x)
    err = float(jnp.max(jnp.abs(out - ref)))
    assert err < 5e-3, f"kernel vs reference mismatch: max abs err = {err}"
    print("KERNEL_OK")
</pallas_src>

<mosaic_0001>
module attributes {stable_mosaic.version = 11 : i64} {
  func.func @_critic_kernel(%arg0: i32, %arg1: memref<2x8x8x3xf32, #tpu.memory_space<vmem>>, %arg2: memref<9x3x16xf32, #tpu.memory_space<vmem>>, %arg3: memref<1x16xf32, #tpu.memory_space<vmem>>, %arg4: memref<9x16x32xf32, #tpu.memory_space<vmem>>, %arg5: memref<1x32xf32, #tpu.memory_space<vmem>>, %arg6: memref<9x32x64xf32, #tpu.memory_space<vmem>>, %arg7: memref<1x64xf32, #tpu.memory_space<vmem>>, %arg8: memref<512x512xf32, #tpu.memory_space<vmem>>, %arg9: memref<1x512xf32, #tpu.memory_space<vmem>>, %arg10: memref<1x512xf32, #tpu.memory_space<vmem>>, %arg11: memref<1x1xf32, #tpu.memory_space<vmem>>, %arg12: memref<2x1xf32, #tpu.memory_space<vmem>>, %arg13: memref<2x10x10x3xf32, #tpu.memory_space<vmem>>, %arg14: memref<2x10x10x16xf32, #tpu.memory_space<vmem>>, %arg15: memref<2x10x10x32xf32, #tpu.memory_space<vmem>>, %arg16: memref<8x2x8x64xf32, #tpu.memory_space<vmem>>, %arg17: memref<2x512xf32, #tpu.memory_space<vmem>>) attributes {dimension_semantics = [#tpu.dimension_semantics<arbitrary>], iteration_bounds = array<i64: 8>, scalar_prefetch = 0 : i64, scratch_operands = 5 : i64, tpu.core_type = #tpu.core_type<tc>, window_params = [{pipeline_mode = #tpu.pipeline_mode<synchronous>, transform_indices = @transform_0, window_bounds = array<i64: 2, 8, 8, 3>}, {pipeline_mode = #tpu.pipeline_mode<synchronous>, transform_indices = @transform_1, window_bounds = array<i64: 9, 3, 16>}, {pipeline_mode = #tpu.pipeline_mode<synchronous>, transform_indices = @transform_2, window_bounds = array<i64: 1, 16>}, {pipeline_mode = #tpu.pipeline_mode<synchronous>, transform_indices = @transform_3, window_bounds = array<i64: 9, 16, 32>}, {pipeline_mode = #tpu.pipeline_mode<synchronous>, transform_indices = @transform_4, window_bounds = array<i64: 1, 32>}, {pipeline_mode = #tpu.pipeline_mode<synchronous>, transform_indices = @transform_5, window_bounds = array<i64: 9, 32, 64>}, {pipeline_mode = #tpu.pipeline_mode<synchronous>, transform_indices = @transform_6, window_bounds = array<i64: 1, 64>}, {transform_indices = @transform_7, window_bounds = array<i64: 512, 512>}, {pipeline_mode = #tpu.pipeline_mode<synchronous>, transform_indices = @transform_8, window_bounds = array<i64: 1, 512>}, {pipeline_mode = #tpu.pipeline_mode<synchronous>, transform_indices = @transform_9, window_bounds = array<i64: 1, 512>}, {pipeline_mode = #tpu.pipeline_mode<synchronous>, transform_indices = @transform_10, window_bounds = array<i64: 1, 1>}, {pipeline_mode = #tpu.pipeline_mode<synchronous>, transform_indices = @transform_11, window_bounds = array<i64: 2, 1>}]} {
    %c0_i32 = arith.constant 0 : i32
    %0 = arith.cmpi eq, %arg0, %c0_i32 : i32
    %1 = arith.extui %0 : i1 to i32
    %c0_i32_0 = arith.constant 0 : i32
    %2 = arith.cmpi ne, %1, %c0_i32_0 : i32
    scf.if %2 {
      %cst_25 = arith.constant 0.000000e+00 : f32
      %53 = vector.broadcast %cst_25 : f32 to vector<2x10x10x3xf32>
      %c0_26 = arith.constant 0 : index
      %c0_27 = arith.constant 0 : index
      %c0_28 = arith.constant 0 : index
      %c0_29 = arith.constant 0 : index
      %54 = vector.load %arg13[%c0_26, %c0_27, %c0_28, %c0_29] : memref<2x10x10x3xf32, #tpu.memory_space<vmem>>, vector<2x10x10x3xf32>
      tpu.vector_store %arg13[%c0_26, %c0_27, %c0_28, %c0_29], %53 {strides = array<i32>} : memref<2x10x10x3xf32, #tpu.memory_space<vmem>>, vector<2x10x10x3xf32>,
      %c0_30 = arith.constant 0 : index
      %c0_31 = arith.constant 0 : index
      %c0_32 = arith.constant 0 : index
      %c0_33 = arith.constant 0 : index
      %55 = vector.load %arg1[%c0_30, %c0_31, %c0_32, %c0_33] : memref<2x8x8x3xf32, #tpu.memory_space<vmem>>, vector<2x8x8x3xf32>
      %c0_34 = arith.constant 0 : index
      %c1 = arith.constant 1 : index
      %c1_35 = arith.constant 1 : index
      %c0_36 = arith.constant 0 : index
      %56 = vector.load %arg13[%c0_34, %c1, %c1_35, %c0_36] : memref<2x10x10x3xf32, #tpu.memory_space<vmem>>, vector<2x8x8x3xf32>
      tpu.vector_store %arg13[%c0_34, %c1, %c1_35, %c0_36], %55 {strides = array<i32>} : memref<2x10x10x3xf32, #tpu.memory_space<vmem>>, vector<2x8x8x3xf32>,
      %cst_37 = arith.constant 0.000000e+00 : f32
      %57 = vector.broadcast %cst_37 : f32 to vector<128x16xf32>
      %c0_38 = arith.constant 0 : index
      %c0_39 = arith.constant 0 : index
      %c0_40 = arith.constant 0 : index
      %c0_41 = arith.constant 0 : index
      %58 = vector.load %arg13[%c0_38, %c0_39, %c0_40, %c0_41] : memref<2x10x10x3xf32, #tpu.memory_space<vmem>>, vector<2x8x8x3xf32>
      %59 = vector.shape_cast %58 : vector<2x8x8x3xf32> to vector<128x3xf32>
      %c0_42 = arith.constant 0 : index
      %c0_43 = arith.constant 0 : index
      %c0_44 = arith.constant 0 : index
      %60 = vector.load %arg2[%c0_42, %c0_43, %c0_44] : memref<9x3x16xf32, #tpu.memory_space<vmem>>, vector<1x3x16xf32>
      %61 = vector.shape_cast %60 : vector<1x3x16xf32> to vector<3x16xf32>
      %cst_45 = arith.constant dense<0.000000e+00> : vector<128x16xf32>
      %62 = tpu.matmul %59, %61, %cst_45 {dimension_numbers = #tpu.dot_dimension_numbers<[1], [0], [0], [1], [0, 0, 1, 1], [], []>} : vector<128x3xf32>, vector<3x16xf32>, vector<128x16xf32> -> vector<128x16xf32>
      %63 = arith.addf %57, %62 : vector<128x16xf32>
      %c0_46 = arith.constant 0 : index
      %c0_47 = arith.constant 0 : index
      %c1_48 = arith.constant 1 : index
      %c0_49 = arith.constant 0 : index
      %64 = vector.load %arg13[%c0_46, %c0_47, %c1_48, %c0_49] : memref<2x10x10x3xf32, #tpu.memory_space<vmem>>, vector<2x8x8x3xf32>
      %65 = vector.shape_cast %64 : vector<2x8x8x3xf32> to vector<128x3xf32>
      %c1_50 = arith.constant 1 : index
      %c0_51 = arith.constant 0 : index
      %c0_52 = arith.constant 0 : index
      %66 = vector.load %arg2[%c1_50, %c0_51, %c0_52] : memref<9x3x16xf32, #tpu.memory_space<vmem>>, vector<1x3x16xf32>
      %67 = vector.shape_cast %66 : vector<1x3x16xf32> to vector<3x16xf32>
      %cst_53 = arith.constant dense<0.000000e+00> : vector<128x16xf32>
      %68 = tpu.matmul %65, %67, %cst_53 {dimension_numbers = #tpu.dot_dimension_numbers<[1], [0], [0], [1], [0, 0, 1, 1], [], []>} : vector<128x3xf32>, vector<3x16xf32>, vector<128x16xf32> -> vector<128x16xf32>
      %69 = arith.addf %63, %68 : vector<128x16xf32>
      %c0_54 = arith.constant 0 : index
      %c0_55 = arith.constant 0 : index
      %c2 = arith.constant 2 : index
      %c0_56 = arith.constant 0 : index
      %70 = vector.load %arg13[%c0_54, %c0_55, %c2, %c0_56] : memref<2x10x10x3xf32, #tpu.memory_space<vmem>>, vector<2x8x8x3xf32>
      %71 = vector.shape_cast %70 : vector<2x8x8x3xf32> to vector<128x3xf32>
      %c2_57 = arith.constant 2 : index
      %c0_58 = arith.constant 0 : index
      %c0_59 = arith.constant 0 : index
      %72 = vector.load %arg2[%c2_57, %c0_58, %c0_59] : memref<9x3x16xf32, #tpu.memory_space<vmem>>, vector<1x3x16xf32>
      %73 = vector.shape_cast %72 : vector<1x3x16xf32> to vector<3x16xf32>
      %cst_60 = arith.constant dense<0.000000e+00> : vector<128x16xf32>
      %74 = tpu.matmul %71, %73, %cst_60 {dimension_numbers = #tpu.dot_dimension_numbers<[1], [0], [0], [1], [0, 0, 1, 1], [], []>} : vector<128x3xf32>, vector<3x16xf32>, vector<128x16xf32> -> vector<128x16xf32>
      %75 = arith.addf %69, %74 : vector<128x16xf32>
      %c0_61 = arith.constant 0 : index
      %c1_62 = arith.constant 1 : index
      %c0_63 = arith.constant 0 : index
      %c0_64 = arith.constant 0 : index
      %76 = vector.load %arg13[%c0_61, %c1_62, %c0_63, %c0_64] : memref<2x10x10x3xf32, #tpu.memory_space<vmem>>, vector<2x8x8x3xf32>
      %77 = vector.shape_cast %76 : vector<2x8x8x3xf32> to vector<128x3xf32>
      %c3 = arith.constant 3 : index
      %c0_65 = arith.constant 0 : index
      %c0_66 = arith.constant 0 : index
      %78 = vector.load %arg2[%c3, %c0_65, %c0_66] : memref<9x3x16xf32, #tpu.memory_space<vmem>>, vector<1x3x16xf32>
      %79 = vector.shape_cast %78 : vector<1x3x16xf32> to vector<3x16xf32>
      %cst_67 = arith.constant dense<0.000000e+00> : vector<128x16xf32>
      %80 = tpu.matmul %77, %79, %cst_67 {dimension_numbers = #tpu.dot_dimension_numbers<[1], [0], [0], [1], [0, 0, 1, 1], [], []>} : vector<128x3xf32>, vector<3x16xf32>, vector<128x16xf32> -> vector<128x16xf32>
      %81 = arith.addf %75, %80 : vector<128x16xf32>
      %c0_68 = arith.constant 0 : index
      %c1_69 = arith.constant 1 : index
      %c1_70 = arith.constant 1 : index
      %c0_71 = arith.constant 0 : index
      %82 = vector.load %arg13[%c0_68, %c1_69, %c1_70, %c0_71] : memref<2x10x10x3xf32, #tpu.memory_space<vmem>>, vector<2x8x8x3xf32>
      %83 = vector.shape_cast %82 : vector<2x8x8x3xf32> to vector<128x3xf32>
      %c4 = arith.constant 4 : index
      %c0_72 = arith.constant 0 : index
      %c0_73 = arith.constant 0 : index
      %84 = vector.load %arg2[%c4, %c0_72, %c0_73] : memref<9x3x16xf32, #tpu.memory_space<vmem>>, vector<1x3x16xf32>
      %85 = vector.shape_cast %84 : vector<1x3x16xf32> to vector<3x16xf32>
      %cst_74 = arith.constant dense<0.000000e+00> : vector<128x16xf32>
      %86 = tpu.matmul %83, %85, %cst_74 {dimension_numbers = #tpu.dot_dimension_numbers<[1], [0], [0], [1], [0, 0, 1, 1], [], []>} : vector<128x3xf32>, vector<3x16xf32>, vector<128x16xf32> -> vector<128x16xf32>
      %87 = arith.addf %81, %86 : vector<128x16xf32>
      %c0_75 = arith.constant 0 : index
      %c1_76 = arith.constant 1 : index
      %c2_77 = arith.constant 2 : index
      %c0_78 = arith.constant 0 : index
      %88 = vector.load %arg13[%c0_75, %c1_76, %c2_77, %c0_78] : memref<2x10x10x3xf32, #tpu.memory_space<vmem>>, vector<2x8x8x3xf32>
      %89 = vector.shape_cast %88 : vector<2x8x8x3xf32> to vector<128x3xf32>
      %c5 = arith.constant 5 : index
      %c0_79 = arith.constant 0 : index
      %c0_80 = arith.constant 0 : index
      %90 = vector.load %arg2[%c5, %c0_79, %c0_80] : memref<9x3x16xf32, #tpu.memory_space<vmem>>, vector<1x3x16xf32>
      %91 = vector.shape_cast %90 : vector<1x3x16xf32> to vector<3x16xf32>
      %cst_81 = arith.constant dense<0.000000e+00> : vector<128x16xf32>
      %92 = tpu.matmul %89, %91, %cst_81 {dimension_numbers = #tpu.dot_dimension_numbers<[1], [0], [0], [1], [0, 0, 1, 1], [], []>} : vector<128x3xf32>, vector<3x16xf32>, vector<128x16xf32> -> vector<128x16xf32>
      %93 = arith.addf %87, %92 : vector<128x16xf32>
      %c0_82 = arith.constant 0 : index
      %c2_83 = arith.constant 2 : index
      %c0_84 = arith.constant 0 : index
      %c0_85 = arith.constant 0 : index
      %94 = vector.load %arg13[%c0_82, %c2_83, %c0_84, %c0_85] : memref<2x10x10x3xf32, #tpu.memory_space<vmem>>, vector<2x8x8x3xf32>
      %95 = vector.shape_cast %94 : vector<2x8x8x3xf32> to vector<128x3xf32>
      %c6 = arith.constant 6 : index
      %c0_86 = arith.constant 0 : index
      %c0_87 = arith.constant 0 : index
      %96 = vector.load %arg2[%c6, %c0_86, %c0_87] : memref<9x3x16xf32, #tpu.memory_space<vmem>>, vector<1x3x16xf32>
      %97 = vector.shape_cast %96 : vector<1x3x16xf32> to vector<3x16xf32>
      %cst_88 = arith.constant dense<0.000000e+00> : vector<128x16xf32>
      %98 = tpu.matmul %95, %97, %cst_88 {dimension_numbers = #tpu.dot_dimension_numbers<[1], [0], [0], [1], [0, 0, 1, 1], [], []>} : vector<128x3xf32>, vector<3x16xf32>, vector<128x16xf32> -> vector<128x16xf32>
      %99 = arith.addf %93, %98 : vector<128x16xf32>
      %c0_89 = arith.constant 0 : index
      %c2_90 = arith.constant 2 : index
      %c1_91 = arith.constant 1 : index
      %c0_92 = arith.constant 0 : index
      %100 = vector.load %arg13[%c0_89, %c2_90, %c1_91, %c0_92] : memref<2x10x10x3xf32, #tpu.memory_space<vmem>>, vector<2x8x8x3xf32>
      %101 = vector.shape_cast %100 : vector<2x8x8x3xf32> to vector<128x3xf32>
      %c7 = arith.constant 7 : index
      %c0_93 = arith.constant 0 : index
      %c0_94 = arith.constant 0 : index
      %102 = vector.load %arg2[%c7, %c0_93, %c0_94] : memref<9x3x16xf32, #tpu.memory_space<vmem>>, vector<1x3x16xf32>
      %103 = vector.shape_cast %102 : vector<1x3x16xf32> to vector<3x16xf32>
      %cst_95 = arith.constant dense<0.000000e+00> : vector<128x16xf32>
      %104 = tpu.matmul %101, %103, %cst_95 {dimension_numbers = #tpu.dot_dimension_numbers<[1], [0], [0], [1], [0, 0, 1, 1], [], []>} : vector<128x3xf32>, vector<3x16xf32>, vector<128x16xf32> -> vector<128x16xf32>
      %105 = arith.addf %99, %104 : vector<128x16xf32>
      %c0_96 = arith.constant 0 : index
      %c2_97 = arith.constant 2 : index
      %c2_98 = arith.constant 2 : index
      %c0_99 = arith.constant 0 : index
      %106 = vector.load %arg13[%c0_96, %c2_97, %c2_98, %c0_99] : memref<2x10x10x3xf32, #tpu.memory_space<vmem>>, vector<2x8x8x3xf32>
      %107 = vector.shape_cast %106 : vector<2x8x8x3xf32> to vector<128x3xf32>
      %c8 = arith.constant 8 : index
      %c0_100 = arith.constant 0 : index
      %c0_101 = arith.constant 0 : index
      %108 = vector.load %arg2[%c8, %c0_100, %c0_101] : memref<9x3x16xf32, #tpu.memory_space<vmem>>, vector<1x3x16xf32>
      %109 = vector.shape_cast %108 : vector<1x3x16xf32> to vector<3x16xf32>
      %cst_102 = arith.constant dense<0.000000e+00> : vector<128x16xf32>
      %110 = tpu.matmul %107, %109, %cst_102 {dimension_numbers = #tpu.dot_dimension_numbers<[1], [0], [0], [1], [0, 0, 1, 1], [], []>} : vector<128x3xf32>, vector<3x16xf32>, vector<128x16xf32> -> vector<128x16xf32>
      %111 = arith.addf %105, %110 : vector<128x16xf32>
      %c0_103 = arith.constant 0 : index
      %c0_104 = arith.constant 0 : index
      %112 = vector.load %arg3[%c0_103, %c0_104] : memref<1x16xf32, #tpu.memory_space<vmem>>, vector<1x16xf32>
      %113 = vector.broadcast %112 : vector<1x16xf32> to vector<128x16xf32>
      %114 = arith.addf %111, %113 : vector<128x16xf32>
      %cst_105 = arith.constant 0.000000e+00 : f32
      %115 = vector.broadcast %cst_105 : f32 to vector<128x16xf32>
      %116 = arith.maximumf %114, %115 : vector<128x16xf32>
      %117 = vector.shape_cast %116 : vector<128x16xf32> to vector<2x8x8x16xf32>
      %cst_106 = arith.constant 0.000000e+00 : f32
      %118 = vector.broadcast %cst_106 : f32 to vector<2x10x10x16xf32>
      %c0_107 = arith.constant 0 : index
      %c0_108 = arith.constant 0 : index
      %c0_109 = arith.constant 0 : index
      %c0_110 = arith.constant 0 : index
      %119 = vector.load %arg14[%c0_107, %c0_108, %c0_109, %c0_110] : memref<2x10x10x16xf32, #tpu.memory_space<vmem>>, vector<2x10x10x16xf32>
      tpu.vector_store %arg14[%c0_107, %c0_108, %c0_109, %c0_110], %118 {strides = array<i32>} : memref<2x10x10x16xf32, #tpu.memory_space<vmem>>, vector<2x10x10x16xf32>,
      %c0_111 = arith.constant 0 : index
      %c1_112 = arith.constant 1 : index
      %c1_113 = arith.constant 1 : index
      %c0_114 = arith.constant 0 : index
      %120 = vector.load %arg14[%c0_111, %c1_112, %c1_113, %c0_114] : memref<2x10x10x16xf32, #tpu.memory_space<vmem>>, vector<2x8x8x16xf32>
      tpu.vector_store %arg14[%c0_111, %c1_112, %c1_113, %c0_114], %117 {strides = array<i32>} : memref<2x10x10x16xf32, #tpu.memory_space<vmem>>, vector<2x8x8x16xf32>,
      %cst_115 = arith.constant 0.000000e+00 : f32
      %121 = vector.broadcast %cst_115 : f32 to vector<128x32xf32>
      %c0_116 = arith.constant 0 : index
      %c0_117 = arith.constant 0 : index
      %c0_118 = arith.constant 0 : index
      %c0_119 = arith.constant 0 : index
      %122 = vector.load %arg14[%c0_116, %c0_117, %c0_118, %c0_119] : memref<2x10x10x16xf32, #tpu.memory_space<vmem>>, vector<2x8x8x16xf32>
      %123 = vector.shape_cast %122 : vector<2x8x8x16xf32> to vector<128x16xf32>
      %c0_120 = arith.constant 0 : index
      %c0_121 = arith.constant 0 : index
      %c0_122 = arith.constant 0 : index
      %124 = vector.load %arg4[%c0_120, %c0_121, %c0_122] : memref<9x16x32xf32, #tpu.memory_space<vmem>>, vector<1x16x32xf32>
      %125 = vector.shape_cast %124 : vector<1x16x32xf32> to vector<16x32xf32>
      %cst_123 = arith.constant dense<0.000000e+00> : vector<128x32xf32>
      %126 = tpu.matmul %123, %125, %cst_123 {dimension_numbers = #tpu.dot_dimension_numbers<[1], [0], [0], [1], [0, 0, 1, 1], [], []>} : vector<128x16xf32>, vector<16x32xf32>, vector<128x32xf32> -> vector<128x32xf32>
      %127 = arith.addf %121, %126 : vector<128x32xf32>
      %c0_124 = arith.constant 0 : index
      %c0_125 = arith.constant 0 : index
      %c1_126 = arith.constant 1 : index
      %c0_127 = arith.constant 0 : index
      %128 = vector.load %arg14[%c0_124, %c0_125, %c1_126, %c0_127] : memref<2x10x10x16xf32, #tpu.memory_space<vmem>>, vector<2x8x8x16xf32>
      %129 = vector.shape_cast %128 : vector<2x8x8x16xf32> to vector<128x16xf32>
      %c1_128 = arith.constant 1 : index
      %c0_129 = arith.constant 0 : index
      %c0_130 = arith.constant 0 : index
      %130 = vector.load %arg4[%c1_128, %c0_129, %c0_130] : memref<9x16x32xf32, #tpu.memory_space<vmem>>, vector<1x16x32xf32>
      %131 = vector.shape_cast %130 : vector<1x16x32xf32> to vector<16x32xf32>
      %cst_131 = arith.constant dense<0.000000e+00> : vector<128x32xf32>
      %132 = tpu.matmul %129, %131, %cst_131 {dimension_numbers = #tpu.dot_dimension_numbers<[1], [0], [0], [1], [0, 0, 1, 1], [], []>} : vector<128x16xf32>, vector<16x32xf32>, vector<128x32xf32> -> vector<128x32xf32>
      %133 = arith.addf %127, %132 : vector<128x32xf32>
      %c0_132 = arith.constant 0 : index
      %c0_133 = arith.constant 0 : index
      %c2_134 = arith.constant 2 : index
      %c0_135 = arith.constant 0 : index
      %134 = vector.load %arg14[%c0_132, %c0_133, %c2_134, %c0_135] : memref<2x10x10x16xf32, #tpu.memory_space<vmem>>, vector<2x8x8x16xf32>
      %135 = vector.shape_cast %134 : vector<2x8x8x16xf32> to vector<128x16xf32>
      %c2_136 = arith.constant 2 : index
      %c0_137 = arith.constant 0 : index
      %c0_138 = arith.constant 0 : index
      %136 = vector.load %arg4[%c2_136, %c0_137, %c0_138] : memref<9x16x32xf32, #tpu.memory_space<vmem>>, vector<1x16x32xf32>
      %137 = vector.shape_cast %136 : vector<1x16x32xf32> to vector<16x32xf32>
      %cst_139 = arith.constant dense<0.000000e+00> : vector<128x32xf32>
      %138 = tpu.matmul %135, %137, %cst_139 {dimension_numbers = #tpu.dot_dimension_numbers<[1], [0], [0], [1], [0, 0, 1, 1], [], []>} : vector<128x16xf32>, vector<16x32xf32>, vector<128x32xf32> -> vector<128x32xf32>
      %139 = arith.addf %133, %138 : vector<128x32xf32>
      %c0_140 = arith.constant 0 : index
      %c1_141 = arith.constant 1 : index
      %c0_142 = arith.constant 0 : index
      %c0_143 = arith.constant 0 : index
      %140 = vector.load %arg14[%c0_140, %c1_141, %c0_142, %c0_143] : memref<2x10x10x16xf32, #tpu.memory_space<vmem>>, vector<2x8x8x16xf32>
      %141 = vector.shape_cast %140 : vector<2x8x8x16xf32> to vector<128x16xf32>
      %c3_144 = arith.constant 3 : index
      %c0_145 = arith.constant 0 : index
      %c0_146 = arith.constant 0 : index
      %142 = vector.load %arg4[%c3_144, %c0_145, %c0_146] : memref<9x16x32xf32, #tpu.memory_space<vmem>>, vector<1x16x32xf32>
      %143 = vector.shape_cast %142 : vector<1x16x32xf32> to vector<16x32xf32>
      %cst_147 = arith.constant dense<0.000000e+00> : vector<128x32xf32>
      %144 = tpu.matmul %141, %143, %cst_147 {dimension_numbers = #tpu.dot_dimension_numbers<[1], [0], [0], [1], [0, 0, 1, 1], [], []>} : vector<128x16xf32>, vector<16x32xf32>, vector<128x32xf32> -> vector<128x32xf32>
      %145 = arith.addf %139, %144 : vector<128x32xf32>
      %c0_148 = arith.constant 0 : index
      %c1_149 = arith.constant 1 : index
      %c1_150 = arith.constant 1 : index
      %c0_151 = arith.constant 0 : index
      %146 = vector.load %arg14[%c0_148, %c1_149, %c1_150, %c0_151] : memref<2x10x10x16xf32, #tpu.memory_space<vmem>>, vector<2x8x8x16xf32>
      %147 = vector.shape_cast %146 : vector<2x8x8x16xf32> to vector<128x16xf32>
      %c4_152 = arith.constant 4 : index
      %c0_153 = arith.constant 0 : index
      %c0_154 = arith.constant 0 : index
      %148 = vector.load %arg4[%c4_152, %c0_153, %c0_154] : memref<9x16x32xf32, #tpu.memory_space<vmem>>, vector<1x16x32xf32>
      %149 = vector.shape_cast %148 : vector<1x16x32xf32> to vector<16x32xf32>
      %cst_155 = arith.constant dense<0.000000e+00> : vector<128x32xf32>
      %150 = tpu.matmul %147, %149, %cst_155 {dimension_numbers = #tpu.dot_dimension_numbers<[1], [0], [0], [1], [0, 0, 1, 1], [], []>} : vector<128x16xf32>, vector<16x32xf32>, vector<128x32xf32> -> vector<128x32xf32>
      %151 = arith.addf %145, %150 : vector<128x32xf32>
      %c0_156 = arith.constant 0 : index
      %c1_157 = arith.constant 1 : index
      %c2_158 = arith.constant 2 : index
      %c0_159 = arith.constant 0 : index
      %152 = vector.load %arg14[%c0_156, %c1_157, %c2_158, %c0_159] : memref<2x10x10x16xf32, #tpu.memory_space<vmem>>, vector<2x8x8x16xf32>
      %153 = vector.shape_cast %152 : vector<2x8x8x16xf32> to vector<128x16xf32>
      %c5_160 = arith.constant 5 : index
      %c0_161 = arith.constant 0 : index
      %c0_162 = arith.constant 0 : index
      %154 = vector.load %arg4[%c5_160, %c0_161, %c0_162] : memref<9x16x32xf32, #tpu.memory_space<vmem>>, vector<1x16x32xf32>
      %155 = vector.shape_cast %154 : vector<1x16x32xf32> to vector<16x32xf32>
      %cst_163 = arith.constant dense<0.000000e+00> : vector<128x32xf32>
      %156 = tpu.matmul %153, %155, %cst_163 {dimension_numbers = #tpu.dot_dimension_numbers<[1], [0], [0], [1], [0, 0, 1, 1], [], []>} : vector<128x16xf32>, vector<16x32xf32>, vector<128x32xf32> -> vector<128x32xf32>
      %157 = arith.addf %151, %156 : vector<128x32xf32>
      %c0_164 = arith.constant 0 : index
      %c2_165 = arith.constant 2 : index
      %c0_166 = arith.constant 0 : index
      %c0_167 = arith.constant 0 : index
      %158 = vector.load %arg14[%c0_164, %c2_165, %c0_166, %c0_167] : memref<2x10x10x16xf32, #tpu.memory_space<vmem>>, vector<2x8x8x16xf32>
      %159 = vector.shape_cast %158 : vector<2x8x8x16xf32> to vector<128x16xf32>
      %c6_168 = arith.constant 6 : index
      %c0_169 = arith.constant 0 : index
      %c0_170 = arith.constant 0 : index
      %160 = vector.load %arg4[%c6_168, %c0_169, %c0_170] : memref<9x16x32xf32, #tpu.memory_space<vmem>>, vector<1x16x32xf32>
      %161 = vector.shape_cast %160 : vector<1x16x32xf32> to vector<16x32xf32>
      %cst_171 = arith.constant dense<0.000000e+00> : vector<128x32xf32>
      %162 = tpu.matmul %159, %161, %cst_171 {dimension_numbers = #tpu.dot_dimension_numbers<[1], [0], [0], [1], [0, 0, 1, 1], [], []>} : vector<128x16xf32>, vector<16x32xf32>, vector<128x32xf32> -> vector<128x32xf32>
      %163 = arith.addf %157, %162 : vector<128x32xf32>
      %c0_172 = arith.constant 0 : index
      %c2_173 = arith.constant 2 : index
      %c1_174 = arith.constant 1 : index
      %c0_175 = arith.constant 0 : index
      %164 = vector.load %arg14[%c0_172, %c2_173, %c1_174, %c0_175] : memref<2x10x10x16xf32, #tpu.memory_space<vmem>>, vector<2x8x8x16xf32>
      %165 = vector.shape_cast %164 : vector<2x8x8x16xf32> to vector<128x16xf32>
      %c7_176 = arith.constant 7 : index
      %c0_177 = arith.constant 0 : index
      %c0_178 = arith.constant 0 : index
      %166 = vector.load %arg4[%c7_176, %c0_177, %c0_178] : memref<9x16x32xf32, #tpu.memory_space<vmem>>, vector<1x16x32xf32>
      %167 = vector.shape_cast %166 : vector<1x16x32xf32> to vector<16x32xf32>
      %cst_179 = arith.constant dense<0.000000e+00> : vector<128x32xf32>
      %168 = tpu.matmul %165, %167, %cst_179 {dimension_numbers = #tpu.dot_dimension_numbers<[1], [0], [0], [1], [0, 0, 1, 1], [], []>} : vector<128x16xf32>, vector<16x32xf32>, vector<128x32xf32> -> vector<128x32xf32>
      %169 = arith.addf %163, %168 : vector<128x32xf32>
      %c0_180 = arith.constant 0 : index
      %c2_181 = arith.constant 2 : index
      %c2_182 = arith.constant 2 : index
      %c0_183 = arith.constant 0 : index
      %170 = vector.load %arg14[%c0_180, %c2_181, %c2_182, %c0_183] : memref<2x10x10x16xf32, #tpu.memory_space<vmem>>, vector<2x8x8x16xf32>
      %171 = vector.shape_cast %170 : vector<2x8x8x16xf32> to vector<128x16xf32>
      %c8_184 = arith.constant 8 : index
      %c0_185 = arith.constant 0 : index
      %c0_186 = arith.constant 0 : index
      %172 = vector.load %arg4[%c8_184, %c0_185, %c0_186] : memref<9x16x32xf32, #tpu.memory_space<vmem>>, vector<1x16x32xf32>
      %173 = vector.shape_cast %172 : vector<1x16x32xf32> to vector<16x32xf32>
      %cst_187 = arith.constant dense<0.000000e+00> : vector<128x32xf32>
      %174 = tpu.matmul %171, %173, %cst_187 {dimension_numbers = #tpu.dot_dimension_numbers<[1], [0], [0], [1], [0, 0, 1, 1], [], []>} : vector<128x16xf32>, vector<16x32xf32>, vector<128x32xf32> -> vector<128x32xf32>
      %175 = arith.addf %169, %174 : vector<128x32xf32>
      %c0_188 = arith.constant 0 : index
      %c0_189 = arith.constant 0 : index
      %176 = vector.load %arg5[%c0_188, %c0_189] : memref<1x32xf32, #tpu.memory_space<vmem>>, vector<1x32xf32>
      %177 = vector.broadcast %176 : vector<1x32xf32> to vector<128x32xf32>
      %178 = arith.addf %175, %177 : vector<128x32xf32>
      %cst_190 = arith.constant 0.000000e+00 : f32
      %179 = vector.broadcast %cst_190 : f32 to vector<128x32xf32>
      %180 = arith.maximumf %178, %179 : vector<128x32xf32>
      %181 = vector.shape_cast %180 : vector<128x32xf32> to vector<2x8x8x32xf32>
      %cst_191 = arith.constant 0.000000e+00 : f32
      %182 = vector.broadcast %cst_191 : f32 to vector<2x10x10x32xf32>
      %c0_192 = arith.constant 0 : index
      %c0_193 = arith.constant 0 : index
      %c0_194 = arith.constant 0 : index
      %c0_195 = arith.constant 0 : index
      %183 = vector.load %arg15[%c0_192, %c0_193, %c0_194, %c0_195] : memref<2x10x10x32xf32, #tpu.memory_space<vmem>>, vector<2x10x10x32xf32>
      tpu.vector_store %arg15[%c0_192, %c0_193, %c0_194, %c0_195], %182 {strides = array<i32>} : memref<2x10x10x32xf32, #tpu.memory_space<vmem>>, vector<2x10x10x32xf32>,
      %c0_196 = arith.constant 0 : index
      %c1_197 = arith.constant 1 : index
      %c1_198 = arith.constant 1 : index
      %c0_199 = arith.constant 0 : index
      %184 = vector.load %arg15[%c0_196, %c1_197, %c1_198, %c0_199] : memref<2x10x10x32xf32, #tpu.memory_space<vmem>>, vector<2x8x8x32xf32>
      tpu.vector_store %arg15[%c0_196, %c1_197, %c1_198, %c0_199], %181 {strides = array<i32>} : memref<2x10x10x32xf32, #tpu.memory_space<vmem>>, vector<2x8x8x32xf32>,
      %cst_200 = arith.constant 0.000000e+00 : f32
      %185 = vector.broadcast %cst_200 : f32 to vector<128x64xf32>
      %c0_201 = arith.constant 0 : index
      %c0_202 = arith.constant 0 : index
      %c0_203 = arith.constant 0 : index
      %c0_204 = arith.constant 0 : index
      %186 = vector.load %arg15[%c0_201, %c0_202, %c0_203, %c0_204] : memref<2x10x10x32xf32, #tpu.memory_space<vmem>>, vector<2x8x8x32xf32>
      %187 = vector.shape_cast %186 : vector<2x8x8x32xf32> to vector<128x32xf32>
      %c0_205 = arith.constant 0 : index
      %c0_206 = arith.constant 0 : index
      %c0_207 = arith.constant 0 : index
      %188 = vector.load %arg6[%c0_205, %c0_206, %c0_207] : memref<9x32x64xf32, #tpu.memory_space<vmem>>, vector<1x32x64xf32>
      %189 = vector.shape_cast %188 : vector<1x32x64xf32> to vector<32x64xf32>
      %cst_208 = arith.constant dense<0.000000e+00> : vector<128x64xf32>
      %190 = tpu.matmul %187, %189, %cst_208 {dimension_numbers = #tpu.dot_dimension_numbers<[1], [0], [0], [1], [0, 0, 1, 1], [], []>} : vector<128x32xf32>, vector<32x64xf32>, vector<128x64xf32> -> vector<128x64xf32>
      %191 = arith.addf %185, %190 : vector<128x64xf32>
      %c0_209 = arith.constant 0 : index
      %c0_210 = arith.constant 0 : index
      %c1_211 = arith.constant 1 : index
      %c0_212 = arith.constant 0 : index
      %192 = vector.load %arg15[%c0_209, %c0_210, %c1_211, %c0_212] : memref<2x10x10x32xf32, #tpu.memory_space<vmem>>, vector<2x8x8x32xf32>
      %193 = vector.shape_cast %192 : vector<2x8x8x32xf32> to vector<128x32xf32>
      %c1_213 = arith.constant 1 : index
      %c0_214 = arith.constant 0 : index
      %c0_215 = arith.constant 0 : index
      %194 = vector.load %arg6[%c1_213, %c0_214, %c0_215] : memref<9x32x64xf32, #tpu.memory_space<vmem>>, vector<1x32x64xf32>
      %195 = vector.shape_cast %194 : vector<1x32x64xf32> to vector<32x64xf32>
      %cst_216 = arith.constant dense<0.000000e+00> : vector<128x64xf32>
      %196 = tpu.matmul %193, %195, %cst_216 {dimension_numbers = #tpu.dot_dimension_numbers<[1], [0], [0], [1], [0, 0, 1, 1], [], []>} : vector<128x32xf32>, vector<32x64xf32>, vector<128x64xf32> -> vector<128x64xf32>
      %197 = arith.addf %191, %196 : vector<128x64xf32>
      %c0_217 = arith.constant 0 : index
      %c0_218 = arith.constant 0 : index
      %c2_219 = arith.constant 2 : index
      %c0_220 = arith.constant 0 : index
      %198 = vector.load %arg15[%c0_217, %c0_218, %c2_219, %c0_220] : memref<2x10x10x32xf32, #tpu.memory_space<vmem>>, vector<2x8x8x32xf32>
      %199 = vector.shape_cast %198 : vector<2x8x8x32xf32> to vector<128x32xf32>
      %c2_221 = arith.constant 2 : index
      %c0_222 = arith.constant 0 : index
      %c0_223 = arith.constant 0 : index
      %200 = vector.load %arg6[%c2_221, %c0_222, %c0_223] : memref<9x32x64xf32, #tpu.memory_space<vmem>>, vector<1x32x64xf32>
      %201 = vector.shape_cast %200 : vector<1x32x64xf32> to vector<32x64xf32>
      %cst_224 = arith.constant dense<0.000000e+00> : vector<128x64xf32>
      %202 = tpu.matmul %199, %201, %cst_224 {dimension_numbers = #tpu.dot_dimension_numbers<[1], [0], [0], [1], [0, 0, 1, 1], [], []>} : vector<128x32xf32>, vector<32x64xf32>, vector<128x64xf32> -> vector<128x64xf32>
      %203 = arith.addf %197, %202 : vector<128x64xf32>
      %c0_225 = arith.constant 0 : index
      %c1_226 = arith.constant 1 : index
      %c0_227 = arith.constant 0 : index
      %c0_228 = arith.constant 0 : index
      %204 = vector.load %arg15[%c0_225, %c1_226, %c0_227, %c0_228] : memref<2x10x10x32xf32, #tpu.memory_space<vmem>>, vector<2x8x8x32xf32>
      %205 = vector.shape_cast %204 : vector<2x8x8x32xf32> to vector<128x32xf32>
      %c3_229 = arith.constant 3 : index
      %c0_230 = arith.constant 0 : index
      %c0_231 = arith.constant 0 : index
      %206 = vector.load %arg6[%c3_229, %c0_230, %c0_231] : memref<9x32x64xf32, #tpu.memory_space<vmem>>, vector<1x32x64xf32>
      %207 = vector.shape_cast %206 : vector<1x32x64xf32> to vector<32x64xf32>
      %cst_232 = arith.constant dense<0.000000e+00> : vector<128x64xf32>
      %208 = tpu.matmul %205, %207, %cst_232 {dimension_numbers = #tpu.dot_dimension_numbers<[1], [0], [0], [1], [0, 0, 1, 1], [], []>} : vector<128x32xf32>, vector<32x64xf32>, vector<128x64xf32> -> vector<128x64xf32>
      %209 = arith.addf %203, %208 : vector<128x64xf32>
      %c0_233 = arith.constant 0 : index
      %c1_234 = arith.constant 1 : index
      %c1_235 = arith.constant 1 : index
      %c0_236 = arith.constant 0 : index
      %210 = vector.load %arg15[%c0_233, %c1_234, %c1_235, %c0_236] : memref<2x10x10x32xf32, #tpu.memory_space<vmem>>, vector<2x8x8x32xf32>
      %211 = vector.shape_cast %210 : vector<2x8x8x32xf32> to vector<128x32xf32>
      %c4_237 = arith.constant 4 : index
      %c0_238 = arith.constant 0 : index
      %c0_239 = arith.constant 0 : index
      %212 = vector.load %arg6[%c4_237, %c0_238, %c0_239] : memref<9x32x64xf32, #tpu.memory_space<vmem>>, vector<1x32x64xf32>
      %213 = vector.shape_cast %212 : vector<1x32x64xf32> to vector<32x64xf32>
      %cst_240 = arith.constant dense<0.000000e+00> : vector<128x64xf32>
      %214 = tpu.matmul %211, %213, %cst_240 {dimension_numbers = #tpu.dot_dimension_numbers<[1], [0], [0], [1], [0, 0, 1, 1], [], []>} : vector<128x32xf32>, vector<32x64xf32>, vector<128x64xf32> -> vector<128x64xf32>
      %215 = arith.addf %209, %214 : vector<128x64xf32>
      %c0_241 = arith.constant 0 : index
      %c1_242 = arith.constant 1 : index
      %c2_243 = arith.constant 2 : index
      %c0_244 = arith.constant 0 : index
      %216 = vector.load %arg15[%c0_241, %c1_242, %c2_243, %c0_244] : memref<2x10x10x32xf32, #tpu.memory_space<vmem>>, vector<2x8x8x32xf32>
      %217 = vector.shape_cast %216 : vector<2x8x8x32xf32> to vector<128x32xf32>
      %c5_245 = arith.constant 5 : index
      %c0_246 = arith.constant 0 : index
      %c0_247 = arith.constant 0 : index
      %218 = vector.load %arg6[%c5_245, %c0_246, %c0_247] : memref<9x32x64xf32, #tpu.memory_space<vmem>>, vector<1x32x64xf32>
      %219 = vector.shape_cast %218 : vector<1x32x64xf32> to vector<32x64xf32>
      %cst_248 = arith.constant dense<0.000000e+00> : vector<128x64xf32>
      %220 = tpu.matmul %217, %219, %cst_248 {dimension_numbers = #tpu.dot_dimension_numbers<[1], [0], [0], [1], [0, 0, 1, 1], [], []>} : vector<128x32xf32>, vector<32x64xf32>, vector<128x64xf32> -> vector<128x64xf32>
      %221 = arith.addf %215, %220 : vector<128x64xf32>
      %c0_249 = arith.constant 0 : index
      %c2_250 = arith.constant 2 : index
      %c0_251 = arith.constant 0 : index
      %c0_252 = arith.constant 0 : index
      %222 = vector.load %arg15[%c0_249, %c2_250, %c0_251, %c0_252] : memref<2x10x10x32xf32, #tpu.memory_space<vmem>>, vector<2x8x8x32xf32>
      %223 = vector.shape_cast %222 : vector<2x8x8x32xf32> to vector<128x32xf32>
      %c6_253 = arith.constant 6 : index
      %c0_254 = arith.constant 0 : index
      %c0_255 = arith.constant 0 : index
      %224 = vector.load %arg6[%c6_253, %c0_254, %c0_255] : memref<9x32x64xf32, #tpu.memory_space<vmem>>, vector<1x32x64xf32>
      %225 = vector.shape_cast %224 : vector<1x32x64xf32> to vector<32x64xf32>
      %cst_256 = arith.constant dense<0.000000e+00> : vector<128x64xf32>
      %226 = tpu.matmul %223, %225, %cst_256 {dimension_numbers = #tpu.dot_dimension_numbers<[1], [0], [0], [1], [0, 0, 1, 1], [], []>} : vector<128x32xf32>, vector<32x64xf32>, vector<128x64xf32> -> vector<128x64xf32>
      %227 = arith.addf %221, %226 : vector<128x64xf32>
      %c0_257 = arith.constant 0 : index
      %c2_258 = arith.constant 2 : index
      %c1_259 = arith.constant 1 : index
      %c0_260 = arith.constant 0 : index
      %228 = vector.load %arg15[%c0_257, %c2_258, %c1_259, %c0_260] : memref<2x10x10x32xf32, #tpu.memory_space<vmem>>, vector<2x8x8x32xf32>
      %229 = vector.shape_cast %228 : vector<2x8x8x32xf32> to vector<128x32xf32>
      %c7_261 = arith.constant 7 : index
      %c0_262 = arith.constant 0 : index
      %c0_263 = arith.constant 0 : index
      %230 = vector.load %arg6[%c7_261, %c0_262, %c0_263] : memref<9x32x64xf32, #tpu.memory_space<vmem>>, vector<1x32x64xf32>
      %231 = vector.shape_cast %230 : vector<1x32x64xf32> to vector<32x64xf32>
      %cst_264 = arith.constant dense<0.000000e+00> : vector<128x64xf32>
      %232 = tpu.matmul %229, %231, %cst_264 {dimension_numbers = #tpu.dot_dimension_numbers<[1], [0], [0], [1], [0, 0, 1, 1], [], []>} : vector<128x32xf32>, vector<32x64xf32>, vector<128x64xf32> -> vector<128x64xf32>
      %233 = arith.addf %227, %232 : vector<128x64xf32>
      %c0_265 = arith.constant 0 : index
      %c2_266 = arith.constant 2 : index
      %c2_267 = arith.constant 2 : index
      %c0_268 = arith.constant 0 : index
      %234 = vector.load %arg15[%c0_265, %c2_266, %c2_267, %c0_268] : memref<2x10x10x32xf32, #tpu.memory_space<vmem>>, vector<2x8x8x32xf32>
      %235 = vector.shape_cast %234 : vector<2x8x8x32xf32> to vector<128x32xf32>
      %c8_269 = arith.constant 8 : index
      %c0_270 = arith.constant 0 : index
      %c0_271 = arith.constant 0 : index
      %236 = vector.load %arg6[%c8_269, %c0_270, %c0_271] : memref<9x32x64xf32, #tpu.memory_space<vmem>>, vector<1x32x64xf32>
      %237 = vector.shape_cast %236 : vector<1x32x64xf32> to vector<32x64xf32>
      %cst_272 = arith.constant dense<0.000000e+00> : vector<128x64xf32>
      %238 = tpu.matmul %235, %237, %cst_272 {dimension_numbers = #tpu.dot_dimension_numbers<[1], [0], [0], [1], [0, 0, 1, 1], [], []>} : vector<128x32xf32>, vector<32x64xf32>, vector<128x64xf32> -> vector<128x64xf32>
      %239 = arith.addf %233, %238 : vector<128x64xf32>
      %c0_273 = arith.constant 0 : index
      %c0_274 = arith.constant 0 : index
      %240 = vector.load %arg7[%c0_273, %c0_274] : memref<1x64xf32, #tpu.memory_space<vmem>>, vector<1x64xf32>
      %241 = vector.broadcast %240 : vector<1x64xf32> to vector<128x64xf32>
      %242 = arith.addf %239, %241 : vector<128x64xf32>
      %cst_275 = arith.constant 0.000000e+00 : f32
      %243 = vector.broadcast %cst_275 : f32 to vector<128x64xf32>
      %244 = arith.maximumf %242, %243 : vector<128x64xf32>
      %245 = vector.shape_cast %244 : vector<128x64xf32> to vector<2x8x8x64xf32>
      %246 = vector.extract_strided_slice %245 {offsets = [0, 0, 0, 0], sizes = [2, 1, 8, 64], strides = [1, 1, 1, 1]} : vector<2x8x8x64xf32> to vector<2x1x8x64xf32>
      %247 = vector.shape_cast %246 : vector<2x1x8x64xf32> to vector<2x8x64xf32>
      %c0_276 = arith.constant 0 : index
      %c0_277 = arith.constant 0 : index
      %c0_278 = arith.constant 0 : index
      %c0_279 = arith.constant 0 : index
      %248 = vector.load %arg16[%c0_276, %c0_277, %c0_278, %c0_279] : memref<8x2x8x64xf32, #tpu.memory_space<vmem>>, vector<1x2x8x64xf32>
      %249 = vector.shape_cast %248 : vector<1x2x8x64xf32> to vector<2x8x64xf32>
      %250 = vector.shape_cast %247 : vector<2x8x64xf32> to vector<1x2x8x64xf32>
      tpu.vector_store %arg16[%c0_276, %c0_277, %c0_278, %c0_279], %250 {strides = array<i32>} : memref<8x2x8x64xf32, #tpu.memory_space<vmem>>, vector<1x2x8x64xf32>,
      %251 = vector.extract_strided_slice %245 {offsets = [0, 1, 0, 0], sizes = [2, 1, 8, 64], strides = [1, 1, 1, 1]} : vector<2x8x8x64xf32> to vector<2x1x8x64xf32>
      %252 = vector.shape_cast %251 : vector<2x1x8x64xf32> to vector<2x8x64xf32>
      %c1_280 = arith.constant 1 : index
      %c0_281 = arith.constant 0 : index
      %c0_282 = arith.constant 0 : index
      %c0_283 = arith.constant 0 : index
      %253 = vector.load %arg16[%c1_280, %c0_281, %c0_282, %c0_283] : memref<8x2x8x64xf32, #tpu.memory_space<vmem>>, vector<1x2x8x64xf32>
      %254 = vector.shape_cast %253 : vector<1x2x8x64xf32> to vector<2x8x64xf32>
      %255 = vector.shape_cast %252 : vector<2x8x64xf32> to vector<1x2x8x64xf32>
      tpu.vector_store %arg16[%c1_280, %c0_281, %c0_282, %c0_283], %255 {strides = array<i32>} : memref<8x2x8x64xf32, #tpu.memory_space<vmem>>, vector<1x2x8x64xf32>,
      %256 = vector.extract_strided_slice %245 {offsets = [0, 2, 0, 0], sizes = [2, 1, 8, 64], strides = [1, 1, 1, 1]} : vector<2x8x8x64xf32> to vector<2x1x8x64xf32>
      %257 = vector.shape_cast %256 : vector<2x1x8x64xf32> to vector<2x8x64xf32>
      %c2_284 = arith.constant 2 : index
      %c0_285 = arith.constant 0 : index
      %c0_286 = arith.constant 0 : index
      %c0_287 = arith.constant 0 : index
      %258 = vector.load %arg16[%c2_284, %c0_285, %c0_286, %c0_287] : memref<8x2x8x64xf32, #tpu.memory_space<vmem>>, vector<1x2x8x64xf32>
      %259 = vector.shape_cast %258 : vector<1x2x8x64xf32> to vector<2x8x64xf32>
      %260 = vector.shape_cast %257 : vector<2x8x64xf32> to vector<1x2x8x64xf32>
      tpu.vector_store %arg16[%c2_284, %c0_285, %c0_286, %c0_287], %260 {strides = array<i32>} : memref<8x2x8x64xf32, #tpu.memory_space<vmem>>, vector<1x2x8x64xf32>,
      %261 = vector.extract_strided_slice %245 {offsets = [0, 3, 0, 0], sizes = [2, 1, 8, 64], strides = [1, 1, 1, 1]} : vector<2x8x8x64xf32> to vector<2x1x8x64xf32>
      %262 = vector.shape_cast %261 : vector<2x1x8x64xf32> to vector<2x8x64xf32>
      %c3_288 = arith.constant 3 : index
      %c0_289 = arith.constant 0 : index
      %c0_290 = arith.constant 0 : index
      %c0_291 = arith.constant 0 : index
      %263 = vector.load %arg16[%c3_288, %c0_289, %c0_290, %c0_291] : memref<8x2x8x64xf32, #tpu.memory_space<vmem>>, vector<1x2x8x64xf32>
      %264 = vector.shape_cast %263 : vector<1x2x8x64xf32> to vector<2x8x64xf32>
      %265 = vector.shape_cast %262 : vector<2x8x64xf32> to vector<1x2x8x64xf32>
      tpu.vector_store %arg16[%c3_288, %c0_289, %c0_290, %c0_291], %265 {strides = array<i32>} : memref<8x2x8x64xf32, #tpu.memory_space<vmem>>, vector<1x2x8x64xf32>,
      %266 = vector.extract_strided_slice %245 {offsets = [0, 4, 0, 0], sizes = [2, 1, 8, 64], strides = [1, 1, 1, 1]} : vector<2x8x8x64xf32> to vector<2x1x8x64xf32>
      %267 = vector.shape_cast %266 : vector<2x1x8x64xf32> to vector<2x8x64xf32>
      %c4_292 = arith.constant 4 : index
      %c0_293 = arith.constant 0 : index
      %c0_294 = arith.constant 0 : index
      %c0_295 = arith.constant 0 : index
      %268 = vector.load %arg16[%c4_292, %c0_293, %c0_294, %c0_295] : memref<8x2x8x64xf32, #tpu.memory_space<vmem>>, vector<1x2x8x64xf32>
      %269 = vector.shape_cast %268 : vector<1x2x8x64xf32> to vector<2x8x64xf32>
      %270 = vector.shape_cast %267 : vector<2x8x64xf32> to vector<1x2x8x64xf32>
      tpu.vector_store %arg16[%c4_292, %c0_293, %c0_294, %c0_295], %270 {strides = array<i32>} : memref<8x2x8x64xf32, #tpu.memory_space<vmem>>, vector<1x2x8x64xf32>,
      %271 = vector.extract_strided_slice %245 {offsets = [0, 5, 0, 0], sizes = [2, 1, 8, 64], strides = [1, 1, 1, 1]} : vector<2x8x8x64xf32> to vector<2x1x8x64xf32>
      %272 = vector.shape_cast %271 : vector<2x1x8x64xf32> to vector<2x8x64xf32>
      %c5_296 = arith.constant 5 : index
      %c0_297 = arith.constant 0 : index
      %c0_298 = arith.constant 0 : index
      %c0_299 = arith.constant 0 : index
      %273 = vector.load %arg16[%c5_296, %c0_297, %c0_298, %c0_299] : memref<8x2x8x64xf32, #tpu.memory_space<vmem>>, vector<1x2x8x64xf32>
      %274 = vector.shape_cast %273 : vector<1x2x8x64xf32> to vector<2x8x64xf32>
      %275 = vector.shape_cast %272 : vector<2x8x64xf32> to vector<1x2x8x64xf32>
      tpu.vector_store %arg16[%c5_296, %c0_297, %c0_298, %c0_299], %275 {strides = array<i32>} : memref<8x2x8x64xf32, #tpu.memory_space<vmem>>, vector<1x2x8x64xf32>,
      %276 = vector.extract_strided_slice %245 {offsets = [0, 6, 0, 0], sizes = [2, 1, 8, 64], strides = [1, 1, 1, 1]} : vector<2x8x8x64xf32> to vector<2x1x8x64xf32>
      %277 = vector.shape_cast %276 : vector<2x1x8x64xf32> to vector<2x8x64xf32>
      %c6_300 = arith.constant 6 : index
      %c0_301 = arith.constant 0 : index
      %c0_302 = arith.constant 0 : index
      %c0_303 = arith.constant 0 : index
      %278 = vector.load %arg16[%c6_300, %c0_301, %c0_302, %c0_303] : memref<8x2x8x64xf32, #tpu.memory_space<vmem>>, vector<1x2x8x64xf32>
      %279 = vector.shape_cast %278 : vector<1x2x8x64xf32> to vector<2x8x64xf32>
      %280 = vector.shape_cast %277 : vector<2x8x64xf32> to vector<1x2x8x64xf32>
      tpu.vector_store %arg16[%c6_300, %c0_301, %c0_302, %c0_303], %280 {strides = array<i32>} : memref<8x2x8x64xf32, #tpu.memory_space<vmem>>, vector<1x2x8x64xf32>,
      %281 = vector.extract_strided_slice %245 {offsets = [0, 7, 0, 0], sizes = [2, 1, 8, 64], strides = [1, 1, 1, 1]} : vector<2x8x8x64xf32> to vector<2x1x8x64xf32>
      %282 = vector.shape_cast %281 : vector<2x1x8x64xf32> to vector<2x8x64xf32>
      %c7_304 = arith.constant 7 : index
      %c0_305 = arith.constant 0 : index
      %c0_306 = arith.constant 0 : index
      %c0_307 = arith.constant 0 : index
      %283 = vector.load %arg16[%c7_304, %c0_305, %c0_306, %c0_307] : memref<8x2x8x64xf32, #tpu.memory_space<vmem>>, vector<1x2x8x64xf32>
      %284 = vector.shape_cast %283 : vector<1x2x8x64xf32> to vector<2x8x64xf32>
      %285 = vector.shape_cast %282 : vector<2x8x64xf32> to vector<1x2x8x64xf32>
      tpu.vector_store %arg16[%c7_304, %c0_305, %c0_306, %c0_307], %285 {strides = array<i32>} : memref<8x2x8x64xf32, #tpu.memory_space<vmem>>, vector<1x2x8x64xf32>,
      %cst_308 = arith.constant 0.000000e+00 : f32
      %286 = vector.broadcast %cst_308 : f32 to vector<2x512xf32>
      %c0_309 = arith.constant 0 : index
      %c0_310 = arith.constant 0 : index
      %287 = vector.load %arg17[%c0_309, %c0_310] : memref<2x512xf32, #tpu.memory_space<vmem>>, vector<2x512xf32>
      tpu.vector_store %arg17[%c0_309, %c0_310], %286 {strides = array<i32>} : memref<2x512xf32, #tpu.memory_space<vmem>>, vector<2x512xf32>,
    } else {
    }
    %3 = arith.index_cast %arg0 : i32 to index
    %c0 = arith.constant 0 : index
    %c0_1 = arith.constant 0 : index
    %c0_2 = arith.constant 0 : index
    %4 = vector.load %arg16[%3, %c0, %c0_1, %c0_2] : memref<8x2x8x64xf32, #tpu.memory_space<vmem>>, vector<1x2x8x64xf32>
    %5 = vector.shape_cast %4 : vector<1x2x8x64xf32> to vector<2x8x64xf32>
    %cst = arith.constant 0.000000e+00 : f32
    %6 = vector.broadcast %cst : f32 to vector<2x512xf32>
    %7 = vector.extract_strided_slice %5 {offsets = [0, 0, 0], sizes = [2, 1, 64], strides = [1, 1, 1]} : vector<2x8x64xf32> to vector<2x1x64xf32>
    %8 = vector.shape_cast %7 : vector<2x1x64xf32> to vector<2x64xf32>
    %c0_3 = arith.constant 0 : index
    %c0_4 = arith.constant 0 : index
    %9 = vector.load %arg8[%c0_3, %c0_4] : memref<512x512xf32, #tpu.memory_space<vmem>>, vector<64x512xf32>
    %cst_5 = arith.constant dense<0.000000e+00> : vector<2x512xf32>
    %10 = tpu.matmul %8, %9, %cst_5 {dimension_numbers = #tpu.dot_dimension_numbers<[1], [0], [0], [1], [0, 0, 1, 1], [], []>} : vector<2x64xf32>, vector<64x512xf32>, vector<2x512xf32> -> vector<2x512xf32>
    %11 = arith.addf %6, %10 : vector<2x512xf32>
    %12 = vector.extract_strided_slice %5 {offsets = [0, 1, 0], sizes = [2, 1, 64], strides = [1, 1, 1]} : vector<2x8x64xf32> to vector<2x1x64xf32>
    %13 = vector.shape_cast %12 : vector<2x1x64xf32> to vector<2x64xf32>
    %c64 = arith.constant 64 : index
    %c0_6 = arith.constant 0 : index
    %14 = vector.load %arg8[%c64, %c0_6] : memref<512x512xf32, #tpu.memory_space<vmem>>, vector<64x512xf32>
    %cst_7 = arith.constant dense<0.000000e+00> : vector<2x512xf32>
    %15 = tpu.matmul %13, %14, %cst_7 {dimension_numbers = #tpu.dot_dimension_numbers<[1], [0], [0], [1], [0, 0, 1, 1], [], []>} : vector<2x64xf32>, vector<64x512xf32>, vector<2x512xf32> -> vector<2x512xf32>
    %16 = arith.addf %11, %15 : vector<2x512xf32>
    %17 = vector.extract_strided_slice %5 {offsets = [0, 2, 0], sizes = [2, 1, 64], strides = [1, 1, 1]} : vector<2x8x64xf32> to vector<2x1x64xf32>
    %18 = vector.shape_cast %17 : vector<2x1x64xf32> to vector<2x64xf32>
    %c128 = arith.constant 128 : index
    %c0_8 = arith.constant 0 : index
    %19 = vector.load %arg8[%c128, %c0_8] : memref<512x512xf32, #tpu.memory_space<vmem>>, vector<64x512xf32>
    %cst_9 = arith.constant dense<0.000000e+00> : vector<2x512xf32>
    %20 = tpu.matmul %18, %19, %cst_9 {dimension_numbers = #tpu.dot_dimension_numbers<[1], [0], [0], [1], [0, 0, 1, 1], [], []>} : vector<2x64xf32>, vector<64x512xf32>, vector<2x512xf32> -> vector<2x512xf32>
    %21 = arith.addf %16, %20 : vector<2x512xf32>
    %22 = vector.extract_strided_slice %5 {offsets = [0, 3, 0], sizes = [2, 1, 64], strides = [1, 1, 1]} : vector<2x8x64xf32> to vector<2x1x64xf32>
    %23 = vector.shape_cast %22 : vector<2x1x64xf32> to vector<2x64xf32>
    %c192 = arith.constant 192 : index
    %c0_10 = arith.constant 0 : index
    %24 = vector.load %arg8[%c192, %c0_10] : memref<512x512xf32, #tpu.memory_space<vmem>>, vector<64x512xf32>
    %cst_11 = arith.constant dense<0.000000e+00> : vector<2x512xf32>
    %25 = tpu.matmul %23, %24, %cst_11 {dimension_numbers = #tpu.dot_dimension_numbers<[1], [0], [0], [1], [0, 0, 1, 1], [], []>} : vector<2x64xf32>, vector<64x512xf32>, vector<2x512xf32> -> vector<2x512xf32>
    %26 = arith.addf %21, %25 : vector<2x512xf32>
    %27 = vector.extract_strided_slice %5 {offsets = [0, 4, 0], sizes = [2, 1, 64], strides = [1, 1, 1]} : vector<2x8x64xf32> to vector<2x1x64xf32>
    %28 = vector.shape_cast %27 : vector<2x1x64xf32> to vector<2x64xf32>
    %c256 = arith.constant 256 : index
    %c0_12 = arith.constant 0 : index
    %29 = vector.load %arg8[%c256, %c0_12] : memref<512x512xf32, #tpu.memory_space<vmem>>, vector<64x512xf32>
    %cst_13 = arith.constant dense<0.000000e+00> : vector<2x512xf32>
    %30 = tpu.matmul %28, %29, %cst_13 {dimension_numbers = #tpu.dot_dimension_numbers<[1], [0], [0], [1], [0, 0, 1, 1], [], []>} : vector<2x64xf32>, vector<64x512xf32>, vector<2x512xf32> -> vector<2x512xf32>
    %31 = arith.addf %26, %30 : vector<2x512xf32>
    %32 = vector.extract_strided_slice %5 {offsets = [0, 5, 0], sizes = [2, 1, 64], strides = [1, 1, 1]} : vector<2x8x64xf32> to vector<2x1x64xf32>
    %33 = vector.shape_cast %32 : vector<2x1x64xf32> to vector<2x64xf32>
    %c320 = arith.constant 320 : index
    %c0_14 = arith.constant 0 : index
    %34 = vector.load %arg8[%c320, %c0_14] : memref<512x512xf32, #tpu.memory_space<vmem>>, vector<64x512xf32>
    %cst_15 = arith.constant dense<0.000000e+00> : vector<2x512xf32>
    %35 = tpu.matmul %33, %34, %cst_15 {dimension_numbers = #tpu.dot_dimension_numbers<[1], [0], [0], [1], [0, 0, 1, 1], [], []>} : vector<2x64xf32>, vector<64x512xf32>, vector<2x512xf32> -> vector<2x512xf32>
    %36 = arith.addf %31, %35 : vector<2x512xf32>
    %37 = vector.extract_strided_slice %5 {offsets = [0, 6, 0], sizes = [2, 1, 64], strides = [1, 1, 1]} : vector<2x8x64xf32> to vector<2x1x64xf32>
    %38 = vector.shape_cast %37 : vector<2x1x64xf32> to vector<2x64xf32>
    %c384 = arith.constant 384 : index
    %c0_16 = arith.constant 0 : index
    %39 = vector.load %arg8[%c384, %c0_16] : memref<512x512xf32, #tpu.memory_space<vmem>>, vector<64x512xf32>
    %cst_17 = arith.constant dense<0.000000e+00> : vector<2x512xf32>
    %40 = tpu.matmul %38, %39, %cst_17 {dimension_numbers = #tpu.dot_dimension_numbers<[1], [0], [0], [1], [0, 0, 1, 1], [], []>} : vector<2x64xf32>, vector<64x512xf32>, vector<2x512xf32> -> vector<2x512xf32>
    %41 = arith.addf %36, %40 : vector<2x512xf32>
    %42 = vector.extract_strided_slice %5 {offsets = [0, 7, 0], sizes = [2, 1, 64], strides = [1, 1, 1]} : vector<2x8x64xf32> to vector<2x1x64xf32>
    %43 = vector.shape_cast %42 : vector<2x1x64xf32> to vector<2x64xf32>
    %c448 = arith.constant 448 : index
    %c0_18 = arith.constant 0 : index
    %44 = vector.load %arg8[%c448, %c0_18] : memref<512x512xf32, #tpu.memory_space<vmem>>, vector<64x512xf32>
    %cst_19 = arith.constant dense<0.000000e+00> : vector<2x512xf32>
    %45 = tpu.matmul %43, %44, %cst_19 {dimension_numbers = #tpu.dot_dimension_numbers<[1], [0], [0], [1], [0, 0, 1, 1], [], []>} : vector<2x64xf32>, vector<64x512xf32>, vector<2x512xf32> -> vector<2x512xf32>
    %46 = arith.addf %41, %45 : vector<2x512xf32>
    %c0_20 = arith.constant 0 : index
    %c0_21 = arith.constant 0 : index
    %47 = vector.load %arg17[%c0_20, %c0_21] : memref<2x512xf32, #tpu.memory_space<vmem>>, vector<2x512xf32>
    %48 = arith.addf %47, %46 : vector<2x512xf32>
    %c0_22 = arith.constant 0 : index
    %c0_23 = arith.constant 0 : index
    %49 = vector.load %arg17[%c0_22, %c0_23] : memref<2x512xf32, #tpu.memory_space<vmem>>, vector<2x512xf32>
    tpu.vector_store %arg17[%c0_22, %c0_23], %48 {strides = array<i32>} : memref<2x512xf32, #tpu.memory_space<vmem>>, vector<2x512xf32>,
    %c7_i32 = arith.constant 7 : i32
    %50 = arith.cmpi eq, %arg0, %c7_i32 : i32
    %51 = arith.extui %50 : i1 to i32
    %c0_i32_24 = arith.constant 0 : i32
    %52 = arith.cmpi ne, %51, %c0_i32_24 : i32
    scf.if %52 {
      %c0_25 = arith.constant 0 : index
      %c0_26 = arith.constant 0 : index
      %53 = vector.load %arg17[%c0_25, %c0_26] : memref<2x512xf32, #tpu.memory_space<vmem>>, vector<2x512xf32>
      %c0_27 = arith.constant 0 : index
      %c0_28 = arith.constant 0 : index
      %54 = vector.load %arg9[%c0_27, %c0_28] : memref<1x512xf32, #tpu.memory_space<vmem>>, vector<1x512xf32>
      %55 = vector.broadcast %54 : vector<1x512xf32> to vector<2x512xf32>
      %56 = arith.addf %53, %55 : vector<2x512xf32>
      %cst_29 = arith.constant 0.000000e+00 : f32
      %57 = vector.broadcast %cst_29 : f32 to vector<2x512xf32>
      %58 = arith.maximumf %56, %57 : vector<2x512xf32>
      %c0_30 = arith.constant 0 : index
      %c0_31 = arith.constant 0 : index
      %59 = vector.load %arg10[%c0_30, %c0_31] : memref<1x512xf32, #tpu.memory_space<vmem>>, vector<1x512xf32>
      %60 = vector.broadcast %59 : vector<1x512xf32> to vector<2x512xf32>
      %61 = arith.mulf %58, %60 : vector<2x512xf32>
      %cst_32 = arith.constant dense<0.000000e+00> : vector<2xf32>
      %62 = vector.multi_reduction <add>, %61, %cst_32 [1] : vector<2x512xf32> to vector<2xf32>
      %63 = vector.shape_cast %62 : vector<2xf32> to vector<2x1xf32>
      %c0_33 = arith.constant 0 : index
      %c0_34 = arith.constant 0 : index
      %64 = vector.load %arg11[%c0_33, %c0_34] : memref<1x1xf32, #tpu.memory_space<vmem>>, vector<1x1xf32>
      %65 = vector.broadcast %64 : vector<1x1xf32> to vector<2x1xf32>
      %66 = arith.addf %63, %65 : vector<2x1xf32>
      %c0_35 = arith.constant 0 : index
      %c0_36 = arith.constant 0 : index
      %67 = vector.load %arg12[%c0_35, %c0_36] : memref<2x1xf32, #tpu.memory_space<vmem>>, vector<2x1xf32>
      tpu.vector_store %arg12[%c0_35, %c0_36], %66 {strides = array<i32>} : memref<2x1xf32, #tpu.memory_space<vmem>>, vector<2x1xf32>,
    } else {
    }
    return
  }
  func.func @transform_0(%arg0: i32) -> (i32, i32, i32, i32) {
    %c0_i32 = arith.constant 0 : i32
    %c0_i32_0 = arith.constant 0 : i32
    %c0_i32_1 = arith.constant 0 : i32
    %c0_i32_2 = arith.constant 0 : i32
    %c0_i32_3 = arith.constant 0 : i32
    return %c0_i32, %c0_i32_0, %c0_i32_1, %c0_i32_2 : i32, i32, i32, i32
  }
  func.func @transform_1(%arg0: i32) -> (i32, i32, i32) {
    %c0_i32 = arith.constant 0 : i32
    %c0_i32_0 = arith.constant 0 : i32
    %c0_i32_1 = arith.constant 0 : i32
    %c0_i32_2 = arith.constant 0 : i32
    return %c0_i32, %c0_i32_0, %c0_i32_1 : i32, i32, i32
  }
  func.func @transform_2(%arg0: i32) -> (i32, i32) {
    %c0_i32 = arith.constant 0 : i32
    %c0_i32_0 = arith.constant 0 : i32
    %c0_i32_1 = arith.constant 0 : i32
    return %c0_i32, %c0_i32_0 : i32, i32
  }
  func.func @transform_3(%arg0: i32) -> (i32, i32, i32) {
    %c0_i32 = arith.constant 0 : i32
    %c0_i32_0 = arith.constant 0 : i32
    %c0_i32_1 = arith.constant 0 : i32
    %c0_i32_2 = arith.constant 0 : i32
    return %c0_i32, %c0_i32_0, %c0_i32_1 : i32, i32, i32
  }
  func.func @transform_4(%arg0: i32) -> (i32, i32) {
    %c0_i32 = arith.constant 0 : i32
    %c0_i32_0 = arith.constant 0 : i32
    %c0_i32_1 = arith.constant 0 : i32
    return %c0_i32, %c0_i32_0 : i32, i32
  }
  func.func @transform_5(%arg0: i32) -> (i32, i32, i32) {
    %c0_i32 = arith.constant 0 : i32
    %c0_i32_0 = arith.constant 0 : i32
    %c0_i32_1 = arith.constant 0 : i32
    %c0_i32_2 = arith.constant 0 : i32
    return %c0_i32, %c0_i32_0, %c0_i32_1 : i32, i32, i32
  }
  func.func @transform_6(%arg0: i32) -> (i32, i32) {
    %c0_i32 = arith.constant 0 : i32
    %c0_i32_0 = arith.constant 0 : i32
    %c0_i32_1 = arith.constant 0 : i32
    return %c0_i32, %c0_i32_0 : i32, i32
  }
  func.func @transform_7(%arg0: i32) -> (i32, i32) {
    %c0_i32 = arith.constant 0 : i32
    %c0_i32_0 = arith.constant 0 : i32
    return %arg0, %c0_i32 : i32, i32
  }
  func.func @transform_8(%arg0: i32) -> (i32, i32) {
    %c0_i32 = arith.constant 0 : i32
    %c0_i32_0 = arith.constant 0 : i32
    %c0_i32_1 = arith.constant 0 : i32
    return %c0_i32, %c0_i32_0 : i32, i32
  }
  func.func @transform_9(%arg0: i32) -> (i32, i32) {
    %c0_i32 = arith.constant 0 : i32
    %c0_i32_0 = arith.constant 0 : i32
    %c0_i32_1 = arith.constant 0 : i32
    return %c0_i32, %c0_i32_0 : i32, i32
  }
  func.func @transform_10(%arg0: i32) -> (i32, i32) {
    %c0_i32 = arith.constant 0 : i32
    %c0_i32_0 = arith.constant 0 : i32
    %c0_i32_1 = arith.constant 0 : i32
    return %c0_i32, %c0_i32_0 : i32, i32
  }
  func.func @transform_11(%arg0: i32) -> (i32, i32) {
    %c0_i32 = arith.constant 0 : i32
    %c0_i32_0 = arith.constant 0 : i32
    %c0_i32_1 = arith.constant 0 : i32
    return %c0_i32, %c0_i32_0 : i32, i32
  }
}

</mosaic_0001>

<llo_original>
// kernel: critic_forward_pallas.1
$region0: #{critic_forward_pallas.1}
  #allocation0 [shape = 'u32[]', space=smem, size = 0x4, offset = 0x4, fixed_abs, tag = 'smem constant byte address 0x4 - core index']
  #allocation1 [shape = 'u32[72,128]{1,0:T(1,128)}', space=vmem, size = 0x9000, scoped, tag = 'internal scratch']
  #allocation2 [shape = 'f32[2,10,10,3]{3,2,1,0:T(8,128)}', space=vmem, size = 0x28000, scoped, tag = 'scratch operand']
  #allocation3 [shape = 'f32[2,10,10,16]{3,2,1,0:T(8,128)}', space=vmem, size = 0x28000, scoped, tag = 'scratch operand']
  #allocation4 [shape = 'f32[2,10,10,32]{3,2,1,0:T(8,128)}', space=vmem, size = 0x28000, scoped, tag = 'scratch operand']
  #allocation5 [shape = 'f32[8,2,8,64]{3,2,1,0:T(8,128)}', space=vmem, size = 0x10000, scoped, tag = 'scratch operand']
  #allocation6 [shape = 'f32[2,512]{1,0:T(2,128)}', space=vmem, size = 0x1000, scoped, tag = 'scratch operand']
  #allocation7 [shape = 'f32[1,1]{1,0:T(1,128)S(1)}', space=vmem, size = 0x200, scoped, tag = 'scoped memory for critic_forward_pallas.1']
  %s0 = inlined_call_operand.vmem [shape: f32[2,8,8,3], index: 0, kind: input, shape index: {}]
  %s1 = inlined_call_operand.hbm [shape: f32[9,3,16], index: 1, kind: input, shape index: {}]
  %s2 = inlined_call_operand.hbm [shape: f32[1,16], index: 2, kind: input, shape index: {}]
  %s3 = inlined_call_operand.hbm [shape: f32[9,16,32], index: 3, kind: input, shape index: {}]
  %s4 = inlined_call_operand.hbm [shape: f32[1,32], index: 4, kind: input, shape index: {}]
  %s5 = inlined_call_operand.hbm [shape: f32[9,32,64], index: 5, kind: input, shape index: {}]
  %s6 = inlined_call_operand.hbm [shape: f32[1,64], index: 6, kind: input, shape index: {}]
  %s7 = inlined_call_operand.hbm [shape: f32[4096,512], index: 7, kind: input, shape index: {}]
  %s8 = inlined_call_operand.hbm [shape: f32[1,512], index: 8, kind: input, shape index: {}]
  %s9 = inlined_call_operand.hbm [shape: f32[1,512], index: 9, kind: input, shape index: {}]
  %s10 = inlined_call_operand.<no memory space> [shape: f32[1,1], index: 10, kind: input, shape index: {}]
  %s11 = inlined_call_operand.vmem [shape: f32[2,1], index: 11, kind: output, shape index: {}]
  %s12 = sld [smem:[#allocation0]]
  $region121: #{critic_forward_pallas.1} parent=0
    _
  %s14 = ssub.s32 1, %s12
  %s15 = scalar_select 0, %s14, %s12
  %v16 = vstv %s10
  %17 = vst [vmem:[#allocation7] sm:$0x1] %v16
  $region1: #{critic_forward_pallas.1} parent=0
    #allocation8 [shape = 'u8[18432]{0}', space=vmem, size = 0x4800, scoped, tag = 'input window, operand 1, single buffered']
    #allocation9 [shape = 's32[2]{0}', space=sflag, size = 0x8, scoped, tag = 'scoped memory for critic_forward_pallas.1']
    #allocation10 [shape = 'u8[512]{0}', space=vmem, size = 0x400, scoped, tag = 'input window, operand 2, single buffered']
    #allocation11 [shape = 's32[1]{0}', space=sflag, size = 0x4, scoped, tag = 'scoped memory for critic_forward_pallas.1']
    #allocation12 [shape = 'u8[73728]{0}', space=vmem, size = 0x12000, scoped, tag = 'input window, operand 3, single buffered']
    #allocation13 [shape = 'u8[512]{0}', space=vmem, size = 0x400, scoped, tag = 'input window, operand 4, single buffered']
    #allocation14 [shape = 's32[1]{0}', space=sflag, size = 0x4, scoped, tag = 'scoped memory for critic_forward_pallas.1']
    #allocation15 [shape = 'u8[147456]{0}', space=vmem, size = 0x24000, scoped, tag = 'input window, operand 5, single buffered']
    #allocation16 [shape = 'u8[512]{0}', space=vmem, size = 0x400, scoped, tag = 'input window, operand 6, single buffered']
    #allocation17 [shape = 's32[1]{0}', space=sflag, size = 0x4, scoped, tag = 'scoped memory for critic_forward_pallas.1']
    #allocation18 [shape = 'u8[2097152]{0}', space=vmem, size = 0x200000, scoped, tag = 'input window, operand 7']
    #allocation19 [shape = 'u8[2048]{0}', space=vmem, size = 0x800, scoped, tag = 'input window, operand 8, single buffered']
    #allocation20 [shape = 'u8[2048]{0}', space=vmem, size = 0x800, scoped, tag = 'input window, operand 9, single buffered']
    %18 = vsyncpa [#allocation9], 0
    %19 = vsyncpa [#allocation11], 0
    %20 = vsyncpa [#allocation14], 0
    %21 = vsyncpa [#allocation17], 0
    loop: start=0, step=1, limit=10
    $region2: #{critic_forward_pallas.1} parent=1 // loop_pre_header
      _
    $region3: #{critic_forward_pallas.1} parent=1 // loop_header
      %s23 = sphi 0, %s27
      %p24 = scmp.ge.s32.totalorder %s23, 10
      %s31 = sphi 0, %s31
      %s33 = sphi 0, %s31
      %s34 = sphi 0, %s33
      %s48 = sphi 0, %s34
      %s52 = sphi 0, %s52
      %s54 = sphi 0, %s52
      %s55 = sphi 0, %s54
      %s69 = sphi 0, %s55
      %s73 = sphi 0, %s73
      %s75 = sphi 0, %s73
      %s76 = sphi 0, %s75
      %s90 = sphi 0, %s76
      %s94 = sphi 0, %s94
      %s96 = sphi 0, %s94
      %s97 = sphi 0, %s96
      %s111 = sphi 0, %s97
      %s115 = sphi 0, %s115
      %s117 = sphi 0, %s115
      %s118 = sphi 0, %s117
      %s132 = sphi 0, %s118
      %s136 = sphi 0, %s136
      %s138 = sphi 0, %s136
      %s139 = sphi 0, %s138
      %s153 = sphi 0, %s139
      %s157 = sphi 0, %s157
      %s159 = sphi 0, %s157
      %s160 = sphi 0, %s159
      %s174 = sphi 0, %s160
      %s180 = sphi 0, %s182
      %s183 = sphi 0, %s180
      %s184 = sphi 0, %s183
      %s200 = sphi 0, %s184
      %s204 = sphi 0, %s204
      %s206 = sphi 0, %s204
      %s207 = sphi 0, %s206
      %s221 = sphi 0, %s207
      %s225 = sphi 0, %s225
      %s227 = sphi 0, %s225
      %s228 = sphi 0, %s227
      %s242 = sphi 0, %s228
      %s246 = sphi 0, %s246
      %s248 = sphi 0, %s246
      %s249 = sphi 0, %s248
      %s263 = sphi 0, %s249
      %s267 = sphi 0, %s267
      %s269 = sphi 0, %s267
      %s270 = sphi 0, %s269
      %s284 = sphi 0, %s270
    $region4: #{critic_forward_pallas.1} parent=1 // loop_header_branch
      %26 = sbr.rel (%p24) target = $region8
    $region5: #{critic_forward_pallas.1} parent=1 // loop_body
      %s28 = ssub.s32 %s23, 1
      %s29 = ssub.s32 %s23, 2
      %s30 = sadd.s32 %s23, 1
      %s32 = sadd.s32 %s31, 1
      %p35 = scmp.eq.s32.totalorder %s23, 7
      %p36 = scmp.ne.s32.totalorder %s31, %s33
      %p37 = scmp.eq.s32.totalorder %s23, 0
      %p38 = por %p36, %p37
      %p39 = scmp.ne.s32.totalorder %s31, %s33
      %p40 = scmp.eq.s32.totalorder %s28, 7
      %p41 = por %p39, %p40
      %p42 = scmp.ne.s32.totalorder %s33, %s34
      %p43 = scmp.eq.s32.totalorder %s28, 0
      %p44 = por %p42, %p43
      %p45 = scmp.ne.s32.totalorder %s33, %s34
      %p46 = scmp.eq.s32.totalorder %s29, 7
      %p47 = por %p45, %p46
      %p49 = scmp.ne.s32.totalorder %s34, %s48
      %p50 = scmp.eq.s32.totalorder %s29, 0
      %p51 = por %p49, %p50
      %s53 = sadd.s32 %s52, 1
      %p56 = scmp.eq.s32.totalorder %s23, 7
      %p57 = scmp.ne.s32.totalorder %s52, %s54
      %p58 = scmp.eq.s32.totalorder %s23, 0
      %p59 = por %p57, %p58
      %p60 = scmp.ne.s32.totalorder %s52, %s54
      %p61 = scmp.eq.s32.totalorder %s28, 7
      %p62 = por %p60, %p61
      %p63 = scmp.ne.s32.totalorder %s54, %s55
      %p64 = scmp.eq.s32.totalorder %s28, 0
      %p65 = por %p63, %p64
      %p66 = scmp.ne.s32.totalorder %s54, %s55
      %p67 = scmp.eq.s32.totalorder %s29, 7
      %p68 = por %p66, %p67
      %p70 = scmp.ne.s32.totalorder %s55, %s69
      %p71 = scmp.eq.s32.totalorder %s29, 0
      %p72 = por %p70, %p71
      %s74 = sadd.s32 %s73, 1
      %p77 = scmp.eq.s32.totalorder %s23, 7
      %p78 = scmp.ne.s32.totalorder %s73, %s75
      %p79 = scmp.eq.s32.totalorder %s23, 0
      %p80 = por %p78, %p79
      %p81 = scmp.ne.s32.totalorder %s73, %s75
      %p82 = scmp.eq.s32.totalorder %s28, 7
      %p83 = por %p81, %p82
      %p84 = scmp.ne.s32.totalorder %s75, %s76
      %p85 = scmp.eq.s32.totalorder %s28, 0
      %p86 = por %p84, %p85
      %p87 = scmp.ne.s32.totalorder %s75, %s76
      %p88 = scmp.eq.s32.totalorder %s29, 7
      %p89 = por %p87, %p88
      %p91 = scmp.ne.s32.totalorder %s76, %s90
      %p92 = scmp.eq.s32.totalorder %s29, 0
      %p93 = por %p91, %p92
      %s95 = sadd.s32 %s94, 1
      %p98 = scmp.eq.s32.totalorder %s23, 7
      %p99 = scmp.ne.s32.totalorder %s94, %s96
      %p100 = scmp.eq.s32.totalorder %s23, 0
      %p101 = por %p99, %p100
      %p102 = scmp.ne.s32.totalorder %s94, %s96
      %p103 = scmp.eq.s32.totalorder %s28, 7
      %p104 = por %p102, %p103
      %p105 = scmp.ne.s32.totalorder %s96, %s97
      %p106 = scmp.eq.s32.totalorder %s28, 0
      %p107 = por %p105, %p106
      %p108 = scmp.ne.s32.totalorder %s96, %s97
      %p109 = scmp.eq.s32.totalorder %s29, 7
      %p110 = por %p108, %p109
      %p112 = scmp.ne.s32.totalorder %s97, %s111
      %p113 = scmp.eq.s32.totalorder %s29, 0
      %p114 = por %p112, %p113
      %s116 = sadd.s32 %s115, 1
      %p119 = scmp.eq.s32.totalorder %s23, 7
      %p120 = scmp.ne.s32.totalorder %s115, %s117
      %p121 = scmp.eq.s32.totalorder %s23, 0
      %p122 = por %p120, %p121
      %p123 = scmp.ne.s32.totalorder %s115, %s117
      %p124 = scmp.eq.s32.totalorder %s28, 7
      %p125 = por %p123, %p124
      %p126 = scmp.ne.s32.totalorder %s117, %s118
      %p127 = scmp.eq.s32.totalorder %s28, 0
      %p128 = por %p126, %p127
      %p129 = scmp.ne.s32.totalorder %s117, %s118
      %p130 = scmp.eq.s32.totalorder %s29, 7
      %p131 = por %p129, %p130
      %p133 = scmp.ne.s32.totalorder %s118, %s132
      %p134 = scmp.eq.s32.totalorder %s29, 0
      %p135 = por %p133, %p134
      %s137 = sadd.s32 %s136, 1
      %p140 = scmp.eq.s32.totalorder %s23, 7
      %p141 = scmp.ne.s32.totalorder %s136, %s138
      %p142 = scmp.eq.s32.totalorder %s23, 0
      %p143 = por %p141, %p142
      %p144 = scmp.ne.s32.totalorder %s136, %s138
      %p145 = scmp.eq.s32.totalorder %s28, 7
      %p146 = por %p144, %p145
      %p147 = scmp.ne.s32.totalorder %s138, %s139
      %p148 = scmp.eq.s32.totalorder %s28, 0
      %p149 = por %p147, %p148
      %p150 = scmp.ne.s32.totalorder %s138, %s139
      %p151 = scmp.eq.s32.totalorder %s29, 7
      %p152 = por %p150, %p151
      %p154 = scmp.ne.s32.totalorder %s139, %s153
      %p155 = scmp.eq.s32.totalorder %s29, 0
      %p156 = por %p154, %p155
      %s158 = sadd.s32 %s157, 1
      %p161 = scmp.eq.s32.totalorder %s23, 7
      %p162 = scmp.ne.s32.totalorder %s157, %s159
      %p163 = scmp.eq.s32.totalorder %s23, 0
      %p164 = por %p162, %p163
      %p165 = scmp.ne.s32.totalorder %s157, %s159
      %p166 = scmp.eq.s32.totalorder %s28, 7
      %p167 = por %p165, %p166
      %p168 = scmp.ne.s32.totalorder %s159, %s160
      %p169 = scmp.eq.s32.totalorder %s28, 0
      %p170 = por %p168, %p169
      %p171 = scmp.ne.s32.totalorder %s159, %s160
      %p172 = scmp.eq.s32.totalorder %s29, 7
      %p173 = por %p171, %p172
      %p175 = scmp.ne.s32.totalorder %s160, %s174
      %p176 = scmp.eq.s32.totalorder %s29, 0
      %p177 = por %p175, %p176
      %s178 = ssub.s32 %s23, %s30
      %p179 = scmp.eq.s32.totalorder %s178, 0
      %s181 = sadd.s32 %s180, 1
      %s182 = scalar_select %p179, %s180, %s181
      %p185 = pneg %p179
      %p186 = scmp.eq.s32.totalorder %s23, 7
      %p187 = por %p185, %p186
      %p188 = scmp.ne.s32.totalorder %s180, %s183
      %p189 = scmp.eq.s32.totalorder %s23, 0
      %p190 = por %p188, %p189
      %p191 = scmp.ne.s32.totalorder %s180, %s183
      %p192 = scmp.eq.s32.totalorder %s28, 7
      %p193 = por %p191, %p192
      %p194 = scmp.ne.s32.totalorder %s183, %s184
      %p195 = scmp.eq.s32.totalorder %s28, 0
      %p196 = por %p194, %p195
      %p197 = scmp.ne.s32.totalorder %s183, %s184
      %p198 = scmp.eq.s32.totalorder %s29, 7
      %p199 = por %p197, %p198
      %p201 = scmp.ne.s32.totalorder %s184, %s200
      %p202 = scmp.eq.s32.totalorder %s29, 0
      %p203 = por %p201, %p202
      %s205 = sadd.s32 %s204, 1
      %p208 = scmp.eq.s32.totalorder %s23, 7
      %p209 = scmp.ne.s32.totalorder %s204, %s206
      %p210 = scmp.eq.s32.totalorder %s23, 0
      %p211 = por %p209, %p210
      %p212 = scmp.ne.s32.totalorder %s204, %s206
      %p213 = scmp.eq.s32.totalorder %s28, 7
      %p214 = por %p212, %p213
      %p215 = scmp.ne.s32.totalorder %s206, %s207
      %p216 = scmp.eq.s32.totalorder %s28, 0
      %p217 = por %p215, %p216
      %p218 = scmp.ne.s32.totalorder %s206, %s207
      %p219 = scmp.eq.s32.totalorder %s29, 7
      %p220 = por %p218, %p219
      %p222 = scmp.ne.s32.totalorder %s207, %s221
      %p223 = scmp.eq.s32.totalorder %s29, 0
      %p224 = por %p222, %p223
      %s226 = sadd.s32 %s225, 1
      %p229 = scmp.eq.s32.totalorder %s23, 7
      %p230 = scmp.ne.s32.totalorder %s225, %s227
      %p231 = scmp.eq.s32.totalorder %s23, 0
      %p232 = por %p230, %p231
      %p233 = scmp.ne.s32.totalorder %s225, %s227
      %p234 = scmp.eq.s32.totalorder %s28, 7
      %p235 = por %p233, %p234
      %p236 = scmp.ne.s32.totalorder %s227, %s228
      %p237 = scmp.eq.s32.totalorder %s28, 0
      %p238 = por %p236, %p237
      %p239 = scmp.ne.s32.totalorder %s227, %s228
      %p240 = scmp.eq.s32.totalorder %s29, 7
      %p241 = por %p239, %p240
      %p243 = scmp.ne.s32.totalorder %s228, %s242
      %p244 = scmp.eq.s32.totalorder %s29, 0
      %p245 = por %p243, %p244
      %s247 = sadd.s32 %s246, 1
      %p250 = scmp.eq.s32.totalorder %s23, 7
      %p251 = scmp.ne.s32.totalorder %s246, %s248
      %p252 = scmp.eq.s32.totalorder %s23, 0
      %p253 = por %p251, %p252
      %p254 = scmp.ne.s32.totalorder %s246, %s248
      %p255 = scmp.eq.s32.totalorder %s28, 7
      %p256 = por %p254, %p255
      %p257 = scmp.ne.s32.totalorder %s248, %s249
      %p258 = scmp.eq.s32.totalorder %s28, 0
      %p259 = por %p257, %p258
      %p260 = scmp.ne.s32.totalorder %s248, %s249
      %p261 = scmp.eq.s32.totalorder %s29, 7
      %p262 = por %p260, %p261
      %p264 = scmp.ne.s32.totalorder %s249, %s263
      %p265 = scmp.eq.s32.totalorder %s29, 0
      %p266 = por %p264, %p265
      %s268 = sadd.s32 %s267, 1
      %p271 = scmp.eq.s32.totalorder %s23, 7
      %p272 = scmp.ne.s32.totalorder %s267, %s269
      %p273 = scmp.eq.s32.totalorder %s23, 0
      %p274 = por %p272, %p273
      %p275 = scmp.ne.s32.totalorder %s267, %s269
      %p276 = scmp.eq.s32.totalorder %s28, 7
      %p277 = por %p275, %p276
      %p278 = scmp.ne.s32.totalorder %s269, %s270
      %p279 = scmp.eq.s32.totalorder %s28, 0
      %p280 = por %p278, %p279
      %p281 = scmp.ne.s32.totalorder %s269, %s270
      %p282 = scmp.eq.s32.totalorder %s29, 7
      %p283 = por %p281, %p282
      %p285 = scmp.ne.s32.totalorder %s270, %s284
      %p286 = scmp.eq.s32.totalorder %s29, 0
      %p287 = por %p285, %p286
      %p288 = scmp.le.s32.totalorder 1, %s23
      %p289 = scmp.lt.s32.totalorder %s23, 9
      %p290 = pnand %p288, %p289
      %p291 = pneg %p290
      // Predicated region
      $region9: #{critic_forward_pallas.1} parent=5 // pred_check
        _
      $region10: #{critic_forward_pallas.1} parent=5 // pred_check_branch
        %293 = sbr.rel (%p290) target = $region12
      $region11: #{critic_forward_pallas.1} parent=5 // pred_region
        %s294 = ssub.s32 %s23, 1
        // Predicated region
        $region13: #{critic_forward_pallas.1} parent=11 // pred_check
          %p295 = pneg %p44
        $region14: #{critic_forward_pallas.1} parent=11 // pred_check_branch
          %297 = sbr.rel (%p295) target = $region16
        $region15: #{critic_forward_pallas.1} parent=11 // pred_region
          _
        $region16: #{critic_forward_pallas.1} parent=11 // pred_fallthru
          _
        // Predicated region
        $region17: #{critic_forward_pallas.1} parent=11 // pred_check
          %p298 = pneg %p65
        $region18: #{critic_forward_pallas.1} parent=11 // pred_check_branch
          %300 = sbr.rel (%p298) target = $region20
        $region19: #{critic_forward_pallas.1} parent=11 // pred_region
          %302 = vsyncadd [#allocation9], 0
          %s303 = sshll.u32 %s1, 4
          %s304 = int_to_ptr.hbm [resolvable:$true] %s303
          %s305 = sshll.u32 [#allocation8], 4
          %s306 = int_to_ptr.vmem [resolvable:$true] %s305
          %311 = dma.hbm_to_vmem [thread:$0]  %s304, 576, %s306, [#allocation9], 64, 64, 4
        $region20: #{critic_forward_pallas.1} parent=11 // pred_fallthru
          _
        // Predicated region
        $region21: #{critic_forward_pallas.1} parent=11 // pred_check
          %p312 = pneg %p86
        $region22: #{critic_forward_pallas.1} parent=11 // pred_check_branch
          %314 = sbr.rel (%p312) target = $region24
        $region23: #{critic_forward_pallas.1} parent=11 // pred_region
          %316 = vsyncadd [#allocation11], 0
          %s318 = sshll.u32 %s2, 4
          %s319 = int_to_ptr.hbm [resolvable:$true] %s318
          %s320 = sshll.u32 [#allocation10], 4
          %s321 = int_to_ptr.vmem [resolvable:$true] %s320
          %323 = dma.hbm_to_vmem [thread:$0]  %s319, 16, %s321, [#allocation11]
        $region24: #{critic_forward_pallas.1} parent=11 // pred_fallthru
          _
        // Predicated region
        $region25: #{critic_forward_pallas.1} parent=11 // pred_check
          %p324 = pneg %p107
        $region26: #{critic_forward_pallas.1} parent=11 // pred_check_branch
          %326 = sbr.rel (%p324) target = $region28
        $region27: #{critic_forward_pallas.1} parent=11 // pred_region
          %328 = vsyncadd [#allocation11], 0
          %s329 = sshll.u32 %s3, 4
          %s330 = int_to_ptr.hbm [resolvable:$true] %s329
          %s331 = sshll.u32 [#allocation12], 4
          %s332 = int_to_ptr.vmem [resolvable:$true] %s331
          %337 = dma.hbm_to_vmem [thread:$0]  %s330, 2304, %s332, [#allocation11], 128, 128, 8
        $region28: #{critic_forward_pallas.1} parent=11 // pred_fallthru
          _
        // Predicated region
        $region29: #{critic_forward_pallas.1} parent=11 // pred_check
          %p338 = pneg %p128
        $region30: #{critic_forward_pallas.1} parent=11 // pred_check_branch
          %340 = sbr.rel (%p338) target = $region32
        $region31: #{critic_forward_pallas.1} parent=11 // pred_region
          %342 = vsyncadd [#allocation14], 0
          %s344 = sshll.u32 %s4, 4
          %s345 = int_to_ptr.hbm [resolvable:$true] %s344
          %s346 = sshll.u32 [#allocation13], 4
          %s347 = int_to_ptr.vmem [resolvable:$true] %s346
          %349 = dma.hbm_to_vmem [thread:$0]  %s345, 16, %s347, [#allocation14]
        $region32: #{critic_forward_pallas.1} parent=11 // pred_fallthru
          _
        // Predicated region
        $region33: #{critic_forward_pallas.1} parent=11 // pred_check
          %p350 = pneg %p149
        $region34: #{critic_forward_pallas.1} parent=11 // pred_check_branch
          %352 = sbr.rel (%p350) target = $region36
        $region35: #{critic_forward_pallas.1} parent=11 // pred_region
          %354 = vsyncadd [#allocation14], 0
          %s355 = sshll.u32 %s5, 4
          %s356 = int_to_ptr.hbm [resolvable:$true] %s355
          %s357 = sshll.u32 [#allocation15], 4
          %s358 = int_to_ptr.vmem [resolvable:$true] %s357
          %363 = dma.hbm_to_vmem [thread:$0]  %s356, 4608, %s358, [#allocation14], 128, 128, 8
        $region36: #{critic_forward_pallas.1} parent=11 // pred_fallthru
          _
        // Predicated region
        $region37: #{critic_forward_pallas.1} parent=11 // pred_check
          %p364 = pneg %p170
        $region38: #{critic_forward_pallas.1} parent=11 // pred_check_branch
          %366 = sbr.rel (%p364) target = $region40
        $region39: #{critic_forward_pallas.1} parent=11 // pred_region
          %368 = vsyncadd [#allocation17], 0
          %s370 = sshll.u32 %s6, 4
          %s371 = int_to_ptr.hbm [resolvable:$true] %s370
          %s372 = sshll.u32 [#allocation16], 4
          %s373 = int_to_ptr.vmem [resolvable:$true] %s372
          %375 = dma.hbm_to_vmem [thread:$0]  %s371, 16, %s373, [#allocation17]
        $region40: #{critic_forward_pallas.1} parent=11 // pred_fallthru
          _
        // Predicated region
        $region41: #{critic_forward_pallas.1} parent=11 // pred_check
          %p376 = pneg %p217
        $region42: #{critic_forward_pallas.1} parent=11 // pred_check_branch
          %378 = sbr.rel (%p376) target = $region44
        $region43: #{critic_forward_pallas.1} parent=11 // pred_region
          %380 = vsyncadd [#allocation11], 0
          %s382 = sshll.u32 %s8, 4
          %s383 = int_to_ptr.hbm [resolvable:$true] %s382
          %s384 = sshll.u32 [#allocation19], 4
          %s385 = int_to_ptr.vmem [resolvable:$true] %s384
          %387 = dma.hbm_to_vmem [thread:$0]  %s383, 64, %s385, [#allocation11]
        $region44: #{critic_forward_pallas.1} parent=11 // pred_fallthru
          _
        // Predicated region
        $region45: #{critic_forward_pallas.1} parent=11 // pred_check
          %p388 = pneg %p238
        $region46: #{critic_forward_pallas.1} parent=11 // pred_check_branch
          %390 = sbr.rel (%p388) target = $region48
        $region47: #{critic_forward_pallas.1} parent=11 // pred_region
          %392 = vsyncadd [#allocation14], 0
          %s394 = sshll.u32 %s9, 4
          %s395 = int_to_ptr.hbm [resolvable:$true] %s394
          %s396 = sshll.u32 [#allocation20], 4
          %s397 = int_to_ptr.vmem [resolvable:$true] %s396
          %399 = dma.hbm_to_vmem [thread:$0]  %s395, 64, %s397, [#allocation14]
        $region48: #{critic_forward_pallas.1} parent=11 // pred_fallthru
          _
        // Predicated region
        $region49: #{critic_forward_pallas.1} parent=11 // pred_check
          %p400 = pneg %p259
        $region50: #{critic_forward_pallas.1} parent=11 // pred_check_branch
          %402 = sbr.rel (%p400) target = $region52
        $region51: #{critic_forward_pallas.1} parent=11 // pred_region
          _
        $region52: #{critic_forward_pallas.1} parent=11 // pred_fallthru
          _
      $region12: #{critic_forward_pallas.1} parent=5 // pred_fallthru
        _
      %p403 = scmp.lt.s32.totalorder %s23, 8
      // Predicated region
      $region53: #{critic_forward_pallas.1} parent=5 // pred_check
        %p404 = pneg %p403
      $region54: #{critic_forward_pallas.1} parent=5 // pred_check_branch
        %406 = sbr.rel (%p404) target = $region56
      $region55: #{critic_forward_pallas.1} parent=5 // pred_region
        // Predicated region
        $region57: #{critic_forward_pallas.1} parent=55 // pred_check
          %p407 = pneg %p190
        $region58: #{critic_forward_pallas.1} parent=55 // pred_check_branch
          %409 = sbr.rel (%p407) target = $region60
        $region59: #{critic_forward_pallas.1} parent=55 // pred_region
          %s410 = sand.u32 %s23, 1
          %s411 = scalar_lea.sflag [#allocation9], %s410
          %s412 = sand.u32 %s180, 1
          %s413 = smul.addr %s412, 2048
          %s414 = scalar_lea.vmem [#allocation18], %s413
          %s415 = smul.u32 64, %s23
          %417 = vsyncadd %s411, 0
          %s418 = smul.addr %s415, 4
          %s419 = smul.addr %s418, 8
          %s420 = scalar_lea.hbm %s7, %s419
          %s421 = sshll.u32 %s420, 4
          %s422 = int_to_ptr.hbm [resolvable:$true] %s421
          %s423 = sshll.u32 %s414, 4
          %s424 = int_to_ptr.vmem [resolvable:$true] %s423
          %429 = dma.hbm_to_vmem [thread:$0]  %s422, 32768, %s424, %s411, 512, 512, 32
        $region60: #{critic_forward_pallas.1} parent=55 // pred_fallthru
          _
      $region56: #{critic_forward_pallas.1} parent=5 // pred_fallthru
        _
      %p430 = scmp.le.s32.totalorder 1, %s23
      %p431 = scmp.lt.s32.totalorder %s23, 9
      %p432 = pnand %p430, %p431
      %p433 = pneg %p432
      // Predicated region
      $region61: #{critic_forward_pallas.1} parent=5 // pred_check
        _
      $region62: #{critic_forward_pallas.1} parent=5 // pred_check_branch
        %435 = sbr.rel (%p432) target = $region64
      $region63: #{critic_forward_pallas.1} parent=5 // pred_region
        %s436 = ssub.s32 %s23, 1
        // Predicated region
        $region65: #{critic_forward_pallas.1} parent=63 // pred_check
          %p437 = pneg %p65
        $region66: #{critic_forward_pallas.1} parent=63 // pred_check_branch
          %439 = sbr.rel (%p437) target = $region68
        $region67: #{critic_forward_pallas.1} parent=63 // pred_region
          %441 = dma.done [#allocation9], 576
        $region68: #{critic_forward_pallas.1} parent=63 // pred_fallthru
          _
        // Predicated region
        $region69: #{critic_forward_pallas.1} parent=63 // pred_check
          %p442 = pneg %p86
        $region70: #{critic_forward_pallas.1} parent=63 // pred_check_branch
          %444 = sbr.rel (%p442) target = $region72
        $region71: #{critic_forward_pallas.1} parent=63 // pred_region
          %446 = dma.done [#allocation11], 16
        $region72: #{critic_forward_pallas.1} parent=63 // pred_fallthru
          _
        // Predicated region
        $region73: #{critic_forward_pallas.1} parent=63 // pred_check
          %p447 = pneg %p107
        $region74: #{critic_forward_pallas.1} parent=63 // pred_check_branch
          %449 = sbr.rel (%p447) target = $region76
        $region75: #{critic_forward_pallas.1} parent=63 // pred_region
          %451 = dma.done [#allocation11], 2304
        $region76: #{critic_forward_pallas.1} parent=63 // pred_fallthru
          _
        // Predicated region
        $region77: #{critic_forward_pallas.1} parent=63 // pred_check
          %p452 = pneg %p128
        $region78: #{critic_forward_pallas.1} parent=63 // pred_check_branch
          %454 = sbr.rel (%p452) target = $region80
        $region79: #{critic_forward_pallas.1} parent=63 // pred_region
          %456 = dma.done [#allocation14], 16
        $region80: #{critic_forward_pallas.1} parent=63 // pred_fallthru
          _
        // Predicated region
        $region81: #{critic_forward_pallas.1} parent=63 // pred_check
          %p457 = pneg %p149
        $region82: #{critic_forward_pallas.1} parent=63 // pred_check_branch
          %459 = sbr.rel (%p457) target = $region84
        $region83: #{critic_forward_pallas.1} parent=63 // pred_region
          %461 = dma.done [#allocation14], 4608
        $region84: #{critic_forward_pallas.1} parent=63 // pred_fallthru
          _
        // Predicated region
        $region85: #{critic_forward_pallas.1} parent=63 // pred_check
          %p462 = pneg %p170
        $region86: #{critic_forward_pallas.1} parent=63 // pred_check_branch
          %464 = sbr.rel (%p462) target = $region88
        $region87: #{critic_forward_pallas.1} parent=63 // pred_region
          %466 = dma.done [#allocation17], 16
        $region88: #{critic_forward_pallas.1} parent=63 // pred_fallthru
          _
        %s467 = sand.u32 %s28, 1
        %s468 = scalar_lea.sflag [#allocation9], %s467
        %s469 = sand.u32 %s183, 1
        %s470 = smul.addr %s469, 2048
        %s471 = scalar_lea.vmem [#allocation18], %s470
        // Predicated region
        $region89: #{critic_forward_pallas.1} parent=63 // pred_check
          %p472 = pneg %p196
        $region90: #{critic_forward_pallas.1} parent=63 // pred_check_branch
          %474 = sbr.rel (%p472) target = $region92
        $region91: #{critic_forward_pallas.1} parent=63 // pred_region
          %476 = dma.done %s468, 32768
        $region92: #{critic_forward_pallas.1} parent=63 // pred_fallthru
          _
        // Predicated region
        $region93: #{critic_forward_pallas.1} parent=63 // pred_check
          %p477 = pneg %p217
        $region94: #{critic_forward_pallas.1} parent=63 // pred_check_branch
          %479 = sbr.rel (%p477) target = $region96
        $region95: #{critic_forward_pallas.1} parent=63 // pred_region
          %481 = dma.done [#allocation11], 64
        $region96: #{critic_forward_pallas.1} parent=63 // pred_fallthru
          _
        // Predicated region
        $region97: #{critic_forward_pallas.1} parent=63 // pred_check
          %p482 = pneg %p238
        $region98: #{critic_forward_pallas.1} parent=63 // pred_check_branch
          %484 = sbr.rel (%p482) target = $region100
        $region99: #{critic_forward_pallas.1} parent=63 // pred_region
          %486 = dma.done [#allocation14], 64
        $region100: #{critic_forward_pallas.1} parent=63 // pred_fallthru
          _
        %p487 = pneg %p44
        %p488 = pneg %p41
        %p489 = pneg %p65
        %p490 = pneg %p62
        %p491 = pneg %p86
        %p492 = pneg %p83
        %p493 = pneg %p107
        %p494 = pneg %p104
        %p495 = pneg %p128
        %p496 = pneg %p125
        %p497 = pneg %p149
        %p498 = pneg %p146
        %p499 = pneg %p170
        %p500 = pneg %p167
        %s501 = sand.u32 %s28, 1
        %s502 = scalar_lea.sflag [#allocation9], %s501
        %s503 = sand.u32 %s183, 1
        %s504 = smul.addr %s503, 2048
        %s505 = scalar_lea.vmem [#allocation18], %s504
        %p506 = pneg %p196
        %p507 = pneg %p193
        %p508 = pneg %p217
        %p509 = pneg %p214
        %p510 = pneg %p238
        %p511 = pneg %p235
        %p512 = pneg %p259
        %p513 = pneg %p256
        %p514 = pneg %p280
        %p515 = pneg %p277
        %s516 = smul.u32 64, %s28
        %p517 = scmp.eq.s32.totalorder %s28, 0
        // Predicated region
        $region101: #{critic_forward_pallas.1} parent=63 // pred_check
          %p518 = pneg %p517
        $region102: #{critic_forward_pallas.1} parent=63 // pred_check_branch
          %520 = sbr.rel (%p518) target = $region104
        $region103: #{critic_forward_pallas.1} parent=63 // pred_region
          %vm521 = vcmask 23552
          %522 = vst.msk [vmem:[#allocation2] sm:$0xff] %vm521, 0.0
          %vm523 = vcmask 17408
          %524 = vst.msk [vmem:[#allocation2 + $0x8] sm:$0x3] %vm523, 0.0
          %525 = vst.msk [vmem:[#allocation2 + $0x10] sm:$0xff] %vm521, 0.0
          %526 = vst.msk [vmem:[#allocation2 + $0x18] sm:$0x3] %vm523, 0.0
          %527 = vst.msk [vmem:[#allocation2 + $0x20] sm:$0xff] %vm521, 0.0
          %528 = vst.msk [vmem:[#allocation2 + $0x28] sm:$0x3] %vm523, 0.0
          %529 = vst.msk [vmem:[#allocation2 + $0x30] sm:$0xff] %vm521, 0.0
          %530 = vst.msk [vmem:[#allocation2 + $0x38] sm:$0x3] %vm523, 0.0
          %531 = vst.msk [vmem:[#allocation2 + $0x40] sm:$0xff] %vm521, 0.0
          %532 = vst.msk [vmem:[#allocation2 + $0x48] sm:$0x3] %vm523, 0.0
          %533 = vst.msk [vmem:[#allocation2 + $0x50] sm:$0xff] %vm521, 0.0
          %534 = vst.msk [vmem:[#allocation2 + $0x58] sm:$0x3] %vm523, 0.0
          %535 = vst.msk [vmem:[#allocation2 + $0x60] sm:$0xff] %vm521, 0.0
          %536 = vst.msk [vmem:[#allocation2 + $0x68] sm:$0x3] %vm523, 0.0
          %537 = vst.msk [vmem:[#allocation2 + $0x70] sm:$0xff] %vm521, 0.0
          %538 = vst.msk [vmem:[#allocation2 + $0x78] sm:$0x3] %vm523, 0.0
          %539 = vst.msk [vmem:[#allocation2 + $0x80] sm:$0xff] %vm521, 0.0
          %540 = vst.msk [vmem:[#allocation2 + $0x88] sm:$0x3] %vm523, 0.0
          %541 = vst.msk [vmem:[#allocation2 + $0x90] sm:$0xff] %vm521, 0.0
          %542 = vst.msk [vmem:[#allocation2 + $0x98] sm:$0x3] %vm523, 0.0
          %543 = vst.msk [vmem:[#allocation2 + $0xa0] sm:$0xff] %vm521, 0.0
          %544 = vst.msk [vmem:[#allocation2 + $0xa8] sm:$0x3] %vm523, 0.0
          %545 = vst.msk [vmem:[#allocation2 + $0xb0] sm:$0xff] %vm521, 0.0
          %546 = vst.msk [vmem:[#allocation2 + $0xb8] sm:$0x3] %vm523, 0.0
          %547 = vst.msk [vmem:[#allocation2 + $0xc0] sm:$0xff] %vm521, 0.0
          %548 = vst.msk [vmem:[#allocation2 + $0xc8] sm:$0x3] %vm523, 0.0
          %549 = vst.msk [vmem:[#allocation2 + $0xd0] sm:$0xff] %vm521, 0.0
          %550 = vst.msk [vmem:[#allocation2 + $0xd8] sm:$0x3] %vm523, 0.0
          %551 = vst.msk [vmem:[#allocation2 + $0xe0] sm:$0xff] %vm521, 0.0
          %552 = vst.msk [vmem:[#allocation2 + $0xe8] sm:$0x3] %vm523, 0.0
          %553 = vst.msk [vmem:[#allocation2 + $0xf0] sm:$0xff] %vm521, 0.0
          %554 = vst.msk [vmem:[#allocation2 + $0xf8] sm:$0x3] %vm523, 0.0
          %555 = vst.msk [vmem:[#allocation2 + $0x100] sm:$0xff] %vm521, 0.0
          %556 = vst.msk [vmem:[#allocation2 + $0x108] sm:$0x3] %vm523, 0.0
          %557 = vst.msk [vmem:[#allocation2 + $0x110] sm:$0xff] %vm521, 0.0
          %558 = vst.msk [vmem:[#allocation2 + $0x118] sm:$0x3] %vm523, 0.0
          %559 = vst.msk [vmem:[#allocation2 + $0x120] sm:$0xff] %vm521, 0.0
          %560 = vst.msk [vmem:[#allocation2 + $0x128] sm:$0x3] %vm523, 0.0
          %561 = vst.msk [vmem:[#allocation2 + $0x130] sm:$0xff] %vm521, 0.0
          %562 = vst.msk [vmem:[#allocation2 + $0x138] sm:$0x3] %vm523, 0.0
          %v563 = vld [vmem:[%s0] sm:$0xff]
          %v564 = vld [vmem:[%s0 + $0x8] sm:$0xff]
          %v565 = vld [vmem:[%s0 + $0x10] sm:$0xff]
          %v566 = vld [vmem:[%s0 + $0x18] sm:$0xff]
          %v567 = vld [vmem:[%s0 + $0x20] sm:$0xff]
          %v568 = vld [vmem:[%s0 + $0x28] sm:$0xff]
          %v569 = vld [vmem:[%s0 + $0x30] sm:$0xff]
          %v570 = vld [vmem:[%s0 + $0x38] sm:$0xff]
          %v571 = vld [vmem:[%s0 + $0x40] sm:$0xff]
          %v572 = vld [vmem:[%s0 + $0x48] sm:$0xff]
          %v573 = vld [vmem:[%s0 + $0x50] sm:$0xff]
          %v574 = vld [vmem:[%s0 + $0x58] sm:$0xff]
          %v575 = vld [vmem:[%s0 + $0x60] sm:$0xff]
          %v576 = vld [vmem:[%s0 + $0x68] sm:$0xff]
          %v577 = vld [vmem:[%s0 + $0x70] sm:$0xff]
          %v578 = vld [vmem:[%s0 + $0x78] sm:$0xff]
          %s579 = scalar_lea.vmem [#allocation2], 16
          %580 = vst.msk [vmem:[%s579 + $0x1] sm:$0xff] %vm521, %v563
          %581 = vst.msk [vmem:[%s579 + $0x11] sm:$0xff] %vm521, %v564
          %582 = vst.msk [vmem:[%s579 + $0x21] sm:$0xff] %vm521, %v565
          %583 = vst.msk [vmem:[%s579 + $0x31] sm:$0xff] %vm521, %v566
          %584 = vst.msk [vmem:[%s579 + $0x41] sm:$0xff] %vm521, %v567
          %585 = vst.msk [vmem:[%s579 + $0x51] sm:$0xff] %vm521, %v568
          %586 = vst.msk [vmem:[%s579 + $0x61] sm:$0xff] %vm521, %v569
          %587 = vst.msk [vmem:[%s579 + $0x71] sm:$0xff] %vm521, %v570
          %588 = vst.msk [vmem:[%s579 + $0xa1] sm:$0xff] %vm521, %v571
          %589 = vst.msk [vmem:[%s579 + $0xb1] sm:$0xff] %vm521, %v572
          %590 = vst.msk [vmem:[%s579 + $0xc1] sm:$0xff] %vm521, %v573
          %591 = vst.msk [vmem:[%s579 + $0xd1] sm:$0xff] %vm521, %v574
          %592 = vst.msk [vmem:[%s579 + $0xe1] sm:$0xff] %vm521, %v575
          %593 = vst.msk [vmem:[%s579 + $0xf1] sm:$0xff] %vm521, %v576
          %594 = vst.msk [vmem:[%s579 + $0x101] sm:$0xff] %vm521, %v577
          %595 = vst.msk [vmem:[%s579 + $0x111] sm:$0xff] %vm521, %v578
          %v596 = vld [vmem:[#allocation2] sm:$0xff]
          %v597 = vld [vmem:[#allocation2 + $0x10] sm:$0xff]
          %v598 = vld [vmem:[#allocation2 + $0x20] sm:$0xff]
          %v599 = vld [vmem:[#allocation2 + $0x30] sm:$0xff]
          %v600 = vld [vmem:[#allocation2 + $0x40] sm:$0xff]
          %v601 = vld [vmem:[#allocation2 + $0x50] sm:$0xff]
          %v602 = vld [vmem:[#allocation2 + $0x60] sm:$0xff]
          %v603 = vld [vmem:[#allocation2 + $0x70] sm:$0xff]
          %v604 = vld [vmem:[#allocation2 + $0xa0] sm:$0xff]
          %v605 = vld [vmem:[#allocation2 + $0xb0] sm:$0xff]
          %v606 = vld [vmem:[#allocation2 + $0xc0] sm:$0xff]
          %v607 = vld [vmem:[#allocation2 + $0xd0] sm:$0xff]
          %v608 = vld [vmem:[#allocation2 + $0xe0] sm:$0xff]
          %v609 = vld [vmem:[#allocation2 + $0xf0] sm:$0xff]
          %v610 = vld [vmem:[#allocation2 + $0x100] sm:$0xff]
          %v611 = vld [vmem:[#allocation2 + $0x110] sm:$0xff]
          %v612 = vld [vmem:[#allocation8] sm:$0x7]
          %v613 = vld [vmem:[#allocation2 + $0x1] sm:$0xff]
          %v614 = vld [vmem:[#allocation2 + $0x11] sm:$0xff]
          %v615 = vld [vmem:[#allocation2 + $0x21] sm:$0xff]
          %v616 = vld [vmem:[#allocation2 + $0x31] sm:$0xff]
          %v617 = vld [vmem:[#allocation2 + $0x41] sm:$0xff]
          %v618 = vld [vmem:[#allocation2 + $0x51] sm:$0xff]
          %v619 = vld [vmem:[#allocation2 + $0x61] sm:$0xff]
          %v620 = vld [vmem:[#allocation2 + $0x71] sm:$0xff]
          %v621 = vld [vmem:[#allocation2 + $0xa1] sm:$0xff]
          %v622 = vld [vmem:[#allocation2 + $0xb1] sm:$0xff]
          %v623 = vld [vmem:[#allocation2 + $0xc1] sm:$0xff]
          %v624 = vld [vmem:[#allocation2 + $0xd1] sm:$0xff]
          %v625 = vld [vmem:[#allocation2 + $0xe1] sm:$0xff]
          %v626 = vld [vmem:[#allocation2 + $0xf1] sm:$0xff]
          %v627 = vld [vmem:[#allocation2 + $0x101] sm:$0xff]
          %v628 = vld [vmem:[#allocation2 + $0x111] sm:$0xff]
          %s629 = scalar_lea.vmem [#allocation8], 4
          %v630 = vld [vmem:[%s629] sm:$0x7]
          %v632 = vsel %vm521, %v613, 0
          %v635 = vsel %vm521, %v614, 0
          %v638 = vsel %vm521, %v615, 0
          %v641 = vsel %vm521, %v616, 0
          %v644 = vsel %vm521, %v617, 0
          %v647 = vsel %vm521, %v618, 0
          %v650 = vsel %vm521, %v619, 0
          %v653 = vsel %vm521, %v620, 0
          %v656 = vsel %vm521, %v621, 0
          %v659 = vsel %vm521, %v622, 0
          %v662 = vsel %vm521, %v623, 0
          %v665 = vsel %vm521, %v624, 0
          %v668 = vsel %vm521, %v625, 0
          %v671 = vsel %vm521, %v626, 0
          %v674 = vsel %vm521, %v627, 0
          %v677 = vsel %vm521, %v628, 0
          %vm679 = vcmask 1042432
          %v681 = vsel %vm679, %v630, 0
          %683 = vmatpush.msra.mxu0 0.0
          %684 = vmatpush.msra.mxu0 0.0
          %685 = vmatpush.msra.mxu0 0.0
          %686 = vmatpush.msra.mxu0 0.0
          %687 = vmatpush.msra.mxu0 0.0
          %688 = vmatpush.msra.mxu0 0.0
          %689 = vmatpush.msra.mxu0 0.0
          %690 = vmatpush.msra.mxu0 0.0
          %691 = vmatpush.msra.mxu0 0.0
          %692 = vmatpush.msra.mxu0 0.0
          %693 = vmatpush.msra.mxu0 0.0
          %694 = vmatpush.msra.mxu0 0.0
          %695 = vmatpush.msra.mxu0 0.0
          %696 = vmatpush.msra.mxu0 0.0
          %697 = vmatpush.msra.mxu0 0.0
          %698 = vmatpush.msra.mxu0 %v681
          %699 = vmatmul.f32.gmra.mxu0 %v632
          %v700 = vpop.f32.mrf.mxu0
          %v701 = vadd.f32 0.0, %v700
          %702 = vmatmul.f32.gmra.mxu0 %v635
          %v703 = vpop.f32.mrf.mxu0
          %v704 = vadd.f32 0.0, %v703
          %705 = vmatmul.f32.gmra.mxu0 %v638
          %v706 = vpop.f32.mrf.mxu0
          %v707 = vadd.f32 0.0, %v706
          %708 = vmatmul.f32.gmra.mxu0 %v641
          %v709 = vpop.f32.mrf.mxu0
          %v710 = vadd.f32 0.0, %v709
          %711 = vmatmul.f32.gmra.mxu0 %v644
          %v712 = vpop.f32.mrf.mxu0
          %v713 = vadd.f32 0.0, %v712
          %714 = vmatmul.f32.gmra.mxu0 %v647
          %v715 = vpop.f32.mrf.mxu0
          %v716 = vadd.f32 0.0, %v715
          %717 = vmatmul.f32.gmra.mxu0 %v650
          %v718 = vpop.f32.mrf.mxu0
          %v719 = vadd.f32 0.0, %v718
          %720 = vmatmul.f32.gmra.mxu0 %v653
          %v721 = vpop.f32.mrf.mxu0
          %v722 = vadd.f32 0.0, %v721
          %723 = vmatmul.f32.gmra.mxu0 %v656
          %v724 = vpop.f32.mrf.mxu0
          %v725 = vadd.f32 0.0, %v724
          %726 = vmatmul.f32.gmra.mxu0 %v659
          %v727 = vpop.f32.mrf.mxu0
          %v728 = vadd.f32 0.0, %v727
          %729 = vmatmul.f32.gmra.mxu0 %v662
          %v730 = vpop.f32.mrf.mxu0
          %v731 = vadd.f32 0.0, %v730
          %732 = vmatmul.f32.gmra.mxu0 %v665
          %v733 = vpop.f32.mrf.mxu0
          %v734 = vadd.f32 0.0, %v733
          %735 = vmatmul.f32.gmra.mxu0 %v668
          %v736 = vpop.f32.mrf.mxu0
          %v737 = vadd.f32 0.0, %v736
          %738 = vmatmul.f32.gmra.mxu0 %v671
          %v739 = vpop.f32.mrf.mxu0
          %v740 = vadd.f32 0.0, %v739
          %741 = vmatmul.f32.gmra.mxu0 %v674
          %v742 = vpop.f32.mrf.mxu0
          %v743 = vadd.f32 0.0, %v742
          %744 = vmatmul.f32.gmra.mxu0 %v677
          %v745 = vpop.f32.mrf.mxu0
          %v746 = vadd.f32 0.0, %v745
          %747 = vdwg.mxu0
          %v749 = vsel %vm521, %v596, 0
          %v752 = vsel %vm521, %v597, 0
          %v755 = vsel %vm521, %v598, 0
          %v758 = vsel %vm521, %v599, 0
          %v761 = vsel %vm521, %v600, 0
          %v764 = vsel %vm521, %v601, 0
          %v767 = vsel %vm521, %v602, 0
          %v770 = vsel %vm521, %v603, 0
          %v773 = vsel %vm521, %v604, 0
          %v776 = vsel %vm521, %v605, 0
          %v779 = vsel %vm521, %v606, 0
          %v782 = vsel %vm521, %v607, 0
          %v785 = vsel %vm521, %v608, 0
          %v788 = vsel %vm521, %v609, 0
          %v791 = vsel %vm521, %v610, 0
          %v794 = vsel %vm521, %v611, 0
          %v797 = vsel %vm679, %v612, 0
          %799 = vmatpush.msra.mxu0 0.0
          %800 = vmatpush.msra.mxu0 0.0
          %801 = vmatpush.msra.mxu0 0.0
          %802 = vmatpush.msra.mxu0 0.0
          %803 = vmatpush.msra.mxu0 0.0
          %804 = vmatpush.msra.mxu0 0.0
          %805 = vmatpush.msra.mxu0 0.0
          %806 = vmatpush.msra.mxu0 0.0
          %807 = vmatpush.msra.mxu0 0.0
          %808 = vmatpush.msra.mxu0 0.0
          %809 = vmatpush.msra.mxu0 0.0
          %810 = vmatpush.msra.mxu0 0.0
          %811 = vmatpush.msra.mxu0 0.0
          %812 = vmatpush.msra.mxu0 0.0
          %813 = vmatpush.msra.mxu0 0.0
          %814 = vmatpush.msra.mxu0 %v797
          %815 = vmatmul.f32.gmra.mxu0 %v749
          %v816 = vpop.f32.mrf.mxu0
          %v817 = vadd.f32 %v701, %v816
          %818 = vmatmul.f32.gmra.mxu0 %v752
          %v819 = vpop.f32.mrf.mxu0
          %v820 = vadd.f32 %v704, %v819
          %821 = vmatmul.f32.gmra.mxu0 %v755
          %v822 = vpop.f32.mrf.mxu0
          %v823 = vadd.f32 %v707, %v822
          %824 = vmatmul.f32.gmra.mxu0 %v758
          %v825 = vpop.f32.mrf.mxu0
          %v826 = vadd.f32 %v710, %v825
          %827 = vmatmul.f32.gmra.mxu0 %v761
          %v828 = vpop.f32.mrf.mxu0
          %v829 = vadd.f32 %v713, %v828
          %830 = vmatmul.f32.gmra.mxu0 %v764
          %v831 = vpop.f32.mrf.mxu0
          %v832 = vadd.f32 %v716, %v831
          %833 = vmatmul.f32.gmra.mxu0 %v767
          %v834 = vpop.f32.mrf.mxu0
          %v835 = vadd.f32 %v719, %v834
          %836 = vmatmul.f32.gmra.mxu0 %v770
          %v837 = vpop.f32.mrf.mxu0
          %v838 = vadd.f32 %v722, %v837
          %839 = vmatmul.f32.gmra.mxu0 %v773
          %v840 = vpop.f32.mrf.mxu0
          %v841 = vadd.f32 %v725, %v840
          %842 = vmatmul.f32.gmra.mxu0 %v776
          %v843 = vpop.f32.mrf.mxu0
          %v844 = vadd.f32 %v728, %v843
          %845 = vmatmul.f32.gmra.mxu0 %v779
          %v846 = vpop.f32.mrf.mxu0
          %v847 = vadd.f32 %v731, %v846
          %848 = vmatmul.f32.gmra.mxu0 %v782
          %v849 = vpop.f32.mrf.mxu0
          %v850 = vadd.f32 %v734, %v849
          %851 = vmatmul.f32.gmra.mxu0 %v785
          %v852 = vpop.f32.mrf.mxu0
          %v853 = vadd.f32 %v737, %v852
          %854 = vmatmul.f32.gmra.mxu0 %v788
          %v855 = vpop.f32.mrf.mxu0
          %v856 = vadd.f32 %v740, %v855
          %857 = vmatmul.f32.gmra.mxu0 %v791
          %v858 = vpop.f32.mrf.mxu0
          %v859 = vadd.f32 %v743, %v858
          %860 = vmatmul.f32.gmra.mxu0 %v794
          %v861 = vpop.f32.mrf.mxu0
          %v862 = vadd.f32 %v746, %v861
          %863 = vdwg.mxu0
          %v864 = vld [vmem:[#allocation2 + $0x2] sm:$0xff]
          %v865 = vld [vmem:[#allocation2 + $0x12] sm:$0xff]
          %v866 = vld [vmem:[#allocation2 + $0x22] sm:$0xff]
          %v867 = vld [vmem:[#allocation2 + $0x32] sm:$0xff]
          %v868 = vld [vmem:[#allocation2 + $0x42] sm:$0xff]
          %v869 = vld [vmem:[#allocation2 + $0x52] sm:$0xff]
          %v870 = vld [vmem:[#allocation2 + $0x62] sm:$0xff]
          %v871 = vld [vmem:[#allocation2 + $0x72] sm:$0xff]
          %v872 = vld [vmem:[#allocation2 + $0xa2] sm:$0xff]
          %v873 = vld [vmem:[#allocation2 + $0xb2] sm:$0xff]
          %v874 = vld [vmem:[#allocation2 + $0xc2] sm:$0xff]
          %v875 = vld [vmem:[#allocation2 + $0xd2] sm:$0xff]
          %v876 = vld [vmem:[#allocation2 + $0xe2] sm:$0xff]
          %v877 = vld [vmem:[#allocation2 + $0xf2] sm:$0xff]
          %v878 = vld [vmem:[#allocation2 + $0x102] sm:$0xff]
          %v879 = vld [vmem:[#allocation2 + $0x112] sm:$0xff]
          %s880 = scalar_lea.vmem [#allocation8], 8
          %v881 = vld [vmem:[%s880] sm:$0x7]
          %v883 = vsel %vm521, %v864, 0
          %v886 = vsel %vm521, %v865, 0
          %v889 = vsel %vm521, %v866, 0
          %v892 = vsel %vm521, %v867, 0
          %v895 = vsel %vm521, %v868, 0
          %v898 = vsel %vm521, %v869, 0
          %v901 = vsel %vm521, %v870, 0
          %v904 = vsel %vm521, %v871, 0
          %v907 = vsel %vm521, %v872, 0
          %v910 = vsel %vm521, %v873, 0
          %v913 = vsel %vm521, %v874, 0
          %v916 = vsel %vm521, %v875, 0
          %v919 = vsel %vm521, %v876, 0
          %v922 = vsel %vm521, %v877, 0
          %v925 = vsel %vm521, %v878, 0
          %v928 = vsel %vm521, %v879, 0
          %v931 = vsel %vm679, %v881, 0
          %933 = vmatpush.msra.mxu0 0.0
          %934 = vmatpush.msra.mxu0 0.0
          %935 = vmatpush.msra.mxu0 0.0
          %936 = vmatpush.msra.mxu0 0.0
          %937 = vmatpush.msra.mxu0 0.0
          %938 = vmatpush.msra.mxu0 0.0
          %939 = vmatpush.msra.mxu0 0.0
          %940 = vmatpush.msra.mxu0 0.0
          %941 = vmatpush.msra.mxu0 0.0
          %942 = vmatpush.msra.mxu0 0.0
          %943 = vmatpush.msra.mxu0 0.0
          %944 = vmatpush.msra.mxu0 0.0
          %945 = vmatpush.msra.mxu0 0.0
          %946 = vmatpush.msra.mxu0 0.0
          %947 = vmatpush.msra.mxu0 0.0
          %948 = vmatpush.msra.mxu0 %v931
          %949 = vmatmul.f32.gmra.mxu0 %v883
          %v950 = vpop.f32.mrf.mxu0
          %v951 = vadd.f32 0.0, %v950
          %952 = vmatmul.f32.gmra.mxu0 %v886
          %v953 = vpop.f32.mrf.mxu0
          %v954 = vadd.f32 0.0, %v953
          %955 = vmatmul.f32.gmra.mxu0 %v889
          %v956 = vpop.f32.mrf.mxu0
          %v957 = vadd.f32 0.0, %v956
          %958 = vmatmul.f32.gmra.mxu0 %v892
          %v959 = vpop.f32.mrf.mxu0
          %v960 = vadd.f32 0.0, %v959
          %961 = vmatmul.f32.gmra.mxu0 %v895
          %v962 = vpop.f32.mrf.mxu0
          %v963 = vadd.f32 0.0, %v962
          %964 = vmatmul.f32.gmra.mxu0 %v898
          %v965 = vpop.f32.mrf.mxu0
          %v966 = vadd.f32 0.0, %v965
          %967 = vmatmul.f32.gmra.mxu0 %v901
          %v968 = vpop.f32.mrf.mxu0
          %v969 = vadd.f32 0.0, %v968
          %970 = vmatmul.f32.gmra.mxu0 %v904
          %v971 = vpop.f32.mrf.mxu0
          %v972 = vadd.f32 0.0, %v971
          %973 = vmatmul.f32.gmra.mxu0 %v907
          %v974 = vpop.f32.mrf.mxu0
          %v975 = vadd.f32 0.0, %v974
          %976 = vmatmul.f32.gmra.mxu0 %v910
          %v977 = vpop.f32.mrf.mxu0
          %v978 = vadd.f32 0.0, %v977
          %979 = vmatmul.f32.gmra.mxu0 %v913
          %v980 = vpop.f32.mrf.mxu0
          %v981 = vadd.f32 0.0, %v980
          %982 = vmatmul.f32.gmra.mxu0 %v916
          %v983 = vpop.f32.mrf.mxu0
          %v984 = vadd.f32 0.0, %v983
          %985 = vmatmul.f32.gmra.mxu0 %v919
          %v986 = vpop.f32.mrf.mxu0
          %v987 = vadd.f32 0.0, %v986
          %988 = vmatmul.f32.gmra.mxu0 %v922
          %v989 = vpop.f32.mrf.mxu0
          %v990 = vadd.f32 0.0, %v989
          %991 = vmatmul.f32.gmra.mxu0 %v925
          %v992 = vpop.f32.mrf.mxu0
          %v993 = vadd.f32 0.0, %v992
          %994 = vmatmul.f32.gmra.mxu0 %v928
          %v995 = vpop.f32.mrf.mxu0
          %v996 = vadd.f32 0.0, %v995
          %997 = vdwg.mxu0
          %v998 = vadd.f32 %v817, %v951
          %v999 = vadd.f32 %v820, %v954
          %v1000 = vadd.f32 %v823, %v957
          %v1001 = vadd.f32 %v826, %v960
          %v1002 = vadd.f32 %v829, %v963
          %v1003 = vadd.f32 %v832, %v966
          %v1004 = vadd.f32 %v835, %v969
          %v1005 = vadd.f32 %v838, %v972
          %v1006 = vadd.f32 %v841, %v975
          %v1007 = vadd.f32 %v844, %v978
          %v1008 = vadd.f32 %v847, %v981
          %v1009 = vadd.f32 %v850, %v984
          %v1010 = vadd.f32 %v853, %v987
          %v1011 = vadd.f32 %v856, %v990
          %v1012 = vadd.f32 %v859, %v993
          %v1013 = vadd.f32 %v862, %v996
          %v1014 = vld [vmem:[%s579] sm:$0xff]
          %v1015 = vld [vmem:[%s579 + $0x10] sm:$0xff]
          %v1016 = vld [vmem:[%s579 + $0x20] sm:$0xff]
          %v1017 = vld [vmem:[%s579 + $0x30] sm:$0xff]
          %v1018 = vld [vmem:[%s579 + $0x40] sm:$0xff]
          %v1019 = vld [vmem:[%s579 + $0x50] sm:$0xff]
          %v1020 = vld [vmem:[%s579 + $0x60] sm:$0xff]
          %v1021 = vld [vmem:[%s579 + $0x70] sm:$0xff]
          %v1022 = vld [vmem:[%s579 + $0xa0] sm:$0xff]
          %v1023 = vld [vmem:[%s579 + $0xb0] sm:$0xff]
          %v1024 = vld [vmem:[%s579 + $0xc0] sm:$0xff]
          %v1025 = vld [vmem:[%s579 + $0xd0] sm:$0xff]
          %v1026 = vld [vmem:[%s579 + $0xe0] sm:$0xff]
          %v1027 = vld [vmem:[%s579 + $0xf0] sm:$0xff]
          %v1028 = vld [vmem:[%s579 + $0x100] sm:$0xff]
          %v1029 = vld [vmem:[%s579 + $0x110] sm:$0xff]
          %s1030 = scalar_lea.vmem [#allocation8], 12
          %v1031 = vld [vmem:[%s1030] sm:$0x7]
          %v1033 = vsel %vm521, %v1014, 0
          %v1036 = vsel %vm521, %v1015, 0
          %v1039 = vsel %vm521, %v1016, 0
          %v1042 = vsel %vm521, %v1017, 0
          %v1045 = vsel %vm521, %v1018, 0
          %v1048 = vsel %vm521, %v1019, 0
          %v1051 = vsel %vm521, %v1020, 0
          %v1054 = vsel %vm521, %v1021, 0
          %v1057 = vsel %vm521, %v1022, 0
          %v1060 = vsel %vm521, %v1023, 0
          %v1063 = vsel %vm521, %v1024, 0
          %v1066 = vsel %vm521, %v1025, 0
          %v1069 = vsel %vm521, %v1026, 0
          %v1072 = vsel %vm521, %v1027, 0
          %v1075 = vsel %vm521, %v1028, 0
          %v1078 = vsel %vm521, %v1029, 0
          %v1081 = vsel %vm679, %v1031, 0
          %1083 = vmatpush.msra.mxu0 0.0
          %1084 = vmatpush.msra.mxu0 0.0
          %1085 = vmatpush.msra.mxu0 0.0
          %1086 = vmatpush.msra.mxu0 0.0
          %1087 = vmatpush.msra.mxu0 0.0
          %1088 = vmatpush.msra.mxu0 0.0
          %1089 = vmatpush.msra.mxu0 0.0
          %1090 = vmatpush.msra.mxu0 0.0
          %1091 = vmatpush.msra.mxu0 0.0
          %1092 = vmatpush.msra.mxu0 0.0
          %1093 = vmatpush.msra.mxu0 0.0
          %1094 = vmatpush.msra.mxu0 0.0
          %1095 = vmatpush.msra.mxu0 0.0
          %1096 = vmatpush.msra.mxu0 0.0
          %1097 = vmatpush.msra.mxu0 0.0
          %1098 = vmatpush.msra.mxu0 %v1081
          %1099 = vmatmul.f32.gmra.mxu0 %v1033
          %v1100 = vpop.f32.mrf.mxu0
          %v1101 = vadd.f32 0.0, %v1100
          %1102 = vmatmul.f32.gmra.mxu0 %v1036
          %v1103 = vpop.f32.mrf.mxu0
          %v1104 = vadd.f32 0.0, %v1103
          %1105 = vmatmul.f32.gmra.mxu0 %v1039
          %v1106 = vpop.f32.mrf.mxu0
          %v1107 = vadd.f32 0.0, %v1106
          %1108 = vmatmul.f32.gmra.mxu0 %v1042
          %v1109 = vpop.f32.mrf.mxu0
          %v1110 = vadd.f32 0.0, %v1109
          %1111 = vmatmul.f32.gmra.mxu0 %v1045
          %v1112 = vpop.f32.mrf.mxu0
          %v1113 = vadd.f32 0.0, %v1112
          %1114 = vmatmul.f32.gmra.mxu0 %v1048
          %v1115 = vpop.f32.mrf.mxu0
          %v1116 = vadd.f32 0.0, %v1115
          %1117 = vmatmul.f32.gmra.mxu0 %v1051
          %v1118 = vpop.f32.mrf.mxu0
          %v1119 = vadd.f32 0.0, %v1118
          %1120 = vmatmul.f32.gmra.mxu0 %v1054
          %v1121 = vpop.f32.mrf.mxu0
          %v1122 = vadd.f32 0.0, %v1121
          %1123 = vmatmul.f32.gmra.mxu0 %v1057
          %v1124 = vpop.f32.mrf.mxu0
          %v1125 = vadd.f32 0.0, %v1124
          %1126 = vmatmul.f32.gmra.mxu0 %v1060
          %v1127 = vpop.f32.mrf.mxu0
          %v1128 = vadd.f32 0.0, %v1127
          %1129 = vmatmul.f32.gmra.mxu0 %v1063
          %v1130 = vpop.f32.mrf.mxu0
          %v1131 = vadd.f32 0.0, %v1130
          %1132 = vmatmul.f32.gmra.mxu0 %v1066
          %v1133 = vpop.f32.mrf.mxu0
          %v1134 = vadd.f32 0.0, %v1133
          %1135 = vmatmul.f32.gmra.mxu0 %v1069
          %v1136 = vpop.f32.mrf.mxu0
          %v1137 = vadd.f32 0.0, %v1136
          %1138 = vmatmul.f32.gmra.mxu0 %v1072
          %v1139 = vpop.f32.mrf.mxu0
          %v1140 = vadd.f32 0.0, %v1139
          %1141 = vmatmul.f32.gmra.mxu0 %v1075
          %v1142 = vpop.f32.mrf.mxu0
          %v1143 = vadd.f32 0.0, %v1142
          %1144 = vmatmul.f32.gmra.mxu0 %v1078
          %v1145 = vpop.f32.mrf.mxu0
          %v1146 = vadd.f32 0.0, %v1145
          %1147 = vdwg.mxu0
          %v1148 = vadd.f32 %v998, %v1101
          %v1149 = vadd.f32 %v999, %v1104
          %v1150 = vadd.f32 %v1000, %v1107
          %v1151 = vadd.f32 %v1001, %v1110
          %v1152 = vadd.f32 %v1002, %v1113
          %v1153 = vadd.f32 %v1003, %v1116
          %v1154 = vadd.f32 %v1004, %v1119
          %v1155 = vadd.f32 %v1005, %v1122
          %v1156 = vadd.f32 %v1006, %v1125
          %v1157 = vadd.f32 %v1007, %v1128
          %v1158 = vadd.f32 %v1008, %v1131
          %v1159 = vadd.f32 %v1009, %v1134
          %v1160 = vadd.f32 %v1010, %v1137
          %v1161 = vadd.f32 %v1011, %v1140
          %v1162 = vadd.f32 %v1012, %v1143
          %v1163 = vadd.f32 %v1013, %v1146
          %v1164 = vld [vmem:[%s579 + $0x1] sm:$0xff]
          %v1165 = vld [vmem:[%s579 + $0x11] sm:$0xff]
          %v1166 = vld [vmem:[%s579 + $0x21] sm:$0xff]
          %v1167 = vld [vmem:[%s579 + $0x31] sm:$0xff]
          %v1168 = vld [vmem:[%s579 + $0x41] sm:$0xff]
          %v1169 = vld [vmem:[%s579 + $0x51] sm:$0xff]
          %v1170 = vld [vmem:[%s579 + $0x61] sm:$0xff]
          %v1171 = vld [vmem:[%s579 + $0x71] sm:$0xff]
          %v1172 = vld [vmem:[%s579 + $0xa1] sm:$0xff]
          %v1173 = vld [vmem:[%s579 + $0xb1] sm:$0xff]
          %v1174 = vld [vmem:[%s579 + $0xc1] sm:$0xff]
          %v1175 = vld [vmem:[%s579 + $0xd1] sm:$0xff]
          %v1176 = vld [vmem:[%s579 + $0xe1] sm:$0xff]
          %v1177 = vld [vmem:[%s579 + $0xf1] sm:$0xff]
          %v1178 = vld [vmem:[%s579 + $0x101] sm:$0xff]
          %v1179 = vld [vmem:[%s579 + $0x111] sm:$0xff]
          %s1180 = scalar_lea.vmem [#allocation8], 16
          %v1181 = vld [vmem:[%s1180] sm:$0x7]
          %v1183 = vsel %vm521, %v1164, 0
          %v1186 = vsel %vm521, %v1165, 0
          %v1189 = vsel %vm521, %v1166, 0
          %v1192 = vsel %vm521, %v1167, 0
          %v1195 = vsel %vm521, %v1168, 0
          %v1198 = vsel %vm521, %v1169, 0
          %v1201 = vsel %vm521, %v1170, 0
          %v1204 = vsel %vm521, %v1171, 0
          %v1207 = vsel %vm521, %v1172, 0
          %v1210 = vsel %vm521, %v1173, 0
          %v1213 = vsel %vm521, %v1174, 0
          %v1216 = vsel %vm521, %v1175, 0
          %v1219 = vsel %vm521, %v1176, 0
          %v1222 = vsel %vm521, %v1177, 0
          %v1225 = vsel %vm521, %v1178, 0
          %v1228 = vsel %vm521, %v1179, 0
          %v1231 = vsel %vm679, %v1181, 0
          %1233 = vmatpush.msra.mxu0 0.0
          %1234 = vmatpush.msra.mxu0 0.0
          %1235 = vmatpush.msra.mxu0 0.0
          %1236 = vmatpush.msra.mxu0 0.0
          %1237 = vmatpush.msra.mxu0 0.0
          %1238 = vmatpush.msra.mxu0 0.0
          %1239 = vmatpush.msra.mxu0 0.0
          %1240 = vmatpush.msra.mxu0 0.0
          %1241 = vmatpush.msra.mxu0 0.0
          %1242 = vmatpush.msra.mxu0 0.0
          %1243 = vmatpush.msra.mxu0 0.0
          %1244 = vmatpush.msra.mxu0 0.0
          %1245 = vmatpush.msra.mxu0 0.0
          %1246 = vmatpush.msra.mxu0 0.0
          %1247 = vmatpush.msra.mxu0 0.0
          %1248 = vmatpush.msra.mxu0 %v1231
          %1249 = vmatmul.f32.gmra.mxu0 %v1183
          %v1250 = vpop.f32.mrf.mxu0
          %v1251 = vadd.f32 0.0, %v1250
          %1252 = vmatmul.f32.gmra.mxu0 %v1186
          %v1253 = vpop.f32.mrf.mxu0
          %v1254 = vadd.f32 0.0, %v1253
          %1255 = vmatmul.f32.gmra.mxu0 %v1189
          %v1256 = vpop.f32.mrf.mxu0
          %v1257 = vadd.f32 0.0, %v1256
          %1258 = vmatmul.f32.gmra.mxu0 %v1192
          %v1259 = vpop.f32.mrf.mxu0
          %v1260 = vadd.f32 0.0, %v1259
          %1261 = vmatmul.f32.gmra.mxu0 %v1195
          %v1262 = vpop.f32.mrf.mxu0
          %v1263 = vadd.f32 0.0, %v1262
          %1264 = vmatmul.f32.gmra.mxu0 %v1198
          %v1265 = vpop.f32.mrf.mxu0
          %v1266 = vadd.f32 0.0, %v1265
          %1267 = vmatmul.f32.gmra.mxu0 %v1201
          %v1268 = vpop.f32.mrf.mxu0
          %v1269 = vadd.f32 0.0, %v1268
          %1270 = vmatmul.f32.gmra.mxu0 %v1204
          %v1271 = vpop.f32.mrf.mxu0
          %v1272 = vadd.f32 0.0, %v1271
          %1273 = vmatmul.f32.gmra.mxu0 %v1207
          %v1274 = vpop.f32.mrf.mxu0
          %v1275 = vadd.f32 0.0, %v1274
          %1276 = vmatmul.f32.gmra.mxu0 %v1210
          %v1277 = vpop.f32.mrf.mxu0
          %v1278 = vadd.f32 0.0, %v1277
          %1279 = vmatmul.f32.gmra.mxu0 %v1213
          %v1280 = vpop.f32.mrf.mxu0
          %v1281 = vadd.f32 0.0, %v1280
          %1282 = vmatmul.f32.gmra.mxu0 %v1216
          %v1283 = vpop.f32.mrf.mxu0
          %v1284 = vadd.f32 0.0, %v1283
          %1285 = vmatmul.f32.gmra.mxu0 %v1219
          %v1286 = vpop.f32.mrf.mxu0
          %v1287 = vadd.f32 0.0, %v1286
          %1288 = vmatmul.f32.gmra.mxu0 %v1222
          %v1289 = vpop.f32.mrf.mxu0
          %v1290 = vadd.f32 0.0, %v1289
          %1291 = vmatmul.f32.gmra.mxu0 %v1225
          %v1292 = vpop.f32.mrf.mxu0
          %v1293 = vadd.f32 0.0, %v1292
          %1294 = vmatmul.f32.gmra.mxu0 %v1228
          %v1295 = vpop.f32.mrf.mxu0
          %v1296 = vadd.f32 0.0, %v1295
          %1297 = vdwg.mxu0
          %v1298 = vadd.f32 %v1148, %v1251
          %v1299 = vadd.f32 %v1149, %v1254
          %v1300 = vadd.f32 %v1150, %v1257
          %v1301 = vadd.f32 %v1151, %v1260
          %v1302 = vadd.f32 %v1152, %v1263
          %v1303 = vadd.f32 %v1153, %v1266
          %v1304 = vadd.f32 %v1154, %v1269
          %v1305 = vadd.f32 %v1155, %v1272
          %v1306 = vadd.f32 %v1156, %v1275
          %v1307 = vadd.f32 %v1157, %v1278
          %v1308 = vadd.f32 %v1158, %v1281
          %v1309 = vadd.f32 %v1159, %v1284
          %v1310 = vadd.f32 %v1160, %v1287
          %v1311 = vadd.f32 %v1161, %v1290
          %v1312 = vadd.f32 %v1162, %v1293
          %v1313 = vadd.f32 %v1163, %v1296
          %v1314 = vld [vmem:[%s579 + $0x2] sm:$0xff]
          %v1315 = vld [vmem:[%s579 + $0x12] sm:$0xff]
          %v1316 = vld [vmem:[%s579 + $0x22] sm:$0xff]
          %v1317 = vld [vmem:[%s579 + $0x32] sm:$0xff]
          %v1318 = vld [vmem:[%s579 + $0x42] sm:$0xff]
          %v1319 = vld [vmem:[%s579 + $0x52] sm:$0xff]
          %v1320 = vld [vmem:[%s579 + $0x62] sm:$0xff]
          %v1321 = vld [vmem:[%s579 + $0x72] sm:$0xff]
          %v1322 = vld [vmem:[%s579 + $0xa2] sm:$0xff]
          %v1323 = vld [vmem:[%s579 + $0xb2] sm:$0xff]
          %v1324 = vld [vmem:[%s579 + $0xc2] sm:$0xff]
          %v1325 = vld [vmem:[%s579 + $0xd2] sm:$0xff]
          %v1326 = vld [vmem:[%s579 + $0xe2] sm:$0xff]
          %v1327 = vld [vmem:[%s579 + $0xf2] sm:$0xff]
          %v1328 = vld [vmem:[%s579 + $0x102] sm:$0xff]
          %v1329 = vld [vmem:[%s579 + $0x112] sm:$0xff]
          %s1330 = scalar_lea.vmem [#allocation8], 20
          %v1331 = vld [vmem:[%s1330] sm:$0x7]
          %v1333 = vsel %vm521, %v1314, 0
          %v1336 = vsel %vm521, %v1315, 0
          %v1339 = vsel %vm521, %v1316, 0
          %v1342 = vsel %vm521, %v1317, 0
          %v1345 = vsel %vm521, %v1318, 0
          %v1348 = vsel %vm521, %v1319, 0
          %v1351 = vsel %vm521, %v1320, 0
          %v1354 = vsel %vm521, %v1321, 0
          %v1357 = vsel %vm521, %v1322, 0
          %v1360 = vsel %vm521, %v1323, 0
          %v1363 = vsel %vm521, %v1324, 0
          %v1366 = vsel %vm521, %v1325, 0
          %v1369 = vsel %vm521, %v1326, 0
          %v1372 = vsel %vm521, %v1327, 0
          %v1375 = vsel %vm521, %v1328, 0
          %v1378 = vsel %vm521, %v1329, 0
          %v1381 = vsel %vm679, %v1331, 0
          %1383 = vmatpush.msra.mxu0 0.0
          %1384 = vmatpush.msra.mxu0 0.0
          %1385 = vmatpush.msra.mxu0 0.0
          %1386 = vmatpush.msra.mxu0 0.0
          %1387 = vmatpush.msra.mxu0 0.0
          %1388 = vmatpush.msra.mxu0 0.0
          %1389 = vmatpush.msra.mxu0 0.0
          %1390 = vmatpush.msra.mxu0 0.0
          %1391 = vmatpush.msra.mxu0 0.0
          %1392 = vmatpush.msra.mxu0 0.0
          %1393 = vmatpush.msra.mxu0 0.0
          %1394 = vmatpush.msra.mxu0 0.0
          %1395 = vmatpush.msra.mxu0 0.0
          %1396 = vmatpush.msra.mxu0 0.0
          %1397 = vmatpush.msra.mxu0 0.0
          %1398 = vmatpush.msra.mxu0 %v1381
          %1399 = vmatmul.f32.gmra.mxu0 %v1333
          %v1400 = vpop.f32.mrf.mxu0
          %v1401 = vadd.f32 0.0, %v1400
          %1402 = vmatmul.f32.gmra.mxu0 %v1336
          %v1403 = vpop.f32.mrf.mxu0
          %v1404 = vadd.f32 0.0, %v1403
          %1405 = vmatmul.f32.gmra.mxu0 %v1339
          %v1406 = vpop.f32.mrf.mxu0
          %v1407 = vadd.f32 0.0, %v1406
          %1408 = vmatmul.f32.gmra.mxu0 %v1342
          %v1409 = vpop.f32.mrf.mxu0
          %v1410 = vadd.f32 0.0, %v1409
          %1411 = vmatmul.f32.gmra.mxu0 %v1345
          %v1412 = vpop.f32.mrf.mxu0
          %v1413 = vadd.f32 0.0, %v1412
          %1414 = vmatmul.f32.gmra.mxu0 %v1348
          %v1415 = vpop.f32.mrf.mxu0
          %v1416 = vadd.f32 0.0, %v1415
          %1417 = vmatmul.f32.gmra.mxu0 %v1351
          %v1418 = vpop.f32.mrf.mxu0
          %v1419 = vadd.f32 0.0, %v1418
          %1420 = vmatmul.f32.gmra.mxu0 %v1354
          %v1421 = vpop.f32.mrf.mxu0
          %v1422 = vadd.f32 0.0, %v1421
          %1423 = vmatmul.f32.gmra.mxu0 %v1357
          %v1424 = vpop.f32.mrf.mxu0
          %v1425 = vadd.f32 0.0, %v1424
          %1426 = vmatmul.f32.gmra.mxu0 %v1360
          %v1427 = vpop.f32.mrf.mxu0
          %v1428 = vadd.f32 0.0, %v1427
          %1429 = vmatmul.f32.gmra.mxu0 %v1363
          %v1430 = vpop.f32.mrf.mxu0
          %v1431 = vadd.f32 0.0, %v1430
          %1432 = vmatmul.f32.gmra.mxu0 %v1366
          %v1433 = vpop.f32.mrf.mxu0
          %v1434 = vadd.f32 0.0, %v1433
          %1435 = vmatmul.f32.gmra.mxu0 %v1369
          %v1436 = vpop.f32.mrf.mxu0
          %v1437 = vadd.f32 0.0, %v1436
          %1438 = vmatmul.f32.gmra.mxu0 %v1372
          %v1439 = vpop.f32.mrf.mxu0
          %v1440 = vadd.f32 0.0, %v1439
          %1441 = vmatmul.f32.gmra.mxu0 %v1375
          %v1442 = vpop.f32.mrf.mxu0
          %v1443 = vadd.f32 0.0, %v1442
          %1444 = vmatmul.f32.gmra.mxu0 %v1378
          %v1445 = vpop.f32.mrf.mxu0
          %v1446 = vadd.f32 0.0, %v1445
          %1447 = vdwg.mxu0
          %v1448 = vadd.f32 %v1298, %v1401
          %v1449 = vadd.f32 %v1299, %v1404
          %v1450 = vadd.f32 %v1300, %v1407
          %v1451 = vadd.f32 %v1301, %v1410
          %v1452 = vadd.f32 %v1302, %v1413
          %v1453 = vadd.f32 %v1303, %v1416
          %v1454 = vadd.f32 %v1304, %v1419
          %v1455 = vadd.f32 %v1305, %v1422
          %v1456 = vadd.f32 %v1306, %v1425
          %v1457 = vadd.f32 %v1307, %v1428
          %v1458 = vadd.f32 %v1308, %v1431
          %v1459 = vadd.f32 %v1309, %v1434
          %v1460 = vadd.f32 %v1310, %v1437
          %v1461 = vadd.f32 %v1311, %v1440
          %v1462 = vadd.f32 %v1312, %v1443
          %v1463 = vadd.f32 %v1313, %v1446
          %s1464 = scalar_lea.vmem [#allocation2], 32
          %v1465 = vld [vmem:[%s1464] sm:$0xff]
          %v1466 = vld [vmem:[%s1464 + $0x10] sm:$0xff]
          %v1467 = vld [vmem:[%s1464 + $0x20] sm:$0xff]
          %v1468 = vld [vmem:[%s1464 + $0x30] sm:$0xff]
          %v1469 = vld [vmem:[%s1464 + $0x40] sm:$0xff]
          %v1470 = vld [vmem:[%s1464 + $0x50] sm:$0xff]
          %v1471 = vld [vmem:[%s1464 + $0x60] sm:$0xff]
          %v1472 = vld [vmem:[%s1464 + $0x70] sm:$0xff]
          %v1473 = vld [vmem:[%s1464 + $0xa0] sm:$0xff]
          %v1474 = vld [vmem:[%s1464 + $0xb0] sm:$0xff]
          %v1475 = vld [vmem:[%s1464 + $0xc0] sm:$0xff]
          %v1476 = vld [vmem:[%s1464 + $0xd0] sm:$0xff]
          %v1477 = vld [vmem:[%s1464 + $0xe0] sm:$0xff]
          %v1478 = vld [vmem:[%s1464 + $0xf0] sm:$0xff]
          %v1479 = vld [vmem:[%s1464 + $0x100] sm:$0xff]
          %v1480 = vld [vmem:[%s1464 + $0x110] sm:$0xff]
          %s1481 = scalar_lea.vmem [#allocation8], 24
          %v1482 = vld [vmem:[%s1481] sm:$0x7]
          %v1484 = vsel %vm521, %v1465, 0
          %v1487 = vsel %vm521, %v1466, 0
          %v1490 = vsel %vm521, %v1467, 0
          %v1493 = vsel %vm521, %v1468, 0
          %v1496 = vsel %vm521, %v1469, 0
          %v1499 = vsel %vm521, %v1470, 0
          %v1502 = vsel %vm521, %v1471, 0
          %v1505 = vsel %vm521, %v1472, 0
          %v1508 = vsel %vm521, %v1473, 0
          %v1511 = vsel %vm521, %v1474, 0
          %v1514 = vsel %vm521, %v1475, 0
          %v1517 = vsel %vm521, %v1476, 0
          %v1520 = vsel %vm521, %v1477, 0
          %v1523 = vsel %vm521, %v1478, 0
          %v1526 = vsel %vm521, %v1479, 0
          %v1529 = vsel %vm521, %v1480, 0
          %v1532 = vsel %vm679, %v1482, 0
          %1534 = vmatpush.msra.mxu0 0.0
          %1535 = vmatpush.msra.mxu0 0.0
          %1536 = vmatpush.msra.mxu0 0.0
          %1537 = vmatpush.msra.mxu0 0.0
          %1538 = vmatpush.msra.mxu0 0.0
          %1539 = vmatpush.msra.mxu0 0.0
          %1540 = vmatpush.msra.mxu0 0.0
          %1541 = vmatpush.msra.mxu0 0.0
          %1542 = vmatpush.msra.mxu0 0.0
          %1543 = vmatpush.msra.mxu0 0.0
          %1544 = vmatpush.msra.mxu0 0.0
          %1545 = vmatpush.msra.mxu0 0.0
          %1546 = vmatpush.msra.mxu0 0.0
          %1547 = vmatpush.msra.mxu0 0.0
          %1548 = vmatpush.msra.mxu0 0.0
          %1549 = vmatpush.msra.mxu0 %v1532
          %1550 = vmatmul.f32.gmra.mxu0 %v1484
          %v1551 = vpop.f32.mrf.mxu0
          %v1552 = vadd.f32 0.0, %v1551
          %1553 = vmatmul.f32.gmra.mxu0 %v1487
          %v1554 = vpop.f32.mrf.mxu0
          %v1555 = vadd.f32 0.0, %v1554
          %1556 = vmatmul.f32.gmra.mxu0 %v1490
          %v1557 = vpop.f32.mrf.mxu0
          %v1558 = vadd.f32 0.0, %v1557
          %1559 = vmatmul.f32.gmra.mxu0 %v1493
          %v1560 = vpop.f32.mrf.mxu0
          %v1561 = vadd.f32 0.0, %v1560
          %1562 = vmatmul.f32.gmra.mxu0 %v1496
          %v1563 = vpop.f32.mrf.mxu0
          %v1564 = vadd.f32 0.0, %v1563
          %1565 = vmatmul.f32.gmra.mxu0 %v1499
          %v1566 = vpop.f32.mrf.mxu0
          %v1567 = vadd.f32 0.0, %v1566
          %1568 = vmatmul.f32.gmra.mxu0 %v1502
          %v1569 = vpop.f32.mrf.mxu0
          %v1570 = vadd.f32 0.0, %v1569
          %1571 = vmatmul.f32.gmra.mxu0 %v1505
          %v1572 = vpop.f32.mrf.mxu0
          %v1573 = vadd.f32 0.0, %v1572
          %1574 = vmatmul.f32.gmra.mxu0 %v1508
          %v1575 = vpop.f32.mrf.mxu0
          %v1576 = vadd.f32 0.0, %v1575
          %1577 = vmatmul.f32.gmra.mxu0 %v1511
          %v1578 = vpop.f32.mrf.mxu0
          %v1579 = vadd.f32 0.0, %v1578
          %1580 = vmatmul.f32.gmra.mxu0 %v1514
          %v1581 = vpop.f32.mrf.mxu0
          %v1582 = vadd.f32 0.0, %v1581
          %1583 = vmatmul.f32.gmra.mxu0 %v1517
          %v1584 = vpop.f32.mrf.mxu0
          %v1585 = vadd.f32 0.0, %v1584
          %1586 = vmatmul.f32.gmra.mxu0 %v1520
          %v1587 = vpop.f32.mrf.mxu0
          %v1588 = vadd.f32 0.0, %v1587
          %1589 = vmatmul.f32.gmra.mxu0 %v1523
          %v1590 = vpop.f32.mrf.mxu0
          %v1591 = vadd.f32 0.0, %v1590
          %1592 = vmatmul.f32.gmra.mxu0 %v1526
          %v1593 = vpop.f32.mrf.mxu0
          %v1594 = vadd.f32 0.0, %v1593
          %1595 = vmatmul.f32.gmra.mxu0 %v1529
          %v1596 = vpop.f32.mrf.mxu0
          %v1597 = vadd.f32 0.0, %v1596
          %1598 = vdwg.mxu0
          %v1599 = vadd.f32 %v1448, %v1552
          %v1600 = vadd.f32 %v1449, %v1555
          %v1601 = vadd.f32 %v1450, %v1558
          %v1602 = vadd.f32 %v1451, %v1561
          %v1603 = vadd.f32 %v1452, %v1564
          %v1604 = vadd.f32 %v1453, %v1567
          %v1605 = vadd.f32 %v1454, %v1570
          %v1606 = vadd.f32 %v1455, %v1573
          %v1607 = vadd.f32 %v1456, %v1576
          %v1608 = vadd.f32 %v1457, %v1579
          %v1609 = vadd.f32 %v1458, %v1582
          %v1610 = vadd.f32 %v1459, %v1585
          %v1611 = vadd.f32 %v1460, %v1588
          %v1612 = vadd.f32 %v1461, %v1591
          %v1613 = vadd.f32 %v1462, %v1594
          %v1614 = vadd.f32 %v1463, %v1597
          %v1615 = vld [vmem:[%s1464 + $0x1] sm:$0xff]
          %v1616 = vld [vmem:[%s1464 + $0x11] sm:$0xff]
          %v1617 = vld [vmem:[%s1464 + $0x21] sm:$0xff]
          %v1618 = vld [vmem:[%s1464 + $0x31] sm:$0xff]
          %v1619 = vld [vmem:[%s1464 + $0x41] sm:$0xff]
          %v1620 = vld [vmem:[%s1464 + $0x51] sm:$0xff]
          %v1621 = vld [vmem:[%s1464 + $0x61] sm:$0xff]
          %v1622 = vld [vmem:[%s1464 + $0x71] sm:$0xff]
          %v1623 = vld [vmem:[%s1464 + $0xa1] sm:$0xff]
          %v1624 = vld [vmem:[%s1464 + $0xb1] sm:$0xff]
          %v1625 = vld [vmem:[%s1464 + $0xc1] sm:$0xff]
          %v1626 = vld [vmem:[%s1464 + $0xd1] sm:$0xff]
          %v1627 = vld [vmem:[%s1464 + $0xe1] sm:$0xff]
          %v1628 = vld [vmem:[%s1464 + $0xf1] sm:$0xff]
          %v1629 = vld [vmem:[%s1464 + $0x101] sm:$0xff]
          %v1630 = vld [vmem:[%s1464 + $0x111] sm:$0xff]
          %s1631 = scalar_lea.vmem [#allocation8], 28
          %v1632 = vld [vmem:[%s1631] sm:$0x7]
          %v1634 = vsel %vm521, %v1615, 0
          %v1637 = vsel %vm521, %v1616, 0
          %v1640 = vsel %vm521, %v1617, 0
          %v1643 = vsel %vm521, %v1618, 0
          %v1646 = vsel %vm521, %v1619, 0
          %v1649 = vsel %vm521, %v1620, 0
          %v1652 = vsel %vm521, %v1621, 0
          %v1655 = vsel %vm521, %v1622, 0
          %v1658 = vsel %vm521, %v1623, 0
          %v1661 = vsel %vm521, %v1624, 0
          %v1664 = vsel %vm521, %v1625, 0
          %v1667 = vsel %vm521, %v1626, 0
          %v1670 = vsel %vm521, %v1627, 0
          %v1673 = vsel %vm521, %v1628, 0
          %v1676 = vsel %vm521, %v1629, 0
          %v1679 = vsel %vm521, %v1630, 0
          %v1682 = vsel %vm679, %v1632, 0
          %1684 = vmatpush.msra.mxu0 0.0
          %1685 = vmatpush.msra.mxu0 0.0
          %1686 = vmatpush.msra.mxu0 0.0
          %1687 = vmatpush.msra.mxu0 0.0
          %1688 = vmatpush.msra.mxu0 0.0
          %1689 = vmatpush.msra.mxu0 0.0
          %1690 = vmatpush.msra.mxu0 0.0
          %1691 = vmatpush.msra.mxu0 0.0
          %1692 = vmatpush.msra.mxu0 0.0
          %1693 = vmatpush.msra.mxu0 0.0
          %1694 = vmatpush.msra.mxu0 0.0
          %1695 = vmatpush.msra.mxu0 0.0
          %1696 = vmatpush.msra.mxu0 0.0
          %1697 = vmatpush.msra.mxu0 0.0
          %1698 = vmatpush.msra.mxu0 0.0
          %1699 = vmatpush.msra.mxu0 %v1682
          %1700 = vmatmul.f32.gmra.mxu0 %v1634
          %v1701 = vpop.f32.mrf.mxu0
          %v1702 = vadd.f32 0.0, %v1701
          %1703 = vmatmul.f32.gmra.mxu0 %v1637
          %v1704 = vpop.f32.mrf.mxu0
          %v1705 = vadd.f32 0.0, %v1704
          %1706 = vmatmul.f32.gmra.mxu0 %v1640
          %v1707 = vpop.f32.mrf.mxu0
          %v1708 = vadd.f32 0.0, %v1707
          %1709 = vmatmul.f32.gmra.mxu0 %v1643
          %v1710 = vpop.f32.mrf.mxu0
          %v1711 = vadd.f32 0.0, %v1710
          %1712 = vmatmul.f32.gmra.mxu0 %v1646
          %v1713 = vpop.f32.mrf.mxu0
          %v1714 = vadd.f32 0.0, %v1713
          %1715 = vmatmul.f32.gmra.mxu0 %v1649
          %v1716 = vpop.f32.mrf.mxu0
          %v1717 = vadd.f32 0.0, %v1716
          %1718 = vmatmul.f32.gmra.mxu0 %v1652
          %v1719 = vpop.f32.mrf.mxu0
          %v1720 = vadd.f32 0.0, %v1719
          %1721 = vmatmul.f32.gmra.mxu0 %v1655
          %v1722 = vpop.f32.mrf.mxu0
          %v1723 = vadd.f32 0.0, %v1722
          %1724 = vmatmul.f32.gmra.mxu0 %v1658
          %v1725 = vpop.f32.mrf.mxu0
          %v1726 = vadd.f32 0.0, %v1725
          %1727 = vmatmul.f32.gmra.mxu0 %v1661
          %v1728 = vpop.f32.mrf.mxu0
          %v1729 = vadd.f32 0.0, %v1728
          %1730 = vmatmul.f32.gmra.mxu0 %v1664
          %v1731 = vpop.f32.mrf.mxu0
          %v1732 = vadd.f32 0.0, %v1731
          %1733 = vmatmul.f32.gmra.mxu0 %v1667
          %v1734 = vpop.f32.mrf.mxu0
          %v1735 = vadd.f32 0.0, %v1734
          %1736 = vmatmul.f32.gmra.mxu0 %v1670
          %v1737 = vpop.f32.mrf.mxu0
          %v1738 = vadd.f32 0.0, %v1737
          %1739 = vmatmul.f32.gmra.mxu0 %v1673
          %v1740 = vpop.f32.mrf.mxu0
          %v1741 = vadd.f32 0.0, %v1740
          %1742 = vmatmul.f32.gmra.mxu0 %v1676
          %v1743 = vpop.f32.mrf.mxu0
          %v1744 = vadd.f32 0.0, %v1743
          %1745 = vmatmul.f32.gmra.mxu0 %v1679
          %v1746 = vpop.f32.mrf.mxu0
          %v1747 = vadd.f32 0.0, %v1746
          %1748 = vdwg.mxu0
          %v1749 = vadd.f32 %v1599, %v1702
          %v1750 = vadd.f32 %v1600, %v1705
          %v1751 = vadd.f32 %v1601, %v1708
          %v1752 = vadd.f32 %v1602, %v1711
          %v1753 = vadd.f32 %v1603, %v1714
          %v1754 = vadd.f32 %v1604, %v1717
          %v1755 = vadd.f32 %v1605, %v1720
          %v1756 = vadd.f32 %v1606, %v1723
          %v1757 = vadd.f32 %v1607, %v1726
          %v1758 = vadd.f32 %v1608, %v1729
          %v1759 = vadd.f32 %v1609, %v1732
          %v1760 = vadd.f32 %v1610, %v1735
          %v1761 = vadd.f32 %v1611, %v1738
          %v1762 = vadd.f32 %v1612, %v1741
          %v1763 = vadd.f32 %v1613, %v1744
          %v1764 = vadd.f32 %v1614, %v1747
          %v1765 = vld [vmem:[%s1464 + $0x2] sm:$0xff]
          %v1766 = vld [vmem:[%s1464 + $0x12] sm:$0xff]
          %v1767 = vld [vmem:[%s1464 + $0x22] sm:$0xff]
          %v1768 = vld [vmem:[%s1464 + $0x32] sm:$0xff]
          %v1769 = vld [vmem:[%s1464 + $0x42] sm:$0xff]
          %v1770 = vld [vmem:[%s1464 + $0x52] sm:$0xff]
          %v1771 = vld [vmem:[%s1464 + $0x62] sm:$0xff]
          %v1772 = vld [vmem:[%s1464 + $0x72] sm:$0xff]
          %v1773 = vld [vmem:[%s1464 + $0xa2] sm:$0xff]
          %v1774 = vld [vmem:[%s1464 + $0xb2] sm:$0xff]
          %v1775 = vld [vmem:[%s1464 + $0xc2] sm:$0xff]
          %v1776 = vld [vmem:[%s1464 + $0xd2] sm:$0xff]
          %v1777 = vld [vmem:[%s1464 + $0xe2] sm:$0xff]
          %v1778 = vld [vmem:[%s1464 + $0xf2] sm:$0xff]
          %v1779 = vld [vmem:[%s1464 + $0x102] sm:$0xff]
          %v1780 = vld [vmem:[%s1464 + $0x112] sm:$0xff]
          %s1781 = scalar_lea.vmem [#allocation8], 32
          %v1782 = vld [vmem:[%s1781] sm:$0x7]
          %v1784 = vsel %vm521, %v1765, 0
          %v1787 = vsel %vm521, %v1766, 0
          %v1790 = vsel %vm521, %v1767, 0
          %v1793 = vsel %vm521, %v1768, 0
          %v1796 = vsel %vm521, %v1769, 0
          %v1799 = vsel %vm521, %v1770, 0
          %v1802 = vsel %vm521, %v1771, 0
          %v1805 = vsel %vm521, %v1772, 0
          %v1808 = vsel %vm521, %v1773, 0
          %v1811 = vsel %vm521, %v1774, 0
          %v1814 = vsel %vm521, %v1775, 0
          %v1817 = vsel %vm521, %v1776, 0
          %v1820 = vsel %vm521, %v1777, 0
          %v1823 = vsel %vm521, %v1778, 0
          %v1826 = vsel %vm521, %v1779, 0
          %v1829 = vsel %vm521, %v1780, 0
          %v1832 = vsel %vm679, %v1782, 0
          %1834 = vmatpush.msra.mxu0 0.0
          %1835 = vmatpush.msra.mxu0 0.0
          %1836 = vmatpush.msra.mxu0 0.0
          %1837 = vmatpush.msra.mxu0 0.0
          %1838 = vmatpush.msra.mxu0 0.0
          %1839 = vmatpush.msra.mxu0 0.0
          %1840 = vmatpush.msra.mxu0 0.0
          %1841 = vmatpush.msra.mxu0 0.0
          %1842 = vmatpush.msra.mxu0 0.0
          %1843 = vmatpush.msra.mxu0 0.0
          %1844 = vmatpush.msra.mxu0 0.0
          %1845 = vmatpush.msra.mxu0 0.0
          %1846 = vmatpush.msra.mxu0 0.0
          %1847 = vmatpush.msra.mxu0 0.0
          %1848 = vmatpush.msra.mxu0 0.0
          %1849 = vmatpush.msra.mxu0 %v1832
          %1850 = vmatmul.f32.gmra.mxu0 %v1784
          %v1851 = vpop.f32.mrf.mxu0
          %v1852 = vadd.f32 0.0, %v1851
          %1853 = vmatmul.f32.gmra.mxu0 %v1787
          %v1854 = vpop.f32.mrf.mxu0
          %v1855 = vadd.f32 0.0, %v1854
          %1856 = vmatmul.f32.gmra.mxu0 %v1790
          %v1857 = vpop.f32.mrf.mxu0
          %v1858 = vadd.f32 0.0, %v1857
          %1859 = vmatmul.f32.gmra.mxu0 %v1793
          %v1860 = vpop.f32.mrf.mxu0
          %v1861 = vadd.f32 0.0, %v1860
          %1862 = vmatmul.f32.gmra.mxu0 %v1796
          %v1863 = vpop.f32.mrf.mxu0
          %v1864 = vadd.f32 0.0, %v1863
          %1865 = vmatmul.f32.gmra.mxu0 %v1799
          %v1866 = vpop.f32.mrf.mxu0
          %v1867 = vadd.f32 0.0, %v1866
          %1868 = vmatmul.f32.gmra.mxu0 %v1802
          %v1869 = vpop.f32.mrf.mxu0
          %v1870 = vadd.f32 0.0, %v1869
          %1871 = vmatmul.f32.gmra.mxu0 %v1805
          %v1872 = vpop.f32.mrf.mxu0
          %v1873 = vadd.f32 0.0, %v1872
          %1874 = vmatmul.f32.gmra.mxu0 %v1808
          %v1875 = vpop.f32.mrf.mxu0
          %v1876 = vadd.f32 0.0, %v1875
          %1877 = vmatmul.f32.gmra.mxu0 %v1811
          %v1878 = vpop.f32.mrf.mxu0
          %v1879 = vadd.f32 0.0, %v1878
          %1880 = vmatmul.f32.gmra.mxu0 %v1814
          %v1881 = vpop.f32.mrf.mxu0
          %v1882 = vadd.f32 0.0, %v1881
          %1883 = vmatmul.f32.gmra.mxu0 %v1817
          %v1884 = vpop.f32.mrf.mxu0
          %v1885 = vadd.f32 0.0, %v1884
          %1886 = vmatmul.f32.gmra.mxu0 %v1820
          %v1887 = vpop.f32.mrf.mxu0
          %v1888 = vadd.f32 0.0, %v1887
          %1889 = vmatmul.f32.gmra.mxu0 %v1823
          %v1890 = vpop.f32.mrf.mxu0
          %v1891 = vadd.f32 0.0, %v1890
          %1892 = vmatmul.f32.gmra.mxu0 %v1826
          %v1893 = vpop.f32.mrf.mxu0
          %v1894 = vadd.f32 0.0, %v1893
          %1895 = vmatmul.f32.gmra.mxu0 %v1829
          %v1896 = vpop.f32.mrf.mxu0
          %v1897 = vadd.f32 0.0, %v1896
          %1898 = vdwg.mxu0
          %v1899 = vadd.f32 %v1749, %v1852
          %v1900 = vadd.f32 %v1750, %v1855
          %v1901 = vadd.f32 %v1751, %v1858
          %v1902 = vadd.f32 %v1752, %v1861
          %v1903 = vadd.f32 %v1753, %v1864
          %v1904 = vadd.f32 %v1754, %v1867
          %v1905 = vadd.f32 %v1755, %v1870
          %v1906 = vadd.f32 %v1756, %v1873
          %v1907 = vadd.f32 %v1757, %v1876
          %v1908 = vadd.f32 %v1758, %v1879
          %v1909 = vadd.f32 %v1759, %v1882
          %v1910 = vadd.f32 %v1760, %v1885
          %v1911 = vadd.f32 %v1761, %v1888
          %v1912 = vadd.f32 %v1762, %v1891
          %v1913 = vadd.f32 %v1763, %v1894
          %v1914 = vadd.f32 %v1764, %v1897
          %v1915 = vld [vmem:[#allocation10] sm:$0x1]
          %v1917 = vperm.slane %v1915, 0
          %v1919 = vadd.f32 %v1899, %v1917
          %v1920 = vadd.f32 %v1900, %v1917
          %v1921 = vadd.f32 %v1901, %v1917
          %v1922 = vadd.f32 %v1902, %v1917
          %v1923 = vadd.f32 %v1903, %v1917
          %v1924 = vadd.f32 %v1904, %v1917
          %v1925 = vadd.f32 %v1905, %v1917
          %v1926 = vadd.f32 %v1906, %v1917
          %v1927 = vadd.f32 %v1907, %v1917
          %v1928 = vadd.f32 %v1908, %v1917
          %v1929 = vadd.f32 %v1909, %v1917
          %v1930 = vadd.f32 %v1910, %v1917
          %v1931 = vadd.f32 %v1911, %v1917
          %v1932 = vadd.f32 %v1912, %v1917
          %v1933 = vadd.f32 %v1913, %v1917
          %v1934 = vadd.f32 %v1914, %v1917
          %v1935 = vmax.f32 %v1919, 0.0
          %v1936 = vmax.f32 %v1920, 0.0
          %v1937 = vmax.f32 %v1921, 0.0
          %v1938 = vmax.f32 %v1922, 0.0
          %v1939 = vmax.f32 %v1923, 0.0
          %v1940 = vmax.f32 %v1924, 0.0
          %v1941 = vmax.f32 %v1925, 0.0
          %v1942 = vmax.f32 %v1926, 0.0
          %v1943 = vmax.f32 %v1927, 0.0
          %v1944 = vmax.f32 %v1928, 0.0
          %v1945 = vmax.f32 %v1929, 0.0
          %v1946 = vmax.f32 %v1930, 0.0
          %v1947 = vmax.f32 %v1931, 0.0
          %v1948 = vmax.f32 %v1932, 0.0
          %v1949 = vmax.f32 %v1933, 0.0
          %v1950 = vmax.f32 %v1934, 0.0
          %vm1951 = vcmask 130048
          %1952 = vst.msk [vmem:[#allocation3] sm:$0xff] %vm1951, 0.0
          %vm1953 = vcmask 123904
          %1954 = vst.msk [vmem:[#allocation3 + $0x8] sm:$0x3] %vm1953, 0.0
          %1955 = vst.msk [vmem:[#allocation3 + $0x10] sm:$0xff] %vm1951, 0.0
          %1956 = vst.msk [vmem:[#allocation3 + $0x18] sm:$0x3] %vm1953, 0.0
          %1957 = vst.msk [vmem:[#allocation3 + $0x20] sm:$0xff] %vm1951, 0.0
          %1958 = vst.msk [vmem:[#allocation3 + $0x28] sm:$0x3] %vm1953, 0.0
          %1959 = vst.msk [vmem:[#allocation3 + $0x30] sm:$0xff] %vm1951, 0.0
          %1960 = vst.msk [vmem:[#allocation3 + $0x38] sm:$0x3] %vm1953, 0.0
          %1961 = vst.msk [vmem:[#allocation3 + $0x40] sm:$0xff] %vm1951, 0.0
          %1962 = vst.msk [vmem:[#allocation3 + $0x48] sm:$0x3] %vm1953, 0.0
          %1963 = vst.msk [vmem:[#allocation3 + $0x50] sm:$0xff] %vm1951, 0.0
          %1964 = vst.msk [vmem:[#allocation3 + $0x58] sm:$0x3] %vm1953, 0.0
          %1965 = vst.msk [vmem:[#allocation3 + $0x60] sm:$0xff] %vm1951, 0.0
          %1966 = vst.msk [vmem:[#allocation3 + $0x68] sm:$0x3] %vm1953, 0.0
          %1967 = vst.msk [vmem:[#allocation3 + $0x70] sm:$0xff] %vm1951, 0.0
          %1968 = vst.msk [vmem:[#allocation3 + $0x78] sm:$0x3] %vm1953, 0.0
          %1969 = vst.msk [vmem:[#allocation3 + $0x80] sm:$0xff] %vm1951, 0.0
          %1970 = vst.msk [vmem:[#allocation3 + $0x88] sm:$0x3] %vm1953, 0.0
          %1971 = vst.msk [vmem:[#allocation3 + $0x90] sm:$0xff] %vm1951, 0.0
          %1972 = vst.msk [vmem:[#allocation3 + $0x98] sm:$0x3] %vm1953, 0.0
          %1973 = vst.msk [vmem:[#allocation3 + $0xa0] sm:$0xff] %vm1951, 0.0
          %1974 = vst.msk [vmem:[#allocation3 + $0xa8] sm:$0x3] %vm1953, 0.0
          %1975 = vst.msk [vmem:[#allocation3 + $0xb0] sm:$0xff] %vm1951, 0.0
          %1976 = vst.msk [vmem:[#allocation3 + $0xb8] sm:$0x3] %vm1953, 0.0
          %1977 = vst.msk [vmem:[#allocation3 + $0xc0] sm:$0xff] %vm1951, 0.0
          %1978 = vst.msk [vmem:[#allocation3 + $0xc8] sm:$0x3] %vm1953, 0.0
          %1979 = vst.msk [vmem:[#allocation3 + $0xd0] sm:$0xff] %vm1951, 0.0
          %1980 = vst.msk [vmem:[#allocation3 + $0xd8] sm:$0x3] %vm1953, 0.0
          %1981 = vst.msk [vmem:[#allocation3 + $0xe0] sm:$0xff] %vm1951, 0.0
          %1982 = vst.msk [vmem:[#allocation3 + $0xe8] sm:$0x3] %vm1953, 0.0
          %1983 = vst.msk [vmem:[#allocation3 + $0xf0] sm:$0xff] %vm1951, 0.0
          %1984 = vst.msk [vmem:[#allocation3 + $0xf8] sm:$0x3] %vm1953, 0.0
          %1985 = vst.msk [vmem:[#allocation3 + $0x100] sm:$0xff] %vm1951, 0.0
          %1986 = vst.msk [vmem:[#allocation3 + $0x108] sm:$0x3] %vm1953, 0.0
          %1987 = vst.msk [vmem:[#allocation3 + $0x110] sm:$0xff] %vm1951, 0.0
          %1988 = vst.msk [vmem:[#allocation3 + $0x118] sm:$0x3] %vm1953, 0.0
          %1989 = vst.msk [vmem:[#allocation3 + $0x120] sm:$0xff] %vm1951, 0.0
          %1990 = vst.msk [vmem:[#allocation3 + $0x128] sm:$0x3] %vm1953, 0.0
          %1991 = vst.msk [vmem:[#allocation3 + $0x130] sm:$0xff] %vm1951, 0.0
          %1992 = vst.msk [vmem:[#allocation3 + $0x138] sm:$0x3] %vm1953, 0.0
          %s1993 = scalar_lea.vmem [#allocation3], 16
          %1994 = vst.msk [vmem:[%s1993 + $0x1] sm:$0xff] %vm1951, %v1935
          %1995 = vst.msk [vmem:[%s1993 + $0x11] sm:$0xff] %vm1951, %v1936
          %1996 = vst.msk [vmem:[%s1993 + $0x21] sm:$0xff] %vm1951, %v1937
          %1997 = vst.msk [vmem:[%s1993 + $0x31] sm:$0xff] %vm1951, %v1938
          %1998 = vst.msk [vmem:[%s1993 + $0x41] sm:$0xff] %vm1951, %v1939
          %1999 = vst.msk [vmem:[%s1993 + $0x51] sm:$0xff] %vm1951, %v1940
          %2000 = vst.msk [vmem:[%s1993 + $0x61] sm:$0xff] %vm1951, %v1941
          %2001 = vst.msk [vmem:[%s1993 + $0x71] sm:$0xff] %vm1951, %v1942
          %2002 = vst.msk [vmem:[%s1993 + $0xa1] sm:$0xff] %vm1951, %v1943
          %2003 = vst.msk [vmem:[%s1993 + $0xb1] sm:$0xff] %vm1951, %v1944
          %2004 = vst.msk [vmem:[%s1993 + $0xc1] sm:$0xff] %vm1951, %v1945
          %2005 = vst.msk [vmem:[%s1993 + $0xd1] sm:$0xff] %vm1951, %v1946
          %2006 = vst.msk [vmem:[%s1993 + $0xe1] sm:$0xff] %vm1951, %v1947
          %2007 = vst.msk [vmem:[%s1993 + $0xf1] sm:$0xff] %vm1951, %v1948
          %2008 = vst.msk [vmem:[%s1993 + $0x101] sm:$0xff] %vm1951, %v1949
          %2009 = vst.msk [vmem:[%s1993 + $0x111] sm:$0xff] %vm1951, %v1950
          %v2010 = vld [vmem:[#allocation3] sm:$0xff]
          %v2011 = vld [vmem:[#allocation3 + $0x10] sm:$0xff]
          %v2012 = vld [vmem:[#allocation3 + $0x20] sm:$0xff]
          %v2013 = vld [vmem:[#allocation3 + $0x30] sm:$0xff]
          %v2014 = vld [vmem:[#allocation3 + $0x40] sm:$0xff]
          %v2015 = vld [vmem:[#allocation3 + $0x50] sm:$0xff]
          %v2016 = vld [vmem:[#allocation3 + $0x60] sm:$0xff]
          %v2017 = vld [vmem:[#allocation3 + $0x70] sm:$0xff]
          %v2018 = vld [vmem:[#allocation3 + $0xa0] sm:$0xff]
          %v2019 = vld [vmem:[#allocation3 + $0xb0] sm:$0xff]
          %v2020 = vld [vmem:[#allocation3 + $0xc0] sm:$0xff]
          %v2021 = vld [vmem:[#allocation3 + $0xd0] sm:$0xff]
          %v2022 = vld [vmem:[#allocation3 + $0xe0] sm:$0xff]
          %v2023 = vld [vmem:[#allocation3 + $0xf0] sm:$0xff]
          %v2024 = vld [vmem:[#allocation3 + $0x100] sm:$0xff]
          %v2025 = vld [vmem:[#allocation3 + $0x110] sm:$0xff]
          %v2026 = vld [vmem:[#allocation12] sm:$0xff]
          %v2027 = vld [vmem:[#allocation12 + $0x8] sm:$0xff]
          %v2028 = vld [vmem:[#allocation3 + $0x1] sm:$0xff]
          %v2029 = vld [vmem:[#allocation3 + $0x11] sm:$0xff]
          %v2030 = vld [vmem:[#allocation3 + $0x21] sm:$0xff]
          %v2031 = vld [vmem:[#allocation3 + $0x31] sm:$0xff]
          %v2032 = vld [vmem:[#allocation3 + $0x41] sm:$0xff]
          %v2033 = vld [vmem:[#allocation3 + $0x51] sm:$0xff]
          %v2034 = vld [vmem:[#allocation3 + $0x61] sm:$0xff]
          %v2035 = vld [vmem:[#allocation3 + $0x71] sm:$0xff]
          %v2036 = vld [vmem:[#allocation3 + $0xa1] sm:$0xff]
          %v2037 = vld [vmem:[#allocation3 + $0xb1] sm:$0xff]
          %v2038 = vld [vmem:[#allocation3 + $0xc1] sm:$0xff]
          %v2039 = vld [vmem:[#allocation3 + $0xd1] sm:$0xff]
          %v2040 = vld [vmem:[#allocation3 + $0xe1] sm:$0xff]
          %v2041 = vld [vmem:[#allocation3 + $0xf1] sm:$0xff]
          %v2042 = vld [vmem:[#allocation3 + $0x101] sm:$0xff]
          %v2043 = vld [vmem:[#allocation3 + $0x111] sm:$0xff]
          %s2044 = scalar_lea.vmem [#allocation12], 16
          %v2045 = vld [vmem:[%s2044] sm:$0xff]
          %v2046 = vld [vmem:[%s2044 + $0x8] sm:$0xff]
          %v2048 = vsel %vm1951, %v2028, 0
          %v2051 = vsel %vm1951, %v2029, 0
          %v2054 = vsel %vm1951, %v2030, 0
          %v2057 = vsel %vm1951, %v2031, 0
          %v2060 = vsel %vm1951, %v2032, 0
          %v2063 = vsel %vm1951, %v2033, 0
          %v2066 = vsel %vm1951, %v2034, 0
          %v2069 = vsel %vm1951, %v2035, 0
          %v2072 = vsel %vm1951, %v2036, 0
          %v2075 = vsel %vm1951, %v2037, 0
          %v2078 = vsel %vm1951, %v2038, 0
          %v2081 = vsel %vm1951, %v2039, 0
          %v2084 = vsel %vm1951, %v2040, 0
          %v2087 = vsel %vm1951, %v2041, 0
          %v2090 = vsel %vm1951, %v2042, 0
          %v2093 = vsel %vm1951, %v2043, 0
          %2095 = vmatpush.msra.mxu0 0.0
          %2096 = vmatpush.msra.mxu0 0.0
          %2097 = vmatpush.msra.mxu0 0.0
          %2098 = vmatpush.msra.mxu0 0.0
          %2099 = vmatpush.msra.mxu0 0.0
          %2100 = vmatpush.msra.mxu0 0.0
          %2101 = vmatpush.msra.mxu0 0.0
          %2102 = vmatpush.msra.mxu0 0.0
          %2103 = vmatpush.msra.mxu0 0.0
          %2104 = vmatpush.msra.mxu0 0.0
          %2105 = vmatpush.msra.mxu0 0.0
          %2106 = vmatpush.msra.mxu0 0.0
          %2107 = vmatpush.msra.mxu0 0.0
          %2108 = vmatpush.msra.mxu0 0.0
          %2109 = vmatpush.msra.mxu0 %v2046
          %2110 = vmatpush.msra.mxu0 %v2045
          %2111 = vmatmul.f32.gmra.mxu0 %v2048
          %v2112 = vpop.f32.mrf.mxu0
          %v2113 = vadd.f32 0.0, %v2112
          %2114 = vmatmul.f32.gmra.mxu0 %v2051
          %v2115 = vpop.f32.mrf.mxu0
          %v2116 = vadd.f32 0.0, %v2115
          %2117 = vmatmul.f32.gmra.mxu0 %v2054
          %v2118 = vpop.f32.mrf.mxu0
          %v2119 = vadd.f32 0.0, %v2118
          %2120 = vmatmul.f32.gmra.mxu0 %v2057
          %v2121 = vpop.f32.mrf.mxu0
          %v2122 = vadd.f32 0.0, %v2121
          %2123 = vmatmul.f32.gmra.mxu0 %v2060
          %v2124 = vpop.f32.mrf.mxu0
          %v2125 = vadd.f32 0.0, %v2124
          %2126 = vmatmul.f32.gmra.mxu0 %v2063
          %v2127 = vpop.f32.mrf.mxu0
          %v2128 = vadd.f32 0.0, %v2127
          %2129 = vmatmul.f32.gmra.mxu0 %v2066
          %v2130 = vpop.f32.mrf.mxu0
          %v2131 = vadd.f32 0.0, %v2130
          %2132 = vmatmul.f32.gmra.mxu0 %v2069
          %v2133 = vpop.f32.mrf.mxu0
          %v2134 = vadd.f32 0.0, %v2133
          %2135 = vmatmul.f32.gmra.mxu0 %v2072
          %v2136 = vpop.f32.mrf.mxu0
          %v2137 = vadd.f32 0.0, %v2136
          %2138 = vmatmul.f32.gmra.mxu0 %v2075
          %v2139 = vpop.f32.mrf.mxu0
          %v2140 = vadd.f32 0.0, %v2139
          %2141 = vmatmul.f32.gmra.mxu0 %v2078
          %v2142 = vpop.f32.mrf.mxu0
          %v2143 = vadd.f32 0.0, %v2142
          %2144 = vmatmul.f32.gmra.mxu0 %v2081
          %v2145 = vpop.f32.mrf.mxu0
          %v2146 = vadd.f32 0.0, %v2145
          %2147 = vmatmul.f32.gmra.mxu0 %v2084
          %v2148 = vpop.f32.mrf.mxu0
          %v2149 = vadd.f32 0.0, %v2148
          %2150 = vmatmul.f32.gmra.mxu0 %v2087
          %v2151 = vpop.f32.mrf.mxu0
          %v2152 = vadd.f32 0.0, %v2151
          %2153 = vmatmul.f32.gmra.mxu0 %v2090
          %v2154 = vpop.f32.mrf.mxu0
          %v2155 = vadd.f32 0.0, %v2154
          %2156 = vmatmul.f32.gmra.mxu0 %v2093
          %v2157 = vpop.f32.mrf.mxu0
          %v2158 = vadd.f32 0.0, %v2157
          %2159 = vdwg.mxu0
          %v2161 = vsel %vm1951, %v2010, 0
          %v2164 = vsel %vm1951, %v2011, 0
          %v2167 = vsel %vm1951, %v2012, 0
          %v2170 = vsel %vm1951, %v2013, 0
          %v2173 = vsel %vm1951, %v2014, 0
          %v2176 = vsel %vm1951, %v2015, 0
          %v2179 = vsel %vm1951, %v2016, 0
          %v2182 = vsel %vm1951, %v2017, 0
          %v2185 = vsel %vm1951, %v2018, 0
          %v2188 = vsel %vm1951, %v2019, 0
          %v2191 = vsel %vm1951, %v2020, 0
          %v2194 = vsel %vm1951, %v2021, 0
          %v2197 = vsel %vm1951, %v2022, 0
          %v2200 = vsel %vm1951, %v2023, 0
          %v2203 = vsel %vm1951, %v2024, 0
          %v2206 = vsel %vm1951, %v2025, 0
          %2208 = vmatpush.msra.mxu0 0.0
          %2209 = vmatpush.msra.mxu0 0.0
          %2210 = vmatpush.msra.mxu0 0.0
          %2211 = vmatpush.msra.mxu0 0.0
          %2212 = vmatpush.msra.mxu0 0.0
          %2213 = vmatpush.msra.mxu0 0.0
          %2214 = vmatpush.msra.mxu0 0.0
          %2215 = vmatpush.msra.mxu0 0.0
          %2216 = vmatpush.msra.mxu0 0.0
          %2217 = vmatpush.msra.mxu0 0.0
          %2218 = vmatpush.msra.mxu0 0.0
          %2219 = vmatpush.msra.mxu0 0.0
          %2220 = vmatpush.msra.mxu0 0.0
          %2221 = vmatpush.msra.mxu0 0.0
          %2222 = vmatpush.msra.mxu0 %v2027
          %2223 = vmatpush.msra.mxu0 %v2026
          %2224 = vmatmul.f32.gmra.mxu0 %v2161
          %v2225 = vpop.f32.mrf.mxu0
          %v2226 = vadd.f32 %v2113, %v2225
          %2227 = vmatmul.f32.gmra.mxu0 %v2164
          %v2228 = vpop.f32.mrf.mxu0
          %v2229 = vadd.f32 %v2116, %v2228
          %2230 = vmatmul.f32.gmra.mxu0 %v2167
          %v2231 = vpop.f32.mrf.mxu0
          %v2232 = vadd.f32 %v2119, %v2231
          %2233 = vmatmul.f32.gmra.mxu0 %v2170
          %v2234 = vpop.f32.mrf.mxu0
          %v2235 = vadd.f32 %v2122, %v2234
          %2236 = vmatmul.f32.gmra.mxu0 %v2173
          %v2237 = vpop.f32.mrf.mxu0
          %v2238 = vadd.f32 %v2125, %v2237
          %2239 = vmatmul.f32.gmra.mxu0 %v2176
          %v2240 = vpop.f32.mrf.mxu0
          %v2241 = vadd.f32 %v2128, %v2240
          %2242 = vmatmul.f32.gmra.mxu0 %v2179
          %v2243 = vpop.f32.mrf.mxu0
          %v2244 = vadd.f32 %v2131, %v2243
          %2245 = vmatmul.f32.gmra.mxu0 %v2182
          %v2246 = vpop.f32.mrf.mxu0
          %v2247 = vadd.f32 %v2134, %v2246
          %2248 = vmatmul.f32.gmra.mxu0 %v2185
          %v2249 = vpop.f32.mrf.mxu0
          %v2250 = vadd.f32 %v2137, %v2249
          %2251 = vmatmul.f32.gmra.mxu0 %v2188
          %v2252 = vpop.f32.mrf.mxu0
          %v2253 = vadd.f32 %v2140, %v2252
          %2254 = vmatmul.f32.gmra.mxu0 %v2191
          %v2255 = vpop.f32.mrf.mxu0
          %v2256 = vadd.f32 %v2143, %v2255
          %2257 = vmatmul.f32.gmra.mxu0 %v2194
          %v2258 = vpop.f32.mrf.mxu0
          %v2259 = vadd.f32 %v2146, %v2258
          %2260 = vmatmul.f32.gmra.mxu0 %v2197
          %v2261 = vpop.f32.mrf.mxu0
          %v2262 = vadd.f32 %v2149, %v2261
          %2263 = vmatmul.f32.gmra.mxu0 %v2200
          %v2264 = vpop.f32.mrf.mxu0
          %v2265 = vadd.f32 %v2152, %v2264
          %2266 = vmatmul.f32.gmra.mxu0 %v2203
          %v2267 = vpop.f32.mrf.mxu0
          %v2268 = vadd.f32 %v2155, %v2267
          %2269 = vmatmul.f32.gmra.mxu0 %v2206
          %v2270 = vpop.f32.mrf.mxu0
          %v2271 = vadd.f32 %v2158, %v2270
          %2272 = vdwg.mxu0
          %v2273 = vld [vmem:[#allocation3 + $0x2] sm:$0xff]
          %v2274 = vld [vmem:[#allocation3 + $0x12] sm:$0xff]
          %v2275 = vld [vmem:[#allocation3 + $0x22] sm:$0xff]
          %v2276 = vld [vmem:[#allocation3 + $0x32] sm:$0xff]
          %v2277 = vld [vmem:[#allocation3 + $0x42] sm:$0xff]
          %v2278 = vld [vmem:[#allocation3 + $0x52] sm:$0xff]
          %v2279 = vld [vmem:[#allocation3 + $0x62] sm:$0xff]
          %v2280 = vld [vmem:[#allocation3 + $0x72] sm:$0xff]
          %v2281 = vld [vmem:[#allocation3 + $0xa2] sm:$0xff]
          %v2282 = vld [vmem:[#allocation3 + $0xb2] sm:$0xff]
          %v2283 = vld [vmem:[#allocation3 + $0xc2] sm:$0xff]
          %v2284 = vld [vmem:[#allocation3 + $0xd2] sm:$0xff]
          %v2285 = vld [vmem:[#allocation3 + $0xe2] sm:$0xff]
          %v2286 = vld [vmem:[#allocation3 + $0xf2] sm:$0xff]
          %v2287 = vld [vmem:[#allocation3 + $0x102] sm:$0xff]
          %v2288 = vld [vmem:[#allocation3 + $0x112] sm:$0xff]
          %s2289 = scalar_lea.vmem [#allocation12], 32
          %v2290 = vld [vmem:[%s2289] sm:$0xff]
          %v2291 = vld [vmem:[%s2289 + $0x8] sm:$0xff]
          %v2293 = vsel %vm1951, %v2273, 0
          %v2296 = vsel %vm1951, %v2274, 0
          %v2299 = vsel %vm1951, %v2275, 0
          %v2302 = vsel %vm1951, %v2276, 0
          %v2305 = vsel %vm1951, %v2277, 0
          %v2308 = vsel %vm1951, %v2278, 0
          %v2311 = vsel %vm1951, %v2279, 0
          %v2314 = vsel %vm1951, %v2280, 0
          %v2317 = vsel %vm1951, %v2281, 0
          %v2320 = vsel %vm1951, %v2282, 0
          %v2323 = vsel %vm1951, %v2283, 0
          %v2326 = vsel %vm1951, %v2284, 0
          %v2329 = vsel %vm1951, %v2285, 0
          %v2332 = vsel %vm1951, %v2286, 0
          %v2335 = vsel %vm1951, %v2287, 0
          %v2338 = vsel %vm1951, %v2288, 0
          %2340 = vmatpush.msra.mxu0 0.0
          %2341 = vmatpush.msra.mxu0 0.0
          %2342 = vmatpush.msra.mxu0 0.0
          %2343 = vmatpush.msra.mxu0 0.0
          %2344 = vmatpush.msra.mxu0 0.0
          %2345 = vmatpush.msra.mxu0 0.0
          %2346 = vmatpush.msra.mxu0 0.0
          %2347 = vmatpush.msra.mxu0 0.0
          %2348 = vmatpush.msra.mxu0 0.0
          %2349 = vmatpush.msra.mxu0 0.0
          %2350 = vmatpush.msra.mxu0 0.0
          %2351 = vmatpush.msra.mxu0 0.0
          %2352 = vmatpush.msra.mxu0 0.0
          %2353 = vmatpush.msra.mxu0 0.0
          %2354 = vmatpush.msra.mxu0 %v2291
          %2355 = vmatpush.msra.mxu0 %v2290
          %2356 = vmatmul.f32.gmra.mxu0 %v2293
          %v2357 = vpop.f32.mrf.mxu0
          %v2358 = vadd.f32 0.0, %v2357
          %2359 = vmatmul.f32.gmra.mxu0 %v2296
          %v2360 = vpop.f32.mrf.mxu0
          %v2361 = vadd.f32 0.0, %v2360
          %2362 = vmatmul.f32.gmra.mxu0 %v2299
          %v2363 = vpop.f32.mrf.mxu0
          %v2364 = vadd.f32 0.0, %v2363
          %2365 = vmatmul.f32.gmra.mxu0 %v2302
          %v2366 = vpop.f32.mrf.mxu0
          %v2367 = vadd.f32 0.0, %v2366
          %2368 = vmatmul.f32.gmra.mxu0 %v2305
          %v2369 = vpop.f32.mrf.mxu0
          %v2370 = vadd.f32 0.0, %v2369
          %2371 = vmatmul.f32.gmra.mxu0 %v2308
          %v2372 = vpop.f32.mrf.mxu0
          %v2373 = vadd.f32 0.0, %v2372
          %2374 = vmatmul.f32.gmra.mxu0 %v2311
          %v2375 = vpop.f32.mrf.mxu0
          %v2376 = vadd.f32 0.0, %v2375
          %2377 = vmatmul.f32.gmra.mxu0 %v2314
          %v2378 = vpop.f32.mrf.mxu0
          %v2379 = vadd.f32 0.0, %v2378
          %2380 = vmatmul.f32.gmra.mxu0 %v2317
          %v2381 = vpop.f32.mrf.mxu0
          %v2382 = vadd.f32 0.0, %v2381
          %2383 = vmatmul.f32.gmra.mxu0 %v2320
          %v2384 = vpop.f32.mrf.mxu0
          %v2385 = vadd.f32 0.0, %v2384
          %2386 = vmatmul.f32.gmra.mxu0 %v2323
          %v2387 = vpop.f32.mrf.mxu0
          %v2388 = vadd.f32 0.0, %v2387
          %2389 = vmatmul.f32.gmra.mxu0 %v2326
          %v2390 = vpop.f32.mrf.mxu0
          %v2391 = vadd.f32 0.0, %v2390
          %2392 = vmatmul.f32.gmra.mxu0 %v2329
          %v2393 = vpop.f32.mrf.mxu0
          %v2394 = vadd.f32 0.0, %v2393
          %2395 = vmatmul.f32.gmra.mxu0 %v2332
          %v2396 = vpop.f32.mrf.mxu0
          %v2397 = vadd.f32 0.0, %v2396
          %2398 = vmatmul.f32.gmra.mxu0 %v2335
          %v2399 = vpop.f32.mrf.mxu0
          %v2400 = vadd.f32 0.0, %v2399
          %2401 = vmatmul.f32.gmra.mxu0 %v2338
          %v2402 = vpop.f32.mrf.mxu0
          %v2403 = vadd.f32 0.0, %v2402
          %2404 = vdwg.mxu0
          %v2405 = vadd.f32 %v2226, %v2358
          %v2406 = vadd.f32 %v2229, %v2361
          %v2407 = vadd.f32 %v2232, %v2364
          %v2408 = vadd.f32 %v2235, %v2367
          %v2409 = vadd.f32 %v2238, %v2370
          %v2410 = vadd.f32 %v2241, %v2373
          %v2411 = vadd.f32 %v2244, %v2376
          %v2412 = vadd.f32 %v2247, %v2379
          %v2413 = vadd.f32 %v2250, %v2382
          %v2414 = vadd.f32 %v2253, %v2385
          %v2415 = vadd.f32 %v2256, %v2388
          %v2416 = vadd.f32 %v2259, %v2391
          %v2417 = vadd.f32 %v2262, %v2394
          %v2418 = vadd.f32 %v2265, %v2397
          %v2419 = vadd.f32 %v2268, %v2400
          %v2420 = vadd.f32 %v2271, %v2403
          %v2421 = vld [vmem:[%s1993] sm:$0xff]
          %v2422 = vld [vmem:[%s1993 + $0x10] sm:$0xff]
          %v2423 = vld [vmem:[%s1993 + $0x20] sm:$0xff]
          %v2424 = vld [vmem:[%s1993 + $0x30] sm:$0xff]
          %v2425 = vld [vmem:[%s1993 + $0x40] sm:$0xff]
          %v2426 = vld [vmem:[%s1993 + $0x50] sm:$0xff]
          %v2427 = vld [vmem:[%s1993 + $0x60] sm:$0xff]
          %v2428 = vld [vmem:[%s1993 + $0x70] sm:$0xff]
          %v2429 = vld [vmem:[%s1993 + $0xa0] sm:$0xff]
          %v2430 = vld [vmem:[%s1993 + $0xb0] sm:$0xff]
          %v2431 = vld [vmem:[%s1993 + $0xc0] sm:$0xff]
          %v2432 = vld [vmem:[%s1993 + $0xd0] sm:$0xff]
          %v2433 = vld [vmem:[%s1993 + $0xe0] sm:$0xff]
          %v2434 = vld [vmem:[%s1993 + $0xf0] sm:$0xff]
          %v2435 = vld [vmem:[%s1993 + $0x100] sm:$0xff]
          %v2436 = vld [vmem:[%s1993 + $0x110] sm:$0xff]
          %s2437 = scalar_lea.vmem [#allocation12], 48
          %v2438 = vld [vmem:[%s2437] sm:$0xff]
          %v2439 = vld [vmem:[%s2437 + $0x8] sm:$0xff]
          %v2441 = vsel %vm1951, %v2421, 0
          %v2444 = vsel %vm1951, %v2422, 0
          %v2447 = vsel %vm1951, %v2423, 0
          %v2450 = vsel %vm1951, %v2424, 0
          %v2453 = vsel %vm1951, %v2425, 0
          %v2456 = vsel %vm1951, %v2426, 0
          %v2459 = vsel %vm1951, %v2427, 0
          %v2462 = vsel %vm1951, %v2428, 0
          %v2465 = vsel %vm1951, %v2429, 0
          %v2468 = vsel %vm1951, %v2430, 0
          %v2471 = vsel %vm1951, %v2431, 0
          %v2474 = vsel %vm1951, %v2432, 0
          %v2477 = vsel %vm1951, %v2433, 0
          %v2480 = vsel %vm1951, %v2434, 0
          %v2483 = vsel %vm1951, %v2435, 0
          %v2486 = vsel %vm1951, %v2436, 0
          %2488 = vmatpush.msra.mxu0 0.0
          %2489 = vmatpush.msra.mxu0 0.0
          %2490 = vmatpush.msra.mxu0 0.0
          %2491 = vmatpush.msra.mxu0 0.0
          %2492 = vmatpush.msra.mxu0 0.0
          %2493 = vmatpush.msra.mxu0 0.0
          %2494 = vmatpush.msra.mxu0 0.0
          %2495 = vmatpush.msra.mxu0 0.0
          %2496 = vmatpush.msra.mxu0 0.0
          %2497 = vmatpush.msra.mxu0 0.0
          %2498 = vmatpush.msra.mxu0 0.0
          %2499 = vmatpush.msra.mxu0 0.0
          %2500 = vmatpush.msra.mxu0 0.0
          %2501 = vmatpush.msra.mxu0 0.0
          %2502 = vmatpush.msra.mxu0 %v2439
          %2503 = vmatpush.msra.mxu0 %v2438
          %2504 = vmatmul.f32.gmra.mxu0 %v2441
          %v2505 = vpop.f32.mrf.mxu0
          %v2506 = vadd.f32 0.0, %v2505
          %2507 = vmatmul.f32.gmra.mxu0 %v2444
          %v2508 = vpop.f32.mrf.mxu0
          %v2509 = vadd.f32 0.0, %v2508
          %2510 = vmatmul.f32.gmra.mxu0 %v2447
          %v2511 = vpop.f32.mrf.mxu0
          %v2512 = vadd.f32 0.0, %v2511
          %2513 = vmatmul.f32.gmra.mxu0 %v2450
          %v2514 = vpop.f32.mrf.mxu0
          %v2515 = vadd.f32 0.0, %v2514
          %2516 = vmatmul.f32.gmra.mxu0 %v2453
          %v2517 = vpop.f32.mrf.mxu0
          %v2518 = vadd.f32 0.0, %v2517
          %2519 = vmatmul.f32.gmra.mxu0 %v2456
          %v2520 = vpop.f32.mrf.mxu0
          %v2521 = vadd.f32 0.0, %v2520
          %2522 = vmatmul.f32.gmra.mxu0 %v2459
          %v2523 = vpop.f32.mrf.mxu0
          %v2524 = vadd.f32 0.0, %v2523
          %2525 = vmatmul.f32.gmra.mxu0 %v2462
          %v2526 = vpop.f32.mrf.mxu0
          %v2527 = vadd.f32 0.0, %v2526
          %2528 = vmatmul.f32.gmra.mxu0 %v2465
          %v2529 = vpop.f32.mrf.mxu0
          %v2530 = vadd.f32 0.0, %v2529
          %2531 = vmatmul.f32.gmra.mxu0 %v2468
          %v2532 = vpop.f32.mrf.mxu0
          %v2533 = vadd.f32 0.0, %v2532
          %2534 = vmatmul.f32.gmra.mxu0 %v2471
          %v2535 = vpop.f32.mrf.mxu0
          %v2536 = vadd.f32 0.0, %v2535
          %2537 = vmatmul.f32.gmra.mxu0 %v2474
          %v2538 = vpop.f32.mrf.mxu0
          %v2539 = vadd.f32 0.0, %v2538
          %2540 = vmatmul.f32.gmra.mxu0 %v2477
          %v2541 = vpop.f32.mrf.mxu0
          %v2542 = vadd.f32 0.0, %v2541
          %2543 = vmatmul.f32.gmra.mxu0 %v2480
          %v2544 = vpop.f32.mrf.mxu0
          %v2545 = vadd.f32 0.0, %v2544
          %2546 = vmatmul.f32.gmra.mxu0 %v2483
          %v2547 = vpop.f32.mrf.mxu0
          %v2548 = vadd.f32 0.0, %v2547
          %2549 = vmatmul.f32.gmra.mxu0 %v2486
          %v2550 = vpop.f32.mrf.mxu0
          %v2551 = vadd.f32 0.0, %v2550
          %2552 = vdwg.mxu0
          %v2553 = vadd.f32 %v2405, %v2506
          %v2554 = vadd.f32 %v2406, %v2509
          %v2555 = vadd.f32 %v2407, %v2512
          %v2556 = vadd.f32 %v2408, %v2515
          %v2557 = vadd.f32 %v2409, %v2518
          %v2558 = vadd.f32 %v2410, %v2521
          %v2559 = vadd.f32 %v2411, %v2524
          %v2560 = vadd.f32 %v2412, %v2527
          %v2561 = vadd.f32 %v2413, %v2530
          %v2562 = vadd.f32 %v2414, %v2533
          %v2563 = vadd.f32 %v2415, %v2536
          %v2564 = vadd.f32 %v2416, %v2539
          %v2565 = vadd.f32 %v2417, %v2542
          %v2566 = vadd.f32 %v2418, %v2545
          %v2567 = vadd.f32 %v2419, %v2548
          %v2568 = vadd.f32 %v2420, %v2551
          %v2569 = vld [vmem:[%s1993 + $0x1] sm:$0xff]
          %v2570 = vld [vmem:[%s1993 + $0x11] sm:$0xff]
          %v2571 = vld [vmem:[%s1993 + $0x21] sm:$0xff]
          %v2572 = vld [vmem:[%s1993 + $0x31] sm:$0xff]
          %v2573 = vld [vmem:[%s1993 + $0x41] sm:$0xff]
          %v2574 = vld [vmem:[%s1993 + $0x51] sm:$0xff]
          %v2575 = vld [vmem:[%s1993 + $0x61] sm:$0xff]
          %v2576 = vld [vmem:[%s1993 + $0x71] sm:$0xff]
          %v2577 = vld [vmem:[%s1993 + $0xa1] sm:$0xff]
          %v2578 = vld [vmem:[%s1993 + $0xb1] sm:$0xff]
          %v2579 = vld [vmem:[%s1993 + $0xc1] sm:$0xff]
          %v2580 = vld [vmem:[%s1993 + $0xd1] sm:$0xff]
          %v2581 = vld [vmem:[%s1993 + $0xe1] sm:$0xff]
          %v2582 = vld [vmem:[%s1993 + $0xf1] sm:$0xff]
          %v2583 = vld [vmem:[%s1993 + $0x101] sm:$0xff]
          %v2584 = vld [vmem:[%s1993 + $0x111] sm:$0xff]
          %s2585 = scalar_lea.vmem [#allocation12], 64
          %v2586 = vld [vmem:[%s2585] sm:$0xff]
          %v2587 = vld [vmem:[%s2585 + $0x8] sm:$0xff]
          %v2589 = vsel %vm1951, %v2569, 0
          %v2592 = vsel %vm1951, %v2570, 0
          %v2595 = vsel %vm1951, %v2571, 0
          %v2598 = vsel %vm1951, %v2572, 0
          %v2601 = vsel %vm1951, %v2573, 0
          %v2604 = vsel %vm1951, %v2574, 0
          %v2607 = vsel %vm1951, %v2575, 0
          %v2610 = vsel %vm1951, %v2576, 0
          %v2613 = vsel %vm1951, %v2577, 0
          %v2616 = vsel %vm1951, %v2578, 0
          %v2619 = vsel %vm1951, %v2579, 0
          %v2622 = vsel %vm1951, %v2580, 0
          %v2625 = vsel %vm1951, %v2581, 0
          %v2628 = vsel %vm1951, %v2582, 0
          %v2631 = vsel %vm1951, %v2583, 0
          %v2634 = vsel %vm1951, %v2584, 0
          %2636 = vmatpush.msra.mxu0 0.0
          %2637 = vmatpush.msra.mxu0 0.0
          %2638 = vmatpush.msra.mxu0 0.0
          %2639 = vmatpush.msra.mxu0 0.0
          %2640 = vmatpush.msra.mxu0 0.0
          %2641 = vmatpush.msra.mxu0 0.0
          %2642 = vmatpush.msra.mxu0 0.0
          %2643 = vmatpush.msra.mxu0 0.0
          %2644 = vmatpush.msra.mxu0 0.0
          %2645 = vmatpush.msra.mxu0 0.0
          %2646 = vmatpush.msra.mxu0 0.0
          %2647 = vmatpush.msra.mxu0 0.0
          %2648 = vmatpush.msra.mxu0 0.0
          %2649 = vmatpush.msra.mxu0 0.0
          %2650 = vmatpush.msra.mxu0 %v2587
          %2651 = vmatpush.msra.mxu0 %v2586
          %2652 = vmatmul.f32.gmra.mxu0 %v2589
          %v2653 = vpop.f32.mrf.mxu0
          %v2654 = vadd.f32 0.0, %v2653
          %2655 = vmatmul.f32.gmra.mxu0 %v2592
          %v2656 = vpop.f32.mrf.mxu0
          %v2657 = vadd.f32 0.0, %v2656
          %2658 = vmatmul.f32.gmra.mxu0 %v2595
          %v2659 = vpop.f32.mrf.mxu0
          %v2660 = vadd.f32 0.0, %v2659
          %2661 = vmatmul.f32.gmra.mxu0 %v2598
          %v2662 = vpop.f32.mrf.mxu0
          %v2663 = vadd.f32 0.0, %v2662
          %2664 = vmatmul.f32.gmra.mxu0 %v2601
          %v2665 = vpop.f32.mrf.mxu0
          %v2666 = vadd.f32 0.0, %v2665
          %2667 = vmatmul.f32.gmra.mxu0 %v2604
          %v2668 = vpop.f32.mrf.mxu0
          %v2669 = vadd.f32 0.0, %v2668
          %2670 = vmatmul.f32.gmra.mxu0 %v2607
          %v2671 = vpop.f32.mrf.mxu0
          %v2672 = vadd.f32 0.0, %v2671
          %2673 = vmatmul.f32.gmra.mxu0 %v2610
          %v2674 = vpop.f32.mrf.mxu0
          %v2675 = vadd.f32 0.0, %v2674
          %2676 = vmatmul.f32.gmra.mxu0 %v2613
          %v2677 = vpop.f32.mrf.mxu0
          %v2678 = vadd.f32 0.0, %v2677
          %2679 = vmatmul.f32.gmra.mxu0 %v2616
          %v2680 = vpop.f32.mrf.mxu0
          %v2681 = vadd.f32 0.0, %v2680
          %2682 = vmatmul.f32.gmra.mxu0 %v2619
          %v2683 = vpop.f32.mrf.mxu0
          %v2684 = vadd.f32 0.0, %v2683
          %2685 = vmatmul.f32.gmra.mxu0 %v2622
          %v2686 = vpop.f32.mrf.mxu0
          %v2687 = vadd.f32 0.0, %v2686
          %2688 = vmatmul.f32.gmra.mxu0 %v2625
          %v2689 = vpop.f32.mrf.mxu0
          %v2690 = vadd.f32 0.0, %v2689
          %2691 = vmatmul.f32.gmra.mxu0 %v2628
          %v2692 = vpop.f32.mrf.mxu0
          %v2693 = vadd.f32 0.0, %v2692
          %2694 = vmatmul.f32.gmra.mxu0 %v2631
          %v2695 = vpop.f32.mrf.mxu0
          %v2696 = vadd.f32 0.0, %v2695
          %2697 = vmatmul.f32.gmra.mxu0 %v2634
          %v2698 = vpop.f32.mrf.mxu0
          %v2699 = vadd.f32 0.0, %v2698
          %2700 = vdwg.mxu0
          %v2701 = vadd.f32 %v2553, %v2654
          %v2702 = vadd.f32 %v2554, %v2657
          %v2703 = vadd.f32 %v2555, %v2660
          %v2704 = vadd.f32 %v2556, %v2663
          %v2705 = vadd.f32 %v2557, %v2666
          %v2706 = vadd.f32 %v2558, %v2669
          %v2707 = vadd.f32 %v2559, %v2672
          %v2708 = vadd.f32 %v2560, %v2675
          %v2709 = vadd.f32 %v2561, %v2678
          %v2710 = vadd.f32 %v2562, %v2681
          %v2711 = vadd.f32 %v2563, %v2684
          %v2712 = vadd.f32 %v2564, %v2687
          %v2713 = vadd.f32 %v2565, %v2690
          %v2714 = vadd.f32 %v2566, %v2693
          %v2715 = vadd.f32 %v2567, %v2696
          %v2716 = vadd.f32 %v2568, %v2699
          %v2717 = vld [vmem:[%s1993 + $0x2] sm:$0xff]
          %v2718 = vld [vmem:[%s1993 + $0x12] sm:$0xff]
          %v2719 = vld [vmem:[%s1993 + $0x22] sm:$0xff]
          %v2720 = vld [vmem:[%s1993 + $0x32] sm:$0xff]
          %v2721 = vld [vmem:[%s1993 + $0x42] sm:$0xff]
          %v2722 = vld [vmem:[%s1993 + $0x52] sm:$0xff]
          %v2723 = vld [vmem:[%s1993 + $0x62] sm:$0xff]
          %v2724 = vld [vmem:[%s1993 + $0x72] sm:$0xff]
          %v2725 = vld [vmem:[%s1993 + $0xa2] sm:$0xff]
          %v2726 = vld [vmem:[%s1993 + $0xb2] sm:$0xff]
          %v2727 = vld [vmem:[%s1993 + $0xc2] sm:$0xff]
          %v2728 = vld [vmem:[%s1993 + $0xd2] sm:$0xff]
          %v2729 = vld [vmem:[%s1993 + $0xe2] sm:$0xff]
          %v2730 = vld [vmem:[%s1993 + $0xf2] sm:$0xff]
          %v2731 = vld [vmem:[%s1993 + $0x102] sm:$0xff]
          %v2732 = vld [vmem:[%s1993 + $0x112] sm:$0xff]
          %s2733 = scalar_lea.vmem [#allocation12], 80
          %v2734 = vld [vmem:[%s2733] sm:$0xff]
          %v2735 = vld [vmem:[%s2733 + $0x8] sm:$0xff]
          %v2737 = vsel %vm1951, %v2717, 0
          %v2740 = vsel %vm1951, %v2718, 0
          %v2743 = vsel %vm1951, %v2719, 0
          %v2746 = vsel %vm1951, %v2720, 0
          %v2749 = vsel %vm1951, %v2721, 0
          %v2752 = vsel %vm1951, %v2722, 0
          %v2755 = vsel %vm1951, %v2723, 0
          %v2758 = vsel %vm1951, %v2724, 0
          %v2761 = vsel %vm1951, %v2725, 0
          %v2764 = vsel %vm1951, %v2726, 0
          %v2767 = vsel %vm1951, %v2727, 0
          %v2770 = vsel %vm1951, %v2728, 0
          %v2773 = vsel %vm1951, %v2729, 0
          %v2776 = vsel %vm1951, %v2730, 0
          %v2779 = vsel %vm1951, %v2731, 0
          %v2782 = vsel %vm1951, %v2732, 0
          %2784 = vmatpush.msra.mxu0 0.0
          %2785 = vmatpush.msra.mxu0 0.0
          %2786 = vmatpush.msra.mxu0 0.0
          %2787 = vmatpush.msra.mxu0 0.0
          %2788 = vmatpush.msra.mxu0 0.0
          %2789 = vmatpush.msra.mxu0 0.0
          %2790 = vmatpush.msra.mxu0 0.0
          %2791 = vmatpush.msra.mxu0 0.0
          %2792 = vmatpush.msra.mxu0 0.0
          %2793 = vmatpush.msra.mxu0 0.0
          %2794 = vmatpush.msra.mxu0 0.0
          %2795 = vmatpush.msra.mxu0 0.0
          %2796 = vmatpush.msra.mxu0 0.0
          %2797 = vmatpush.msra.mxu0 0.0
          %2798 = vmatpush.msra.mxu0 %v2735
          %2799 = vmatpush.msra.mxu0 %v2734
          %2800 = vmatmul.f32.gmra.mxu0 %v2737
          %v2801 = vpop.f32.mrf.mxu0
          %v2802 = vadd.f32 0.0, %v2801
          %2803 = vmatmul.f32.gmra.mxu0 %v2740
          %v2804 = vpop.f32.mrf.mxu0
          %v2805 = vadd.f32 0.0, %v2804
          %2806 = vmatmul.f32.gmra.mxu0 %v2743
          %v2807 = vpop.f32.mrf.mxu0
          %v2808 = vadd.f32 0.0, %v2807
          %2809 = vmatmul.f32.gmra.mxu0 %v2746
          %v2810 = vpop.f32.mrf.mxu0
          %v2811 = vadd.f32 0.0, %v2810
          %2812 = vmatmul.f32.gmra.mxu0 %v2749
          %v2813 = vpop.f32.mrf.mxu0
          %v2814 = vadd.f32 0.0, %v2813
          %2815 = vmatmul.f32.gmra.mxu0 %v2752
          %v2816 = vpop.f32.mrf.mxu0
          %v2817 = vadd.f32 0.0, %v2816
          %2818 = vmatmul.f32.gmra.mxu0 %v2755
          %v2819 = vpop.f32.mrf.mxu0
          %v2820 = vadd.f32 0.0, %v2819
          %2821 = vmatmul.f32.gmra.mxu0 %v2758
          %v2822 = vpop.f32.mrf.mxu0
          %v2823 = vadd.f32 0.0, %v2822
          %2824 = vmatmul.f32.gmra.mxu0 %v2761
          %v2825 = vpop.f32.mrf.mxu0
          %v2826 = vadd.f32 0.0, %v2825
          %2827 = vmatmul.f32.gmra.mxu0 %v2764
          %v2828 = vpop.f32.mrf.mxu0
          %v2829 = vadd.f32 0.0, %v2828
          %2830 = vmatmul.f32.gmra.mxu0 %v2767
          %v2831 = vpop.f32.mrf.mxu0
          %v2832 = vadd.f32 0.0, %v2831
          %2833 = vmatmul.f32.gmra.mxu0 %v2770
          %v2834 = vpop.f32.mrf.mxu0
          %v2835 = vadd.f32 0.0, %v2834
          %2836 = vmatmul.f32.gmra.mxu0 %v2773
          %v2837 = vpop.f32.mrf.mxu0
          %v2838 = vadd.f32 0.0, %v2837
          %2839 = vmatmul.f32.gmra.mxu0 %v2776
          %v2840 = vpop.f32.mrf.mxu0
          %v2841 = vadd.f32 0.0, %v2840
          %2842 = vmatmul.f32.gmra.mxu0 %v2779
          %v2843 = vpop.f32.mrf.mxu0
          %v2844 = vadd.f32 0.0, %v2843
          %2845 = vmatmul.f32.gmra.mxu0 %v2782
          %v2846 = vpop.f32.mrf.mxu0
          %v2847 = vadd.f32 0.0, %v2846
          %2848 = vdwg.mxu0
          %v2849 = vadd.f32 %v2701, %v2802
          %v2850 = vadd.f32 %v2702, %v2805
          %v2851 = vadd.f32 %v2703, %v2808
          %v2852 = vadd.f32 %v2704, %v2811
          %v2853 = vadd.f32 %v2705, %v2814
          %v2854 = vadd.f32 %v2706, %v2817
          %v2855 = vadd.f32 %v2707, %v2820
          %v2856 = vadd.f32 %v2708, %v2823
          %v2857 = vadd.f32 %v2709, %v2826
          %v2858 = vadd.f32 %v2710, %v2829
          %v2859 = vadd.f32 %v2711, %v2832
          %v2860 = vadd.f32 %v2712, %v2835
          %v2861 = vadd.f32 %v2713, %v2838
          %v2862 = vadd.f32 %v2714, %v2841
          %v2863 = vadd.f32 %v2715, %v2844
          %v2864 = vadd.f32 %v2716, %v2847
          %s2865 = scalar_lea.vmem [#allocation3], 32
          %v2866 = vld [vmem:[%s2865] sm:$0xff]
          %v2867 = vld [vmem:[%s2865 + $0x10] sm:$0xff]
          %v2868 = vld [vmem:[%s2865 + $0x20] sm:$0xff]
          %v2869 = vld [vmem:[%s2865 + $0x30] sm:$0xff]
          %v2870 = vld [vmem:[%s2865 + $0x40] sm:$0xff]
          %v2871 = vld [vmem:[%s2865 + $0x50] sm:$0xff]
          %v2872 = vld [vmem:[%s2865 + $0x60] sm:$0xff]
          %v2873 = vld [vmem:[%s2865 + $0x70] sm:$0xff]
          %v2874 = vld [vmem:[%s2865 + $0xa0] sm:$0xff]
          %v2875 = vld [vmem:[%s2865 + $0xb0] sm:$0xff]
          %v2876 = vld [vmem:[%s2865 + $0xc0] sm:$0xff]
          %v2877 = vld [vmem:[%s2865 + $0xd0] sm:$0xff]
          %v2878 = vld [vmem:[%s2865 + $0xe0] sm:$0xff]
          %v2879 = vld [vmem:[%s2865 + $0xf0] sm:$0xff]
          %v2880 = vld [vmem:[%s2865 + $0x100] sm:$0xff]
          %v2881 = vld [vmem:[%s2865 + $0x110] sm:$0xff]
          %s2882 = scalar_lea.vmem [#allocation12], 96
          %v2883 = vld [vmem:[%s2882] sm:$0xff]
          %v2884 = vld [vmem:[%s2882 + $0x8] sm:$0xff]
          %v2886 = vsel %vm1951, %v2866, 0
          %v2889 = vsel %vm1951, %v2867, 0
          %v2892 = vsel %vm1951, %v2868, 0
          %v2895 = vsel %vm1951, %v2869, 0
          %v2898 = vsel %vm1951, %v2870, 0
          %v2901 = vsel %vm1951, %v2871, 0
          %v2904 = vsel %vm1951, %v2872, 0
          %v2907 = vsel %vm1951, %v2873, 0
          %v2910 = vsel %vm1951, %v2874, 0
          %v2913 = vsel %vm1951, %v2875, 0
          %v2916 = vsel %vm1951, %v2876, 0
          %v2919 = vsel %vm1951, %v2877, 0
          %v2922 = vsel %vm1951, %v2878, 0
          %v2925 = vsel %vm1951, %v2879, 0
          %v2928 = vsel %vm1951, %v2880, 0
          %v2931 = vsel %vm1951, %v2881, 0
          %2933 = vmatpush.msra.mxu0 0.0
          %2934 = vmatpush.msra.mxu0 0.0
          %2935 = vmatpush.msra.mxu0 0.0
          %2936 = vmatpush.msra.mxu0 0.0
          %2937 = vmatpush.msra.mxu0 0.0
          %2938 = vmatpush.msra.mxu0 0.0
          %2939 = vmatpush.msra.mxu0 0.0
          %2940 = vmatpush.msra.mxu0 0.0
          %2941 = vmatpush.msra.mxu0 0.0
          %2942 = vmatpush.msra.mxu0 0.0
          %2943 = vmatpush.msra.mxu0 0.0
          %2944 = vmatpush.msra.mxu0 0.0
          %2945 = vmatpush.msra.mxu0 0.0
          %2946 = vmatpush.msra.mxu0 0.0
          %2947 = vmatpush.msra.mxu0 %v2884
          %2948 = vmatpush.msra.mxu0 %v2883
          %2949 = vmatmul.f32.gmra.mxu0 %v2886
          %v2950 = vpop.f32.mrf.mxu0
          %v2951 = vadd.f32 0.0, %v2950
          %2952 = vmatmul.f32.gmra.mxu0 %v2889
          %v2953 = vpop.f32.mrf.mxu0
          %v2954 = vadd.f32 0.0, %v2953
          %2955 = vmatmul.f32.gmra.mxu0 %v2892
          %v2956 = vpop.f32.mrf.mxu0
          %v2957 = vadd.f32 0.0, %v2956
          %2958 = vmatmul.f32.gmra.mxu0 %v2895
          %v2959 = vpop.f32.mrf.mxu0
          %v2960 = vadd.f32 0.0, %v2959
          %2961 = vmatmul.f32.gmra.mxu0 %v2898
          %v2962 = vpop.f32.mrf.mxu0
          %v2963 = vadd.f32 0.0, %v2962
          %2964 = vmatmul.f32.gmra.mxu0 %v2901
          %v2965 = vpop.f32.mrf.mxu0
          %v2966 = vadd.f32 0.0, %v2965
          %2967 = vmatmul.f32.gmra.mxu0 %v2904
          %v2968 = vpop.f32.mrf.mxu0
          %v2969 = vadd.f32 0.0, %v2968
          %2970 = vmatmul.f32.gmra.mxu0 %v2907
          %v2971 = vpop.f32.mrf.mxu0
          %v2972 = vadd.f32 0.0, %v2971
          %2973 = vmatmul.f32.gmra.mxu0 %v2910
          %v2974 = vpop.f32.mrf.mxu0
          %v2975 = vadd.f32 0.0, %v2974
          %2976 = vmatmul.f32.gmra.mxu0 %v2913
          %v2977 = vpop.f32.mrf.mxu0
          %v2978 = vadd.f32 0.0, %v2977
          %2979 = vmatmul.f32.gmra.mxu0 %v2916
          %v2980 = vpop.f32.mrf.mxu0
          %v2981 = vadd.f32 0.0, %v2980
          %2982 = vmatmul.f32.gmra.mxu0 %v2919
          %v2983 = vpop.f32.mrf.mxu0
          %v2984 = vadd.f32 0.0, %v2983
          %2985 = vmatmul.f32.gmra.mxu0 %v2922
          %v2986 = vpop.f32.mrf.mxu0
          %v2987 = vadd.f32 0.0, %v2986
          %2988 = vmatmul.f32.gmra.mxu0 %v2925
          %v2989 = vpop.f32.mrf.mxu0
          %v2990 = vadd.f32 0.0, %v2989
          %2991 = vmatmul.f32.gmra.mxu0 %v2928
          %v2992 = vpop.f32.mrf.mxu0
          %v2993 = vadd.f32 0.0, %v2992
          %2994 = vmatmul.f32.gmra.mxu0 %v2931
          %v2995 = vpop.f32.mrf.mxu0
          %v2996 = vadd.f32 0.0, %v2995
          %2997 = vdwg.mxu0
          %v2998 = vadd.f32 %v2849, %v2951
          %v2999 = vadd.f32 %v2850, %v2954
          %v3000 = vadd.f32 %v2851, %v2957
          %v3001 = vadd.f32 %v2852, %v2960
          %v3002 = vadd.f32 %v2853, %v2963
          %v3003 = vadd.f32 %v2854, %v2966
          %v3004 = vadd.f32 %v2855, %v2969
          %v3005 = vadd.f32 %v2856, %v2972
          %v3006 = vadd.f32 %v2857, %v2975
          %v3007 = vadd.f32 %v2858, %v2978
          %v3008 = vadd.f32 %v2859, %v2981
          %v3009 = vadd.f32 %v2860, %v2984
          %v3010 = vadd.f32 %v2861, %v2987
          %v3011 = vadd.f32 %v2862, %v2990
          %v3012 = vadd.f32 %v2863, %v2993
          %v3013 = vadd.f32 %v2864, %v2996
          %v3014 = vld [vmem:[%s2865 + $0x1] sm:$0xff]
          %v3015 = vld [vmem:[%s2865 + $0x11] sm:$0xff]
          %v3016 = vld [vmem:[%s2865 + $0x21] sm:$0xff]
          %v3017 = vld [vmem:[%s2865 + $0x31] sm:$0xff]
          %v3018 = vld [vmem:[%s2865 + $0x41] sm:$0xff]
          %v3019 = vld [vmem:[%s2865 + $0x51] sm:$0xff]
          %v3020 = vld [vmem:[%s2865 + $0x61] sm:$0xff]
          %v3021 = vld [vmem:[%s2865 + $0x71] sm:$0xff]
          %v3022 = vld [vmem:[%s2865 + $0xa1] sm:$0xff]
          %v3023 = vld [vmem:[%s2865 + $0xb1] sm:$0xff]
          %v3024 = vld [vmem:[%s2865 + $0xc1] sm:$0xff]
          %v3025 = vld [vmem:[%s2865 + $0xd1] sm:$0xff]
          %v3026 = vld [vmem:[%s2865 + $0xe1] sm:$0xff]
          %v3027 = vld [vmem:[%s2865 + $0xf1] sm:$0xff]
          %v3028 = vld [vmem:[%s2865 + $0x101] sm:$0xff]
          %v3029 = vld [vmem:[%s2865 + $0x111] sm:$0xff]
          %s3030 = scalar_lea.vmem [#allocation12], 112
          %v3031 = vld [vmem:[%s3030] sm:$0xff]
          %v3032 = vld [vmem:[%s3030 + $0x8] sm:$0xff]
          %v3034 = vsel %vm1951, %v3014, 0
          %v3037 = vsel %vm1951, %v3015, 0
          %v3040 = vsel %vm1951, %v3016, 0
          %v3043 = vsel %vm1951, %v3017, 0
          %v3046 = vsel %vm1951, %v3018, 0
          %v3049 = vsel %vm1951, %v3019, 0
          %v3052 = vsel %vm1951, %v3020, 0
          %v3055 = vsel %vm1951, %v3021, 0
          %v3058 = vsel %vm1951, %v3022, 0
          %v3061 = vsel %vm1951, %v3023, 0
          %v3064 = vsel %vm1951, %v3024, 0
          %v3067 = vsel %vm1951, %v3025, 0
          %v3070 = vsel %vm1951, %v3026, 0
          %v3073 = vsel %vm1951, %v3027, 0
          %v3076 = vsel %vm1951, %v3028, 0
          %v3079 = vsel %vm1951, %v3029, 0
          %3081 = vmatpush.msra.mxu0 0.0
          %3082 = vmatpush.msra.mxu0 0.0
          %3083 = vmatpush.msra.mxu0 0.0
          %3084 = vmatpush.msra.mxu0 0.0
          %3085 = vmatpush.msra.mxu0 0.0
          %3086 = vmatpush.msra.mxu0 0.0
          %3087 = vmatpush.msra.mxu0 0.0
          %3088 = vmatpush.msra.mxu0 0.0
          %3089 = vmatpush.msra.mxu0 0.0
          %3090 = vmatpush.msra.mxu0 0.0
          %3091 = vmatpush.msra.mxu0 0.0
          %3092 = vmatpush.msra.mxu0 0.0
          %3093 = vmatpush.msra.mxu0 0.0
          %3094 = vmatpush.msra.mxu0 0.0
          %3095 = vmatpush.msra.mxu0 %v3032
          %3096 = vmatpush.msra.mxu0 %v3031
          %3097 = vmatmul.f32.gmra.mxu0 %v3034
          %v3098 = vpop.f32.mrf.mxu0
          %v3099 = vadd.f32 0.0, %v3098
          %3100 = vmatmul.f32.gmra.mxu0 %v3037
          %v3101 = vpop.f32.mrf.mxu0
          %v3102 = vadd.f32 0.0, %v3101
          %3103 = vmatmul.f32.gmra.mxu0 %v3040
          %v3104 = vpop.f32.mrf.mxu0
          %v3105 = vadd.f32 0.0, %v3104
          %3106 = vmatmul.f32.gmra.mxu0 %v3043
          %v3107 = vpop.f32.mrf.mxu0
          %v3108 = vadd.f32 0.0, %v3107
          %3109 = vmatmul.f32.gmra.mxu0 %v3046
          %v3110 = vpop.f32.mrf.mxu0
          %v3111 = vadd.f32 0.0, %v3110
          %3112 = vmatmul.f32.gmra.mxu0 %v3049
          %v3113 = vpop.f32.mrf.mxu0
          %v3114 = vadd.f32 0.0, %v3113
          %3115 = vmatmul.f32.gmra.mxu0 %v3052
          %v3116 = vpop.f32.mrf.mxu0
          %v3117 = vadd.f32 0.0, %v3116
          %3118 = vmatmul.f32.gmra.mxu0 %v3055
          %v3119 = vpop.f32.mrf.mxu0
          %v3120 = vadd.f32 0.0, %v3119
          %3121 = vmatmul.f32.gmra.mxu0 %v3058
          %v3122 = vpop.f32.mrf.mxu0
          %v3123 = vadd.f32 0.0, %v3122
          %3124 = vmatmul.f32.gmra.mxu0 %v3061
          %v3125 = vpop.f32.mrf.mxu0
          %v3126 = vadd.f32 0.0, %v3125
          %3127 = vmatmul.f32.gmra.mxu0 %v3064
          %v3128 = vpop.f32.mrf.mxu0
          %v3129 = vadd.f32 0.0, %v3128
          %3130 = vmatmul.f32.gmra.mxu0 %v3067
          %v3131 = vpop.f32.mrf.mxu0
          %v3132 = vadd.f32 0.0, %v3131
          %3133 = vmatmul.f32.gmra.mxu0 %v3070
          %v3134 = vpop.f32.mrf.mxu0
          %v3135 = vadd.f32 0.0, %v3134
          %3136 = vmatmul.f32.gmra.mxu0 %v3073
          %v3137 = vpop.f32.mrf.mxu0
          %v3138 = vadd.f32 0.0, %v3137
          %3139 = vmatmul.f32.gmra.mxu0 %v3076
          %v3140 = vpop.f32.mrf.mxu0
          %v3141 = vadd.f32 0.0, %v3140
          %3142 = vmatmul.f32.gmra.mxu0 %v3079
          %v3143 = vpop.f32.mrf.mxu0
          %v3144 = vadd.f32 0.0, %v3143
          %3145 = vdwg.mxu0
          %v3146 = vadd.f32 %v2998, %v3099
          %v3147 = vadd.f32 %v2999, %v3102
          %v3148 = vadd.f32 %v3000, %v3105
          %v3149 = vadd.f32 %v3001, %v3108
          %v3150 = vadd.f32 %v3002, %v3111
          %v3151 = vadd.f32 %v3003, %v3114
          %v3152 = vadd.f32 %v3004, %v3117
          %v3153 = vadd.f32 %v3005, %v3120
          %v3154 = vadd.f32 %v3006, %v3123
          %v3155 = vadd.f32 %v3007, %v3126
          %v3156 = vadd.f32 %v3008, %v3129
          %v3157 = vadd.f32 %v3009, %v3132
          %v3158 = vadd.f32 %v3010, %v3135
          %v3159 = vadd.f32 %v3011, %v3138
          %v3160 = vadd.f32 %v3012, %v3141
          %v3161 = vadd.f32 %v3013, %v3144
          %v3162 = vld [vmem:[%s2865 + $0x2] sm:$0xff]
          %v3163 = vld [vmem:[%s2865 + $0x12] sm:$0xff]
          %v3164 = vld [vmem:[%s2865 + $0x22] sm:$0xff]
          %v3165 = vld [vmem:[%s2865 + $0x32] sm:$0xff]
          %v3166 = vld [vmem:[%s2865 + $0x42] sm:$0xff]
          %v3167 = vld [vmem:[%s2865 + $0x52] sm:$0xff]
          %v3168 = vld [vmem:[%s2865 + $0x62] sm:$0xff]
          %v3169 = vld [vmem:[%s2865 + $0x72] sm:$0xff]
          %v3170 = vld [vmem:[%s2865 + $0xa2] sm:$0xff]
          %v3171 = vld [vmem:[%s2865 + $0xb2] sm:$0xff]
          %v3172 = vld [vmem:[%s2865 + $0xc2] sm:$0xff]
          %v3173 = vld [vmem:[%s2865 + $0xd2] sm:$0xff]
          %v3174 = vld [vmem:[%s2865 + $0xe2] sm:$0xff]
          %v3175 = vld [vmem:[%s2865 + $0xf2] sm:$0xff]
          %v3176 = vld [vmem:[%s2865 + $0x102] sm:$0xff]
          %v3177 = vld [vmem:[%s2865 + $0x112] sm:$0xff]
          %s3178 = scalar_lea.vmem [#allocation12], 128
          %v3179 = vld [vmem:[%s3178] sm:$0xff]
          %v3180 = vld [vmem:[%s3178 + $0x8] sm:$0xff]
          %v3182 = vsel %vm1951, %v3162, 0
          %v3185 = vsel %vm1951, %v3163, 0
          %v3188 = vsel %vm1951, %v3164, 0
          %v3191 = vsel %vm1951, %v3165, 0
          %v3194 = vsel %vm1951, %v3166, 0
          %v3197 = vsel %vm1951, %v3167, 0
          %v3200 = vsel %vm1951, %v3168, 0
          %v3203 = vsel %vm1951, %v3169, 0
          %v3206 = vsel %vm1951, %v3170, 0
          %v3209 = vsel %vm1951, %v3171, 0
          %v3212 = vsel %vm1951, %v3172, 0
          %v3215 = vsel %vm1951, %v3173, 0
          %v3218 = vsel %vm1951, %v3174, 0
          %v3221 = vsel %vm1951, %v3175, 0
          %v3224 = vsel %vm1951, %v3176, 0
          %v3227 = vsel %vm1951, %v3177, 0
          %3229 = vmatpush.msra.mxu0 0.0
          %3230 = vmatpush.msra.mxu0 0.0
          %3231 = vmatpush.msra.mxu0 0.0
          %3232 = vmatpush.msra.mxu0 0.0
          %3233 = vmatpush.msra.mxu0 0.0
          %3234 = vmatpush.msra.mxu0 0.0
          %3235 = vmatpush.msra.mxu0 0.0
          %3236 = vmatpush.msra.mxu0 0.0
          %3237 = vmatpush.msra.mxu0 0.0
          %3238 = vmatpush.msra.mxu0 0.0
          %3239 = vmatpush.msra.mxu0 0.0
          %3240 = vmatpush.msra.mxu0 0.0
          %3241 = vmatpush.msra.mxu0 0.0
          %3242 = vmatpush.msra.mxu0 0.0
          %3243 = vmatpush.msra.mxu0 %v3180
          %3244 = vmatpush.msra.mxu0 %v3179
          %3245 = vmatmul.f32.gmra.mxu0 %v3182
          %v3246 = vpop.f32.mrf.mxu0
          %v3247 = vadd.f32 0.0, %v3246
          %3248 = vmatmul.f32.gmra.mxu0 %v3185
          %v3249 = vpop.f32.mrf.mxu0
          %v3250 = vadd.f32 0.0, %v3249
          %3251 = vmatmul.f32.gmra.mxu0 %v3188
          %v3252 = vpop.f32.mrf.mxu0
          %v3253 = vadd.f32 0.0, %v3252
          %3254 = vmatmul.f32.gmra.mxu0 %v3191
          %v3255 = vpop.f32.mrf.mxu0
          %v3256 = vadd.f32 0.0, %v3255
          %3257 = vmatmul.f32.gmra.mxu0 %v3194
          %v3258 = vpop.f32.mrf.mxu0
          %v3259 = vadd.f32 0.0, %v3258
          %3260 = vmatmul.f32.gmra.mxu0 %v3197
          %v3261 = vpop.f32.mrf.mxu0
          %v3262 = vadd.f32 0.0, %v3261
          %3263 = vmatmul.f32.gmra.mxu0 %v3200
          %v3264 = vpop.f32.mrf.mxu0
          %v3265 = vadd.f32 0.0, %v3264
          %3266 = vmatmul.f32.gmra.mxu0 %v3203
          %v3267 = vpop.f32.mrf.mxu0
          %v3268 = vadd.f32 0.0, %v3267
          %3269 = vmatmul.f32.gmra.mxu0 %v3206
          %v3270 = vpop.f32.mrf.mxu0
          %v3271 = vadd.f32 0.0, %v3270
          %3272 = vmatmul.f32.gmra.mxu0 %v3209
          %v3273 = vpop.f32.mrf.mxu0
          %v3274 = vadd.f32 0.0, %v3273
          %3275 = vmatmul.f32.gmra.mxu0 %v3212
          %v3276 = vpop.f32.mrf.mxu0
          %v3277 = vadd.f32 0.0, %v3276
          %3278 = vmatmul.f32.gmra.mxu0 %v3215
          %v3279 = vpop.f32.mrf.mxu0
          %v3280 = vadd.f32 0.0, %v3279
          %3281 = vmatmul.f32.gmra.mxu0 %v3218
          %v3282 = vpop.f32.mrf.mxu0
          %v3283 = vadd.f32 0.0, %v3282
          %3284 = vmatmul.f32.gmra.mxu0 %v3221
          %v3285 = vpop.f32.mrf.mxu0
          %v3286 = vadd.f32 0.0, %v3285
          %3287 = vmatmul.f32.gmra.mxu0 %v3224
          %v3288 = vpop.f32.mrf.mxu0
          %v3289 = vadd.f32 0.0, %v3288
          %3290 = vmatmul.f32.gmra.mxu0 %v3227
          %v3291 = vpop.f32.mrf.mxu0
          %v3292 = vadd.f32 0.0, %v3291
          %3293 = vdwg.mxu0
          %v3294 = vadd.f32 %v3146, %v3247
          %v3295 = vadd.f32 %v3147, %v3250
          %v3296 = vadd.f32 %v3148, %v3253
          %v3297 = vadd.f32 %v3149, %v3256
          %v3298 = vadd.f32 %v3150, %v3259
          %v3299 = vadd.f32 %v3151, %v3262
          %v3300 = vadd.f32 %v3152, %v3265
          %v3301 = vadd.f32 %v3153, %v3268
          %v3302 = vadd.f32 %v3154, %v3271
          %v3303 = vadd.f32 %v3155, %v3274
          %v3304 = vadd.f32 %v3156, %v3277
          %v3305 = vadd.f32 %v3157, %v3280
          %v3306 = vadd.f32 %v3158, %v3283
          %v3307 = vadd.f32 %v3159, %v3286
          %v3308 = vadd.f32 %v3160, %v3289
          %v3309 = vadd.f32 %v3161, %v3292
          %v3310 = vld [vmem:[#allocation13] sm:$0x1]
          %v3312 = vperm.slane %v3310, 0
          %v3314 = vadd.f32 %v3294, %v3312
          %v3315 = vadd.f32 %v3295, %v3312
          %v3316 = vadd.f32 %v3296, %v3312
          %v3317 = vadd.f32 %v3297, %v3312
          %v3318 = vadd.f32 %v3298, %v3312
          %v3319 = vadd.f32 %v3299, %v3312
          %v3320 = vadd.f32 %v3300, %v3312
          %v3321 = vadd.f32 %v3301, %v3312
          %v3322 = vadd.f32 %v3302, %v3312
          %v3323 = vadd.f32 %v3303, %v3312
          %v3324 = vadd.f32 %v3304, %v3312
          %v3325 = vadd.f32 %v3305, %v3312
          %v3326 = vadd.f32 %v3306, %v3312
          %v3327 = vadd.f32 %v3307, %v3312
          %v3328 = vadd.f32 %v3308, %v3312
          %v3329 = vadd.f32 %v3309, %v3312
          %v3330 = vmax.f32 %v3314, 0.0
          %v3331 = vmax.f32 %v3315, 0.0
          %v3332 = vmax.f32 %v3316, 0.0
          %v3333 = vmax.f32 %v3317, 0.0
          %v3334 = vmax.f32 %v3318, 0.0
          %v3335 = vmax.f32 %v3319, 0.0
          %v3336 = vmax.f32 %v3320, 0.0
          %v3337 = vmax.f32 %v3321, 0.0
          %v3338 = vmax.f32 %v3322, 0.0
          %v3339 = vmax.f32 %v3323, 0.0
          %v3340 = vmax.f32 %v3324, 0.0
          %v3341 = vmax.f32 %v3325, 0.0
          %v3342 = vmax.f32 %v3326, 0.0
          %v3343 = vmax.f32 %v3327, 0.0
          %v3344 = vmax.f32 %v3328, 0.0
          %v3345 = vmax.f32 %v3329, 0.0
          %vm3346 = vcmask 261120
          %3347 = vst.msk [vmem:[#allocation4] sm:$0xff] %vm3346, 0.0
          %vm3348 = vcmask 254976
          %3349 = vst.msk [vmem:[#allocation4 + $0x8] sm:$0x3] %vm3348, 0.0
          %3350 = vst.msk [vmem:[#allocation4 + $0x10] sm:$0xff] %vm3346, 0.0
          %3351 = vst.msk [vmem:[#allocation4 + $0x18] sm:$0x3] %vm3348, 0.0
          %3352 = vst.msk [vmem:[#allocation4 + $0x20] sm:$0xff] %vm3346, 0.0
          %3353 = vst.msk [vmem:[#allocation4 + $0x28] sm:$0x3] %vm3348, 0.0
          %3354 = vst.msk [vmem:[#allocation4 + $0x30] sm:$0xff] %vm3346, 0.0
          %3355 = vst.msk [vmem:[#allocation4 + $0x38] sm:$0x3] %vm3348, 0.0
          %3356 = vst.msk [vmem:[#allocation4 + $0x40] sm:$0xff] %vm3346, 0.0
          %3357 = vst.msk [vmem:[#allocation4 + $0x48] sm:$0x3] %vm3348, 0.0
          %3358 = vst.msk [vmem:[#allocation4 + $0x50] sm:$0xff] %vm3346, 0.0
          %3359 = vst.msk [vmem:[#allocation4 + $0x58] sm:$0x3] %vm3348, 0.0
          %3360 = vst.msk [vmem:[#allocation4 + $0x60] sm:$0xff] %vm3346, 0.0
          %3361 = vst.msk [vmem:[#allocation4 + $0x68] sm:$0x3] %vm3348, 0.0
          %3362 = vst.msk [vmem:[#allocation4 + $0x70] sm:$0xff] %vm3346, 0.0
          %3363 = vst.msk [vmem:[#allocation4 + $0x78] sm:$0x3] %vm3348, 0.0
          %3364 = vst.msk [vmem:[#allocation4 + $0x80] sm:$0xff] %vm3346, 0.0
          %3365 = vst.msk [vmem:[#allocation4 + $0x88] sm:$0x3] %vm3348, 0.0
          %3366 = vst.msk [vmem:[#allocation4 + $0x90] sm:$0xff] %vm3346, 0.0
          %3367 = vst.msk [vmem:[#allocation4 + $0x98] sm:$0x3] %vm3348, 0.0
          %3368 = vst.msk [vmem:[#allocation4 + $0xa0] sm:$0xff] %vm3346, 0.0
          %3369 = vst.msk [vmem:[#allocation4 + $0xa8] sm:$0x3] %vm3348, 0.0
          %3370 = vst.msk [vmem:[#allocation4 + $0xb0] sm:$0xff] %vm3346, 0.0
          %3371 = vst.msk [vmem:[#allocation4 + $0xb8] sm:$0x3] %vm3348, 0.0
          %3372 = vst.msk [vmem:[#allocation4 + $0xc0] sm:$0xff] %vm3346, 0.0
          %3373 = vst.msk [vmem:[#allocation4 + $0xc8] sm:$0x3] %vm3348, 0.0
          %3374 = vst.msk [vmem:[#allocation4 + $0xd0] sm:$0xff] %vm3346, 0.0
          %3375 = vst.msk [vmem:[#allocation4 + $0xd8] sm:$0x3] %vm3348, 0.0
          %3376 = vst.msk [vmem:[#allocation4 + $0xe0] sm:$0xff] %vm3346, 0.0
          %3377 = vst.msk [vmem:[#allocation4 + $0xe8] sm:$0x3] %vm3348, 0.0
          %3378 = vst.msk [vmem:[#allocation4 + $0xf0] sm:$0xff] %vm3346, 0.0
          %3379 = vst.msk [vmem:[#allocation4 + $0xf8] sm:$0x3] %vm3348, 0.0
          %3380 = vst.msk [vmem:[#allocation4 + $0x100] sm:$0xff] %vm3346, 0.0
          %3381 = vst.msk [vmem:[#allocation4 + $0x108] sm:$0x3] %vm3348, 0.0
          %3382 = vst.msk [vmem:[#allocation4 + $0x110] sm:$0xff] %vm3346, 0.0
          %3383 = vst.msk [vmem:[#allocation4 + $0x118] sm:$0x3] %vm3348, 0.0
          %3384 = vst.msk [vmem:[#allocation4 + $0x120] sm:$0xff] %vm3346, 0.0
          %3385 = vst.msk [vmem:[#allocation4 + $0x128] sm:$0x3] %vm3348, 0.0
          %3386 = vst.msk [vmem:[#allocation4 + $0x130] sm:$0xff] %vm3346, 0.0
          %3387 = vst.msk [vmem:[#allocation4 + $0x138] sm:$0x3] %vm3348, 0.0
          %s3388 = scalar_lea.vmem [#allocation4], 16
          %3389 = vst.msk [vmem:[%s3388 + $0x1] sm:$0xff] %vm3346, %v3330
          %3390 = vst.msk [vmem:[%s3388 + $0x11] sm:$0xff] %vm3346, %v3331
          %3391 = vst.msk [vmem:[%s3388 + $0x21] sm:$0xff] %vm3346, %v3332
          %3392 = vst.msk [vmem:[%s3388 + $0x31] sm:$0xff] %vm3346, %v3333
          %3393 = vst.msk [vmem:[%s3388 + $0x41] sm:$0xff] %vm3346, %v3334
          %3394 = vst.msk [vmem:[%s3388 + $0x51] sm:$0xff] %vm3346, %v3335
          %3395 = vst.msk [vmem:[%s3388 + $0x61] sm:$0xff] %vm3346, %v3336
          %3396 = vst.msk [vmem:[%s3388 + $0x71] sm:$0xff] %vm3346, %v3337
          %3397 = vst.msk [vmem:[%s3388 + $0xa1] sm:$0xff] %vm3346, %v3338
          %3398 = vst.msk [vmem:[%s3388 + $0xb1] sm:$0xff] %vm3346, %v3339
          %3399 = vst.msk [vmem:[%s3388 + $0xc1] sm:$0xff] %vm3346, %v3340
          %3400 = vst.msk [vmem:[%s3388 + $0xd1] sm:$0xff] %vm3346, %v3341
          %3401 = vst.msk [vmem:[%s3388 + $0xe1] sm:$0xff] %vm3346, %v3342
          %3402 = vst.msk [vmem:[%s3388 + $0xf1] sm:$0xff] %vm3346, %v3343
          %3403 = vst.msk [vmem:[%s3388 + $0x101] sm:$0xff] %vm3346, %v3344
          %3404 = vst.msk [vmem:[%s3388 + $0x111] sm:$0xff] %vm3346, %v3345
          %v3405 = vld [vmem:[#allocation4] sm:$0xff]
          %v3406 = vld [vmem:[#allocation4 + $0x10] sm:$0xff]
          %v3407 = vld [vmem:[#allocation4 + $0x20] sm:$0xff]
          %v3408 = vld [vmem:[#allocation4 + $0x30] sm:$0xff]
          %v3409 = vld [vmem:[#allocation4 + $0x40] sm:$0xff]
          %v3410 = vld [vmem:[#allocation4 + $0x50] sm:$0xff]
          %v3411 = vld [vmem:[#allocation4 + $0x60] sm:$0xff]
          %v3412 = vld [vmem:[#allocation4 + $0x70] sm:$0xff]
          %v3413 = vld [vmem:[#allocation4 + $0xa0] sm:$0xff]
          %v3414 = vld [vmem:[#allocation4 + $0xb0] sm:$0xff]
          %v3415 = vld [vmem:[#allocation4 + $0xc0] sm:$0xff]
          %v3416 = vld [vmem:[#allocation4 + $0xd0] sm:$0xff]
          %v3417 = vld [vmem:[#allocation4 + $0xe0] sm:$0xff]
          %v3418 = vld [vmem:[#allocation4 + $0xf0] sm:$0xff]
          %v3419 = vld [vmem:[#allocation4 + $0x100] sm:$0xff]
          %v3420 = vld [vmem:[#allocation4 + $0x110] sm:$0xff]
          %v3421 = vld [vmem:[#allocation15] sm:$0xff]
          %v3422 = vld [vmem:[#allocation15 + $0x8] sm:$0xff]
          %v3423 = vld [vmem:[#allocation15 + $0x10] sm:$0xff]
          %v3424 = vld [vmem:[#allocation15 + $0x18] sm:$0xff]
          %v3425 = vld [vmem:[#allocation4 + $0x1] sm:$0xff]
          %v3426 = vld [vmem:[#allocation4 + $0x11] sm:$0xff]
          %v3427 = vld [vmem:[#allocation4 + $0x21] sm:$0xff]
          %v3428 = vld [vmem:[#allocation4 + $0x31] sm:$0xff]
          %v3429 = vld [vmem:[#allocation4 + $0x41] sm:$0xff]
          %v3430 = vld [vmem:[#allocation4 + $0x51] sm:$0xff]
          %v3431 = vld [vmem:[#allocation4 + $0x61] sm:$0xff]
          %v3432 = vld [vmem:[#allocation4 + $0x71] sm:$0xff]
          %v3433 = vld [vmem:[#allocation4 + $0xa1] sm:$0xff]
          %v3434 = vld [vmem:[#allocation4 + $0xb1] sm:$0xff]
          %v3435 = vld [vmem:[#allocation4 + $0xc1] sm:$0xff]
          %v3436 = vld [vmem:[#allocation4 + $0xd1] sm:$0xff]
          %v3437 = vld [vmem:[#allocation4 + $0xe1] sm:$0xff]
          %v3438 = vld [vmem:[#allocation4 + $0xf1] sm:$0xff]
          %v3439 = vld [vmem:[#allocation4 + $0x101] sm:$0xff]
          %v3440 = vld [vmem:[#allocation4 + $0x111] sm:$0xff]
          %s3441 = scalar_lea.vmem [#allocation15], 32
          %v3442 = vld [vmem:[%s3441] sm:$0xff]
          %v3443 = vld [vmem:[%s3441 + $0x8] sm:$0xff]
          %v3444 = vld [vmem:[%s3441 + $0x10] sm:$0xff]
          %v3445 = vld [vmem:[%s3441 + $0x18] sm:$0xff]
          %v3447 = vsel %vm3346, %v3425, 0
          %v3450 = vsel %vm3346, %v3426, 0
          %v3453 = vsel %vm3346, %v3427, 0
          %v3456 = vsel %vm3346, %v3428, 0
          %v3459 = vsel %vm3346, %v3429, 0
          %v3462 = vsel %vm3346, %v3430, 0
          %v3465 = vsel %vm3346, %v3431, 0
          %v3468 = vsel %vm3346, %v3432, 0
          %v3471 = vsel %vm3346, %v3433, 0
          %v3474 = vsel %vm3346, %v3434, 0
          %v3477 = vsel %vm3346, %v3435, 0
          %v3480 = vsel %vm3346, %v3436, 0
          %v3483 = vsel %vm3346, %v3437, 0
          %v3486 = vsel %vm3346, %v3438, 0
          %v3489 = vsel %vm3346, %v3439, 0
          %v3492 = vsel %vm3346, %v3440, 0
          %3494 = vmatpush.msra.mxu0 0.0
          %3495 = vmatpush.msra.mxu0 0.0
          %3496 = vmatpush.msra.mxu0 0.0
          %3497 = vmatpush.msra.mxu0 0.0
          %3498 = vmatpush.msra.mxu0 0.0
          %3499 = vmatpush.msra.mxu0 0.0
          %3500 = vmatpush.msra.mxu0 0.0
          %3501 = vmatpush.msra.mxu0 0.0
          %3502 = vmatpush.msra.mxu0 0.0
          %3503 = vmatpush.msra.mxu0 0.0
          %3504 = vmatpush.msra.mxu0 0.0
          %3505 = vmatpush.msra.mxu0 0.0
          %3506 = vmatpush.msra.mxu0 %v3445
          %3507 = vmatpush.msra.mxu0 %v3444
          %3508 = vmatpush.msra.mxu0 %v3443
          %3509 = vmatpush.msra.mxu0 %v3442
          %3510 = vmatmul.f32.gmra.mxu0 %v3447
          %v3511 = vpop.f32.mrf.mxu0
          %v3512 = vadd.f32 0.0, %v3511
          %3513 = vmatmul.f32.gmra.mxu0 %v3450
          %v3514 = vpop.f32.mrf.mxu0
          %v3515 = vadd.f32 0.0, %v3514
          %3516 = vmatmul.f32.gmra.mxu0 %v3453
          %v3517 = vpop.f32.mrf.mxu0
          %v3518 = vadd.f32 0.0, %v3517
          %3519 = vmatmul.f32.gmra.mxu0 %v3456
          %v3520 = vpop.f32.mrf.mxu0
          %v3521 = vadd.f32 0.0, %v3520
          %3522 = vmatmul.f32.gmra.mxu0 %v3459
          %v3523 = vpop.f32.mrf.mxu0
          %v3524 = vadd.f32 0.0, %v3523
          %3525 = vmatmul.f32.gmra.mxu0 %v3462
          %v3526 = vpop.f32.mrf.mxu0
          %v3527 = vadd.f32 0.0, %v3526
          %3528 = vmatmul.f32.gmra.mxu0 %v3465
          %v3529 = vpop.f32.mrf.mxu0
          %v3530 = vadd.f32 0.0, %v3529
          %3531 = vmatmul.f32.gmra.mxu0 %v3468
          %v3532 = vpop.f32.mrf.mxu0
          %v3533 = vadd.f32 0.0, %v3532
          %3534 = vmatmul.f32.gmra.mxu0 %v3471
          %v3535 = vpop.f32.mrf.mxu0
          %v3536 = vadd.f32 0.0, %v3535
          %3537 = vmatmul.f32.gmra.mxu0 %v3474
          %v3538 = vpop.f32.mrf.mxu0
          %v3539 = vadd.f32 0.0, %v3538
          %3540 = vmatmul.f32.gmra.mxu0 %v3477
          %v3541 = vpop.f32.mrf.mxu0
          %v3542 = vadd.f32 0.0, %v3541
          %3543 = vmatmul.f32.gmra.mxu0 %v3480
          %v3544 = vpop.f32.mrf.mxu0
          %v3545 = vadd.f32 0.0, %v3544
          %3546 = vmatmul.f32.gmra.mxu0 %v3483
          %v3547 = vpop.f32.mrf.mxu0
          %v3548 = vadd.f32 0.0, %v3547
          %3549 = vmatmul.f32.gmra.mxu0 %v3486
          %v3550 = vpop.f32.mrf.mxu0
          %v3551 = vadd.f32 0.0, %v3550
          %3552 = vmatmul.f32.gmra.mxu0 %v3489
          %v3553 = vpop.f32.mrf.mxu0
          %v3554 = vadd.f32 0.0, %v3553
          %3555 = vmatmul.f32.gmra.mxu0 %v3492
          %v3556 = vpop.f32.mrf.mxu0
          %v3557 = vadd.f32 0.0, %v3556
          %3558 = vdwg.mxu0
          %v3560 = vsel %vm3346, %v3405, 0
          %v3563 = vsel %vm3346, %v3406, 0
          %v3566 = vsel %vm3346, %v3407, 0
          %v3569 = vsel %vm3346, %v3408, 0
          %v3572 = vsel %vm3346, %v3409, 0
          %v3575 = vsel %vm3346, %v3410, 0
          %v3578 = vsel %vm3346, %v3411, 0
          %v3581 = vsel %vm3346, %v3412, 0
          %v3584 = vsel %vm3346, %v3413, 0
          %v3587 = vsel %vm3346, %v3414, 0
          %v3590 = vsel %vm3346, %v3415, 0
          %v3593 = vsel %vm3346, %v3416, 0
          %v3596 = vsel %vm3346, %v3417, 0
          %v3599 = vsel %vm3346, %v3418, 0
          %v3602 = vsel %vm3346, %v3419, 0
          %v3605 = vsel %vm3346, %v3420, 0
          %3607 = vmatpush.msra.mxu0 0.0
          %3608 = vmatpush.msra.mxu0 0.0
          %3609 = vmatpush.msra.mxu0 0.0
          %3610 = vmatpush.msra.mxu0 0.0
          %3611 = vmatpush.msra.mxu0 0.0
          %3612 = vmatpush.msra.mxu0 0.0
          %3613 = vmatpush.msra.mxu0 0.0
          %3614 = vmatpush.msra.mxu0 0.0
          %3615 = vmatpush.msra.mxu0 0.0
          %3616 = vmatpush.msra.mxu0 0.0
          %3617 = vmatpush.msra.mxu0 0.0
          %3618 = vmatpush.msra.mxu0 0.0
          %3619 = vmatpush.msra.mxu0 %v3424
          %3620 = vmatpush.msra.mxu0 %v3423
          %3621 = vmatpush.msra.mxu0 %v3422
          %3622 = vmatpush.msra.mxu0 %v3421
          %3623 = vmatmul.f32.gmra.mxu0 %v3560
          %v3624 = vpop.f32.mrf.mxu0
          %v3625 = vadd.f32 %v3512, %v3624
          %3626 = vmatmul.f32.gmra.mxu0 %v3563
          %v3627 = vpop.f32.mrf.mxu0
          %v3628 = vadd.f32 %v3515, %v3627
          %3629 = vmatmul.f32.gmra.mxu0 %v3566
          %v3630 = vpop.f32.mrf.mxu0
          %v3631 = vadd.f32 %v3518, %v3630
          %3632 = vmatmul.f32.gmra.mxu0 %v3569
          %v3633 = vpop.f32.mrf.mxu0
          %v3634 = vadd.f32 %v3521, %v3633
          %3635 = vmatmul.f32.gmra.mxu0 %v3572
          %v3636 = vpop.f32.mrf.mxu0
          %v3637 = vadd.f32 %v3524, %v3636
          %3638 = vmatmul.f32.gmra.mxu0 %v3575
          %v3639 = vpop.f32.mrf.mxu0
          %v3640 = vadd.f32 %v3527, %v3639
          %3641 = vmatmul.f32.gmra.mxu0 %v3578
          %v3642 = vpop.f32.mrf.mxu0
          %v3643 = vadd.f32 %v3530, %v3642
          %3644 = vmatmul.f32.gmra.mxu0 %v3581
          %v3645 = vpop.f32.mrf.mxu0
          %v3646 = vadd.f32 %v3533, %v3645
          %3647 = vmatmul.f32.gmra.mxu0 %v3584
          %v3648 = vpop.f32.mrf.mxu0
          %v3649 = vadd.f32 %v3536, %v3648
          %3650 = vmatmul.f32.gmra.mxu0 %v3587
          %v3651 = vpop.f32.mrf.mxu0
          %v3652 = vadd.f32 %v3539, %v3651
          %3653 = vmatmul.f32.gmra.mxu0 %v3590
          %v3654 = vpop.f32.mrf.mxu0
          %v3655 = vadd.f32 %v3542, %v3654
          %3656 = vmatmul.f32.gmra.mxu0 %v3593
          %v3657 = vpop.f32.mrf.mxu0
          %v3658 = vadd.f32 %v3545, %v3657
          %3659 = vmatmul.f32.gmra.mxu0 %v3596
          %v3660 = vpop.f32.mrf.mxu0
          %v3661 = vadd.f32 %v3548, %v3660
          %3662 = vmatmul.f32.gmra.mxu0 %v3599
          %v3663 = vpop.f32.mrf.mxu0
          %v3664 = vadd.f32 %v3551, %v3663
          %3665 = vmatmul.f32.gmra.mxu0 %v3602
          %v3666 = vpop.f32.mrf.mxu0
          %v3667 = vadd.f32 %v3554, %v3666
          %3668 = vmatmul.f32.gmra.mxu0 %v3605
          %v3669 = vpop.f32.mrf.mxu0
          %v3670 = vadd.f32 %v3557, %v3669
          %3671 = vdwg.mxu0
          %v3672 = vld [vmem:[#allocation4 + $0x2] sm:$0xff]
          %v3673 = vld [vmem:[#allocation4 + $0x12] sm:$0xff]
          %v3674 = vld [vmem:[#allocation4 + $0x22] sm:$0xff]
          %v3675 = vld [vmem:[#allocation4 + $0x32] sm:$0xff]
          %v3676 = vld [vmem:[#allocation4 + $0x42] sm:$0xff]
          %v3677 = vld [vmem:[#allocation4 + $0x52] sm:$0xff]
          %v3678 = vld [vmem:[#allocation4 + $0x62] sm:$0xff]
          %v3679 = vld [vmem:[#allocation4 + $0x72] sm:$0xff]
          %v3680 = vld [vmem:[#allocation4 + $0xa2] sm:$0xff]
          %v3681 = vld [vmem:[#allocation4 + $0xb2] sm:$0xff]
          %v3682 = vld [vmem:[#allocation4 + $0xc2] sm:$0xff]
          %v3683 = vld [vmem:[#allocation4 + $0xd2] sm:$0xff]
          %v3684 = vld [vmem:[#allocation4 + $0xe2] sm:$0xff]
          %v3685 = vld [vmem:[#allocation4 + $0xf2] sm:$0xff]
          %v3686 = vld [vmem:[#allocation4 + $0x102] sm:$0xff]
          %v3687 = vld [vmem:[#allocation4 + $0x112] sm:$0xff]
          %s3688 = scalar_lea.vmem [#allocation15], 64
          %v3689 = vld [vmem:[%s3688] sm:$0xff]
          %v3690 = vld [vmem:[%s3688 + $0x8] sm:$0xff]
          %v3691 = vld [vmem:[%s3688 + $0x10] sm:$0xff]
          %v3692 = vld [vmem:[%s3688 + $0x18] sm:$0xff]
          %v3694 = vsel %vm3346, %v3672, 0
          %v3697 = vsel %vm3346, %v3673, 0
          %v3700 = vsel %vm3346, %v3674, 0
          %v3703 = vsel %vm3346, %v3675, 0
          %v3706 = vsel %vm3346, %v3676, 0
          %v3709 = vsel %vm3346, %v3677, 0
          %v3712 = vsel %vm3346, %v3678, 0
          %v3715 = vsel %vm3346, %v3679, 0
          %v3718 = vsel %vm3346, %v3680, 0
          %v3721 = vsel %vm3346, %v3681, 0
          %v3724 = vsel %vm3346, %v3682, 0
          %v3727 = vsel %vm3346, %v3683, 0
          %v3730 = vsel %vm3346, %v3684, 0
          %v3733 = vsel %vm3346, %v3685, 0
          %v3736 = vsel %vm3346, %v3686, 0
          %v3739 = vsel %vm3346, %v3687, 0
          %3741 = vmatpush.msra.mxu0 0.0
          %3742 = vmatpush.msra.mxu0 0.0
          %3743 = vmatpush.msra.mxu0 0.0
          %3744 = vmatpush.msra.mxu0 0.0
          %3745 = vmatpush.msra.mxu0 0.0
          %3746 = vmatpush.msra.mxu0 0.0
          %3747 = vmatpush.msra.mxu0 0.0
          %3748 = vmatpush.msra.mxu0 0.0
          %3749 = vmatpush.msra.mxu0 0.0
          %3750 = vmatpush.msra.mxu0 0.0
          %3751 = vmatpush.msra.mxu0 0.0
          %3752 = vmatpush.msra.mxu0 0.0
          %3753 = vmatpush.msra.mxu0 %v3692
          %3754 = vmatpush.msra.mxu0 %v3691
          %3755 = vmatpush.msra.mxu0 %v3690
          %3756 = vmatpush.msra.mxu0 %v3689
          %3757 = vmatmul.f32.gmra.mxu0 %v3694
          %v3758 = vpop.f32.mrf.mxu0
          %v3759 = vadd.f32 0.0, %v3758
          %3760 = vmatmul.f32.gmra.mxu0 %v3697
          %v3761 = vpop.f32.mrf.mxu0
          %v3762 = vadd.f32 0.0, %v3761
          %3763 = vmatmul.f32.gmra.mxu0 %v3700
          %v3764 = vpop.f32.mrf.mxu0
          %v3765 = vadd.f32 0.0, %v3764
          %3766 = vmatmul.f32.gmra.mxu0 %v3703
          %v3767 = vpop.f32.mrf.mxu0
          %v3768 = vadd.f32 0.0, %v3767
          %3769 = vmatmul.f32.gmra.mxu0 %v3706
          %v3770 = vpop.f32.mrf.mxu0
          %v3771 = vadd.f32 0.0, %v3770
          %3772 = vmatmul.f32.gmra.mxu0 %v3709
          %v3773 = vpop.f32.mrf.mxu0
          %v3774 = vadd.f32 0.0, %v3773
          %3775 = vmatmul.f32.gmra.mxu0 %v3712
          %v3776 = vpop.f32.mrf.mxu0
          %v3777 = vadd.f32 0.0, %v3776
          %3778 = vmatmul.f32.gmra.mxu0 %v3715
          %v3779 = vpop.f32.mrf.mxu0
          %v3780 = vadd.f32 0.0, %v3779
          %3781 = vmatmul.f32.gmra.mxu0 %v3718
          %v3782 = vpop.f32.mrf.mxu0
          %v3783 = vadd.f32 0.0, %v3782
          %3784 = vmatmul.f32.gmra.mxu0 %v3721
          %v3785 = vpop.f32.mrf.mxu0
          %v3786 = vadd.f32 0.0, %v3785
          %3787 = vmatmul.f32.gmra.mxu0 %v3724
          %v3788 = vpop.f32.mrf.mxu0
          %v3789 = vadd.f32 0.0, %v3788
          %3790 = vmatmul.f32.gmra.mxu0 %v3727
          %v3791 = vpop.f32.mrf.mxu0
          %v3792 = vadd.f32 0.0, %v3791
          %3793 = vmatmul.f32.gmra.mxu0 %v3730
          %v3794 = vpop.f32.mrf.mxu0
          %v3795 = vadd.f32 0.0, %v3794
          %3796 = vmatmul.f32.gmra.mxu0 %v3733
          %v3797 = vpop.f32.mrf.mxu0
          %v3798 = vadd.f32 0.0, %v3797
          %3799 = vmatmul.f32.gmra.mxu0 %v3736
          %v3800 = vpop.f32.mrf.mxu0
          %v3801 = vadd.f32 0.0, %v3800
          %3802 = vmatmul.f32.gmra.mxu0 %v3739
          %v3803 = vpop.f32.mrf.mxu0
          %v3804 = vadd.f32 0.0, %v3803
          %3805 = vdwg.mxu0
          %v3806 = vadd.f32 %v3625, %v3759
          %v3807 = vadd.f32 %v3628, %v3762
          %v3808 = vadd.f32 %v3631, %v3765
          %v3809 = vadd.f32 %v3634, %v3768
          %v3810 = vadd.f32 %v3637, %v3771
          %v3811 = vadd.f32 %v3640, %v3774
          %v3812 = vadd.f32 %v3643, %v3777
          %v3813 = vadd.f32 %v3646, %v3780
          %v3814 = vadd.f32 %v3649, %v3783
          %v3815 = vadd.f32 %v3652, %v3786
          %v3816 = vadd.f32 %v3655, %v3789
          %v3817 = vadd.f32 %v3658, %v3792
          %v3818 = vadd.f32 %v3661, %v3795
          %v3819 = vadd.f32 %v3664, %v3798
          %v3820 = vadd.f32 %v3667, %v3801
          %v3821 = vadd.f32 %v3670, %v3804
          %v3822 = vld [vmem:[%s3388] sm:$0xff]
          %v3823 = vld [vmem:[%s3388 + $0x10] sm:$0xff]
          %v3824 = vld [vmem:[%s3388 + $0x20] sm:$0xff]
          %v3825 = vld [vmem:[%s3388 + $0x30] sm:$0xff]
          %v3826 = vld [vmem:[%s3388 + $0x40] sm:$0xff]
          %v3827 = vld [vmem:[%s3388 + $0x50] sm:$0xff]
          %v3828 = vld [vmem:[%s3388 + $0x60] sm:$0xff]
          %v3829 = vld [vmem:[%s3388 + $0x70] sm:$0xff]
          %v3830 = vld [vmem:[%s3388 + $0xa0] sm:$0xff]
          %v3831 = vld [vmem:[%s3388 + $0xb0] sm:$0xff]
          %v3832 = vld [vmem:[%s3388 + $0xc0] sm:$0xff]
          %v3833 = vld [vmem:[%s3388 + $0xd0] sm:$0xff]
          %v3834 = vld [vmem:[%s3388 + $0xe0] sm:$0xff]
          %v3835 = vld [vmem:[%s3388 + $0xf0] sm:$0xff]
          %v3836 = vld [vmem:[%s3388 + $0x100] sm:$0xff]
          %v3837 = vld [vmem:[%s3388 + $0x110] sm:$0xff]
          %s3838 = scalar_lea.vmem [#allocation15], 96
          %v3839 = vld [vmem:[%s3838] sm:$0xff]
          %v3840 = vld [vmem:[%s3838 + $0x8] sm:$0xff]
          %v3841 = vld [vmem:[%s3838 + $0x10] sm:$0xff]
          %v3842 = vld [vmem:[%s3838 + $0x18] sm:$0xff]
          %v3844 = vsel %vm3346, %v3822, 0
          %v3847 = vsel %vm3346, %v3823, 0
          %v3850 = vsel %vm3346, %v3824, 0
          %v3853 = vsel %vm3346, %v3825, 0
          %v3856 = vsel %vm3346, %v3826, 0
          %v3859 = vsel %vm3346, %v3827, 0
          %v3862 = vsel %vm3346, %v3828, 0
          %v3865 = vsel %vm3346, %v3829, 0
          %v3868 = vsel %vm3346, %v3830, 0
          %v3871 = vsel %vm3346, %v3831, 0
          %v3874 = vsel %vm3346, %v3832, 0
          %v3877 = vsel %vm3346, %v3833, 0
          %v3880 = vsel %vm3346, %v3834, 0
          %v3883 = vsel %vm3346, %v3835, 0
          %v3886 = vsel %vm3346, %v3836, 0
          %v3889 = vsel %vm3346, %v3837, 0
          %3891 = vmatpush.msra.mxu0 0.0
          %3892 = vmatpush.msra.mxu0 0.0
          %3893 = vmatpush.msra.mxu0 0.0
          %3894 = vmatpush.msra.mxu0 0.0
          %3895 = vmatpush.msra.mxu0 0.0
          %3896 = vmatpush.msra.mxu0 0.0
          %3897 = vmatpush.msra.mxu0 0.0
          %3898 = vmatpush.msra.mxu0 0.0
          %3899 = vmatpush.msra.mxu0 0.0
          %3900 = vmatpush.msra.mxu0 0.0
          %3901 = vmatpush.msra.mxu0 0.0
          %3902 = vmatpush.msra.mxu0 0.0
          %3903 = vmatpush.msra.mxu0 %v3842
          %3904 = vmatpush.msra.mxu0 %v3841
          %3905 = vmatpush.msra.mxu0 %v3840
          %3906 = vmatpush.msra.mxu0 %v3839
          %3907 = vmatmul.f32.gmra.mxu0 %v3844
          %v3908 = vpop.f32.mrf.mxu0
          %v3909 = vadd.f32 0.0, %v3908
          %3910 = vmatmul.f32.gmra.mxu0 %v3847
          %v3911 = vpop.f32.mrf.mxu0
          %v3912 = vadd.f32 0.0, %v3911
          %3913 = vmatmul.f32.gmra.mxu0 %v3850
          %v3914 = vpop.f32.mrf.mxu0
          %v3915 = vadd.f32 0.0, %v3914
          %3916 = vmatmul.f32.gmra.mxu0 %v3853
          %v3917 = vpop.f32.mrf.mxu0
          %v3918 = vadd.f32 0.0, %v3917
          %3919 = vmatmul.f32.gmra.mxu0 %v3856
          %v3920 = vpop.f32.mrf.mxu0
          %v3921 = vadd.f32 0.0, %v3920
          %3922 = vmatmul.f32.gmra.mxu0 %v3859
          %v3923 = vpop.f32.mrf.mxu0
          %v3924 = vadd.f32 0.0, %v3923
          %3925 = vmatmul.f32.gmra.mxu0 %v3862
          %v3926 = vpop.f32.mrf.mxu0
          %v3927 = vadd.f32 0.0, %v3926
          %3928 = vmatmul.f32.gmra.mxu0 %v3865
          %v3929 = vpop.f32.mrf.mxu0
          %v3930 = vadd.f32 0.0, %v3929
          %3931 = vmatmul.f32.gmra.mxu0 %v3868
          %v3932 = vpop.f32.mrf.mxu0
          %v3933 = vadd.f32 0.0, %v3932
          %3934 = vmatmul.f32.gmra.mxu0 %v3871
          %v3935 = vpop.f32.mrf.mxu0
          %v3936 = vadd.f32 0.0, %v3935
          %3937 = vmatmul.f32.gmra.mxu0 %v3874
          %v3938 = vpop.f32.mrf.mxu0
          %v3939 = vadd.f32 0.0, %v3938
          %3940 = vmatmul.f32.gmra.mxu0 %v3877
          %v3941 = vpop.f32.mrf.mxu0
          %v3942 = vadd.f32 0.0, %v3941
          %3943 = vmatmul.f32.gmra.mxu0 %v3880
          %v3944 = vpop.f32.mrf.mxu0
          %v3945 = vadd.f32 0.0, %v3944
          %3946 = vmatmul.f32.gmra.mxu0 %v3883
          %v3947 = vpop.f32.mrf.mxu0
          %v3948 = vadd.f32 0.0, %v3947
          %3949 = vmatmul.f32.gmra.mxu0 %v3886
          %v3950 = vpop.f32.mrf.mxu0
          %v3951 = vadd.f32 0.0, %v3950
          %3952 = vmatmul.f32.gmra.mxu0 %v3889
          %v3953 = vpop.f32.mrf.mxu0
          %v3954 = vadd.f32 0.0, %v3953
          %3955 = vdwg.mxu0
          %v3956 = vadd.f32 %v3806, %v3909
          %v3957 = vadd.f32 %v3807, %v3912
          %v3958 = vadd.f32 %v3808, %v3915
          %v3959 = vadd.f32 %v3809, %v3918
          %v3960 = vadd.f32 %v3810, %v3921
          %v3961 = vadd.f32 %v3811, %v3924
          %v3962 = vadd.f32 %v3812, %v3927
          %v3963 = vadd.f32 %v3813, %v3930
          %v3964 = vadd.f32 %v3814, %v3933
          %v3965 = vadd.f32 %v3815, %v3936
          %v3966 = vadd.f32 %v3816, %v3939
          %v3967 = vadd.f32 %v3817, %v3942
          %v3968 = vadd.f32 %v3818, %v3945
          %v3969 = vadd.f32 %v3819, %v3948
          %v3970 = vadd.f32 %v3820, %v3951
          %v3971 = vadd.f32 %v3821, %v3954
          %v3972 = vld [vmem:[%s3388 + $0x1] sm:$0xff]
          %v3973 = vld [vmem:[%s3388 + $0x11] sm:$0xff]
          %v3974 = vld [vmem:[%s3388 + $0x21] sm:$0xff]
          %v3975 = vld [vmem:[%s3388 + $0x31] sm:$0xff]
          %v3976 = vld [vmem:[%s3388 + $0x41] sm:$0xff]
          %v3977 = vld [vmem:[%s3388 + $0x51] sm:$0xff]
          %v3978 = vld [vmem:[%s3388 + $0x61] sm:$0xff]
          %v3979 = vld [vmem:[%s3388 + $0x71] sm:$0xff]
          %v3980 = vld [vmem:[%s3388 + $0xa1] sm:$0xff]
          %v3981 = vld [vmem:[%s3388 + $0xb1] sm:$0xff]
          %v3982 = vld [vmem:[%s3388 + $0xc1] sm:$0xff]
          %v3983 = vld [vmem:[%s3388 + $0xd1] sm:$0xff]
          %v3984 = vld [vmem:[%s3388 + $0xe1] sm:$0xff]
          %v3985 = vld [vmem:[%s3388 + $0xf1] sm:$0xff]
          %v3986 = vld [vmem:[%s3388 + $0x101] sm:$0xff]
          %v3987 = vld [vmem:[%s3388 + $0x111] sm:$0xff]
          %s3988 = scalar_lea.vmem [#allocation15], 128
          %v3989 = vld [vmem:[%s3988] sm:$0xff]
          %v3990 = vld [vmem:[%s3988 + $0x8] sm:$0xff]
          %v3991 = vld [vmem:[%s3988 + $0x10] sm:$0xff]
          %v3992 = vld [vmem:[%s3988 + $0x18] sm:$0xff]
          %v3994 = vsel %vm3346, %v3972, 0
          %v3997 = vsel %vm3346, %v3973, 0
          %v4000 = vsel %vm3346, %v3974, 0
          %v4003 = vsel %vm3346, %v3975, 0
          %v4006 = vsel %vm3346, %v3976, 0
          %v4009 = vsel %vm3346, %v3977, 0
          %v4012 = vsel %vm3346, %v3978, 0
          %v4015 = vsel %vm3346, %v3979, 0
          %v4018 = vsel %vm3346, %v3980, 0
          %v4021 = vsel %vm3346, %v3981, 0
          %v4024 = vsel %vm3346, %v3982, 0
          %v4027 = vsel %vm3346, %v3983, 0
          %v4030 = vsel %vm3346, %v3984, 0
          %v4033 = vsel %vm3346, %v3985, 0
          %v4036 = vsel %vm3346, %v3986, 0
          %v4039 = vsel %vm3346, %v3987, 0
          %4041 = vmatpush.msra.mxu0 0.0
          %4042 = vmatpush.msra.mxu0 0.0
          %4043 = vmatpush.msra.mxu0 0.0
          %4044 = vmatpush.msra.mxu0 0.0
          %4045 = vmatpush.msra.mxu0 0.0
          %4046 = vmatpush.msra.mxu0 0.0
          %4047 = vmatpush.msra.mxu0 0.0
          %4048 = vmatpush.msra.mxu0 0.0
          %4049 = vmatpush.msra.mxu0 0.0
          %4050 = vmatpush.msra.mxu0 0.0
          %4051 = vmatpush.msra.mxu0 0.0
          %4052 = vmatpush.msra.mxu0 0.0
          %4053 = vmatpush.msra.mxu0 %v3992
          %4054 = vmatpush.msra.mxu0 %v3991
          %4055 = vmatpush.msra.mxu0 %v3990
          %4056 = vmatpush.msra.mxu0 %v3989
          %4057 = vmatmul.f32.gmra.mxu0 %v3994
          %v4058 = vpop.f32.mrf.mxu0
          %v4059 = vadd.f32 0.0, %v4058
          %4060 = vmatmul.f32.gmra.mxu0 %v3997
          %v4061 = vpop.f32.mrf.mxu0
          %v4062 = vadd.f32 0.0, %v4061
          %4063 = vmatmul.f32.gmra.mxu0 %v4000
          %v4064 = vpop.f32.mrf.mxu0
          %v4065 = vadd.f32 0.0, %v4064
          %4066 = vmatmul.f32.gmra.mxu0 %v4003
          %v4067 = vpop.f32.mrf.mxu0
          %v4068 = vadd.f32 0.0, %v4067
          %4069 = vmatmul.f32.gmra.mxu0 %v4006
          %v4070 = vpop.f32.mrf.mxu0
          %v4071 = vadd.f32 0.0, %v4070
          %4072 = vmatmul.f32.gmra.mxu0 %v4009
          %v4073 = vpop.f32.mrf.mxu0
          %v4074 = vadd.f32 0.0, %v4073
          %4075 = vmatmul.f32.gmra.mxu0 %v4012
          %v4076 = vpop.f32.mrf.mxu0
          %v4077 = vadd.f32 0.0, %v4076
          %4078 = vmatmul.f32.gmra.mxu0 %v4015
          %v4079 = vpop.f32.mrf.mxu0
          %v4080 = vadd.f32 0.0, %v4079
          %4081 = vmatmul.f32.gmra.mxu0 %v4018
          %v4082 = vpop.f32.mrf.mxu0
          %v4083 = vadd.f32 0.0, %v4082
          %4084 = vmatmul.f32.gmra.mxu0 %v4021
          %v4085 = vpop.f32.mrf.mxu0
          %v4086 = vadd.f32 0.0, %v4085
          %4087 = vmatmul.f32.gmra.mxu0 %v4024
          %v4088 = vpop.f32.mrf.mxu0
          %v4089 = vadd.f32 0.0, %v4088
          %4090 = vmatmul.f32.gmra.mxu0 %v4027
          %v4091 = vpop.f32.mrf.mxu0
          %v4092 = vadd.f32 0.0, %v4091
          %4093 = vmatmul.f32.gmra.mxu0 %v4030
          %v4094 = vpop.f32.mrf.mxu0
          %v4095 = vadd.f32 0.0, %v4094
          %4096 = vmatmul.f32.gmra.mxu0 %v4033
          %v4097 = vpop.f32.mrf.mxu0
          %v4098 = vadd.f32 0.0, %v4097
          %4099 = vmatmul.f32.gmra.mxu0 %v4036
          %v4100 = vpop.f32.mrf.mxu0
          %v4101 = vadd.f32 0.0, %v4100
          %4102 = vmatmul.f32.gmra.mxu0 %v4039
          %v4103 = vpop.f32.mrf.mxu0
          %v4104 = vadd.f32 0.0, %v4103
          %4105 = vdwg.mxu0
          %v4106 = vadd.f32 %v3956, %v4059
          %v4107 = vadd.f32 %v3957, %v4062
          %v4108 = vadd.f32 %v3958, %v4065
          %v4109 = vadd.f32 %v3959, %v4068
          %v4110 = vadd.f32 %v3960, %v4071
          %v4111 = vadd.f32 %v3961, %v4074
          %v4112 = vadd.f32 %v3962, %v4077
          %v4113 = vadd.f32 %v3963, %v4080
          %v4114 = vadd.f32 %v3964, %v4083
          %v4115 = vadd.f32 %v3965, %v4086
          %v4116 = vadd.f32 %v3966, %v4089
          %v4117 = vadd.f32 %v3967, %v4092
          %v4118 = vadd.f32 %v3968, %v4095
          %v4119 = vadd.f32 %v3969, %v4098
          %v4120 = vadd.f32 %v3970, %v4101
          %v4121 = vadd.f32 %v3971, %v4104
          %v4122 = vld [vmem:[%s3388 + $0x2] sm:$0xff]
          %v4123 = vld [vmem:[%s3388 + $0x12] sm:$0xff]
          %v4124 = vld [vmem:[%s3388 + $0x22] sm:$0xff]
          %v4125 = vld [vmem:[%s3388 + $0x32] sm:$0xff]
          %v4126 = vld [vmem:[%s3388 + $0x42] sm:$0xff]
          %v4127 = vld [vmem:[%s3388 + $0x52] sm:$0xff]
          %v4128 = vld [vmem:[%s3388 + $0x62] sm:$0xff]
          %v4129 = vld [vmem:[%s3388 + $0x72] sm:$0xff]
          %v4130 = vld [vmem:[%s3388 + $0xa2] sm:$0xff]
          %v4131 = vld [vmem:[%s3388 + $0xb2] sm:$0xff]
          %v4132 = vld [vmem:[%s3388 + $0xc2] sm:$0xff]
          %v4133 = vld [vmem:[%s3388 + $0xd2] sm:$0xff]
          %v4134 = vld [vmem:[%s3388 + $0xe2] sm:$0xff]
          %v4135 = vld [vmem:[%s3388 + $0xf2] sm:$0xff]
          %v4136 = vld [vmem:[%s3388 + $0x102] sm:$0xff]
          %v4137 = vld [vmem:[%s3388 + $0x112] sm:$0xff]
          %s4138 = scalar_lea.vmem [#allocation15], 160
          %v4139 = vld [vmem:[%s4138] sm:$0xff]
          %v4140 = vld [vmem:[%s4138 + $0x8] sm:$0xff]
          %v4141 = vld [vmem:[%s4138 + $0x10] sm:$0xff]
          %v4142 = vld [vmem:[%s4138 + $0x18] sm:$0xff]
          %v4144 = vsel %vm3346, %v4122, 0
          %v4147 = vsel %vm3346, %v4123, 0
          %v4150 = vsel %vm3346, %v4124, 0
          %v4153 = vsel %vm3346, %v4125, 0
          %v4156 = vsel %vm3346, %v4126, 0
          %v4159 = vsel %vm3346, %v4127, 0
          %v4162 = vsel %vm3346, %v4128, 0
          %v4165 = vsel %vm3346, %v4129, 0
          %v4168 = vsel %vm3346, %v4130, 0
          %v4171 = vsel %vm3346, %v4131, 0
          %v4174 = vsel %vm3346, %v4132, 0
          %v4177 = vsel %vm3346, %v4133, 0
          %v4180 = vsel %vm3346, %v4134, 0
          %v4183 = vsel %vm3346, %v4135, 0
          %v4186 = vsel %vm3346, %v4136, 0
          %v4189 = vsel %vm3346, %v4137, 0
          %4191 = vmatpush.msra.mxu0 0.0
          %4192 = vmatpush.msra.mxu0 0.0
          %4193 = vmatpush.msra.mxu0 0.0
          %4194 = vmatpush.msra.mxu0 0.0
          %4195 = vmatpush.msra.mxu0 0.0
          %4196 = vmatpush.msra.mxu0 0.0
          %4197 = vmatpush.msra.mxu0 0.0
          %4198 = vmatpush.msra.mxu0 0.0
          %4199 = vmatpush.msra.mxu0 0.0
          %4200 = vmatpush.msra.mxu0 0.0
          %4201 = vmatpush.msra.mxu0 0.0
          %4202 = vmatpush.msra.mxu0 0.0
          %4203 = vmatpush.msra.mxu0 %v4142
          %4204 = vmatpush.msra.mxu0 %v4141
          %4205 = vmatpush.msra.mxu0 %v4140
          %4206 = vmatpush.msra.mxu0 %v4139
          %4207 = vmatmul.f32.gmra.mxu0 %v4144
          %v4208 = vpop.f32.mrf.mxu0
          %v4209 = vadd.f32 0.0, %v4208
          %4210 = vmatmul.f32.gmra.mxu0 %v4147
          %v4211 = vpop.f32.mrf.mxu0
          %v4212 = vadd.f32 0.0, %v4211
          %4213 = vmatmul.f32.gmra.mxu0 %v4150
          %v4214 = vpop.f32.mrf.mxu0
          %v4215 = vadd.f32 0.0, %v4214
          %4216 = vmatmul.f32.gmra.mxu0 %v4153
          %v4217 = vpop.f32.mrf.mxu0
          %v4218 = vadd.f32 0.0, %v4217
          %4219 = vmatmul.f32.gmra.mxu0 %v4156
          %v4220 = vpop.f32.mrf.mxu0
          %v4221 = vadd.f32 0.0, %v4220
          %4222 = vmatmul.f32.gmra.mxu0 %v4159
          %v4223 = vpop.f32.mrf.mxu0
          %v4224 = vadd.f32 0.0, %v4223
          %4225 = vmatmul.f32.gmra.mxu0 %v4162
          %v4226 = vpop.f32.mrf.mxu0
          %v4227 = vadd.f32 0.0, %v4226
          %4228 = vmatmul.f32.gmra.mxu0 %v4165
          %v4229 = vpop.f32.mrf.mxu0
          %v4230 = vadd.f32 0.0, %v4229
          %4231 = vmatmul.f32.gmra.mxu0 %v4168
          %v4232 = vpop.f32.mrf.mxu0
          %v4233 = vadd.f32 0.0, %v4232
          %4234 = vmatmul.f32.gmra.mxu0 %v4171
          %v4235 = vpop.f32.mrf.mxu0
          %v4236 = vadd.f32 0.0, %v4235
          %4237 = vmatmul.f32.gmra.mxu0 %v4174
          %v4238 = vpop.f32.mrf.mxu0
          %v4239 = vadd.f32 0.0, %v4238
          %4240 = vmatmul.f32.gmra.mxu0 %v4177
          %v4241 = vpop.f32.mrf.mxu0
          %v4242 = vadd.f32 0.0, %v4241
          %4243 = vmatmul.f32.gmra.mxu0 %v4180
          %v4244 = vpop.f32.mrf.mxu0
          %v4245 = vadd.f32 0.0, %v4244
          %4246 = vmatmul.f32.gmra.mxu0 %v4183
          %v4247 = vpop.f32.mrf.mxu0
          %v4248 = vadd.f32 0.0, %v4247
          %4249 = vmatmul.f32.gmra.mxu0 %v4186
          %v4250 = vpop.f32.mrf.mxu0
          %v4251 = vadd.f32 0.0, %v4250
          %4252 = vmatmul.f32.gmra.mxu0 %v4189
          %v4253 = vpop.f32.mrf.mxu0
          %v4254 = vadd.f32 0.0, %v4253
          %4255 = vdwg.mxu0
          %v4256 = vadd.f32 %v4106, %v4209
          %v4257 = vadd.f32 %v4107, %v4212
          %v4258 = vadd.f32 %v4108, %v4215
          %v4259 = vadd.f32 %v4109, %v4218
          %v4260 = vadd.f32 %v4110, %v4221
          %v4261 = vadd.f32 %v4111, %v4224
          %v4262 = vadd.f32 %v4112, %v4227
          %v4263 = vadd.f32 %v4113, %v4230
          %v4264 = vadd.f32 %v4114, %v4233
          %v4265 = vadd.f32 %v4115, %v4236
          %v4266 = vadd.f32 %v4116, %v4239
          %v4267 = vadd.f32 %v4117, %v4242
          %v4268 = vadd.f32 %v4118, %v4245
          %v4269 = vadd.f32 %v4119, %v4248
          %v4270 = vadd.f32 %v4120, %v4251
          %v4271 = vadd.f32 %v4121, %v4254
          %s4272 = scalar_lea.vmem [#allocation4], 32
          %v4273 = vld [vmem:[%s4272] sm:$0xff]
          %v4274 = vld [vmem:[%s4272 + $0x10] sm:$0xff]
          %v4275 = vld [vmem:[%s4272 + $0x20] sm:$0xff]
          %v4276 = vld [vmem:[%s4272 + $0x30] sm:$0xff]
          %v4277 = vld [vmem:[%s4272 + $0x40] sm:$0xff]
          %v4278 = vld [vmem:[%s4272 + $0x50] sm:$0xff]
          %v4279 = vld [vmem:[%s4272 + $0x60] sm:$0xff]
          %v4280 = vld [vmem:[%s4272 + $0x70] sm:$0xff]
          %v4281 = vld [vmem:[%s4272 + $0xa0] sm:$0xff]
          %v4282 = vld [vmem:[%s4272 + $0xb0] sm:$0xff]
          %v4283 = vld [vmem:[%s4272 + $0xc0] sm:$0xff]
          %v4284 = vld [vmem:[%s4272 + $0xd0] sm:$0xff]
          %v4285 = vld [vmem:[%s4272 + $0xe0] sm:$0xff]
          %v4286 = vld [vmem:[%s4272 + $0xf0] sm:$0xff]
          %v4287 = vld [vmem:[%s4272 + $0x100] sm:$0xff]
          %v4288 = vld [vmem:[%s4272 + $0x110] sm:$0xff]
          %s4289 = scalar_lea.vmem [#allocation15], 192
          %v4290 = vld [vmem:[%s4289] sm:$0xff]
          %v4291 = vld [vmem:[%s4289 + $0x8] sm:$0xff]
          %v4292 = vld [vmem:[%s4289 + $0x10] sm:$0xff]
          %v4293 = vld [vmem:[%s4289 + $0x18] sm:$0xff]
          %v4295 = vsel %vm3346, %v4273, 0
          %v4298 = vsel %vm3346, %v4274, 0
          %v4301 = vsel %vm3346, %v4275, 0
          %v4304 = vsel %vm3346, %v4276, 0
          %v4307 = vsel %vm3346, %v4277, 0
          %v4310 = vsel %vm3346, %v4278, 0
          %v4313 = vsel %vm3346, %v4279, 0
          %v4316 = vsel %vm3346, %v4280, 0
          %v4319 = vsel %vm3346, %v4281, 0
          %v4322 = vsel %vm3346, %v4282, 0
          %v4325 = vsel %vm3346, %v4283, 0
          %v4328 = vsel %vm3346, %v4284, 0
          %v4331 = vsel %vm3346, %v4285, 0
          %v4334 = vsel %vm3346, %v4286, 0
          %v4337 = vsel %vm3346, %v4287, 0
          %v4340 = vsel %vm3346, %v4288, 0
          %4342 = vmatpush.msra.mxu0 0.0
          %4343 = vmatpush.msra.mxu0 0.0
          %4344 = vmatpush.msra.mxu0 0.0
          %4345 = vmatpush.msra.mxu0 0.0
          %4346 = vmatpush.msra.mxu0 0.0
          %4347 = vmatpush.msra.mxu0 0.0
          %4348 = vmatpush.msra.mxu0 0.0
          %4349 = vmatpush.msra.mxu0 0.0
          %4350 = vmatpush.msra.mxu0 0.0
          %4351 = vmatpush.msra.mxu0 0.0
          %4352 = vmatpush.msra.mxu0 0.0
          %4353 = vmatpush.msra.mxu0 0.0
          %4354 = vmatpush.msra.mxu0 %v4293
          %4355 = vmatpush.msra.mxu0 %v4292
          %4356 = vmatpush.msra.mxu0 %v4291
          %4357 = vmatpush.msra.mxu0 %v4290
          %4358 = vmatmul.f32.gmra.mxu0 %v4295
          %v4359 = vpop.f32.mrf.mxu0
          %v4360 = vadd.f32 0.0, %v4359
          %4361 = vmatmul.f32.gmra.mxu0 %v4298
          %v4362 = vpop.f32.mrf.mxu0
          %v4363 = vadd.f32 0.0, %v4362
          %4364 = vmatmul.f32.gmra.mxu0 %v4301
          %v4365 = vpop.f32.mrf.mxu0
          %v4366 = vadd.f32 0.0, %v4365
          %4367 = vmatmul.f32.gmra.mxu0 %v4304
          %v4368 = vpop.f32.mrf.mxu0
          %v4369 = vadd.f32 0.0, %v4368
          %4370 = vmatmul.f32.gmra.mxu0 %v4307
          %v4371 = vpop.f32.mrf.mxu0
          %v4372 = vadd.f32 0.0, %v4371
          %4373 = vmatmul.f32.gmra.mxu0 %v4310
          %v4374 = vpop.f32.mrf.mxu0
          %v4375 = vadd.f32 0.0, %v4374
          %4376 = vmatmul.f32.gmra.mxu0 %v4313
          %v4377 = vpop.f32.mrf.mxu0
          %v4378 = vadd.f32 0.0, %v4377
          %4379 = vmatmul.f32.gmra.mxu0 %v4316
          %v4380 = vpop.f32.mrf.mxu0
          %v4381 = vadd.f32 0.0, %v4380
          %4382 = vmatmul.f32.gmra.mxu0 %v4319
          %v4383 = vpop.f32.mrf.mxu0
          %v4384 = vadd.f32 0.0, %v4383
          %4385 = vmatmul.f32.gmra.mxu0 %v4322
          %v4386 = vpop.f32.mrf.mxu0
          %v4387 = vadd.f32 0.0, %v4386
          %4388 = vmatmul.f32.gmra.mxu0 %v4325
          %v4389 = vpop.f32.mrf.mxu0
          %v4390 = vadd.f32 0.0, %v4389
          %4391 = vmatmul.f32.gmra.mxu0 %v4328
          %v4392 = vpop.f32.mrf.mxu0
          %v4393 = vadd.f32 0.0, %v4392
          %4394 = vmatmul.f32.gmra.mxu0 %v4331
          %v4395 = vpop.f32.mrf.mxu0
          %v4396 = vadd.f32 0.0, %v4395
          %4397 = vmatmul.f32.gmra.mxu0 %v4334
          %v4398 = vpop.f32.mrf.mxu0
          %v4399 = vadd.f32 0.0, %v4398
          %4400 = vmatmul.f32.gmra.mxu0 %v4337
          %v4401 = vpop.f32.mrf.mxu0
          %v4402 = vadd.f32 0.0, %v4401
          %4403 = vmatmul.f32.gmra.mxu0 %v4340
          %v4404 = vpop.f32.mrf.mxu0
          %v4405 = vadd.f32 0.0, %v4404
          %4406 = vdwg.mxu0
          %v4407 = vadd.f32 %v4256, %v4360
          %v4408 = vadd.f32 %v4257, %v4363
          %v4409 = vadd.f32 %v4258, %v4366
          %v4410 = vadd.f32 %v4259, %v4369
          %v4411 = vadd.f32 %v4260, %v4372
          %v4412 = vadd.f32 %v4261, %v4375
          %v4413 = vadd.f32 %v4262, %v4378
          %v4414 = vadd.f32 %v4263, %v4381
          %v4415 = vadd.f32 %v4264, %v4384
          %v4416 = vadd.f32 %v4265, %v4387
          %v4417 = vadd.f32 %v4266, %v4390
          %v4418 = vadd.f32 %v4267, %v4393
          %v4419 = vadd.f32 %v4268, %v4396
          %v4420 = vadd.f32 %v4269, %v4399
          %v4421 = vadd.f32 %v4270, %v4402
          %v4422 = vadd.f32 %v4271, %v4405
          %v4423 = vld [vmem:[%s4272 + $0x1] sm:$0xff]
          %v4424 = vld [vmem:[%s4272 + $0x11] sm:$0xff]
          %v4425 = vld [vmem:[%s4272 + $0x21] sm:$0xff]
          %v4426 = vld [vmem:[%s4272 + $0x31] sm:$0xff]
          %v4427 = vld [vmem:[%s4272 + $0x41] sm:$0xff]
          %v4428 = vld [vmem:[%s4272 + $0x51] sm:$0xff]
          %v4429 = vld [vmem:[%s4272 + $0x61] sm:$0xff]
          %v4430 = vld [vmem:[%s4272 + $0x71] sm:$0xff]
          %v4431 = vld [vmem:[%s4272 + $0xa1] sm:$0xff]
          %v4432 = vld [vmem:[%s4272 + $0xb1] sm:$0xff]
          %v4433 = vld [vmem:[%s4272 + $0xc1] sm:$0xff]
          %v4434 = vld [vmem:[%s4272 + $0xd1] sm:$0xff]
          %v4435 = vld [vmem:[%s4272 + $0xe1] sm:$0xff]
          %v4436 = vld [vmem:[%s4272 + $0xf1] sm:$0xff]
          %v4437 = vld [vmem:[%s4272 + $0x101] sm:$0xff]
          %v4438 = vld [vmem:[%s4272 + $0x111] sm:$0xff]
          %s4439 = scalar_lea.vmem [#allocation15], 224
          %v4440 = vld [vmem:[%s4439] sm:$0xff]
          %v4441 = vld [vmem:[%s4439 + $0x8] sm:$0xff]
          %v4442 = vld [vmem:[%s4439 + $0x10] sm:$0xff]
          %v4443 = vld [vmem:[%s4439 + $0x18] sm:$0xff]
          %v4445 = vsel %vm3346, %v4423, 0
          %v4448 = vsel %vm3346, %v4424, 0
          %v4451 = vsel %vm3346, %v4425, 0
          %v4454 = vsel %vm3346, %v4426, 0
          %v4457 = vsel %vm3346, %v4427, 0
          %v4460 = vsel %vm3346, %v4428, 0
          %v4463 = vsel %vm3346, %v4429, 0
          %v4466 = vsel %vm3346, %v4430, 0
          %v4469 = vsel %vm3346, %v4431, 0
          %v4472 = vsel %vm3346, %v4432, 0
          %v4475 = vsel %vm3346, %v4433, 0
          %v4478 = vsel %vm3346, %v4434, 0
          %v4481 = vsel %vm3346, %v4435, 0
          %v4484 = vsel %vm3346, %v4436, 0
          %v4487 = vsel %vm3346, %v4437, 0
          %v4490 = vsel %vm3346, %v4438, 0
          %4492 = vmatpush.msra.mxu0 0.0
          %4493 = vmatpush.msra.mxu0 0.0
          %4494 = vmatpush.msra.mxu0 0.0
          %4495 = vmatpush.msra.mxu0 0.0
          %4496 = vmatpush.msra.mxu0 0.0
          %4497 = vmatpush.msra.mxu0 0.0
          %4498 = vmatpush.msra.mxu0 0.0
          %4499 = vmatpush.msra.mxu0 0.0
          %4500 = vmatpush.msra.mxu0 0.0
          %4501 = vmatpush.msra.mxu0 0.0
          %4502 = vmatpush.msra.mxu0 0.0
          %4503 = vmatpush.msra.mxu0 0.0
          %4504 = vmatpush.msra.mxu0 %v4443
          %4505 = vmatpush.msra.mxu0 %v4442
          %4506 = vmatpush.msra.mxu0 %v4441
          %4507 = vmatpush.msra.mxu0 %v4440
          %4508 = vmatmul.f32.gmra.mxu0 %v4445
          %v4509 = vpop.f32.mrf.mxu0
          %v4510 = vadd.f32 0.0, %v4509
          %4511 = vmatmul.f32.gmra.mxu0 %v4448
          %v4512 = vpop.f32.mrf.mxu0
          %v4513 = vadd.f32 0.0, %v4512
          %4514 = vmatmul.f32.gmra.mxu0 %v4451
          %v4515 = vpop.f32.mrf.mxu0
          %v4516 = vadd.f32 0.0, %v4515
          %4517 = vmatmul.f32.gmra.mxu0 %v4454
          %v4518 = vpop.f32.mrf.mxu0
          %v4519 = vadd.f32 0.0, %v4518
          %4520 = vmatmul.f32.gmra.mxu0 %v4457
          %v4521 = vpop.f32.mrf.mxu0
          %v4522 = vadd.f32 0.0, %v4521
          %4523 = vmatmul.f32.gmra.mxu0 %v4460
          %v4524 = vpop.f32.mrf.mxu0
          %v4525 = vadd.f32 0.0, %v4524
          %4526 = vmatmul.f32.gmra.mxu0 %v4463
          %v4527 = vpop.f32.mrf.mxu0
          %v4528 = vadd.f32 0.0, %v4527
          %4529 = vmatmul.f32.gmra.mxu0 %v4466
          %v4530 = vpop.f32.mrf.mxu0
          %v4531 = vadd.f32 0.0, %v4530
          %4532 = vmatmul.f32.gmra.mxu0 %v4469
          %v4533 = vpop.f32.mrf.mxu0
          %v4534 = vadd.f32 0.0, %v4533
          %4535 = vmatmul.f32.gmra.mxu0 %v4472
          %v4536 = vpop.f32.mrf.mxu0
          %v4537 = vadd.f32 0.0, %v4536
          %4538 = vmatmul.f32.gmra.mxu0 %v4475
          %v4539 = vpop.f32.mrf.mxu0
          %v4540 = vadd.f32 0.0, %v4539
          %4541 = vmatmul.f32.gmra.mxu0 %v4478
          %v4542 = vpop.f32.mrf.mxu0
          %v4543 = vadd.f32 0.0, %v4542
          %4544 = vmatmul.f32.gmra.mxu0 %v4481
          %v4545 = vpop.f32.mrf.mxu0
          %v4546 = vadd.f32 0.0, %v4545
          %4547 = vmatmul.f32.gmra.mxu0 %v4484
          %v4548 = vpop.f32.mrf.mxu0
          %v4549 = vadd.f32 0.0, %v4548
          %4550 = vmatmul.f32.gmra.mxu0 %v4487
          %v4551 = vpop.f32.mrf.mxu0
          %v4552 = vadd.f32 0.0, %v4551
          %4553 = vmatmul.f32.gmra.mxu0 %v4490
          %v4554 = vpop.f32.mrf.mxu0
          %v4555 = vadd.f32 0.0, %v4554
          %4556 = vdwg.mxu0
          %v4557 = vadd.f32 %v4407, %v4510
          %v4558 = vadd.f32 %v4408, %v4513
          %v4559 = vadd.f32 %v4409, %v4516
          %v4560 = vadd.f32 %v4410, %v4519
          %v4561 = vadd.f32 %v4411, %v4522
          %v4562 = vadd.f32 %v4412, %v4525
          %v4563 = vadd.f32 %v4413, %v4528
          %v4564 = vadd.f32 %v4414, %v4531
          %v4565 = vadd.f32 %v4415, %v4534
          %v4566 = vadd.f32 %v4416, %v4537
          %v4567 = vadd.f32 %v4417, %v4540
          %v4568 = vadd.f32 %v4418, %v4543
          %v4569 = vadd.f32 %v4419, %v4546
          %v4570 = vadd.f32 %v4420, %v4549
          %v4571 = vadd.f32 %v4421, %v4552
          %v4572 = vadd.f32 %v4422, %v4555
          %v4573 = vld [vmem:[%s4272 + $0x2] sm:$0xff]
          %v4574 = vld [vmem:[%s4272 + $0x12] sm:$0xff]
          %v4575 = vld [vmem:[%s4272 + $0x22] sm:$0xff]
          %v4576 = vld [vmem:[%s4272 + $0x32] sm:$0xff]
          %v4577 = vld [vmem:[%s4272 + $0x42] sm:$0xff]
          %v4578 = vld [vmem:[%s4272 + $0x52] sm:$0xff]
          %v4579 = vld [vmem:[%s4272 + $0x62] sm:$0xff]
          %v4580 = vld [vmem:[%s4272 + $0x72] sm:$0xff]
          %v4581 = vld [vmem:[%s4272 + $0xa2] sm:$0xff]
          %v4582 = vld [vmem:[%s4272 + $0xb2] sm:$0xff]
          %v4583 = vld [vmem:[%s4272 + $0xc2] sm:$0xff]
          %v4584 = vld [vmem:[%s4272 + $0xd2] sm:$0xff]
          %v4585 = vld [vmem:[%s4272 + $0xe2] sm:$0xff]
          %v4586 = vld [vmem:[%s4272 + $0xf2] sm:$0xff]
          %v4587 = vld [vmem:[%s4272 + $0x102] sm:$0xff]
          %v4588 = vld [vmem:[%s4272 + $0x112] sm:$0xff]
          %s4589 = scalar_lea.vmem [#allocation15], 256
          %v4590 = vld [vmem:[%s4589] sm:$0xff]
          %v4591 = vld [vmem:[%s4589 + $0x8] sm:$0xff]
          %v4592 = vld [vmem:[%s4589 + $0x10] sm:$0xff]
          %v4593 = vld [vmem:[%s4589 + $0x18] sm:$0xff]
          %v4595 = vsel %vm3346, %v4573, 0
          %v4598 = vsel %vm3346, %v4574, 0
          %v4601 = vsel %vm3346, %v4575, 0
          %v4604 = vsel %vm3346, %v4576, 0
          %v4607 = vsel %vm3346, %v4577, 0
          %v4610 = vsel %vm3346, %v4578, 0
          %v4613 = vsel %vm3346, %v4579, 0
          %v4616 = vsel %vm3346, %v4580, 0
          %v4619 = vsel %vm3346, %v4581, 0
          %v4622 = vsel %vm3346, %v4582, 0
          %v4625 = vsel %vm3346, %v4583, 0
          %v4628 = vsel %vm3346, %v4584, 0
          %v4631 = vsel %vm3346, %v4585, 0
          %v4634 = vsel %vm3346, %v4586, 0
          %v4637 = vsel %vm3346, %v4587, 0
          %v4640 = vsel %vm3346, %v4588, 0
          %4642 = vmatpush.msra.mxu0 0.0
          %4643 = vmatpush.msra.mxu0 0.0
          %4644 = vmatpush.msra.mxu0 0.0
          %4645 = vmatpush.msra.mxu0 0.0
          %4646 = vmatpush.msra.mxu0 0.0
          %4647 = vmatpush.msra.mxu0 0.0
          %4648 = vmatpush.msra.mxu0 0.0
          %4649 = vmatpush.msra.mxu0 0.0
          %4650 = vmatpush.msra.mxu0 0.0
          %4651 = vmatpush.msra.mxu0 0.0
          %4652 = vmatpush.msra.mxu0 0.0
          %4653 = vmatpush.msra.mxu0 0.0
          %4654 = vmatpush.msra.mxu0 %v4593
          %4655 = vmatpush.msra.mxu0 %v4592
          %4656 = vmatpush.msra.mxu0 %v4591
          %4657 = vmatpush.msra.mxu0 %v4590
          %4658 = vmatmul.f32.gmra.mxu0 %v4595
          %v4659 = vpop.f32.mrf.mxu0
          %v4660 = vadd.f32 0.0, %v4659
          %4661 = vmatmul.f32.gmra.mxu0 %v4598
          %v4662 = vpop.f32.mrf.mxu0
          %v4663 = vadd.f32 0.0, %v4662
          %4664 = vmatmul.f32.gmra.mxu0 %v4601
          %v4665 = vpop.f32.mrf.mxu0
          %v4666 = vadd.f32 0.0, %v4665
          %4667 = vmatmul.f32.gmra.mxu0 %v4604
          %v4668 = vpop.f32.mrf.mxu0
          %v4669 = vadd.f32 0.0, %v4668
          %4670 = vmatmul.f32.gmra.mxu0 %v4607
          %v4671 = vpop.f32.mrf.mxu0
          %v4672 = vadd.f32 0.0, %v4671
          %4673 = vmatmul.f32.gmra.mxu0 %v4610
          %v4674 = vpop.f32.mrf.mxu0
          %v4675 = vadd.f32 0.0, %v4674
          %4676 = vmatmul.f32.gmra.mxu0 %v4613
          %v4677 = vpop.f32.mrf.mxu0
          %v4678 = vadd.f32 0.0, %v4677
          %4679 = vmatmul.f32.gmra.mxu0 %v4616
          %v4680 = vpop.f32.mrf.mxu0
          %v4681 = vadd.f32 0.0, %v4680
          %4682 = vmatmul.f32.gmra.mxu0 %v4619
          %v4683 = vpop.f32.mrf.mxu0
          %v4684 = vadd.f32 0.0, %v4683
          %4685 = vmatmul.f32.gmra.mxu0 %v4622
          %v4686 = vpop.f32.mrf.mxu0
          %v4687 = vadd.f32 0.0, %v4686
          %4688 = vmatmul.f32.gmra.mxu0 %v4625
          %v4689 = vpop.f32.mrf.mxu0
          %v4690 = vadd.f32 0.0, %v4689
          %4691 = vmatmul.f32.gmra.mxu0 %v4628
          %v4692 = vpop.f32.mrf.mxu0
          %v4693 = vadd.f32 0.0, %v4692
          %4694 = vmatmul.f32.gmra.mxu0 %v4631
          %v4695 = vpop.f32.mrf.mxu0
          %v4696 = vadd.f32 0.0, %v4695
          %4697 = vmatmul.f32.gmra.mxu0 %v4634
          %v4698 = vpop.f32.mrf.mxu0
          %v4699 = vadd.f32 0.0, %v4698
          %4700 = vmatmul.f32.gmra.mxu0 %v4637
          %v4701 = vpop.f32.mrf.mxu0
          %v4702 = vadd.f32 0.0, %v4701
          %4703 = vmatmul.f32.gmra.mxu0 %v4640
          %v4704 = vpop.f32.mrf.mxu0
          %v4705 = vadd.f32 0.0, %v4704
          %4706 = vdwg.mxu0
          %v4707 = vadd.f32 %v4557, %v4660
          %v4708 = vadd.f32 %v4558, %v4663
          %v4709 = vadd.f32 %v4559, %v4666
          %v4710 = vadd.f32 %v4560, %v4669
          %v4711 = vadd.f32 %v4561, %v4672
          %v4712 = vadd.f32 %v4562, %v4675
          %v4713 = vadd.f32 %v4563, %v4678
          %v4714 = vadd.f32 %v4564, %v4681
          %v4715 = vadd.f32 %v4565, %v4684
          %v4716 = vadd.f32 %v4566, %v4687
          %v4717 = vadd.f32 %v4567, %v4690
          %v4718 = vadd.f32 %v4568, %v4693
          %v4719 = vadd.f32 %v4569, %v4696
          %v4720 = vadd.f32 %v4570, %v4699
          %v4721 = vadd.f32 %v4571, %v4702
          %v4722 = vadd.f32 %v4572, %v4705
          %v4723 = vld [vmem:[#allocation16] sm:$0x1]
          %v4725 = vperm.slane %v4723, 0
          %v4727 = vadd.f32 %v4707, %v4725
          %v4728 = vadd.f32 %v4708, %v4725
          %v4729 = vadd.f32 %v4709, %v4725
          %v4730 = vadd.f32 %v4710, %v4725
          %v4731 = vadd.f32 %v4711, %v4725
          %v4732 = vadd.f32 %v4712, %v4725
          %v4733 = vadd.f32 %v4713, %v4725
          %v4734 = vadd.f32 %v4714, %v4725
          %v4735 = vadd.f32 %v4715, %v4725
          %v4736 = vadd.f32 %v4716, %v4725
          %v4737 = vadd.f32 %v4717, %v4725
          %v4738 = vadd.f32 %v4718, %v4725
          %v4739 = vadd.f32 %v4719, %v4725
          %v4740 = vadd.f32 %v4720, %v4725
          %v4741 = vadd.f32 %v4721, %v4725
          %v4742 = vadd.f32 %v4722, %v4725
          %v4743 = vmax.f32 %v4727, 0.0
          %v4744 = vmax.f32 %v4728, 0.0
          %v4745 = vmax.f32 %v4729, 0.0
          %v4746 = vmax.f32 %v4730, 0.0
          %v4747 = vmax.f32 %v4731, 0.0
          %v4748 = vmax.f32 %v4732, 0.0
          %v4749 = vmax.f32 %v4733, 0.0
          %v4750 = vmax.f32 %v4734, 0.0
          %v4751 = vmax.f32 %v4735, 0.0
          %v4752 = vmax.f32 %v4736, 0.0
          %v4753 = vmax.f32 %v4737, 0.0
          %v4754 = vmax.f32 %v4738, 0.0
          %v4755 = vmax.f32 %v4739, 0.0
          %v4756 = vmax.f32 %v4740, 0.0
          %v4757 = vmax.f32 %v4741, 0.0
          %v4758 = vmax.f32 %v4742, 0.0
          %vm4759 = vcmask 523264
          %4760 = vst.msk [vmem:[#allocation5] sm:$0xff] %vm4759, %v4743
          %4761 = vst.msk [vmem:[#allocation5 + $0x8] sm:$0xff] %vm4759, %v4751
          %s4762 = scalar_lea.vmem [#allocation5], 16
          %4763 = vst.msk [vmem:[%s4762] sm:$0xff] %vm4759, %v4744
          %4764 = vst.msk [vmem:[%s4762 + $0x8] sm:$0xff] %vm4759, %v4752
          %s4765 = scalar_lea.vmem [#allocation5], 32
          %4766 = vst.msk [vmem:[%s4765] sm:$0xff] %vm4759, %v4745
          %4767 = vst.msk [vmem:[%s4765 + $0x8] sm:$0xff] %vm4759, %v4753
          %s4768 = scalar_lea.vmem [#allocation5], 48
          %4769 = vst.msk [vmem:[%s4768] sm:$0xff] %vm4759, %v4746
          %4770 = vst.msk [vmem:[%s4768 + $0x8] sm:$0xff] %vm4759, %v4754
          %s4771 = scalar_lea.vmem [#allocation5], 64
          %4772 = vst.msk [vmem:[%s4771] sm:$0xff] %vm4759, %v4747
          %4773 = vst.msk [vmem:[%s4771 + $0x8] sm:$0xff] %vm4759, %v4755
          %s4774 = scalar_lea.vmem [#allocation5], 80
          %4775 = vst.msk [vmem:[%s4774] sm:$0xff] %vm4759, %v4748
          %4776 = vst.msk [vmem:[%s4774 + $0x8] sm:$0xff] %vm4759, %v4756
          %s4777 = scalar_lea.vmem [#allocation5], 96
          %4778 = vst.msk [vmem:[%s4777] sm:$0xff] %vm4759, %v4749
          %4779 = vst.msk [vmem:[%s4777 + $0x8] sm:$0xff] %vm4759, %v4757
          %s4780 = scalar_lea.vmem [#allocation5], 112
          %4781 = vst.msk [vmem:[%s4780] sm:$0xff] %vm4759, %v4750
          %4782 = vst.msk [vmem:[%s4780 + $0x8] sm:$0xff] %vm4759, %v4758
          %4783 = vst [vmem:[#allocation6] sm:$0xff] 0.0
        $region104: #{critic_forward_pallas.1} parent=63 // pred_fallthru
          _
        %s4784 = smul.u32 %s28, 16
        %s4785 = scalar_lea.vmem [#allocation5], %s4784
        %v4786 = vld [vmem:[%s4785] sm:$0xff]
        %v4787 = vld [vmem:[%s4785 + $0x8] sm:$0xff]
        %v4788 = vld [vmem:[%s471] sm:$0xff]
        %v4789 = vld [vmem:[%s471 + $0x8] sm:$0xff]
        %v4790 = vld [vmem:[%s471 + $0x10] sm:$0xff]
        %v4791 = vld [vmem:[%s471 + $0x18] sm:$0xff]
        %v4792 = vld [vmem:[%s471 + $0x20] sm:$0xff]
        %v4793 = vld [vmem:[%s471 + $0x28] sm:$0xff]
        %v4794 = vld [vmem:[%s471 + $0x30] sm:$0xff]
        %v4795 = vld [vmem:[%s471 + $0x38] sm:$0xff]
        %v4796 = vld [vmem:[%s471 + $0x40] sm:$0xff]
        %v4797 = vld [vmem:[%s471 + $0x48] sm:$0xff]
        %v4798 = vld [vmem:[%s471 + $0x50] sm:$0xff]
        %v4799 = vld [vmem:[%s471 + $0x58] sm:$0xff]
        %v4800 = vld [vmem:[%s471 + $0x60] sm:$0xff]
        %v4801 = vld [vmem:[%s471 + $0x68] sm:$0xff]
        %v4802 = vld [vmem:[%s471 + $0x70] sm:$0xff]
        %v4803 = vld [vmem:[%s471 + $0x78] sm:$0xff]
        %v4804 = vld [vmem:[%s471 + $0x80] sm:$0xff]
        %v4805 = vld [vmem:[%s471 + $0x88] sm:$0xff]
        %v4806 = vld [vmem:[%s471 + $0x90] sm:$0xff]
        %v4807 = vld [vmem:[%s471 + $0x98] sm:$0xff]
        %v4808 = vld [vmem:[%s471 + $0xa0] sm:$0xff]
        %v4809 = vld [vmem:[%s471 + $0xa8] sm:$0xff]
        %v4810 = vld [vmem:[%s471 + $0xb0] sm:$0xff]
        %v4811 = vld [vmem:[%s471 + $0xb8] sm:$0xff]
        %v4812 = vld [vmem:[%s471 + $0xc0] sm:$0xff]
        %v4813 = vld [vmem:[%s471 + $0xc8] sm:$0xff]
        %v4814 = vld [vmem:[%s471 + $0xd0] sm:$0xff]
        %v4815 = vld [vmem:[%s471 + $0xd8] sm:$0xff]
        %v4816 = vld [vmem:[%s471 + $0xe0] sm:$0xff]
        %v4817 = vld [vmem:[%s471 + $0xe8] sm:$0xff]
        %v4818 = vld [vmem:[%s471 + $0xf0] sm:$0xff]
        %v4819 = vld [vmem:[%s471 + $0xf8] sm:$0xff]
        %v4820 = vld [vmem:[%s471 + $0x100] sm:$0xff]
        %v4821 = vld [vmem:[%s471 + $0x108] sm:$0xff]
        %v4822 = vld [vmem:[%s471 + $0x110] sm:$0xff]
        %v4823 = vld [vmem:[%s471 + $0x118] sm:$0xff]
        %v4824 = vld [vmem:[%s471 + $0x120] sm:$0xff]
        %v4825 = vld [vmem:[%s471 + $0x128] sm:$0xff]
        %v4826 = vld [vmem:[%s471 + $0x130] sm:$0xff]
        %v4827 = vld [vmem:[%s471 + $0x138] sm:$0xff]
        %v4828 = vld [vmem:[%s471 + $0x140] sm:$0xff]
        %v4829 = vld [vmem:[%s471 + $0x148] sm:$0xff]
        %v4830 = vld [vmem:[%s471 + $0x150] sm:$0xff]
        %v4831 = vld [vmem:[%s471 + $0x158] sm:$0xff]
        %v4832 = vld [vmem:[%s471 + $0x160] sm:$0xff]
        %v4833 = vld [vmem:[%s471 + $0x168] sm:$0xff]
        %v4834 = vld [vmem:[%s471 + $0x170] sm:$0xff]
        %v4835 = vld [vmem:[%s471 + $0x178] sm:$0xff]
        %v4836 = vld [vmem:[%s471 + $0x180] sm:$0xff]
        %v4837 = vld [vmem:[%s471 + $0x188] sm:$0xff]
        %v4838 = vld [vmem:[%s471 + $0x190] sm:$0xff]
        %v4839 = vld [vmem:[%s471 + $0x198] sm:$0xff]
        %v4840 = vld [vmem:[%s471 + $0x1a0] sm:$0xff]
        %v4841 = vld [vmem:[%s471 + $0x1a8] sm:$0xff]
        %v4842 = vld [vmem:[%s471 + $0x1b0] sm:$0xff]
        %v4843 = vld [vmem:[%s471 + $0x1b8] sm:$0xff]
        %v4844 = vld [vmem:[%s471 + $0x1c0] sm:$0xff]
        %v4845 = vld [vmem:[%s471 + $0x1c8] sm:$0xff]
        %v4846 = vld [vmem:[%s471 + $0x1d0] sm:$0xff]
        %v4847 = vld [vmem:[%s471 + $0x1d8] sm:$0xff]
        %v4848 = vld [vmem:[%s471 + $0x1e0] sm:$0xff]
        %v4849 = vld [vmem:[%s471 + $0x1e8] sm:$0xff]
        %v4850 = vld [vmem:[%s471 + $0x1f0] sm:$0xff]
        %v4851 = vld [vmem:[%s471 + $0x1f8] sm:$0xff]
        %v4854 = vrot.slane %v4786, 1
        %vm4855 = vcmask 1041409
        %v4856 = vsel %vm4855, %v4787, %v4854
        %vm4857 = vcmask 523264
        %v4858 = vsel %vm4857, %v4856, 0
        %4860 = vmatpush.msra.mxu0 0.0
        %4861 = vmatpush.msra.mxu0 0.0
        %4862 = vmatpush.msra.mxu0 0.0
        %4863 = vmatpush.msra.mxu0 0.0
        %4864 = vmatpush.msra.mxu0 0.0
        %4865 = vmatpush.msra.mxu0 0.0
        %4866 = vmatpush.msra.mxu0 0.0
        %4867 = vmatpush.msra.mxu0 0.0
        %4868 = vmatpush.msra.mxu0 %v4848
        %4869 = vmatpush.msra.mxu0 %v4844
        %4870 = vmatpush.msra.mxu0 %v4840
        %4871 = vmatpush.msra.mxu0 %v4836
        %4872 = vmatpush.msra.mxu0 %v4832
        %4873 = vmatpush.msra.mxu0 %v4828
        %4874 = vmatpush.msra.mxu0 %v4824
        %4875 = vmatpush.msra.mxu0 %v4820
        %4876 = vmatmul.f32.gmra.mxu0 %v4858
        %v4877 = vpop.f32.mrf.mxu0
        %v4878 = vadd.f32 0.0, %v4877
        %4879 = vdwg.mxu0
        %4880 = vmatpush.msra.mxu0 0.0
        %4881 = vmatpush.msra.mxu0 0.0
        %4882 = vmatpush.msra.mxu0 0.0
        %4883 = vmatpush.msra.mxu0 0.0
        %4884 = vmatpush.msra.mxu0 0.0
        %4885 = vmatpush.msra.mxu0 0.0
        %4886 = vmatpush.msra.mxu0 0.0
        %4887 = vmatpush.msra.mxu0 0.0
        %4888 = vmatpush.msra.mxu0 %v4849
        %4889 = vmatpush.msra.mxu0 %v4845
        %4890 = vmatpush.msra.mxu0 %v4841
        %4891 = vmatpush.msra.mxu0 %v4837
        %4892 = vmatpush.msra.mxu0 %v4833
        %4893 = vmatpush.msra.mxu0 %v4829
        %4894 = vmatpush.msra.mxu0 %v4825
        %4895 = vmatpush.msra.mxu0 %v4821
        %4896 = vmatmul.f32.gmra.mxu0 %v4858
        %v4897 = vpop.f32.mrf.mxu0
        %v4898 = vadd.f32 0.0, %v4897
        %4899 = vdwg.mxu0
        %4900 = vmatpush.msra.mxu0 0.0
        %4901 = vmatpush.msra.mxu0 0.0
        %4902 = vmatpush.msra.mxu0 0.0
        %4903 = vmatpush.msra.mxu0 0.0
        %4904 = vmatpush.msra.mxu0 0.0
        %4905 = vmatpush.msra.mxu0 0.0
        %4906 = vmatpush.msra.mxu0 0.0
        %4907 = vmatpush.msra.mxu0 0.0
        %4908 = vmatpush.msra.mxu0 %v4850
        %4909 = vmatpush.msra.mxu0 %v4846
        %4910 = vmatpush.msra.mxu0 %v4842
        %4911 = vmatpush.msra.mxu0 %v4838
        %4912 = vmatpush.msra.mxu0 %v4834
        %4913 = vmatpush.msra.mxu0 %v4830
        %4914 = vmatpush.msra.mxu0 %v4826
        %4915 = vmatpush.msra.mxu0 %v4822
        %4916 = vmatmul.f32.gmra.mxu0 %v4858
        %v4917 = vpop.f32.mrf.mxu0
        %v4918 = vadd.f32 0.0, %v4917
        %4919 = vdwg.mxu0
        %4920 = vmatpush.msra.mxu0 0.0
        %4921 = vmatpush.msra.mxu0 0.0
        %4922 = vmatpush.msra.mxu0 0.0
        %4923 = vmatpush.msra.mxu0 0.0
        %4924 = vmatpush.msra.mxu0 0.0
        %4925 = vmatpush.msra.mxu0 0.0
        %4926 = vmatpush.msra.mxu0 0.0
        %4927 = vmatpush.msra.mxu0 0.0
        %4928 = vmatpush.msra.mxu0 %v4851
        %4929 = vmatpush.msra.mxu0 %v4847
        %4930 = vmatpush.msra.mxu0 %v4843
        %4931 = vmatpush.msra.mxu0 %v4839
        %4932 = vmatpush.msra.mxu0 %v4835
        %4933 = vmatpush.msra.mxu0 %v4831
        %4934 = vmatpush.msra.mxu0 %v4827
        %4935 = vmatpush.msra.mxu0 %v4823
        %4936 = vmatmul.f32.gmra.mxu0 %v4858
        %v4937 = vpop.f32.mrf.mxu0
        %v4938 = vadd.f32 0.0, %v4937
        %4939 = vdwg.mxu0
        %v4940 = vrot.slane %v4787, 7
        %v4941 = vsel %vm4855, %v4940, %v4786
        %v4942 = vsel %vm4857, %v4941, 0
        %4944 = vmatpush.msra.mxu0 0.0
        %4945 = vmatpush.msra.mxu0 0.0
        %4946 = vmatpush.msra.mxu0 0.0
        %4947 = vmatpush.msra.mxu0 0.0
        %4948 = vmatpush.msra.mxu0 0.0
        %4949 = vmatpush.msra.mxu0 0.0
        %4950 = vmatpush.msra.mxu0 0.0
        %4951 = vmatpush.msra.mxu0 0.0
        %4952 = vmatpush.msra.mxu0 %v4816
        %4953 = vmatpush.msra.mxu0 %v4812
        %4954 = vmatpush.msra.mxu0 %v4808
        %4955 = vmatpush.msra.mxu0 %v4804
        %4956 = vmatpush.msra.mxu0 %v4800
        %4957 = vmatpush.msra.mxu0 %v4796
        %4958 = vmatpush.msra.mxu0 %v4792
        %4959 = vmatpush.msra.mxu0 %v4788
        %4960 = vmatmul.f32.gmra.mxu0 %v4942
        %v4961 = vpop.f32.mrf.mxu0
        %v4962 = vadd.f32 %v4878, %v4961
        %4963 = vdwg.mxu0
        %4964 = vmatpush.msra.mxu0 0.0
        %4965 = vmatpush.msra.mxu0 0.0
        %4966 = vmatpush.msra.mxu0 0.0
        %4967 = vmatpush.msra.mxu0 0.0
        %4968 = vmatpush.msra.mxu0 0.0
        %4969 = vmatpush.msra.mxu0 0.0
        %4970 = vmatpush.msra.mxu0 0.0
        %4971 = vmatpush.msra.mxu0 0.0
        %4972 = vmatpush.msra.mxu0 %v4817
        %4973 = vmatpush.msra.mxu0 %v4813
        %4974 = vmatpush.msra.mxu0 %v4809
        %4975 = vmatpush.msra.mxu0 %v4805
        %4976 = vmatpush.msra.mxu0 %v4801
        %4977 = vmatpush.msra.mxu0 %v4797
        %4978 = vmatpush.msra.mxu0 %v4793
        %4979 = vmatpush.msra.mxu0 %v4789
        %4980 = vmatmul.f32.gmra.mxu0 %v4942
        %v4981 = vpop.f32.mrf.mxu0
        %v4982 = vadd.f32 %v4898, %v4981
        %4983 = vdwg.mxu0
        %4984 = vmatpush.msra.mxu0 0.0
        %4985 = vmatpush.msra.mxu0 0.0
        %4986 = vmatpush.msra.mxu0 0.0
        %4987 = vmatpush.msra.mxu0 0.0
        %4988 = vmatpush.msra.mxu0 0.0
        %4989 = vmatpush.msra.mxu0 0.0
        %4990 = vmatpush.msra.mxu0 0.0
        %4991 = vmatpush.msra.mxu0 0.0
        %4992 = vmatpush.msra.mxu0 %v4818
        %4993 = vmatpush.msra.mxu0 %v4814
        %4994 = vmatpush.msra.mxu0 %v4810
        %4995 = vmatpush.msra.mxu0 %v4806
        %4996 = vmatpush.msra.mxu0 %v4802
        %4997 = vmatpush.msra.mxu0 %v4798
        %4998 = vmatpush.msra.mxu0 %v4794
        %4999 = vmatpush.msra.mxu0 %v4790
        %5000 = vmatmul.f32.gmra.mxu0 %v4942
        %v5001 = vpop.f32.mrf.mxu0
        %v5002 = vadd.f32 %v4918, %v5001
        %5003 = vdwg.mxu0
        %5004 = vmatpush.msra.mxu0 0.0
        %5005 = vmatpush.msra.mxu0 0.0
        %5006 = vmatpush.msra.mxu0 0.0
        %5007 = vmatpush.msra.mxu0 0.0
        %5008 = vmatpush.msra.mxu0 0.0
        %5009 = vmatpush.msra.mxu0 0.0
        %5010 = vmatpush.msra.mxu0 0.0
        %5011 = vmatpush.msra.mxu0 0.0
        %5012 = vmatpush.msra.mxu0 %v4819
        %5013 = vmatpush.msra.mxu0 %v4815
        %5014 = vmatpush.msra.mxu0 %v4811
        %5015 = vmatpush.msra.mxu0 %v4807
        %5016 = vmatpush.msra.mxu0 %v4803
        %5017 = vmatpush.msra.mxu0 %v4799
        %5018 = vmatpush.msra.mxu0 %v4795
        %5019 = vmatpush.msra.mxu0 %v4791
        %5020 = vmatmul.f32.gmra.mxu0 %v4942
        %v5021 = vpop.f32.mrf.mxu0
        %v5022 = vadd.f32 %v4938, %v5021
        %5023 = vdwg.mxu0
        %v5024 = vld [vmem:[%s471 + $0x200] sm:$0xff]
        %v5025 = vld [vmem:[%s471 + $0x208] sm:$0xff]
        %v5026 = vld [vmem:[%s471 + $0x210] sm:$0xff]
        %v5027 = vld [vmem:[%s471 + $0x218] sm:$0xff]
        %v5028 = vld [vmem:[%s471 + $0x220] sm:$0xff]
        %v5029 = vld [vmem:[%s471 + $0x228] sm:$0xff]
        %v5030 = vld [vmem:[%s471 + $0x230] sm:$0xff]
        %v5031 = vld [vmem:[%s471 + $0x238] sm:$0xff]
        %v5032 = vld [vmem:[%s471 + $0x240] sm:$0xff]
        %v5033 = vld [vmem:[%s471 + $0x248] sm:$0xff]
        %v5034 = vld [vmem:[%s471 + $0x250] sm:$0xff]
        %v5035 = vld [vmem:[%s471 + $0x258] sm:$0xff]
        %v5036 = vld [vmem:[%s471 + $0x260] sm:$0xff]
        %v5037 = vld [vmem:[%s471 + $0x268] sm:$0xff]
        %v5038 = vld [vmem:[%s471 + $0x270] sm:$0xff]
        %v5039 = vld [vmem:[%s471 + $0x278] sm:$0xff]
        %v5040 = vld [vmem:[%s471 + $0x280] sm:$0xff]
        %v5041 = vld [vmem:[%s471 + $0x288] sm:$0xff]
        %v5042 = vld [vmem:[%s471 + $0x290] sm:$0xff]
        %v5043 = vld [vmem:[%s471 + $0x298] sm:$0xff]
        %v5044 = vld [vmem:[%s471 + $0x2a0] sm:$0xff]
        %v5045 = vld [vmem:[%s471 + $0x2a8] sm:$0xff]
        %v5046 = vld [vmem:[%s471 + $0x2b0] sm:$0xff]
        %v5047 = vld [vmem:[%s471 + $0x2b8] sm:$0xff]
        %v5048 = vld [vmem:[%s471 + $0x2c0] sm:$0xff]
        %v5049 = vld [vmem:[%s471 + $0x2c8] sm:$0xff]
        %v5050 = vld [vmem:[%s471 + $0x2d0] sm:$0xff]
        %v5051 = vld [vmem:[%s471 + $0x2d8] sm:$0xff]
        %v5052 = vld [vmem:[%s471 + $0x2e0] sm:$0xff]
        %v5053 = vld [vmem:[%s471 + $0x2e8] sm:$0xff]
        %v5054 = vld [vmem:[%s471 + $0x2f0] sm:$0xff]
        %v5055 = vld [vmem:[%s471 + $0x2f8] sm:$0xff]
        %v5056 = vrot.slane %v4786, 2
        %v5057 = vrot.slane %v4787, 1
        %v5058 = vsel %vm4855, %v5057, %v5056
        %v5059 = vsel %vm4857, %v5058, 0
        %5061 = vmatpush.msra.mxu0 0.0
        %5062 = vmatpush.msra.mxu0 0.0
        %5063 = vmatpush.msra.mxu0 0.0
        %5064 = vmatpush.msra.mxu0 0.0
        %5065 = vmatpush.msra.mxu0 0.0
        %5066 = vmatpush.msra.mxu0 0.0
        %5067 = vmatpush.msra.mxu0 0.0
        %5068 = vmatpush.msra.mxu0 0.0
        %5069 = vmatpush.msra.mxu0 %v5052
        %5070 = vmatpush.msra.mxu0 %v5048
        %5071 = vmatpush.msra.mxu0 %v5044
        %5072 = vmatpush.msra.mxu0 %v5040
        %5073 = vmatpush.msra.mxu0 %v5036
        %5074 = vmatpush.msra.mxu0 %v5032
        %5075 = vmatpush.msra.mxu0 %v5028
        %5076 = vmatpush.msra.mxu0 %v5024
        %5077 = vmatmul.f32.gmra.mxu0 %v5059
        %v5078 = vpop.f32.mrf.mxu0
        %v5079 = vadd.f32 0.0, %v5078
        %5080 = vdwg.mxu0
        %5081 = vmatpush.msra.mxu0 0.0
        %5082 = vmatpush.msra.mxu0 0.0
        %5083 = vmatpush.msra.mxu0 0.0
        %5084 = vmatpush.msra.mxu0 0.0
        %5085 = vmatpush.msra.mxu0 0.0
        %5086 = vmatpush.msra.mxu0 0.0
        %5087 = vmatpush.msra.mxu0 0.0
        %5088 = vmatpush.msra.mxu0 0.0
        %5089 = vmatpush.msra.mxu0 %v5053
        %5090 = vmatpush.msra.mxu0 %v5049
        %5091 = vmatpush.msra.mxu0 %v5045
        %5092 = vmatpush.msra.mxu0 %v5041
        %5093 = vmatpush.msra.mxu0 %v5037
        %5094 = vmatpush.msra.mxu0 %v5033
        %5095 = vmatpush.msra.mxu0 %v5029
        %5096 = vmatpush.msra.mxu0 %v5025
        %5097 = vmatmul.f32.gmra.mxu0 %v5059
        %v5098 = vpop.f32.mrf.mxu0
        %v5099 = vadd.f32 0.0, %v5098
        %5100 = vdwg.mxu0
        %5101 = vmatpush.msra.mxu0 0.0
        %5102 = vmatpush.msra.mxu0 0.0
        %5103 = vmatpush.msra.mxu0 0.0
        %5104 = vmatpush.msra.mxu0 0.0
        %5105 = vmatpush.msra.mxu0 0.0
        %5106 = vmatpush.msra.mxu0 0.0
        %5107 = vmatpush.msra.mxu0 0.0
        %5108 = vmatpush.msra.mxu0 0.0
        %5109 = vmatpush.msra.mxu0 %v5054
        %5110 = vmatpush.msra.mxu0 %v5050
        %5111 = vmatpush.msra.mxu0 %v5046
        %5112 = vmatpush.msra.mxu0 %v5042
        %5113 = vmatpush.msra.mxu0 %v5038
        %5114 = vmatpush.msra.mxu0 %v5034
        %5115 = vmatpush.msra.mxu0 %v5030
        %5116 = vmatpush.msra.mxu0 %v5026
        %5117 = vmatmul.f32.gmra.mxu0 %v5059
        %v5118 = vpop.f32.mrf.mxu0
        %v5119 = vadd.f32 0.0, %v5118
        %5120 = vdwg.mxu0
        %5121 = vmatpush.msra.mxu0 0.0
        %5122 = vmatpush.msra.mxu0 0.0
        %5123 = vmatpush.msra.mxu0 0.0
        %5124 = vmatpush.msra.mxu0 0.0
        %5125 = vmatpush.msra.mxu0 0.0
        %5126 = vmatpush.msra.mxu0 0.0
        %5127 = vmatpush.msra.mxu0 0.0
        %5128 = vmatpush.msra.mxu0 0.0
        %5129 = vmatpush.msra.mxu0 %v5055
        %5130 = vmatpush.msra.mxu0 %v5051
        %5131 = vmatpush.msra.mxu0 %v5047
        %5132 = vmatpush.msra.mxu0 %v5043
        %5133 = vmatpush.msra.mxu0 %v5039
        %5134 = vmatpush.msra.mxu0 %v5035
        %5135 = vmatpush.msra.mxu0 %v5031
        %5136 = vmatpush.msra.mxu0 %v5027
        %5137 = vmatmul.f32.gmra.mxu0 %v5059
        %v5138 = vpop.f32.mrf.mxu0
        %v5139 = vadd.f32 0.0, %v5138
        %5140 = vdwg.mxu0
        %v5141 = vadd.f32 %v4962, %v5079
        %v5142 = vadd.f32 %v4982, %v5099
        %v5143 = vadd.f32 %v5002, %v5119
        %v5144 = vadd.f32 %v5022, %v5139
        %v5145 = vld [vmem:[%s471 + $0x300] sm:$0xff]
        %v5146 = vld [vmem:[%s471 + $0x308] sm:$0xff]
        %v5147 = vld [vmem:[%s471 + $0x310] sm:$0xff]
        %v5148 = vld [vmem:[%s471 + $0x318] sm:$0xff]
        %v5149 = vld [vmem:[%s471 + $0x320] sm:$0xff]
        %v5150 = vld [vmem:[%s471 + $0x328] sm:$0xff]
        %v5151 = vld [vmem:[%s471 + $0x330] sm:$0xff]
        %v5152 = vld [vmem:[%s471 + $0x338] sm:$0xff]
        %v5153 = vld [vmem:[%s471 + $0x340] sm:$0xff]
        %v5154 = vld [vmem:[%s471 + $0x348] sm:$0xff]
        %v5155 = vld [vmem:[%s471 + $0x350] sm:$0xff]
        %v5156 = vld [vmem:[%s471 + $0x358] sm:$0xff]
        %v5157 = vld [vmem:[%s471 + $0x360] sm:$0xff]
        %v5158 = vld [vmem:[%s471 + $0x368] sm:$0xff]
        %v5159 = vld [vmem:[%s471 + $0x370] sm:$0xff]
        %v5160 = vld [vmem:[%s471 + $0x378] sm:$0xff]
        %v5161 = vld [vmem:[%s471 + $0x380] sm:$0xff]
        %v5162 = vld [vmem:[%s471 + $0x388] sm:$0xff]
        %v5163 = vld [vmem:[%s471 + $0x390] sm:$0xff]
        %v5164 = vld [vmem:[%s471 + $0x398] sm:$0xff]
        %v5165 = vld [vmem:[%s471 + $0x3a0] sm:$0xff]
        %v5166 = vld [vmem:[%s471 + $0x3a8] sm:$0xff]
        %v5167 = vld [vmem:[%s471 + $0x3b0] sm:$0xff]
        %v5168 = vld [vmem:[%s471 + $0x3b8] sm:$0xff]
        %v5169 = vld [vmem:[%s471 + $0x3c0] sm:$0xff]
        %v5170 = vld [vmem:[%s471 + $0x3c8] sm:$0xff]
        %v5171 = vld [vmem:[%s471 + $0x3d0] sm:$0xff]
        %v5172 = vld [vmem:[%s471 + $0x3d8] sm:$0xff]
        %v5173 = vld [vmem:[%s471 + $0x3e0] sm:$0xff]
        %v5174 = vld [vmem:[%s471 + $0x3e8] sm:$0xff]
        %v5175 = vld [vmem:[%s471 + $0x3f0] sm:$0xff]
        %v5176 = vld [vmem:[%s471 + $0x3f8] sm:$0xff]
        %v5177 = vrot.slane %v4786, 3
        %v5178 = vrot.slane %v4787, 2
        %v5179 = vsel %vm4855, %v5178, %v5177
        %v5180 = vsel %vm4857, %v5179, 0
        %5182 = vmatpush.msra.mxu0 0.0
        %5183 = vmatpush.msra.mxu0 0.0
        %5184 = vmatpush.msra.mxu0 0.0
        %5185 = vmatpush.msra.mxu0 0.0
        %5186 = vmatpush.msra.mxu0 0.0
        %5187 = vmatpush.msra.mxu0 0.0
        %5188 = vmatpush.msra.mxu0 0.0
        %5189 = vmatpush.msra.mxu0 0.0
        %5190 = vmatpush.msra.mxu0 %v5173
        %5191 = vmatpush.msra.mxu0 %v5169
        %5192 = vmatpush.msra.mxu0 %v5165
        %5193 = vmatpush.msra.mxu0 %v5161
        %5194 = vmatpush.msra.mxu0 %v5157
        %5195 = vmatpush.msra.mxu0 %v5153
        %5196 = vmatpush.msra.mxu0 %v5149
        %5197 = vmatpush.msra.mxu0 %v5145
        %5198 = vmatmul.f32.gmra.mxu0 %v5180
        %v5199 = vpop.f32.mrf.mxu0
        %v5200 = vadd.f32 0.0, %v5199
        %5201 = vdwg.mxu0
        %5202 = vmatpush.msra.mxu0 0.0
        %5203 = vmatpush.msra.mxu0 0.0
        %5204 = vmatpush.msra.mxu0 0.0
        %5205 = vmatpush.msra.mxu0 0.0
        %5206 = vmatpush.msra.mxu0 0.0
        %5207 = vmatpush.msra.mxu0 0.0
        %5208 = vmatpush.msra.mxu0 0.0
        %5209 = vmatpush.msra.mxu0 0.0
        %5210 = vmatpush.msra.mxu0 %v5174
        %5211 = vmatpush.msra.mxu0 %v5170
        %5212 = vmatpush.msra.mxu0 %v5166
        %5213 = vmatpush.msra.mxu0 %v5162
        %5214 = vmatpush.msra.mxu0 %v5158
        %5215 = vmatpush.msra.mxu0 %v5154
        %5216 = vmatpush.msra.mxu0 %v5150
        %5217 = vmatpush.msra.mxu0 %v5146
        %5218 = vmatmul.f32.gmra.mxu0 %v5180
        %v5219 = vpop.f32.mrf.mxu0
        %v5220 = vadd.f32 0.0, %v5219
        %5221 = vdwg.mxu0
        %5222 = vmatpush.msra.mxu0 0.0
        %5223 = vmatpush.msra.mxu0 0.0
        %5224 = vmatpush.msra.mxu0 0.0
        %5225 = vmatpush.msra.mxu0 0.0
        %5226 = vmatpush.msra.mxu0 0.0
        %5227 = vmatpush.msra.mxu0 0.0
        %5228 = vmatpush.msra.mxu0 0.0
        %5229 = vmatpush.msra.mxu0 0.0
        %5230 = vmatpush.msra.mxu0 %v5175
        %5231 = vmatpush.msra.mxu0 %v5171
        %5232 = vmatpush.msra.mxu0 %v5167
        %5233 = vmatpush.msra.mxu0 %v5163
        %5234 = vmatpush.msra.mxu0 %v5159
        %5235 = vmatpush.msra.mxu0 %v5155
        %5236 = vmatpush.msra.mxu0 %v5151
        %5237 = vmatpush.msra.mxu0 %v5147
        %5238 = vmatmul.f32.gmra.mxu0 %v5180
        %v5239 = vpop.f32.mrf.mxu0
        %v5240 = vadd.f32 0.0, %v5239
        %5241 = vdwg.mxu0
        %5242 = vmatpush.msra.mxu0 0.0
        %5243 = vmatpush.msra.mxu0 0.0
        %5244 = vmatpush.msra.mxu0 0.0
        %5245 = vmatpush.msra.mxu0 0.0
        %5246 = vmatpush.msra.mxu0 0.0
        %5247 = vmatpush.msra.mxu0 0.0
        %5248 = vmatpush.msra.mxu0 0.0
        %5249 = vmatpush.msra.mxu0 0.0
        %5250 = vmatpush.msra.mxu0 %v5176
        %5251 = vmatpush.msra.mxu0 %v5172
        %5252 = vmatpush.msra.mxu0 %v5168
        %5253 = vmatpush.msra.mxu0 %v5164
        %5254 = vmatpush.msra.mxu0 %v5160
        %5255 = vmatpush.msra.mxu0 %v5156
        %5256 = vmatpush.msra.mxu0 %v5152
        %5257 = vmatpush.msra.mxu0 %v5148
        %5258 = vmatmul.f32.gmra.mxu0 %v5180
        %v5259 = vpop.f32.mrf.mxu0
        %v5260 = vadd.f32 0.0, %v5259
        %5261 = vdwg.mxu0
        %v5262 = vadd.f32 %v5141, %v5200
        %v5263 = vadd.f32 %v5142, %v5220
        %v5264 = vadd.f32 %v5143, %v5240
        %v5265 = vadd.f32 %v5144, %v5260
        %v5266 = vld [vmem:[%s471 + $0x400] sm:$0xff]
        %v5267 = vld [vmem:[%s471 + $0x408] sm:$0xff]
        %v5268 = vld [vmem:[%s471 + $0x410] sm:$0xff]
        %v5269 = vld [vmem:[%s471 + $0x418] sm:$0xff]
        %v5270 = vld [vmem:[%s471 + $0x420] sm:$0xff]
        %v5271 = vld [vmem:[%s471 + $0x428] sm:$0xff]
        %v5272 = vld [vmem:[%s471 + $0x430] sm:$0xff]
        %v5273 = vld [vmem:[%s471 + $0x438] sm:$0xff]
        %v5274 = vld [vmem:[%s471 + $0x440] sm:$0xff]
        %v5275 = vld [vmem:[%s471 + $0x448] sm:$0xff]
        %v5276 = vld [vmem:[%s471 + $0x450] sm:$0xff]
        %v5277 = vld [vmem:[%s471 + $0x458] sm:$0xff]
        %v5278 = vld [vmem:[%s471 + $0x460] sm:$0xff]
        %v5279 = vld [vmem:[%s471 + $0x468] sm:$0xff]
        %v5280 = vld [vmem:[%s471 + $0x470] sm:$0xff]
        %v5281 = vld [vmem:[%s471 + $0x478] sm:$0xff]
        %v5282 = vld [vmem:[%s471 + $0x480] sm:$0xff]
        %v5283 = vld [vmem:[%s471 + $0x488] sm:$0xff]
        %v5284 = vld [vmem:[%s471 + $0x490] sm:$0xff]
        %v5285 = vld [vmem:[%s471 + $0x498] sm:$0xff]
        %v5286 = vld [vmem:[%s471 + $0x4a0] sm:$0xff]
        %v5287 = vld [vmem:[%s471 + $0x4a8] sm:$0xff]
        %v5288 = vld [vmem:[%s471 + $0x4b0] sm:$0xff]
        %v5289 = vld [vmem:[%s471 + $0x4b8] sm:$0xff]
        %v5290 = vld [vmem:[%s471 + $0x4c0] sm:$0xff]
        %v5291 = vld [vmem:[%s471 + $0x4c8] sm:$0xff]
        %v5292 = vld [vmem:[%s471 + $0x4d0] sm:$0xff]
        %v5293 = vld [vmem:[%s471 + $0x4d8] sm:$0xff]
        %v5294 = vld [vmem:[%s471 + $0x4e0] sm:$0xff]
        %v5295 = vld [vmem:[%s471 + $0x4e8] sm:$0xff]
        %v5296 = vld [vmem:[%s471 + $0x4f0] sm:$0xff]
        %v5297 = vld [vmem:[%s471 + $0x4f8] sm:$0xff]
        %v5298 = vrot.slane %v4786, 4
        %v5299 = vrot.slane %v4787, 3
        %v5300 = vsel %vm4855, %v5299, %v5298
        %v5301 = vsel %vm4857, %v5300, 0
        %5303 = vmatpush.msra.mxu0 0.0
        %5304 = vmatpush.msra.mxu0 0.0
        %5305 = vmatpush.msra.mxu0 0.0
        %5306 = vmatpush.msra.mxu0 0.0
        %5307 = vmatpush.msra.mxu0 0.0
        %5308 = vmatpush.msra.mxu0 0.0
        %5309 = vmatpush.msra.mxu0 0.0
        %5310 = vmatpush.msra.mxu0 0.0
        %5311 = vmatpush.msra.mxu0 %v5294
        %5312 = vmatpush.msra.mxu0 %v5290
        %5313 = vmatpush.msra.mxu0 %v5286
        %5314 = vmatpush.msra.mxu0 %v5282
        %5315 = vmatpush.msra.mxu0 %v5278
        %5316 = vmatpush.msra.mxu0 %v5274
        %5317 = vmatpush.msra.mxu0 %v5270
        %5318 = vmatpush.msra.mxu0 %v5266
        %5319 = vmatmul.f32.gmra.mxu0 %v5301
        %v5320 = vpop.f32.mrf.mxu0
        %v5321 = vadd.f32 0.0, %v5320
        %5322 = vdwg.mxu0
        %5323 = vmatpush.msra.mxu0 0.0
        %5324 = vmatpush.msra.mxu0 0.0
        %5325 = vmatpush.msra.mxu0 0.0
        %5326 = vmatpush.msra.mxu0 0.0
        %5327 = vmatpush.msra.mxu0 0.0
        %5328 = vmatpush.msra.mxu0 0.0
        %5329 = vmatpush.msra.mxu0 0.0
        %5330 = vmatpush.msra.mxu0 0.0
        %5331 = vmatpush.msra.mxu0 %v5295
        %5332 = vmatpush.msra.mxu0 %v5291
        %5333 = vmatpush.msra.mxu0 %v5287
        %5334 = vmatpush.msra.mxu0 %v5283
        %5335 = vmatpush.msra.mxu0 %v5279
        %5336 = vmatpush.msra.mxu0 %v5275
        %5337 = vmatpush.msra.mxu0 %v5271
        %5338 = vmatpush.msra.mxu0 %v5267
        %5339 = vmatmul.f32.gmra.mxu0 %v5301
        %v5340 = vpop.f32.mrf.mxu0
        %v5341 = vadd.f32 0.0, %v5340
        %5342 = vdwg.mxu0
        %5343 = vmatpush.msra.mxu0 0.0
        %5344 = vmatpush.msra.mxu0 0.0
        %5345 = vmatpush.msra.mxu0 0.0
        %5346 = vmatpush.msra.mxu0 0.0
        %5347 = vmatpush.msra.mxu0 0.0
        %5348 = vmatpush.msra.mxu0 0.0
        %5349 = vmatpush.msra.mxu0 0.0
        %5350 = vmatpush.msra.mxu0 0.0
        %5351 = vmatpush.msra.mxu0 %v5296
        %5352 = vmatpush.msra.mxu0 %v5292
        %5353 = vmatpush.msra.mxu0 %v5288
        %5354 = vmatpush.msra.mxu0 %v5284
        %5355 = vmatpush.msra.mxu0 %v5280
        %5356 = vmatpush.msra.mxu0 %v5276
        %5357 = vmatpush.msra.mxu0 %v5272
        %5358 = vmatpush.msra.mxu0 %v5268
        %5359 = vmatmul.f32.gmra.mxu0 %v5301
        %v5360 = vpop.f32.mrf.mxu0
        %v5361 = vadd.f32 0.0, %v5360
        %5362 = vdwg.mxu0
        %5363 = vmatpush.msra.mxu0 0.0
        %5364 = vmatpush.msra.mxu0 0.0
        %5365 = vmatpush.msra.mxu0 0.0
        %5366 = vmatpush.msra.mxu0 0.0
        %5367 = vmatpush.msra.mxu0 0.0
        %5368 = vmatpush.msra.mxu0 0.0
        %5369 = vmatpush.msra.mxu0 0.0
        %5370 = vmatpush.msra.mxu0 0.0
        %5371 = vmatpush.msra.mxu0 %v5297
        %5372 = vmatpush.msra.mxu0 %v5293
        %5373 = vmatpush.msra.mxu0 %v5289
        %5374 = vmatpush.msra.mxu0 %v5285
        %5375 = vmatpush.msra.mxu0 %v5281
        %5376 = vmatpush.msra.mxu0 %v5277
        %5377 = vmatpush.msra.mxu0 %v5273
        %5378 = vmatpush.msra.mxu0 %v5269
        %5379 = vmatmul.f32.gmra.mxu0 %v5301
        %v5380 = vpop.f32.mrf.mxu0
        %v5381 = vadd.f32 0.0, %v5380
        %5382 = vdwg.mxu0
        %v5383 = vadd.f32 %v5262, %v5321
        %v5384 = vadd.f32 %v5263, %v5341
        %v5385 = vadd.f32 %v5264, %v5361
        %v5386 = vadd.f32 %v5265, %v5381
        %v5387 = vld [vmem:[%s471 + $0x500] sm:$0xff]
        %v5388 = vld [vmem:[%s471 + $0x508] sm:$0xff]
        %v5389 = vld [vmem:[%s471 + $0x510] sm:$0xff]
        %v5390 = vld [vmem:[%s471 + $0x518] sm:$0xff]
        %v5391 = vld [vmem:[%s471 + $0x520] sm:$0xff]
        %v5392 = vld [vmem:[%s471 + $0x528] sm:$0xff]
        %v5393 = vld [vmem:[%s471 + $0x530] sm:$0xff]
        %v5394 = vld [vmem:[%s471 + $0x538] sm:$0xff]
        %v5395 = vld [vmem:[%s471 + $0x540] sm:$0xff]
        %v5396 = vld [vmem:[%s471 + $0x548] sm:$0xff]
        %v5397 = vld [vmem:[%s471 + $0x550] sm:$0xff]
        %v5398 = vld [vmem:[%s471 + $0x558] sm:$0xff]
        %v5399 = vld [vmem:[%s471 + $0x560] sm:$0xff]
        %v5400 = vld [vmem:[%s471 + $0x568] sm:$0xff]
        %v5401 = vld [vmem:[%s471 + $0x570] sm:$0xff]
        %v5402 = vld [vmem:[%s471 + $0x578] sm:$0xff]
        %v5403 = vld [vmem:[%s471 + $0x580] sm:$0xff]
        %v5404 = vld [vmem:[%s471 + $0x588] sm:$0xff]
        %v5405 = vld [vmem:[%s471 + $0x590] sm:$0xff]
        %v5406 = vld [vmem:[%s471 + $0x598] sm:$0xff]
        %v5407 = vld [vmem:[%s471 + $0x5a0] sm:$0xff]
        %v5408 = vld [vmem:[%s471 + $0x5a8] sm:$0xff]
        %v5409 = vld [vmem:[%s471 + $0x5b0] sm:$0xff]
        %v5410 = vld [vmem:[%s471 + $0x5b8] sm:$0xff]
        %v5411 = vld [vmem:[%s471 + $0x5c0] sm:$0xff]
        %v5412 = vld [vmem:[%s471 + $0x5c8] sm:$0xff]
        %v5413 = vld [vmem:[%s471 + $0x5d0] sm:$0xff]
        %v5414 = vld [vmem:[%s471 + $0x5d8] sm:$0xff]
        %v5415 = vld [vmem:[%s471 + $0x5e0] sm:$0xff]
        %v5416 = vld [vmem:[%s471 + $0x5e8] sm:$0xff]
        %v5417 = vld [vmem:[%s471 + $0x5f0] sm:$0xff]
        %v5418 = vld [vmem:[%s471 + $0x5f8] sm:$0xff]
        %v5419 = vrot.slane %v4786, 5
        %v5420 = vrot.slane %v4787, 4
        %v5421 = vsel %vm4855, %v5420, %v5419
        %v5422 = vsel %vm4857, %v5421, 0
        %5424 = vmatpush.msra.mxu0 0.0
        %5425 = vmatpush.msra.mxu0 0.0
        %5426 = vmatpush.msra.mxu0 0.0
        %5427 = vmatpush.msra.mxu0 0.0
        %5428 = vmatpush.msra.mxu0 0.0
        %5429 = vmatpush.msra.mxu0 0.0
        %5430 = vmatpush.msra.mxu0 0.0
        %5431 = vmatpush.msra.mxu0 0.0
        %5432 = vmatpush.msra.mxu0 %v5415
        %5433 = vmatpush.msra.mxu0 %v5411
        %5434 = vmatpush.msra.mxu0 %v5407
        %5435 = vmatpush.msra.mxu0 %v5403
        %5436 = vmatpush.msra.mxu0 %v5399
        %5437 = vmatpush.msra.mxu0 %v5395
        %5438 = vmatpush.msra.mxu0 %v5391
        %5439 = vmatpush.msra.mxu0 %v5387
        %5440 = vmatmul.f32.gmra.mxu0 %v5422
        %v5441 = vpop.f32.mrf.mxu0
        %v5442 = vadd.f32 0.0, %v5441
        %5443 = vdwg.mxu0
        %5444 = vmatpush.msra.mxu0 0.0
        %5445 = vmatpush.msra.mxu0 0.0
        %5446 = vmatpush.msra.mxu0 0.0
        %5447 = vmatpush.msra.mxu0 0.0
        %5448 = vmatpush.msra.mxu0 0.0
        %5449 = vmatpush.msra.mxu0 0.0
        %5450 = vmatpush.msra.mxu0 0.0
        %5451 = vmatpush.msra.mxu0 0.0
        %5452 = vmatpush.msra.mxu0 %v5416
        %5453 = vmatpush.msra.mxu0 %v5412
        %5454 = vmatpush.msra.mxu0 %v5408
        %5455 = vmatpush.msra.mxu0 %v5404
        %5456 = vmatpush.msra.mxu0 %v5400
        %5457 = vmatpush.msra.mxu0 %v5396
        %5458 = vmatpush.msra.mxu0 %v5392
        %5459 = vmatpush.msra.mxu0 %v5388
        %5460 = vmatmul.f32.gmra.mxu0 %v5422
        %v5461 = vpop.f32.mrf.mxu0
        %v5462 = vadd.f32 0.0, %v5461
        %5463 = vdwg.mxu0
        %5464 = vmatpush.msra.mxu0 0.0
        %5465 = vmatpush.msra.mxu0 0.0
        %5466 = vmatpush.msra.mxu0 0.0
        %5467 = vmatpush.msra.mxu0 0.0
        %5468 = vmatpush.msra.mxu0 0.0
        %5469 = vmatpush.msra.mxu0 0.0
        %5470 = vmatpush.msra.mxu0 0.0
        %5471 = vmatpush.msra.mxu0 0.0
        %5472 = vmatpush.msra.mxu0 %v5417
        %5473 = vmatpush.msra.mxu0 %v5413
        %5474 = vmatpush.msra.mxu0 %v5409
        %5475 = vmatpush.msra.mxu0 %v5405
        %5476 = vmatpush.msra.mxu0 %v5401
        %5477 = vmatpush.msra.mxu0 %v5397
        %5478 = vmatpush.msra.mxu0 %v5393
        %5479 = vmatpush.msra.mxu0 %v5389
        %5480 = vmatmul.f32.gmra.mxu0 %v5422
        %v5481 = vpop.f32.mrf.mxu0
        %v5482 = vadd.f32 0.0, %v5481
        %5483 = vdwg.mxu0
        %5484 = vmatpush.msra.mxu0 0.0
        %5485 = vmatpush.msra.mxu0 0.0
        %5486 = vmatpush.msra.mxu0 0.0
        %5487 = vmatpush.msra.mxu0 0.0
        %5488 = vmatpush.msra.mxu0 0.0
        %5489 = vmatpush.msra.mxu0 0.0
        %5490 = vmatpush.msra.mxu0 0.0
        %5491 = vmatpush.msra.mxu0 0.0
        %5492 = vmatpush.msra.mxu0 %v5418
        %5493 = vmatpush.msra.mxu0 %v5414
        %5494 = vmatpush.msra.mxu0 %v5410
        %5495 = vmatpush.msra.mxu0 %v5406
        %5496 = vmatpush.msra.mxu0 %v5402
        %5497 = vmatpush.msra.mxu0 %v5398
        %5498 = vmatpush.msra.mxu0 %v5394
        %5499 = vmatpush.msra.mxu0 %v5390
        %5500 = vmatmul.f32.gmra.mxu0 %v5422
        %v5501 = vpop.f32.mrf.mxu0
        %v5502 = vadd.f32 0.0, %v5501
        %5503 = vdwg.mxu0
        %v5504 = vadd.f32 %v5383, %v5442
        %v5505 = vadd.f32 %v5384, %v5462
        %v5506 = vadd.f32 %v5385, %v5482
        %v5507 = vadd.f32 %v5386, %v5502
        %v5508 = vld [vmem:[%s471 + $0x600] sm:$0xff]
        %v5509 = vld [vmem:[%s471 + $0x608] sm:$0xff]
        %v5510 = vld [vmem:[%s471 + $0x610] sm:$0xff]
        %v5511 = vld [vmem:[%s471 + $0x618] sm:$0xff]
        %v5512 = vld [vmem:[%s471 + $0x620] sm:$0xff]
        %v5513 = vld [vmem:[%s471 + $0x628] sm:$0xff]
        %v5514 = vld [vmem:[%s471 + $0x630] sm:$0xff]
        %v5515 = vld [vmem:[%s471 + $0x638] sm:$0xff]
        %v5516 = vld [vmem:[%s471 + $0x640] sm:$0xff]
        %v5517 = vld [vmem:[%s471 + $0x648] sm:$0xff]
        %v5518 = vld [vmem:[%s471 + $0x650] sm:$0xff]
        %v5519 = vld [vmem:[%s471 + $0x658] sm:$0xff]
        %v5520 = vld [vmem:[%s471 + $0x660] sm:$0xff]
        %v5521 = vld [vmem:[%s471 + $0x668] sm:$0xff]
        %v5522 = vld [vmem:[%s471 + $0x670] sm:$0xff]
        %v5523 = vld [vmem:[%s471 + $0x678] sm:$0xff]
        %v5524 = vld [vmem:[%s471 + $0x680] sm:$0xff]
        %v5525 = vld [vmem:[%s471 + $0x688] sm:$0xff]
        %v5526 = vld [vmem:[%s471 + $0x690] sm:$0xff]
        %v5527 = vld [vmem:[%s471 + $0x698] sm:$0xff]
        %v5528 = vld [vmem:[%s471 + $0x6a0] sm:$0xff]
        %v5529 = vld [vmem:[%s471 + $0x6a8] sm:$0xff]
        %v5530 = vld [vmem:[%s471 + $0x6b0] sm:$0xff]
        %v5531 = vld [vmem:[%s471 + $0x6b8] sm:$0xff]
        %v5532 = vld [vmem:[%s471 + $0x6c0] sm:$0xff]
        %v5533 = vld [vmem:[%s471 + $0x6c8] sm:$0xff]
        %v5534 = vld [vmem:[%s471 + $0x6d0] sm:$0xff]
        %v5535 = vld [vmem:[%s471 + $0x6d8] sm:$0xff]
        %v5536 = vld [vmem:[%s471 + $0x6e0] sm:$0xff]
        %v5537 = vld [vmem:[%s471 + $0x6e8] sm:$0xff]
        %v5538 = vld [vmem:[%s471 + $0x6f0] sm:$0xff]
        %v5539 = vld [vmem:[%s471 + $0x6f8] sm:$0xff]
        %v5540 = vrot.slane %v4786, 6
        %v5541 = vrot.slane %v4787, 5
        %v5542 = vsel %vm4855, %v5541, %v5540
        %v5543 = vsel %vm4857, %v5542, 0
        %5545 = vmatpush.msra.mxu0 0.0
        %5546 = vmatpush.msra.mxu0 0.0
        %5547 = vmatpush.msra.mxu0 0.0
        %5548 = vmatpush.msra.mxu0 0.0
        %5549 = vmatpush.msra.mxu0 0.0
        %5550 = vmatpush.msra.mxu0 0.0
        %5551 = vmatpush.msra.mxu0 0.0
        %5552 = vmatpush.msra.mxu0 0.0
        %5553 = vmatpush.msra.mxu0 %v5536
        %5554 = vmatpush.msra.mxu0 %v5532
        %5555 = vmatpush.msra.mxu0 %v5528
        %5556 = vmatpush.msra.mxu0 %v5524
        %5557 = vmatpush.msra.mxu0 %v5520
        %5558 = vmatpush.msra.mxu0 %v5516
        %5559 = vmatpush.msra.mxu0 %v5512
        %5560 = vmatpush.msra.mxu0 %v5508
        %5561 = vmatmul.f32.gmra.mxu0 %v5543
        %v5562 = vpop.f32.mrf.mxu0
        %v5563 = vadd.f32 0.0, %v5562
        %5564 = vdwg.mxu0
        %5565 = vmatpush.msra.mxu0 0.0
        %5566 = vmatpush.msra.mxu0 0.0
        %5567 = vmatpush.msra.mxu0 0.0
        %5568 = vmatpush.msra.mxu0 0.0
        %5569 = vmatpush.msra.mxu0 0.0
        %5570 = vmatpush.msra.mxu0 0.0
        %5571 = vmatpush.msra.mxu0 0.0
        %5572 = vmatpush.msra.mxu0 0.0
        %5573 = vmatpush.msra.mxu0 %v5537
        %5574 = vmatpush.msra.mxu0 %v5533
        %5575 = vmatpush.msra.mxu0 %v5529
        %5576 = vmatpush.msra.mxu0 %v5525
        %5577 = vmatpush.msra.mxu0 %v5521
        %5578 = vmatpush.msra.mxu0 %v5517
        %5579 = vmatpush.msra.mxu0 %v5513
        %5580 = vmatpush.msra.mxu0 %v5509
        %5581 = vmatmul.f32.gmra.mxu0 %v5543
        %v5582 = vpop.f32.mrf.mxu0
        %v5583 = vadd.f32 0.0, %v5582
        %5584 = vdwg.mxu0
        %5585 = vmatpush.msra.mxu0 0.0
        %5586 = vmatpush.msra.mxu0 0.0
        %5587 = vmatpush.msra.mxu0 0.0
        %5588 = vmatpush.msra.mxu0 0.0
        %5589 = vmatpush.msra.mxu0 0.0
        %5590 = vmatpush.msra.mxu0 0.0
        %5591 = vmatpush.msra.mxu0 0.0
        %5592 = vmatpush.msra.mxu0 0.0
        %5593 = vmatpush.msra.mxu0 %v5538
        %5594 = vmatpush.msra.mxu0 %v5534
        %5595 = vmatpush.msra.mxu0 %v5530
        %5596 = vmatpush.msra.mxu0 %v5526
        %5597 = vmatpush.msra.mxu0 %v5522
        %5598 = vmatpush.msra.mxu0 %v5518
        %5599 = vmatpush.msra.mxu0 %v5514
        %5600 = vmatpush.msra.mxu0 %v5510
        %5601 = vmatmul.f32.gmra.mxu0 %v5543
        %v5602 = vpop.f32.mrf.mxu0
        %v5603 = vadd.f32 0.0, %v5602
        %5604 = vdwg.mxu0
        %5605 = vmatpush.msra.mxu0 0.0
        %5606 = vmatpush.msra.mxu0 0.0
        %5607 = vmatpush.msra.mxu0 0.0
        %5608 = vmatpush.msra.mxu0 0.0
        %5609 = vmatpush.msra.mxu0 0.0
        %5610 = vmatpush.msra.mxu0 0.0
        %5611 = vmatpush.msra.mxu0 0.0
        %5612 = vmatpush.msra.mxu0 0.0
        %5613 = vmatpush.msra.mxu0 %v5539
        %5614 = vmatpush.msra.mxu0 %v5535
        %5615 = vmatpush.msra.mxu0 %v5531
        %5616 = vmatpush.msra.mxu0 %v5527
        %5617 = vmatpush.msra.mxu0 %v5523
        %5618 = vmatpush.msra.mxu0 %v5519
        %5619 = vmatpush.msra.mxu0 %v5515
        %5620 = vmatpush.msra.mxu0 %v5511
        %5621 = vmatmul.f32.gmra.mxu0 %v5543
        %v5622 = vpop.f32.mrf.mxu0
        %v5623 = vadd.f32 0.0, %v5622
        %5624 = vdwg.mxu0
        %v5625 = vadd.f32 %v5504, %v5563
        %v5626 = vadd.f32 %v5505, %v5583
        %v5627 = vadd.f32 %v5506, %v5603
        %v5628 = vadd.f32 %v5507, %v5623
        %v5629 = vld [vmem:[%s471 + $0x700] sm:$0xff]
        %v5630 = vld [vmem:[%s471 + $0x708] sm:$0xff]
        %v5631 = vld [vmem:[%s471 + $0x710] sm:$0xff]
        %v5632 = vld [vmem:[%s471 + $0x718] sm:$0xff]
        %v5633 = vld [vmem:[%s471 + $0x720] sm:$0xff]
        %v5634 = vld [vmem:[%s471 + $0x728] sm:$0xff]
        %v5635 = vld [vmem:[%s471 + $0x730] sm:$0xff]
        %v5636 = vld [vmem:[%s471 + $0x738] sm:$0xff]
        %v5637 = vld [vmem:[%s471 + $0x740] sm:$0xff]
        %v5638 = vld [vmem:[%s471 + $0x748] sm:$0xff]
        %v5639 = vld [vmem:[%s471 + $0x750] sm:$0xff]
        %v5640 = vld [vmem:[%s471 + $0x758] sm:$0xff]
        %v5641 = vld [vmem:[%s471 + $0x760] sm:$0xff]
        %v5642 = vld [vmem:[%s471 + $0x768] sm:$0xff]
        %v5643 = vld [vmem:[%s471 + $0x770] sm:$0xff]
        %v5644 = vld [vmem:[%s471 + $0x778] sm:$0xff]
        %v5645 = vld [vmem:[%s471 + $0x780] sm:$0xff]
        %v5646 = vld [vmem:[%s471 + $0x788] sm:$0xff]
        %v5647 = vld [vmem:[%s471 + $0x790] sm:$0xff]
        %v5648 = vld [vmem:[%s471 + $0x798] sm:$0xff]
        %v5649 = vld [vmem:[%s471 + $0x7a0] sm:$0xff]
        %v5650 = vld [vmem:[%s471 + $0x7a8] sm:$0xff]
        %v5651 = vld [vmem:[%s471 + $0x7b0] sm:$0xff]
        %v5652 = vld [vmem:[%s471 + $0x7b8] sm:$0xff]
        %v5653 = vld [vmem:[%s471 + $0x7c0] sm:$0xff]
        %v5654 = vld [vmem:[%s471 + $0x7c8] sm:$0xff]
        %v5655 = vld [vmem:[%s471 + $0x7d0] sm:$0xff]
        %v5656 = vld [vmem:[%s471 + $0x7d8] sm:$0xff]
        %v5657 = vld [vmem:[%s471 + $0x7e0] sm:$0xff]
        %v5658 = vld [vmem:[%s471 + $0x7e8] sm:$0xff]
        %v5659 = vld [vmem:[%s471 + $0x7f0] sm:$0xff]
        %v5660 = vld [vmem:[%s471 + $0x7f8] sm:$0xff]
        %v5661 = vrot.slane %v4786, 7
        %v5662 = vrot.slane %v4787, 6
        %v5663 = vsel %vm4855, %v5662, %v5661
        %v5664 = vsel %vm4857, %v5663, 0
        %5666 = vmatpush.msra.mxu0 0.0
        %5667 = vmatpush.msra.mxu0 0.0
        %5668 = vmatpush.msra.mxu0 0.0
        %5669 = vmatpush.msra.mxu0 0.0
        %5670 = vmatpush.msra.mxu0 0.0
        %5671 = vmatpush.msra.mxu0 0.0
        %5672 = vmatpush.msra.mxu0 0.0
        %5673 = vmatpush.msra.mxu0 0.0
        %5674 = vmatpush.msra.mxu0 %v5657
        %5675 = vmatpush.msra.mxu0 %v5653
        %5676 = vmatpush.msra.mxu0 %v5649
        %5677 = vmatpush.msra.mxu0 %v5645
        %5678 = vmatpush.msra.mxu0 %v5641
        %5679 = vmatpush.msra.mxu0 %v5637
        %5680 = vmatpush.msra.mxu0 %v5633
        %5681 = vmatpush.msra.mxu0 %v5629
        %5682 = vmatmul.f32.gmra.mxu0 %v5664
        %v5683 = vpop.f32.mrf.mxu0
        %v5684 = vadd.f32 0.0, %v5683
        %5685 = vdwg.mxu0
        %5686 = vmatpush.msra.mxu0 0.0
        %5687 = vmatpush.msra.mxu0 0.0
        %5688 = vmatpush.msra.mxu0 0.0
        %5689 = vmatpush.msra.mxu0 0.0
        %5690 = vmatpush.msra.mxu0 0.0
        %5691 = vmatpush.msra.mxu0 0.0
        %5692 = vmatpush.msra.mxu0 0.0
        %5693 = vmatpush.msra.mxu0 0.0
        %5694 = vmatpush.msra.mxu0 %v5658
        %5695 = vmatpush.msra.mxu0 %v5654
        %5696 = vmatpush.msra.mxu0 %v5650
        %5697 = vmatpush.msra.mxu0 %v5646
        %5698 = vmatpush.msra.mxu0 %v5642
        %5699 = vmatpush.msra.mxu0 %v5638
        %5700 = vmatpush.msra.mxu0 %v5634
        %5701 = vmatpush.msra.mxu0 %v5630
        %5702 = vmatmul.f32.gmra.mxu0 %v5664
        %v5703 = vpop.f32.mrf.mxu0
        %v5704 = vadd.f32 0.0, %v5703
        %5705 = vdwg.mxu0
        %5706 = vmatpush.msra.mxu0 0.0
        %5707 = vmatpush.msra.mxu0 0.0
        %5708 = vmatpush.msra.mxu0 0.0
        %5709 = vmatpush.msra.mxu0 0.0
        %5710 = vmatpush.msra.mxu0 0.0
        %5711 = vmatpush.msra.mxu0 0.0
        %5712 = vmatpush.msra.mxu0 0.0
        %5713 = vmatpush.msra.mxu0 0.0
        %5714 = vmatpush.msra.mxu0 %v5659
        %5715 = vmatpush.msra.mxu0 %v5655
        %5716 = vmatpush.msra.mxu0 %v5651
        %5717 = vmatpush.msra.mxu0 %v5647
        %5718 = vmatpush.msra.mxu0 %v5643
        %5719 = vmatpush.msra.mxu0 %v5639
        %5720 = vmatpush.msra.mxu0 %v5635
        %5721 = vmatpush.msra.mxu0 %v5631
        %5722 = vmatmul.f32.gmra.mxu0 %v5664
        %v5723 = vpop.f32.mrf.mxu0
        %v5724 = vadd.f32 0.0, %v5723
        %5725 = vdwg.mxu0
        %5726 = vmatpush.msra.mxu0 0.0
        %5727 = vmatpush.msra.mxu0 0.0
        %5728 = vmatpush.msra.mxu0 0.0
        %5729 = vmatpush.msra.mxu0 0.0
        %5730 = vmatpush.msra.mxu0 0.0
        %5731 = vmatpush.msra.mxu0 0.0
        %5732 = vmatpush.msra.mxu0 0.0
        %5733 = vmatpush.msra.mxu0 0.0
        %5734 = vmatpush.msra.mxu0 %v5660
        %5735 = vmatpush.msra.mxu0 %v5656
        %5736 = vmatpush.msra.mxu0 %v5652
        %5737 = vmatpush.msra.mxu0 %v5648
        %5738 = vmatpush.msra.mxu0 %v5644
        %5739 = vmatpush.msra.mxu0 %v5640
        %5740 = vmatpush.msra.mxu0 %v5636
        %5741 = vmatpush.msra.mxu0 %v5632
        %5742 = vmatmul.f32.gmra.mxu0 %v5664
        %v5743 = vpop.f32.mrf.mxu0
        %v5744 = vadd.f32 0.0, %v5743
        %5745 = vdwg.mxu0
        %v5746 = vadd.f32 %v5625, %v5684
        %v5747 = vadd.f32 %v5626, %v5704
        %v5748 = vadd.f32 %v5627, %v5724
        %v5749 = vadd.f32 %v5628, %v5744
        %v5750 = vld [vmem:[#allocation6] sm:$0xff]
        %v5755 = vrot.slane %v5747, 6
        %v5756 = vrot.slane %v5748, 4
        %v5757 = vrot.slane %v5749, 2
        %vm5758 = vcmask 1041408
        %v5759 = vsel %vm5758, %v5746, %v5755
        %vm5760 = vcmask 1045508
        %v5761 = vsel %vm5760, %v5756, %v5757
        %vm5762 = vcmask 1043456
        %v5763 = vsel %vm5762, %v5759, %v5761
        %v5765 = vadd.f32 %v5750, %v5763
        %5766 = vst [vmem:[#allocation6] sm:$0xff] %v5765
        %p5767 = scmp.eq.s32.totalorder %s28, 7
        // Predicated region
        $region105: #{critic_forward_pallas.1} parent=63 // pred_check
          %p5768 = pneg %p5767
        $region106: #{critic_forward_pallas.1} parent=63 // pred_check_branch
          %5770 = sbr.rel (%p5768) target = $region108
        $region107: #{critic_forward_pallas.1} parent=63 // pred_region
          %v5771 = vld [vmem:[#allocation6] sm:$0xff]
          %v5772 = vld [vmem:[#allocation19] sm:$0xf]
          %v5774 = vperm.slane %v5772, 0
          %v5775 = vperm.slane %v5772, 1
          %v5776 = vperm.slane %v5772, 2
          %v5777 = vperm.slane %v5772, 3
          %v5778 = vrot.slane %v5775, 6
          %v5779 = vrot.slane %v5776, 4
          %v5780 = vrot.slane %v5777, 2
          %v5781 = vsel %vm5758, %v5774, %v5778
          %v5782 = vsel %vm5760, %v5779, %v5780
          %v5783 = vsel %vm5762, %v5781, %v5782
          %v5785 = vadd.f32 %v5771, %v5783
          %v5786 = vmax.f32 %v5785, 0.0
          %v5787 = vld [vmem:[#allocation20] sm:$0xf]
          %v5789 = vperm.slane %v5787, 0
          %v5790 = vperm.slane %v5787, 1
          %v5791 = vperm.slane %v5787, 2
          %v5792 = vperm.slane %v5787, 3
          %v5793 = vrot.slane %v5790, 6
          %v5794 = vrot.slane %v5791, 4
          %v5795 = vrot.slane %v5792, 2
          %v5796 = vsel %vm5758, %v5789, %v5793
          %v5797 = vsel %vm5760, %v5794, %v5795
          %v5798 = vsel %vm5762, %v5796, %v5797
          %v5800 = vmul.f32 %v5786, %v5798
          %5802 = vst [vmem:[#allocation1] ss:$4 sm:$0xff] %v5800
          %v5803 = vld.sshfl [vmem:[#allocation1] sm:$0xff pattern:$0x73625140]
          %v5804 = vld.sshfl [vmem:[#allocation1 + $0x8] sm:$0xff pattern:$0x73625140]
          %v5805 = vld.sshfl [vmem:[#allocation1 + $0x10] sm:$0xff pattern:$0x73625140]
          %v5806 = vld.sshfl [vmem:[#allocation1 + $0x18] sm:$0xff pattern:$0x73625140]
          %v5811 = vsel %vm5758, %v5803, 0.0
          %v5812 = vsel %vm5758, %v5804, 0.0
          %v5813 = vadd.f32 %v5811, %v5812
          %v5814 = vsel %vm5758, %v5805, 0.0
          %v5815 = vadd.f32 %v5813, %v5814
          %v5816 = vsel %vm5758, %v5806, 0.0
          %v5817 = vadd.f32 %v5815, %v5816
          %5818 = vadd.xlane.f32.xlu0 %v5817
          %v5819 = vpop.xlane.xlu0 %5818
          %v5820 = vld [vmem:[#allocation7] sm:$0x1]
          %v5822 = vperm.slane %v5820, 0
          %v5824 = vadd.f32 %v5819, %v5822
          %vm5825 = vcmask 1024
          %5826 = vst.msk [vmem:[%s11] sm:$0x3] %vm5825, %v5824
        $region108: #{critic_forward_pallas.1} parent=63 // pred_fallthru
          _
        // Predicated region
        $region109: #{critic_forward_pallas.1} parent=63 // pred_check
          %p5827 = pneg %p277
        $region110: #{critic_forward_pallas.1} parent=63 // pred_check_branch
          %5829 = sbr.rel (%p5827) target = $region112
        $region111: #{critic_forward_pallas.1} parent=63 // pred_region
          _
        $region112: #{critic_forward_pallas.1} parent=63 // pred_fallthru
          _
        // Predicated region
        $region113: #{critic_forward_pallas.1} parent=63 // pred_check
          %p5830 = pneg %p277
        $region114: #{critic_forward_pallas.1} parent=63 // pred_check_branch
          %5832 = sbr.rel (%p5830) target = $region116
        $region115: #{critic_forward_pallas.1} parent=63 // pred_region
          _
        $region116: #{critic_forward_pallas.1} parent=63 // pred_fallthru
          _
      $region64: #{critic_forward_pallas.1} parent=5 // pred_fallthru
        _
      %p5833 = scmp.le.s32.totalorder 2, %s23
      // Predicated region
      $region117: #{critic_forward_pallas.1} parent=5 // pred_check
        %p5834 = pneg %p5833
      $region118: #{critic_forward_pallas.1} parent=5 // pred_check_branch
        %5836 = sbr.rel (%p5834) target = $region120
      $region119: #{critic_forward_pallas.1} parent=5 // pred_region
        %s5837 = ssub.s32 %s23, 2
      $region120: #{critic_forward_pallas.1} parent=5 // pred_fallthru
        _
    $region6: #{critic_forward_pallas.1} parent=1 // loop_footer
      %s27 = sadd.s32 1, %s23
    $region7: #{critic_forward_pallas.1} parent=1 // loop_footer_branch
      %22 = sbr.rel target = $region3
    $region8: #{critic_forward_pallas.1} parent=1 // loop_exit
      _
    %5838 = vsyncpa [#allocation9], 1
    %s5839 = scalar_lea.sflag [#allocation9], 1
    %5840 = vsyncpa %s5839, 1
    %5841 = vsyncpa [#allocation11], 1
    %5842 = vsyncpa [#allocation14], 1
    %5843 = vsyncpa [#allocation17], 1

</llo_original>
